<compile_context>
chip_gen: v7x
topology: tpu7x:2x2x1
jax: 0.10.0
libtpu: 0.0.40
codegen_flags: <defaults>
</compile_context>

<pallas_src>
import jax
import jax.numpy as jnp
from jax.experimental import pallas as pl
from jax.experimental.pallas import tpu as pltpu

# ---- small config consistent with the module -------------------------------
MAX_LEN = 16            # configs.max_sentence_length
VOCAB = 128             # configs.vocab_size
EMB_DIM = 108           # configs.embedding_dimension (108 + 20 = 128 lanes)
LABEL_NUM = 8           # configs.label_num
FILTER_SIZES = (1, 2, 3, 4)
N_FILTERS = 1024        # hard-coded in the module
POS_DIM = 10
D = EMB_DIM + 2 * POS_DIM   # 128
BATCH = 2


def textcnn_kernel(x_ref, w_ref, b_ref, out_ref):
    """One (feature-group, batch-tile) grid step.

    x_ref  : (4, BT*L, D) bf16  tap-major shifted inputs, x_tap[k][j] = x[j+k]
    w_ref  : (1, 5, D, F) bf16  this group's 5 nonzero conv-weight slabs
                                group 0: [W1_t0, W4_t0, W4_t1, W4_t2, W4_t3]
                                group 1: [W2_t0, W2_t1, W3_t0, W3_t1, W3_t2]
    b_ref  : (1, 1, 2F)   f32   this group's biases  [left filter | right filter]
    out_ref: (BT, 2F)     f32   max-pooled conv features (lane-dense)
    """
    group = pl.program_id(0)
    bt, two_f = out_ref.shape
    f = two_f // 2
    m = x_ref.shape[1]              # BT * L
    seq_len = m // bt               # L

    def conv_relu_pool(slabs, bias, valid_len):
        # slabs: list of (tap index into x_ref, slab index into w_ref)
        k0, s0 = slabs[0]
        acc = jnp.dot(x_ref[k0], w_ref[0, s0],
                      preferred_element_type=jnp.float32)          # (BT*L, F)
        for k, s in slabs[1:]:
            acc += jnp.dot(x_ref[k], w_ref[0, s],
                           preferred_element_type=jnp.float32)
        y = jnp.maximum(acc + bias, 0.0).reshape(bt, seq_len, f)
        # invalid conv positions (j >= L - fs + 1): multiplicative zero mask
        # (ReLU output >= 0 and position 0 is always valid, so this is exact).
        pos = jax.lax.broadcasted_iota(jnp.int32, (bt, seq_len, f), 1)
        y = jnp.where(pos < valid_len, y, 0.0)
        return jnp.max(y, axis=1)                                   # (BT, F)

    @pl.when(group == 0)
    def _():
        # group 0: filters fs=1 (left half) | fs=4 (right half)
        out_ref[:, :f] = conv_relu_pool([(0, 0)],
                                        b_ref[0, :, :f], seq_len)          # 16
        out_ref[:, f:] = conv_relu_pool([(0, 1), (1, 2), (2, 3), (3, 4)],
                                        b_ref[0, :, f:], seq_len - 3)      # 13

    @pl.when(group == 1)
    def _():
        # group 1: filters fs=2 (left half) | fs=3 (right half)
        out_ref[:, :f] = conv_relu_pool([(0, 0), (1, 1)],
                                        b_ref[0, :, :f], seq_len - 1)      # 15
        out_ref[:, f:] = conv_relu_pool([(0, 2), (1, 3), (2, 4)],
                                        b_ref[0, :, f:], seq_len - 2)      # 14


def textcnn_features(x, conv_ws, conv_bs):
    """x (B, L, D) f32 -> pooled conv features (B, 4F) f32.

    Returned feature columns are ordered [fs=1 | fs=4 | fs=2 | fs=3]
    (balanced zero-free weight grouping); callers must permute accordingly.
    """
    B, L, d_in = x.shape
    F = conv_ws[0].shape[-1]
    k_taps = max(FILTER_SIZES)                       # 4
    assert len(conv_ws) == 4 and tuple(w.shape[0] for w in conv_ws) == FILTER_SIZES

    # ---- tap-major shifted copies: x_tap[k, b, j] = x[b, j + k] (0 past end) ----
    shifted = [x]
    for k in range(1, k_taps):
        shifted.append(jnp.pad(x[:, k:, :], ((0, 0), (0, k), (0, 0))))
    x_tap = jnp.stack(shifted, axis=0).astype(jnp.bfloat16)       # (4, B, L, D)

    # ---- fold batch into the matmul M dimension ---------------------------------
    bt = B if B <= 16 else 16
    n_tiles = pl.cdiv(B, bt)
    b_pad = n_tiles * bt
    if b_pad != B:
        x_tap = jnp.pad(x_tap, ((0, 0), (0, b_pad - B), (0, 0), (0, 0)))
    x_tap = x_tap.reshape(k_taps, b_pad * L, d_in)                 # (4, B_pad*L, D)

    # ---- zero-free packed weights: two balanced groups of 5 (D, F) slabs --------
    w1, w2, w3, w4 = conv_ws                                       # (fs, D, F) each
    g0 = jnp.stack([w1[0], w4[0], w4[1], w4[2], w4[3]], axis=0)    # {fs=1, fs=4}
    g1 = jnp.stack([w2[0], w2[1], w3[0], w3[1], w3[2]], axis=0)    # {fs=2, fs=3}
    w_packed = jnp.stack([g0, g1], axis=0).astype(jnp.bfloat16)    # (2, 5, D, F)

    b1, b2, b3, b4 = conv_bs                                       # (1, F) each
    bias_packed = jnp.stack(
        [jnp.concatenate([b1, b4], axis=1),
         jnp.concatenate([b2, b3], axis=1)], axis=0).astype(jnp.float32)  # (2, 1, 2F)

    n_groups = 2
    pooled = pl.pallas_call(
        textcnn_kernel,
        out_shape=jax.ShapeDtypeStruct((b_pad, n_groups * 2 * F), jnp.float32),
        grid_spec=pltpu.PrefetchScalarGridSpec(
            num_scalar_prefetch=0,
            grid=(n_groups, n_tiles),
            in_specs=[
                pl.BlockSpec((k_taps, bt * L, d_in), lambda n, b: (0, b, 0)),
                pl.BlockSpec((1, 5, d_in, F), lambda n, b: (n, 0, 0, 0)),
                pl.BlockSpec((1, 1, 2 * F), lambda n, b: (n, 0, 0)),
            ],
            out_specs=pl.BlockSpec((bt, 2 * F), lambda n, b: (b, n)),
        ),
        compiler_params=pltpu.CompilerParams(
            # feature-group axis "parallel": each v7x TensorCore fetches only
            # its own 1.25 MiB weight half; batch axis stays "arbitrary".
            dimension_semantics=("parallel", "arbitrary"),
            vmem_limit_bytes=32 * 1024 * 1024,
        ),
    )(x_tap, w_packed, bias_packed)

    return pooled[:B]


def textcnn_forward(x, conv_ws, conv_bs, w_lin, b_lin):
    feats = textcnn_features(x, conv_ws, conv_bs)    # columns: fs=1 | fs=4 | fs=2 | fs=3
    F = conv_ws[0].shape[-1]
    # Permute the Linear weight rows once to match the kernel's feature order.
    w_perm = jnp.concatenate(
        [w_lin[0:F], w_lin[3 * F:4 * F], w_lin[F:2 * F], w_lin[2 * F:3 * F]], axis=0)
    # TODO(synk): nn.Dropout is identity in eval mode; training-mode dropout not implemented.
    # The tiny 4096 -> label_num Linear stays in plain XLA so the kernel's
    # output remains lane-dense (avoids 8-lane masked stores).
    return feats.astype(jnp.float32) @ w_perm + b_lin


def reference_forward(x, conv_ws, conv_bs, w_lin, b_lin):
    """Pure-JAX reference (mirrors the PyTorch forward).  Uses the same bf16
    rounding of activations / conv weights as the kernel path, f32 math."""
    xb = x.astype(jnp.bfloat16).astype(jnp.float32)
    outs = []
    for w, bias, fs in zip(conv_ws, conv_bs, FILTER_SIZES):
        wb = w.astype(jnp.bfloat16).astype(jnp.float32)
        l_out = x.shape[1] - fs + 1
        s = jnp.zeros((x.shape[0], l_out, w.shape[-1]), jnp.float32)
        for k in range(fs):
            s = s + jnp.einsum("bld,df->blf", xb[:, k:k + l_out, :], wb[k],
                               precision=jax.lax.Precision.HIGHEST)
        s = jax.nn.relu(s + bias[None, :, :])
        outs.append(jnp.max(s, axis=1))                  # (B, F)
    cat = jnp.concatenate(outs, axis=1)                  # (B, 4F) torch.cat order
    return cat @ w_lin + b_lin


if __name__ == "__main__":
    key = jax.random.PRNGKey(0)
    keys = jax.random.split(key, 16)

    # --- parameters (deterministic synthetic init, PyTorch shapes) ----------
    embed_w = jax.random.normal(keys[0], (VOCAB, EMB_DIM), jnp.float32) * 0.1
    pos1_w = jax.random.normal(keys[1], (VOCAB, POS_DIM), jnp.float32) * 0.1
    pos2_w = jax.random.normal(keys[2], (VOCAB, POS_DIM), jnp.float32) * 0.1

    conv_ws, conv_bs = [], []
    for i, fs in enumerate(FILTER_SIZES):
        # nn.Conv2d weight (F, 1, fs, D) -> stored here as (fs, D, F)
        w = jax.random.normal(keys[3 + i], (fs, D, N_FILTERS), jnp.float32) * 0.05
        b = jax.random.normal(keys[7 + i], (1, N_FILTERS), jnp.float32) * 0.05
        conv_ws.append(w)
        conv_bs.append(b)

    # nn.Linear(4*F, label_num): weight (label_num, 4F) -> stored transposed
    w_lin = jax.random.normal(keys[11], (len(FILTER_SIZES) * N_FILTERS, LABEL_NUM),
                              jnp.float32) * 0.05
    b_lin = jax.random.normal(keys[12], (1, LABEL_NUM), jnp.float32) * 0.05

    # --- inputs --------------------------------------------------------------
    sentences = jax.random.randint(keys[13], (BATCH, MAX_LEN), 0, VOCAB, jnp.int32)
    pos1 = jax.random.randint(keys[14], (BATCH, MAX_LEN), 0, VOCAB, jnp.int32)
    pos2 = jax.random.randint(keys[15], (BATCH, MAX_LEN), 0, VOCAB, jnp.int32)

    # --- embedding lookup + concat (plain-JAX glue, matches torch.cat) -------
    x = jnp.concatenate(
        [embed_w[sentences], pos1_w[pos1], pos2_w[pos2]], axis=-1
    ).astype(jnp.float32)                            # (B, L, D)

    # --- run Pallas kernel ----------------------------------------------------
    out = textcnn_forward(x, conv_ws, conv_bs, w_lin, b_lin)
    out = jax.block_until_ready(out)

    ref = reference_forward(x, conv_ws, conv_bs, w_lin, b_lin)
    assert out.shape == (BATCH, LABEL_NUM)
    assert jnp.allclose(out, ref, atol=1e-2, rtol=1e-2), (out, ref)

    print("KERNEL_OK")
</pallas_src>

<mosaic_0001>
module attributes {stable_mosaic.version = 11 : i64} {
  func.func @textcnn_kernel(%arg0: i32, %arg1: i32, %arg2: memref<4x32x128xbf16, #tpu.memory_space<vmem>>, %arg3: memref<1x5x128x1024xbf16, #tpu.memory_space<vmem>>, %arg4: memref<1x1x2048xf32, #tpu.memory_space<vmem>>, %arg5: memref<2x2048xf32, #tpu.memory_space<vmem>>) attributes {dimension_semantics = [#tpu.dimension_semantics<parallel>, #tpu.dimension_semantics<arbitrary>], iteration_bounds = array<i64: 2, 1>, scalar_prefetch = 0 : i64, scratch_operands = 0 : i64, tpu.core_type = #tpu.core_type<tc>, window_params = [{transform_indices = @transform_0, window_bounds = array<i64: 4, 32, 128>}, {transform_indices = @transform_1, window_bounds = array<i64: 1, 5, 128, 1024>}, {transform_indices = @transform_2, window_bounds = array<i64: 1, 1, 2048>}, {transform_indices = @transform_3, window_bounds = array<i64: 2, 2048>}]} {
    %c0_i32 = arith.constant 0 : i32
    %0 = arith.cmpi eq, %arg0, %c0_i32 : i32
    %1 = arith.extui %0 : i1 to i32
    %c0_i32_0 = arith.constant 0 : i32
    %2 = arith.cmpi ne, %1, %c0_i32_0 : i32
    scf.if %2 {
      %c0 = arith.constant 0 : index
      %c0_2 = arith.constant 0 : index
      %c0_3 = arith.constant 0 : index
      %6 = vector.load %arg4[%c0, %c0_2, %c0_3] : memref<1x1x2048xf32, #tpu.memory_space<vmem>>, vector<1x1x1024xf32>
      %7 = vector.shape_cast %6 : vector<1x1x1024xf32> to vector<1x1024xf32>
      %c0_4 = arith.constant 0 : index
      %c0_5 = arith.constant 0 : index
      %c0_6 = arith.constant 0 : index
      %8 = vector.load %arg2[%c0_4, %c0_5, %c0_6] : memref<4x32x128xbf16, #tpu.memory_space<vmem>>, vector<1x32x128xbf16>
      %9 = vector.shape_cast %8 : vector<1x32x128xbf16> to vector<32x128xbf16>
      %c0_7 = arith.constant 0 : index
      %c0_8 = arith.constant 0 : index
      %c0_9 = arith.constant 0 : index
      %c0_10 = arith.constant 0 : index
      %10 = vector.load %arg3[%c0_7, %c0_8, %c0_9, %c0_10] : memref<1x5x128x1024xbf16, #tpu.memory_space<vmem>>, vector<1x1x128x1024xbf16>
      %11 = vector.shape_cast %10 : vector<1x1x128x1024xbf16> to vector<128x1024xbf16>
      %cst = arith.constant dense<0.000000e+00> : vector<32x1024xf32>
      %12 = tpu.matmul %9, %11, %cst {dimension_numbers = #tpu.dot_dimension_numbers<[1], [0], [0], [1], [0, 0, 1, 1], [], []>} : vector<32x128xbf16>, vector<128x1024xbf16>, vector<32x1024xf32> -> vector<32x1024xf32>
      %13 = vector.broadcast %7 : vector<1x1024xf32> to vector<32x1024xf32>
      %14 = arith.addf %12, %13 : vector<32x1024xf32>
      %cst_11 = arith.constant 0.000000e+00 : f32
      %15 = vector.broadcast %cst_11 : f32 to vector<32x1024xf32>
      %16 = arith.maximumf %14, %15 : vector<32x1024xf32>
      %17 = vector.shape_cast %16 : vector<32x1024xf32> to vector<2x16x1024xf32>
      %18 = tpu.iota {dimensions = array<i32: 1>} : vector<2x16x1024xi32>
      %c16_i32 = arith.constant 16 : i32
      %19 = vector.broadcast %c16_i32 : i32 to vector<2x16x1024xi32>
      %20 = arith.cmpi slt, %18, %19 : vector<2x16x1024xi32>
      %cst_12 = arith.constant 0.000000e+00 : f32
      %21 = vector.broadcast %cst_12 : f32 to vector<2x16x1024xf32>
      %22 = arith.select %20, %17, %21 : vector<2x16x1024xi1>, vector<2x16x1024xf32>
      %cst_13 = arith.constant dense<0xFF800000> : vector<2x1024xf32>
      %23 = vector.multi_reduction <maximumf>, %22, %cst_13 [1] : vector<2x16x1024xf32> to vector<2x1024xf32>
      %c0_14 = arith.constant 0 : index
      %c0_15 = arith.constant 0 : index
      %24 = vector.load %arg5[%c0_14, %c0_15] : memref<2x2048xf32, #tpu.memory_space<vmem>>, vector<2x1024xf32>
      tpu.vector_store %arg5[%c0_14, %c0_15], %23 {strides = array<i32>} : memref<2x2048xf32, #tpu.memory_space<vmem>>, vector<2x1024xf32>,
      %c0_16 = arith.constant 0 : index
      %c0_17 = arith.constant 0 : index
      %c1024 = arith.constant 1024 : index
      %25 = vector.load %arg4[%c0_16, %c0_17, %c1024] : memref<1x1x2048xf32, #tpu.memory_space<vmem>>, vector<1x1x1024xf32>
      %26 = vector.shape_cast %25 : vector<1x1x1024xf32> to vector<1x1024xf32>
      %c0_18 = arith.constant 0 : index
      %c0_19 = arith.constant 0 : index
      %c0_20 = arith.constant 0 : index
      %27 = vector.load %arg2[%c0_18, %c0_19, %c0_20] : memref<4x32x128xbf16, #tpu.memory_space<vmem>>, vector<1x32x128xbf16>
      %28 = vector.shape_cast %27 : vector<1x32x128xbf16> to vector<32x128xbf16>
      %c0_21 = arith.constant 0 : index
      %c1 = arith.constant 1 : index
      %c0_22 = arith.constant 0 : index
      %c0_23 = arith.constant 0 : index
      %29 = vector.load %arg3[%c0_21, %c1, %c0_22, %c0_23] : memref<1x5x128x1024xbf16, #tpu.memory_space<vmem>>, vector<1x1x128x1024xbf16>
      %30 = vector.shape_cast %29 : vector<1x1x128x1024xbf16> to vector<128x1024xbf16>
      %cst_24 = arith.constant dense<0.000000e+00> : vector<32x1024xf32>
      %31 = tpu.matmul %28, %30, %cst_24 {dimension_numbers = #tpu.dot_dimension_numbers<[1], [0], [0], [1], [0, 0, 1, 1], [], []>} : vector<32x128xbf16>, vector<128x1024xbf16>, vector<32x1024xf32> -> vector<32x1024xf32>
      %c1_25 = arith.constant 1 : index
      %c0_26 = arith.constant 0 : index
      %c0_27 = arith.constant 0 : index
      %32 = vector.load %arg2[%c1_25, %c0_26, %c0_27] : memref<4x32x128xbf16, #tpu.memory_space<vmem>>, vector<1x32x128xbf16>
      %33 = vector.shape_cast %32 : vector<1x32x128xbf16> to vector<32x128xbf16>
      %c0_28 = arith.constant 0 : index
      %c2 = arith.constant 2 : index
      %c0_29 = arith.constant 0 : index
      %c0_30 = arith.constant 0 : index
      %34 = vector.load %arg3[%c0_28, %c2, %c0_29, %c0_30] : memref<1x5x128x1024xbf16, #tpu.memory_space<vmem>>, vector<1x1x128x1024xbf16>
      %35 = vector.shape_cast %34 : vector<1x1x128x1024xbf16> to vector<128x1024xbf16>
      %cst_31 = arith.constant dense<0.000000e+00> : vector<32x1024xf32>
      %36 = tpu.matmul %33, %35, %cst_31 {dimension_numbers = #tpu.dot_dimension_numbers<[1], [0], [0], [1], [0, 0, 1, 1], [], []>} : vector<32x128xbf16>, vector<128x1024xbf16>, vector<32x1024xf32> -> vector<32x1024xf32>
      %37 = arith.addf %31, %36 : vector<32x1024xf32>
      %c2_32 = arith.constant 2 : index
      %c0_33 = arith.constant 0 : index
      %c0_34 = arith.constant 0 : index
      %38 = vector.load %arg2[%c2_32, %c0_33, %c0_34] : memref<4x32x128xbf16, #tpu.memory_space<vmem>>, vector<1x32x128xbf16>
      %39 = vector.shape_cast %38 : vector<1x32x128xbf16> to vector<32x128xbf16>
      %c0_35 = arith.constant 0 : index
      %c3 = arith.constant 3 : index
      %c0_36 = arith.constant 0 : index
      %c0_37 = arith.constant 0 : index
      %40 = vector.load %arg3[%c0_35, %c3, %c0_36, %c0_37] : memref<1x5x128x1024xbf16, #tpu.memory_space<vmem>>, vector<1x1x128x1024xbf16>
      %41 = vector.shape_cast %40 : vector<1x1x128x1024xbf16> to vector<128x1024xbf16>
      %cst_38 = arith.constant dense<0.000000e+00> : vector<32x1024xf32>
      %42 = tpu.matmul %39, %41, %cst_38 {dimension_numbers = #tpu.dot_dimension_numbers<[1], [0], [0], [1], [0, 0, 1, 1], [], []>} : vector<32x128xbf16>, vector<128x1024xbf16>, vector<32x1024xf32> -> vector<32x1024xf32>
      %43 = arith.addf %37, %42 : vector<32x1024xf32>
      %c3_39 = arith.constant 3 : index
      %c0_40 = arith.constant 0 : index
      %c0_41 = arith.constant 0 : index
      %44 = vector.load %arg2[%c3_39, %c0_40, %c0_41] : memref<4x32x128xbf16, #tpu.memory_space<vmem>>, vector<1x32x128xbf16>
      %45 = vector.shape_cast %44 : vector<1x32x128xbf16> to vector<32x128xbf16>
      %c0_42 = arith.constant 0 : index
      %c4 = arith.constant 4 : index
      %c0_43 = arith.constant 0 : index
      %c0_44 = arith.constant 0 : index
      %46 = vector.load %arg3[%c0_42, %c4, %c0_43, %c0_44] : memref<1x5x128x1024xbf16, #tpu.memory_space<vmem>>, vector<1x1x128x1024xbf16>
      %47 = vector.shape_cast %46 : vector<1x1x128x1024xbf16> to vector<128x1024xbf16>
      %cst_45 = arith.constant dense<0.000000e+00> : vector<32x1024xf32>
      %48 = tpu.matmul %45, %47, %cst_45 {dimension_numbers = #tpu.dot_dimension_numbers<[1], [0], [0], [1], [0, 0, 1, 1], [], []>} : vector<32x128xbf16>, vector<128x1024xbf16>, vector<32x1024xf32> -> vector<32x1024xf32>
      %49 = arith.addf %43, %48 : vector<32x1024xf32>
      %50 = vector.broadcast %26 : vector<1x1024xf32> to vector<32x1024xf32>
      %51 = arith.addf %49, %50 : vector<32x1024xf32>
      %cst_46 = arith.constant 0.000000e+00 : f32
      %52 = vector.broadcast %cst_46 : f32 to vector<32x1024xf32>
      %53 = arith.maximumf %51, %52 : vector<32x1024xf32>
      %54 = vector.shape_cast %53 : vector<32x1024xf32> to vector<2x16x1024xf32>
      %55 = tpu.iota {dimensions = array<i32: 1>} : vector<2x16x1024xi32>
      %c13_i32 = arith.constant 13 : i32
      %56 = vector.broadcast %c13_i32 : i32 to vector<2x16x1024xi32>
      %57 = arith.cmpi slt, %55, %56 : vector<2x16x1024xi32>
      %cst_47 = arith.constant 0.000000e+00 : f32
      %58 = vector.broadcast %cst_47 : f32 to vector<2x16x1024xf32>
      %59 = arith.select %57, %54, %58 : vector<2x16x1024xi1>, vector<2x16x1024xf32>
      %cst_48 = arith.constant dense<0xFF800000> : vector<2x1024xf32>
      %60 = vector.multi_reduction <maximumf>, %59, %cst_48 [1] : vector<2x16x1024xf32> to vector<2x1024xf32>
      %c0_49 = arith.constant 0 : index
      %c1024_50 = arith.constant 1024 : index
      %61 = vector.load %arg5[%c0_49, %c1024_50] : memref<2x2048xf32, #tpu.memory_space<vmem>>, vector<2x1024xf32>
      tpu.vector_store %arg5[%c0_49, %c1024_50], %60 {strides = array<i32>} : memref<2x2048xf32, #tpu.memory_space<vmem>>, vector<2x1024xf32>,
    } else {
    }
    %c1_i32 = arith.constant 1 : i32
    %3 = arith.cmpi eq, %arg0, %c1_i32 : i32
    %4 = arith.extui %3 : i1 to i32
    %c0_i32_1 = arith.constant 0 : i32
    %5 = arith.cmpi ne, %4, %c0_i32_1 : i32
    scf.if %5 {
      %c0 = arith.constant 0 : index
      %c0_2 = arith.constant 0 : index
      %c0_3 = arith.constant 0 : index
      %6 = vector.load %arg4[%c0, %c0_2, %c0_3] : memref<1x1x2048xf32, #tpu.memory_space<vmem>>, vector<1x1x1024xf32>
      %7 = vector.shape_cast %6 : vector<1x1x1024xf32> to vector<1x1024xf32>
      %c0_4 = arith.constant 0 : index
      %c0_5 = arith.constant 0 : index
      %c0_6 = arith.constant 0 : index
      %8 = vector.load %arg2[%c0_4, %c0_5, %c0_6] : memref<4x32x128xbf16, #tpu.memory_space<vmem>>, vector<1x32x128xbf16>
      %9 = vector.shape_cast %8 : vector<1x32x128xbf16> to vector<32x128xbf16>
      %c0_7 = arith.constant 0 : index
      %c0_8 = arith.constant 0 : index
      %c0_9 = arith.constant 0 : index
      %c0_10 = arith.constant 0 : index
      %10 = vector.load %arg3[%c0_7, %c0_8, %c0_9, %c0_10] : memref<1x5x128x1024xbf16, #tpu.memory_space<vmem>>, vector<1x1x128x1024xbf16>
      %11 = vector.shape_cast %10 : vector<1x1x128x1024xbf16> to vector<128x1024xbf16>
      %cst = arith.constant dense<0.000000e+00> : vector<32x1024xf32>
      %12 = tpu.matmul %9, %11, %cst {dimension_numbers = #tpu.dot_dimension_numbers<[1], [0], [0], [1], [0, 0, 1, 1], [], []>} : vector<32x128xbf16>, vector<128x1024xbf16>, vector<32x1024xf32> -> vector<32x1024xf32>
      %c1 = arith.constant 1 : index
      %c0_11 = arith.constant 0 : index
      %c0_12 = arith.constant 0 : index
      %13 = vector.load %arg2[%c1, %c0_11, %c0_12] : memref<4x32x128xbf16, #tpu.memory_space<vmem>>, vector<1x32x128xbf16>
      %14 = vector.shape_cast %13 : vector<1x32x128xbf16> to vector<32x128xbf16>
      %c0_13 = arith.constant 0 : index
      %c1_14 = arith.constant 1 : index
      %c0_15 = arith.constant 0 : index
      %c0_16 = arith.constant 0 : index
      %15 = vector.load %arg3[%c0_13, %c1_14, %c0_15, %c0_16] : memref<1x5x128x1024xbf16, #tpu.memory_space<vmem>>, vector<1x1x128x1024xbf16>
      %16 = vector.shape_cast %15 : vector<1x1x128x1024xbf16> to vector<128x1024xbf16>
      %cst_17 = arith.constant dense<0.000000e+00> : vector<32x1024xf32>
      %17 = tpu.matmul %14, %16, %cst_17 {dimension_numbers = #tpu.dot_dimension_numbers<[1], [0], [0], [1], [0, 0, 1, 1], [], []>} : vector<32x128xbf16>, vector<128x1024xbf16>, vector<32x1024xf32> -> vector<32x1024xf32>
      %18 = arith.addf %12, %17 : vector<32x1024xf32>
      %19 = vector.broadcast %7 : vector<1x1024xf32> to vector<32x1024xf32>
      %20 = arith.addf %18, %19 : vector<32x1024xf32>
      %cst_18 = arith.constant 0.000000e+00 : f32
      %21 = vector.broadcast %cst_18 : f32 to vector<32x1024xf32>
      %22 = arith.maximumf %20, %21 : vector<32x1024xf32>
      %23 = vector.shape_cast %22 : vector<32x1024xf32> to vector<2x16x1024xf32>
      %24 = tpu.iota {dimensions = array<i32: 1>} : vector<2x16x1024xi32>
      %c15_i32 = arith.constant 15 : i32
      %25 = vector.broadcast %c15_i32 : i32 to vector<2x16x1024xi32>
      %26 = arith.cmpi slt, %24, %25 : vector<2x16x1024xi32>
      %cst_19 = arith.constant 0.000000e+00 : f32
      %27 = vector.broadcast %cst_19 : f32 to vector<2x16x1024xf32>
      %28 = arith.select %26, %23, %27 : vector<2x16x1024xi1>, vector<2x16x1024xf32>
      %cst_20 = arith.constant dense<0xFF800000> : vector<2x1024xf32>
      %29 = vector.multi_reduction <maximumf>, %28, %cst_20 [1] : vector<2x16x1024xf32> to vector<2x1024xf32>
      %c0_21 = arith.constant 0 : index
      %c0_22 = arith.constant 0 : index
      %30 = vector.load %arg5[%c0_21, %c0_22] : memref<2x2048xf32, #tpu.memory_space<vmem>>, vector<2x1024xf32>
      tpu.vector_store %arg5[%c0_21, %c0_22], %29 {strides = array<i32>} : memref<2x2048xf32, #tpu.memory_space<vmem>>, vector<2x1024xf32>,
      %c0_23 = arith.constant 0 : index
      %c0_24 = arith.constant 0 : index
      %c1024 = arith.constant 1024 : index
      %31 = vector.load %arg4[%c0_23, %c0_24, %c1024] : memref<1x1x2048xf32, #tpu.memory_space<vmem>>, vector<1x1x1024xf32>
      %32 = vector.shape_cast %31 : vector<1x1x1024xf32> to vector<1x1024xf32>
      %c0_25 = arith.constant 0 : index
      %c0_26 = arith.constant 0 : index
      %c0_27 = arith.constant 0 : index
      %33 = vector.load %arg2[%c0_25, %c0_26, %c0_27] : memref<4x32x128xbf16, #tpu.memory_space<vmem>>, vector<1x32x128xbf16>
      %34 = vector.shape_cast %33 : vector<1x32x128xbf16> to vector<32x128xbf16>
      %c0_28 = arith.constant 0 : index
      %c2 = arith.constant 2 : index
      %c0_29 = arith.constant 0 : index
      %c0_30 = arith.constant 0 : index
      %35 = vector.load %arg3[%c0_28, %c2, %c0_29, %c0_30] : memref<1x5x128x1024xbf16, #tpu.memory_space<vmem>>, vector<1x1x128x1024xbf16>
      %36 = vector.shape_cast %35 : vector<1x1x128x1024xbf16> to vector<128x1024xbf16>
      %cst_31 = arith.constant dense<0.000000e+00> : vector<32x1024xf32>
      %37 = tpu.matmul %34, %36, %cst_31 {dimension_numbers = #tpu.dot_dimension_numbers<[1], [0], [0], [1], [0, 0, 1, 1], [], []>} : vector<32x128xbf16>, vector<128x1024xbf16>, vector<32x1024xf32> -> vector<32x1024xf32>
      %c1_32 = arith.constant 1 : index
      %c0_33 = arith.constant 0 : index
      %c0_34 = arith.constant 0 : index
      %38 = vector.load %arg2[%c1_32, %c0_33, %c0_34] : memref<4x32x128xbf16, #tpu.memory_space<vmem>>, vector<1x32x128xbf16>
      %39 = vector.shape_cast %38 : vector<1x32x128xbf16> to vector<32x128xbf16>
      %c0_35 = arith.constant 0 : index
      %c3 = arith.constant 3 : index
      %c0_36 = arith.constant 0 : index
      %c0_37 = arith.constant 0 : index
      %40 = vector.load %arg3[%c0_35, %c3, %c0_36, %c0_37] : memref<1x5x128x1024xbf16, #tpu.memory_space<vmem>>, vector<1x1x128x1024xbf16>
      %41 = vector.shape_cast %40 : vector<1x1x128x1024xbf16> to vector<128x1024xbf16>
      %cst_38 = arith.constant dense<0.000000e+00> : vector<32x1024xf32>
      %42 = tpu.matmul %39, %41, %cst_38 {dimension_numbers = #tpu.dot_dimension_numbers<[1], [0], [0], [1], [0, 0, 1, 1], [], []>} : vector<32x128xbf16>, vector<128x1024xbf16>, vector<32x1024xf32> -> vector<32x1024xf32>
      %43 = arith.addf %37, %42 : vector<32x1024xf32>
      %c2_39 = arith.constant 2 : index
      %c0_40 = arith.constant 0 : index
      %c0_41 = arith.constant 0 : index
      %44 = vector.load %arg2[%c2_39, %c0_40, %c0_41] : memref<4x32x128xbf16, #tpu.memory_space<vmem>>, vector<1x32x128xbf16>
      %45 = vector.shape_cast %44 : vector<1x32x128xbf16> to vector<32x128xbf16>
      %c0_42 = arith.constant 0 : index
      %c4 = arith.constant 4 : index
      %c0_43 = arith.constant 0 : index
      %c0_44 = arith.constant 0 : index
      %46 = vector.load %arg3[%c0_42, %c4, %c0_43, %c0_44] : memref<1x5x128x1024xbf16, #tpu.memory_space<vmem>>, vector<1x1x128x1024xbf16>
      %47 = vector.shape_cast %46 : vector<1x1x128x1024xbf16> to vector<128x1024xbf16>
      %cst_45 = arith.constant dense<0.000000e+00> : vector<32x1024xf32>
      %48 = tpu.matmul %45, %47, %cst_45 {dimension_numbers = #tpu.dot_dimension_numbers<[1], [0], [0], [1], [0, 0, 1, 1], [], []>} : vector<32x128xbf16>, vector<128x1024xbf16>, vector<32x1024xf32> -> vector<32x1024xf32>
      %49 = arith.addf %43, %48 : vector<32x1024xf32>
      %50 = vector.broadcast %32 : vector<1x1024xf32> to vector<32x1024xf32>
      %51 = arith.addf %49, %50 : vector<32x1024xf32>
      %cst_46 = arith.constant 0.000000e+00 : f32
      %52 = vector.broadcast %cst_46 : f32 to vector<32x1024xf32>
      %53 = arith.maximumf %51, %52 : vector<32x1024xf32>
      %54 = vector.shape_cast %53 : vector<32x1024xf32> to vector<2x16x1024xf32>
      %55 = tpu.iota {dimensions = array<i32: 1>} : vector<2x16x1024xi32>
      %c14_i32 = arith.constant 14 : i32
      %56 = vector.broadcast %c14_i32 : i32 to vector<2x16x1024xi32>
      %57 = arith.cmpi slt, %55, %56 : vector<2x16x1024xi32>
      %cst_47 = arith.constant 0.000000e+00 : f32
      %58 = vector.broadcast %cst_47 : f32 to vector<2x16x1024xf32>
      %59 = arith.select %57, %54, %58 : vector<2x16x1024xi1>, vector<2x16x1024xf32>
      %cst_48 = arith.constant dense<0xFF800000> : vector<2x1024xf32>
      %60 = vector.multi_reduction <maximumf>, %59, %cst_48 [1] : vector<2x16x1024xf32> to vector<2x1024xf32>
      %c0_49 = arith.constant 0 : index
      %c1024_50 = arith.constant 1024 : index
      %61 = vector.load %arg5[%c0_49, %c1024_50] : memref<2x2048xf32, #tpu.memory_space<vmem>>, vector<2x1024xf32>
      tpu.vector_store %arg5[%c0_49, %c1024_50], %60 {strides = array<i32>} : memref<2x2048xf32, #tpu.memory_space<vmem>>, vector<2x1024xf32>,
    } else {
    }
    return
  }
  func.func @transform_0(%arg0: i32, %arg1: i32) -> (i32, i32, i32) {
    %c0_i32 = arith.constant 0 : i32
    %c0_i32_0 = arith.constant 0 : i32
    %c0_i32_1 = arith.constant 0 : i32
    return %c0_i32, %arg1, %c0_i32_0 : i32, i32, i32
  }
  func.func @transform_1(%arg0: i32, %arg1: i32) -> (i32, i32, i32, i32) {
    %c0_i32 = arith.constant 0 : i32
    %c0_i32_0 = arith.constant 0 : i32
    %c0_i32_1 = arith.constant 0 : i32
    %c0_i32_2 = arith.constant 0 : i32
    return %arg0, %c0_i32, %c0_i32_0, %c0_i32_1 : i32, i32, i32, i32
  }
  func.func @transform_2(%arg0: i32, %arg1: i32) -> (i32, i32, i32) {
    %c0_i32 = arith.constant 0 : i32
    %c0_i32_0 = arith.constant 0 : i32
    %c0_i32_1 = arith.constant 0 : i32
    return %arg0, %c0_i32, %c0_i32_0 : i32, i32, i32
  }
  func.func @transform_3(%arg0: i32, %arg1: i32) -> (i32, i32) {
    %c0_i32 = arith.constant 0 : i32
    return %arg1, %arg0 : i32, i32
  }
}

</mosaic_0001>

<llo_original>
// kernel: tpu_custom_call.1
$region0: #{tpu_custom_call.1}
  #allocation0 [shape = 'u32[]', space=smem, size = 0x4, offset = 0x4, fixed_abs, tag = 'smem constant byte address 0x4 - core index']
  #allocation1 [shape = 'u32[144,128]{1,0:T(1,128)}', space=vmem, size = 0x12000, scoped, tag = 'internal scratch']
  %s0 = inlined_call_operand.hbm [shape: bf16[4,32,128], index: 0, kind: input, shape index: {}]
  %s1 = inlined_call_operand.hbm [shape: bf16[2,5,128,1024], index: 1, kind: input, shape index: {}]
  %s2 = inlined_call_operand.hbm [shape: f32[2,1,2048], index: 2, kind: input, shape index: {}]
  %s3 = inlined_call_operand.hbm [shape: f32[2,4096], index: 3, kind: output, shape index: {}]
  %s4 = sld [smem:[#allocation0]]
  $region65: #{tpu_custom_call.1} parent=0
    _
  %s6 = ssub.s32 1, %s4
  %s7 = scalar_select 0, %s6, %s4
  $region1: #{tpu_custom_call.1} parent=0
    #allocation2 [shape = 'u8[32768]{0}', space=vmem, size = 0x8000, scoped, tag = 'input window, operand 0, single buffered']
    #allocation3 [shape = 's32[2]{0}', space=sflag, size = 0x8, scoped, tag = 'scoped memory for tpu_custom_call.1']
    #allocation4 [shape = 's32[2]{0}', space=sflag, size = 0x8, scoped, tag = 'scoped memory for tpu_custom_call.1']
    #allocation5 [shape = 'u8[2621440]{0}', space=vmem, size = 0x280000, scoped, tag = 'input window, operand 1']
    #allocation6 [shape = 's32[2]{0}', space=sflag, size = 0x8, scoped, tag = 'scoped memory for tpu_custom_call.1']
    #allocation7 [shape = 'u8[16384]{0}', space=vmem, size = 0x4000, scoped, tag = 'input window, operand 2']
    #allocation8 [shape = 'u8[32768]{0}', space=vmem, size = 0x8000, scoped, tag = 'output window, operand 0']
    %8 = vsyncpa [#allocation3], 0
    %9 = vsyncpa [#allocation6], 0
    %s10 = scalar_lea.sflag [#allocation6], 1
    %11 = vsyncpa %s10, 0
    %12 = vsyncpa [#allocation4], 0
    %s13 = scalar_lea.sflag [#allocation4], 1
    %14 = vsyncpa %s13, 0
    loop: start=0, step=1, limit=4
    $region2: #{tpu_custom_call.1} parent=1 // loop_pre_header
      _
    $region3: #{tpu_custom_call.1} parent=1 // loop_header
      %s16 = sphi 0, %s20
      %p17 = scmp.ge.s32.totalorder %s16, 4
      %s23 = sphi 0, %s35
      %s24 = sphi 0, %s31
      %s25 = sphi 0, %s23
      %s26 = sphi 0, %s24
      %s27 = sphi 0, %s25
      %s28 = sphi 0, %s26
      %s38 = sphi 0, %s40
      %s41 = sphi 0, %s38
      %s42 = sphi 0, %s41
      %s58 = sphi 0, %s42
      %s64 = sphi 0, %s66
      %s67 = sphi 0, %s64
      %s68 = sphi 0, %s67
      %s84 = sphi 0, %s68
      %s90 = sphi 0, %s92
      %s93 = sphi 0, %s90
      %s94 = sphi 0, %s93
      %s110 = sphi 0, %s94
      %s118 = sphi 0, %s120
      %s121 = sphi 0, %s118
      %s122 = sphi 0, %s121
      %s138 = sphi 0, %s122
    $region4: #{tpu_custom_call.1} parent=1 // loop_header_branch
      %19 = sbr.rel (%p17) target = $region8
    $region5: #{tpu_custom_call.1} parent=1 // loop_body
      %s21 = ssub.s32 %s16, 1
      %s22 = ssub.s32 %s16, 2
      %s29 = sadd.s32 1, %s24
      %p30 = scmp.ge.s32.totalorder %s29, 1
      %s31 = scalar_select %p30, 0, %s29
      %s32 = sadd.s32 1, %s23
      %s33 = scalar_select %p30, %s32, %s23
      %p34 = scmp.ge.s32.totalorder %s33, 2
      %s35 = scalar_select %p34, 0, %s33
      %s36 = ssub.s32 %s24, %s31
      %p37 = scmp.eq.s32.totalorder %s36, 0
      %s39 = sadd.s32 %s38, 1
      %s40 = scalar_select %p37, %s38, %s39
      %p43 = pneg %p37
      %p44 = scmp.eq.s32.totalorder %s16, 1
      %p45 = por %p43, %p44
      %p46 = scmp.ne.s32.totalorder %s38, %s41
      %p47 = scmp.eq.s32.totalorder %s16, 0
      %p48 = por %p46, %p47
      %p49 = scmp.ne.s32.totalorder %s38, %s41
      %p50 = scmp.eq.s32.totalorder %s21, 1
      %p51 = por %p49, %p50
      %p52 = scmp.ne.s32.totalorder %s41, %s42
      %p53 = scmp.eq.s32.totalorder %s21, 0
      %p54 = por %p52, %p53
      %p55 = scmp.ne.s32.totalorder %s41, %s42
      %p56 = scmp.eq.s32.totalorder %s22, 1
      %p57 = por %p55, %p56
      %p59 = scmp.ne.s32.totalorder %s42, %s58
      %p60 = scmp.eq.s32.totalorder %s22, 0
      %p61 = por %p59, %p60
      %s62 = ssub.s32 %s23, %s35
      %p63 = scmp.eq.s32.totalorder %s62, 0
      %s65 = sadd.s32 %s64, 1
      %s66 = scalar_select %p63, %s64, %s65
      %p69 = pneg %p63
      %p70 = scmp.eq.s32.totalorder %s16, 1
      %p71 = por %p69, %p70
      %p72 = scmp.ne.s32.totalorder %s64, %s67
      %p73 = scmp.eq.s32.totalorder %s16, 0
      %p74 = por %p72, %p73
      %p75 = scmp.ne.s32.totalorder %s64, %s67
      %p76 = scmp.eq.s32.totalorder %s21, 1
      %p77 = por %p75, %p76
      %p78 = scmp.ne.s32.totalorder %s67, %s68
      %p79 = scmp.eq.s32.totalorder %s21, 0
      %p80 = por %p78, %p79
      %p81 = scmp.ne.s32.totalorder %s67, %s68
      %p82 = scmp.eq.s32.totalorder %s22, 1
      %p83 = por %p81, %p82
      %p85 = scmp.ne.s32.totalorder %s68, %s84
      %p86 = scmp.eq.s32.totalorder %s22, 0
      %p87 = por %p85, %p86
      %s88 = ssub.s32 %s23, %s35
      %p89 = scmp.eq.s32.totalorder %s88, 0
      %s91 = sadd.s32 %s90, 1
      %s92 = scalar_select %p89, %s90, %s91
      %p95 = pneg %p89
      %p96 = scmp.eq.s32.totalorder %s16, 1
      %p97 = por %p95, %p96
      %p98 = scmp.ne.s32.totalorder %s90, %s93
      %p99 = scmp.eq.s32.totalorder %s16, 0
      %p100 = por %p98, %p99
      %p101 = scmp.ne.s32.totalorder %s90, %s93
      %p102 = scmp.eq.s32.totalorder %s21, 1
      %p103 = por %p101, %p102
      %p104 = scmp.ne.s32.totalorder %s93, %s94
      %p105 = scmp.eq.s32.totalorder %s21, 0
      %p106 = por %p104, %p105
      %p107 = scmp.ne.s32.totalorder %s93, %s94
      %p108 = scmp.eq.s32.totalorder %s22, 1
      %p109 = por %p107, %p108
      %p111 = scmp.ne.s32.totalorder %s94, %s110
      %p112 = scmp.eq.s32.totalorder %s22, 0
      %p113 = por %p111, %p112
      %s114 = ssub.s32 %s24, %s31
      %s115 = ssub.s32 %s23, %s35
      %s116 = sor.u32 %s114, %s115
      %p117 = scmp.eq.s32.totalorder %s116, 0
      %s119 = sadd.s32 %s118, 1
      %s120 = scalar_select %p117, %s118, %s119
      %p123 = pneg %p117
      %p124 = scmp.eq.s32.totalorder %s16, 1
      %p125 = por %p123, %p124
      %p126 = scmp.ne.s32.totalorder %s118, %s121
      %p127 = scmp.eq.s32.totalorder %s16, 0
      %p128 = por %p126, %p127
      %p129 = scmp.ne.s32.totalorder %s118, %s121
      %p130 = scmp.eq.s32.totalorder %s21, 1
      %p131 = por %p129, %p130
      %p132 = scmp.ne.s32.totalorder %s121, %s122
      %p133 = scmp.eq.s32.totalorder %s21, 0
      %p134 = por %p132, %p133
      %p135 = scmp.ne.s32.totalorder %s121, %s122
      %p136 = scmp.eq.s32.totalorder %s22, 1
      %p137 = por %p135, %p136
      %p139 = scmp.ne.s32.totalorder %s122, %s138
      %p140 = scmp.eq.s32.totalorder %s22, 0
      %p141 = por %p139, %p140
      %p142 = scmp.le.s32.totalorder 1, %s16
      %p143 = scmp.lt.s32.totalorder %s16, 3
      %p144 = pnand %p142, %p143
      %p145 = pneg %p144
      // Predicated region
      $region9: #{tpu_custom_call.1} parent=5 // pred_check
        _
      $region10: #{tpu_custom_call.1} parent=5 // pred_check_branch
        %147 = sbr.rel (%p144) target = $region12
      $region11: #{tpu_custom_call.1} parent=5 // pred_region
        %s148 = ssub.s32 %s16, 1
        // Predicated region
        $region13: #{tpu_custom_call.1} parent=11 // pred_check
          %p149 = pneg %p54
        $region14: #{tpu_custom_call.1} parent=11 // pred_check_branch
          %151 = sbr.rel (%p149) target = $region16
        $region15: #{tpu_custom_call.1} parent=11 // pred_region
          %s152 = smul.u32 4, %s26
          %s154 = ssub.s32 1024, 1024
          %155 = vsyncadd [#allocation3], %s154
          %s156 = smul.addr %s152, 64
          %s157 = scalar_lea.hbm %s0, %s156
          %s158 = sshll.u32 [#allocation2], 4
          %s159 = int_to_ptr.vmem [resolvable:$true] %s158
          %164 = dma.hbm_to_vmem [thread:$0]  %s157, 1024, %s159, [#allocation3], 64, 64, 4
        $region16: #{tpu_custom_call.1} parent=11 // pred_fallthru
          _
      $region12: #{tpu_custom_call.1} parent=5 // pred_fallthru
        _
      %p165 = scmp.lt.s32.totalorder %s16, 2
      // Predicated region
      $region17: #{tpu_custom_call.1} parent=5 // pred_check
        %p166 = pneg %p165
      $region18: #{tpu_custom_call.1} parent=5 // pred_check_branch
        %168 = sbr.rel (%p166) target = $region20
      $region19: #{tpu_custom_call.1} parent=5 // pred_region
        // Predicated region
        $region21: #{tpu_custom_call.1} parent=19 // pred_check
          %p169 = pneg %p74
        $region22: #{tpu_custom_call.1} parent=19 // pred_check_branch
          %171 = sbr.rel (%p169) target = $region24
        $region23: #{tpu_custom_call.1} parent=19 // pred_region
          %s172 = sand.u32 %s16, 1
          %s173 = scalar_lea.sflag [#allocation6], %s172
          %s174 = sand.u32 %s64, 1
          %s175 = smul.addr %s174, 2560
          %s176 = scalar_lea.vmem [#allocation5], %s175
          %s178 = ssub.s32 40960, 40960
          %179 = vsyncadd %s173, %s178
          %s180 = smul.addr %s23, 640
          %s181 = smul.addr %s180, 64
          %s182 = scalar_lea.hbm %s1, %s181
          %s183 = sshll.u32 %s176, 4
          %s184 = int_to_ptr.vmem [resolvable:$true] %s183
          %189 = dma.hbm_to_vmem [thread:$0]  %s182, 40960, %s184, %s173, 512, 512, 32
        $region24: #{tpu_custom_call.1} parent=19 // pred_fallthru
          _
        // Predicated region
        $region25: #{tpu_custom_call.1} parent=19 // pred_check
          %p190 = pneg %p100
        $region26: #{tpu_custom_call.1} parent=19 // pred_check_branch
          %192 = sbr.rel (%p190) target = $region28
        $region27: #{tpu_custom_call.1} parent=19 // pred_region
          %s193 = sand.u32 %s16, 1
          %s194 = scalar_lea.sflag [#allocation6], %s193
          %s195 = sand.u32 %s90, 1
          %s196 = smul.addr %s195, 16
          %s197 = scalar_lea.vmem [#allocation7], %s196
          %s199 = ssub.s32 256, 256
          %200 = vsyncadd %s194, %s199
          %s201 = smul.addr %s23, 16
          %s202 = smul.addr %s201, 16
          %s203 = scalar_lea.hbm %s2, %s202
          %s205 = sshll.u32 %s197, 4
          %s206 = int_to_ptr.vmem [resolvable:$true] %s205
          %208 = dma.hbm_to_vmem [thread:$0]  %s203, 256, %s206, %s194
        $region28: #{tpu_custom_call.1} parent=19 // pred_fallthru
          _
      $region20: #{tpu_custom_call.1} parent=5 // pred_fallthru
        _
      %p209 = scmp.le.s32.totalorder 1, %s16
      %p210 = scmp.lt.s32.totalorder %s16, 3
      %p211 = pnand %p209, %p210
      %p212 = pneg %p211
      // Predicated region
      $region29: #{tpu_custom_call.1} parent=5 // pred_check
        _
      $region30: #{tpu_custom_call.1} parent=5 // pred_check_branch
        %214 = sbr.rel (%p211) target = $region32
      $region31: #{tpu_custom_call.1} parent=5 // pred_region
        %s215 = ssub.s32 %s16, 1
        // Predicated region
        $region33: #{tpu_custom_call.1} parent=31 // pred_check
          %p216 = pneg %p54
        $region34: #{tpu_custom_call.1} parent=31 // pred_check_branch
          %218 = sbr.rel (%p216) target = $region36
        $region35: #{tpu_custom_call.1} parent=31 // pred_region
          %219 = dma.done [#allocation3], 1024
        $region36: #{tpu_custom_call.1} parent=31 // pred_fallthru
          _
        %s220 = sand.u32 %s21, 1
        %s221 = scalar_lea.sflag [#allocation6], %s220
        %s222 = sand.u32 %s67, 1
        %s223 = smul.addr %s222, 2560
        %s224 = scalar_lea.vmem [#allocation5], %s223
        // Predicated region
        $region37: #{tpu_custom_call.1} parent=31 // pred_check
          %p225 = pneg %p80
        $region38: #{tpu_custom_call.1} parent=31 // pred_check_branch
          %227 = sbr.rel (%p225) target = $region40
        $region39: #{tpu_custom_call.1} parent=31 // pred_region
          %228 = dma.done %s221, 40960
        $region40: #{tpu_custom_call.1} parent=31 // pred_fallthru
          _
        %s229 = sand.u32 %s21, 1
        %s230 = scalar_lea.sflag [#allocation6], %s229
        %s231 = sand.u32 %s93, 1
        %s232 = smul.addr %s231, 16
        %s233 = scalar_lea.vmem [#allocation7], %s232
        // Predicated region
        $region41: #{tpu_custom_call.1} parent=31 // pred_check
          %p234 = pneg %p106
        $region42: #{tpu_custom_call.1} parent=31 // pred_check_branch
          %236 = sbr.rel (%p234) target = $region44
        $region43: #{tpu_custom_call.1} parent=31 // pred_region
          %237 = dma.done %s230, 256
        $region44: #{tpu_custom_call.1} parent=31 // pred_fallthru
          _
        %p238 = pneg %p54
        %p239 = pneg %p51
        %s240 = sand.u32 %s21, 1
        %s241 = scalar_lea.sflag [#allocation6], %s240
        %s242 = sand.u32 %s67, 1
        %s243 = smul.addr %s242, 2560
        %s244 = scalar_lea.vmem [#allocation5], %s243
        %p245 = pneg %p80
        %p246 = pneg %p77
        %s247 = sand.u32 %s21, 1
        %s248 = scalar_lea.sflag [#allocation6], %s247
        %s249 = sand.u32 %s93, 1
        %s250 = smul.addr %s249, 16
        %s251 = scalar_lea.vmem [#allocation7], %s250
        %p252 = pneg %p106
        %p253 = pneg %p103
        %p254 = pneg %p134
        %p255 = pneg %p131
        %s256 = sand.u32 %s121, 1
        %s257 = scalar_lea.sflag [#allocation4], %s256
        %s258 = sand.u32 %s121, 1
        %s259 = smul.addr %s258, 32
        %s260 = scalar_lea.vmem [#allocation8], %s259
        %s261 = smul.u32 4, %s26
        %s262 = smul.u32 16, %s25
        %p264 = scmp.eq.s32.totalorder %s25, 0
        // Predicated region
        $region45: #{tpu_custom_call.1} parent=31 // pred_check
          %p265 = pneg %p264
        $region46: #{tpu_custom_call.1} parent=31 // pred_check_branch
          %267 = sbr.rel (%p265) target = $region48
        $region47: #{tpu_custom_call.1} parent=31 // pred_region
          %v268 = vld [vmem:[%s233] sm:$0xff]
          %v269 = vld [vmem:[#allocation2] sm:$0xf]
          %v270 = vld [vmem:[#allocation2 + $0x4] sm:$0xf]
          %v271 = vld [vmem:[#allocation2 + $0x8] sm:$0xf]
          %v272 = vld [vmem:[#allocation2 + $0xc] sm:$0xf]
          %v273 = vld [vmem:[%s224] sm:$0xff]
          %v274 = vld [vmem:[%s224 + $0x8] sm:$0xff]
          %v275 = vld [vmem:[%s224 + $0x10] sm:$0xff]
          %v276 = vld [vmem:[%s224 + $0x18] sm:$0xff]
          %v277 = vld [vmem:[%s224 + $0x20] sm:$0xff]
          %v278 = vld [vmem:[%s224 + $0x28] sm:$0xff]
          %v279 = vld [vmem:[%s224 + $0x30] sm:$0xff]
          %v280 = vld [vmem:[%s224 + $0x38] sm:$0xff]
          %v281 = vld [vmem:[%s224 + $0x40] sm:$0xff]
          %v282 = vld [vmem:[%s224 + $0x48] sm:$0xff]
          %v283 = vld [vmem:[%s224 + $0x50] sm:$0xff]
          %v284 = vld [vmem:[%s224 + $0x58] sm:$0xff]
          %v285 = vld [vmem:[%s224 + $0x60] sm:$0xff]
          %v286 = vld [vmem:[%s224 + $0x68] sm:$0xff]
          %v287 = vld [vmem:[%s224 + $0x70] sm:$0xff]
          %v288 = vld [vmem:[%s224 + $0x78] sm:$0xff]
          %v289 = vld [vmem:[%s224 + $0x80] sm:$0xff]
          %v290 = vld [vmem:[%s224 + $0x88] sm:$0xff]
          %v291 = vld [vmem:[%s224 + $0x90] sm:$0xff]
          %v292 = vld [vmem:[%s224 + $0x98] sm:$0xff]
          %v293 = vld [vmem:[%s224 + $0xa0] sm:$0xff]
          %v294 = vld [vmem:[%s224 + $0xa8] sm:$0xff]
          %v295 = vld [vmem:[%s224 + $0xb0] sm:$0xff]
          %v296 = vld [vmem:[%s224 + $0xb8] sm:$0xff]
          %v297 = vld [vmem:[%s224 + $0xc0] sm:$0xff]
          %v298 = vld [vmem:[%s224 + $0xc8] sm:$0xff]
          %v299 = vld [vmem:[%s224 + $0xd0] sm:$0xff]
          %v300 = vld [vmem:[%s224 + $0xd8] sm:$0xff]
          %v301 = vld [vmem:[%s224 + $0xe0] sm:$0xff]
          %v302 = vld [vmem:[%s224 + $0xe8] sm:$0xff]
          %v303 = vld [vmem:[%s224 + $0xf0] sm:$0xff]
          %v304 = vld [vmem:[%s224 + $0xf8] sm:$0xff]
          %v305 = vld [vmem:[%s224 + $0x100] sm:$0xff]
          %v306 = vld [vmem:[%s224 + $0x108] sm:$0xff]
          %v307 = vld [vmem:[%s224 + $0x110] sm:$0xff]
          %v308 = vld [vmem:[%s224 + $0x118] sm:$0xff]
          %v309 = vld [vmem:[%s224 + $0x120] sm:$0xff]
          %v310 = vld [vmem:[%s224 + $0x128] sm:$0xff]
          %v311 = vld [vmem:[%s224 + $0x130] sm:$0xff]
          %v312 = vld [vmem:[%s224 + $0x138] sm:$0xff]
          %v313 = vld [vmem:[%s224 + $0x140] sm:$0xff]
          %v314 = vld [vmem:[%s224 + $0x148] sm:$0xff]
          %v315 = vld [vmem:[%s224 + $0x150] sm:$0xff]
          %v316 = vld [vmem:[%s224 + $0x158] sm:$0xff]
          %v317 = vld [vmem:[%s224 + $0x160] sm:$0xff]
          %v318 = vld [vmem:[%s224 + $0x168] sm:$0xff]
          %v319 = vld [vmem:[%s224 + $0x170] sm:$0xff]
          %v320 = vld [vmem:[%s224 + $0x178] sm:$0xff]
          %v321 = vld [vmem:[%s224 + $0x180] sm:$0xff]
          %v322 = vld [vmem:[%s224 + $0x188] sm:$0xff]
          %v323 = vld [vmem:[%s224 + $0x190] sm:$0xff]
          %v324 = vld [vmem:[%s224 + $0x198] sm:$0xff]
          %v325 = vld [vmem:[%s224 + $0x1a0] sm:$0xff]
          %v326 = vld [vmem:[%s224 + $0x1a8] sm:$0xff]
          %v327 = vld [vmem:[%s224 + $0x1b0] sm:$0xff]
          %v328 = vld [vmem:[%s224 + $0x1b8] sm:$0xff]
          %v329 = vld [vmem:[%s224 + $0x1c0] sm:$0xff]
          %v330 = vld [vmem:[%s224 + $0x1c8] sm:$0xff]
          %v331 = vld [vmem:[%s224 + $0x1d0] sm:$0xff]
          %v332 = vld [vmem:[%s224 + $0x1d8] sm:$0xff]
          %v333 = vld [vmem:[%s224 + $0x1e0] sm:$0xff]
          %v334 = vld [vmem:[%s224 + $0x1e8] sm:$0xff]
          %v335 = vld [vmem:[%s224 + $0x1f0] sm:$0xff]
          %v336 = vld [vmem:[%s224 + $0x1f8] sm:$0xff]
          %v338 = vlaneseq
          %v339 = vshrl.u32 %v338, 7
          %v340 = vsub.s32 0, %v339
          %v341 = vrot.slane %v268, %v340
          %v342 = vlaneseq
          %v343 = vshrl.u32 %v342, 7
          %v344 = vsub.s32 1, %v343
          %v345 = vrot.slane %v268, %v344
          %v346 = vlaneseq
          %v347 = vshrl.u32 %v346, 7
          %v348 = vsub.s32 2, %v347
          %v349 = vrot.slane %v268, %v348
          %v350 = vlaneseq
          %v351 = vshrl.u32 %v350, 7
          %v352 = vsub.s32 3, %v351
          %v353 = vrot.slane %v268, %v352
          %v354 = vlaneseq
          %v355 = vshrl.u32 %v354, 7
          %v356 = vsub.s32 4, %v355
          %v357 = vrot.slane %v268, %v356
          %v358 = vlaneseq
          %v359 = vshrl.u32 %v358, 7
          %v360 = vsub.s32 5, %v359
          %v361 = vrot.slane %v268, %v360
          %v362 = vlaneseq
          %v363 = vshrl.u32 %v362, 7
          %v364 = vsub.s32 6, %v363
          %v365 = vrot.slane %v268, %v364
          %v366 = vlaneseq
          %v367 = vshrl.u32 %v366, 7
          %v368 = vsub.s32 7, %v367
          %v369 = vrot.slane %v268, %v368
          %v382 = vunpack.c.l.b16 %v269
          %v383 = vunpack.c.l.b16 %v270
          %v384 = vunpack.c.l.b16 %v271
          %v385 = vunpack.c.l.b16 %v272
          %v386 = vpack.c.b16 %v383, %v382
          %v387 = vpack.c.b16 %v385, %v384
          %v454 = vunpack.c.l.b16 %v273
          %v455 = vunpack.c.h.b16 %v273
          %v456 = vunpack.c.l.b16 %v274
          %v457 = vunpack.c.h.b16 %v274
          %v458 = vunpack.c.l.b16 %v275
          %v459 = vunpack.c.h.b16 %v275
          %v460 = vunpack.c.l.b16 %v276
          %v461 = vunpack.c.h.b16 %v276
          %v462 = vunpack.c.l.b16 %v277
          %v463 = vunpack.c.h.b16 %v277
          %v464 = vunpack.c.l.b16 %v278
          %v465 = vunpack.c.h.b16 %v278
          %v466 = vunpack.c.l.b16 %v279
          %v467 = vunpack.c.h.b16 %v279
          %v468 = vunpack.c.l.b16 %v280
          %v469 = vunpack.c.h.b16 %v280
          %v470 = vunpack.c.l.b16 %v281
          %v471 = vunpack.c.h.b16 %v281
          %v472 = vunpack.c.l.b16 %v282
          %v473 = vunpack.c.h.b16 %v282
          %v474 = vunpack.c.l.b16 %v283
          %v475 = vunpack.c.h.b16 %v283
          %v476 = vunpack.c.l.b16 %v284
          %v477 = vunpack.c.h.b16 %v284
          %v478 = vunpack.c.l.b16 %v285
          %v479 = vunpack.c.h.b16 %v285
          %v480 = vunpack.c.l.b16 %v286
          %v481 = vunpack.c.h.b16 %v286
          %v482 = vunpack.c.l.b16 %v287
          %v483 = vunpack.c.h.b16 %v287
          %v484 = vunpack.c.l.b16 %v288
          %v485 = vunpack.c.h.b16 %v288
          %v486 = vunpack.c.l.b16 %v289
          %v487 = vunpack.c.h.b16 %v289
          %v488 = vunpack.c.l.b16 %v290
          %v489 = vunpack.c.h.b16 %v290
          %v490 = vunpack.c.l.b16 %v291
          %v491 = vunpack.c.h.b16 %v291
          %v492 = vunpack.c.l.b16 %v292
          %v493 = vunpack.c.h.b16 %v292
          %v494 = vunpack.c.l.b16 %v293
          %v495 = vunpack.c.h.b16 %v293
          %v496 = vunpack.c.l.b16 %v294
          %v497 = vunpack.c.h.b16 %v294
          %v498 = vunpack.c.l.b16 %v295
          %v499 = vunpack.c.h.b16 %v295
          %v500 = vunpack.c.l.b16 %v296
          %v501 = vunpack.c.h.b16 %v296
          %v502 = vunpack.c.l.b16 %v297
          %v503 = vunpack.c.h.b16 %v297
          %v504 = vunpack.c.l.b16 %v298
          %v505 = vunpack.c.h.b16 %v298
          %v506 = vunpack.c.l.b16 %v299
          %v507 = vunpack.c.h.b16 %v299
          %v508 = vunpack.c.l.b16 %v300
          %v509 = vunpack.c.h.b16 %v300
          %v510 = vunpack.c.l.b16 %v301
          %v511 = vunpack.c.h.b16 %v301
          %v512 = vunpack.c.l.b16 %v302
          %v513 = vunpack.c.h.b16 %v302
          %v514 = vunpack.c.l.b16 %v303
          %v515 = vunpack.c.h.b16 %v303
          %v516 = vunpack.c.l.b16 %v304
          %v517 = vunpack.c.h.b16 %v304
          %v518 = vunpack.c.l.b16 %v305
          %v519 = vunpack.c.h.b16 %v305
          %v520 = vunpack.c.l.b16 %v306
          %v521 = vunpack.c.h.b16 %v306
          %v522 = vunpack.c.l.b16 %v307
          %v523 = vunpack.c.h.b16 %v307
          %v524 = vunpack.c.l.b16 %v308
          %v525 = vunpack.c.h.b16 %v308
          %v526 = vunpack.c.l.b16 %v309
          %v527 = vunpack.c.h.b16 %v309
          %v528 = vunpack.c.l.b16 %v310
          %v529 = vunpack.c.h.b16 %v310
          %v530 = vunpack.c.l.b16 %v311
          %v531 = vunpack.c.h.b16 %v311
          %v532 = vunpack.c.l.b16 %v312
          %v533 = vunpack.c.h.b16 %v312
          %v534 = vunpack.c.l.b16 %v313
          %v535 = vunpack.c.h.b16 %v313
          %v536 = vunpack.c.l.b16 %v314
          %v537 = vunpack.c.h.b16 %v314
          %v538 = vunpack.c.l.b16 %v315
          %v539 = vunpack.c.h.b16 %v315
          %v540 = vunpack.c.l.b16 %v316
          %v541 = vunpack.c.h.b16 %v316
          %v542 = vunpack.c.l.b16 %v317
          %v543 = vunpack.c.h.b16 %v317
          %v544 = vunpack.c.l.b16 %v318
          %v545 = vunpack.c.h.b16 %v318
          %v546 = vunpack.c.l.b16 %v319
          %v547 = vunpack.c.h.b16 %v319
          %v548 = vunpack.c.l.b16 %v320
          %v549 = vunpack.c.h.b16 %v320
          %v550 = vunpack.c.l.b16 %v321
          %v551 = vunpack.c.h.b16 %v321
          %v552 = vunpack.c.l.b16 %v322
          %v553 = vunpack.c.h.b16 %v322
          %v554 = vunpack.c.l.b16 %v323
          %v555 = vunpack.c.h.b16 %v323
          %v556 = vunpack.c.l.b16 %v324
          %v557 = vunpack.c.h.b16 %v324
          %v558 = vunpack.c.l.b16 %v325
          %v559 = vunpack.c.h.b16 %v325
          %v560 = vunpack.c.l.b16 %v326
          %v561 = vunpack.c.h.b16 %v326
          %v562 = vunpack.c.l.b16 %v327
          %v563 = vunpack.c.h.b16 %v327
          %v564 = vunpack.c.l.b16 %v328
          %v565 = vunpack.c.h.b16 %v328
          %v566 = vunpack.c.l.b16 %v329
          %v567 = vunpack.c.h.b16 %v329
          %v568 = vunpack.c.l.b16 %v330
          %v569 = vunpack.c.h.b16 %v330
          %v570 = vunpack.c.l.b16 %v331
          %v571 = vunpack.c.h.b16 %v331
          %v572 = vunpack.c.l.b16 %v332
          %v573 = vunpack.c.h.b16 %v332
          %v574 = vunpack.c.l.b16 %v333
          %v575 = vunpack.c.h.b16 %v333
          %v576 = vunpack.c.l.b16 %v334
          %v577 = vunpack.c.h.b16 %v334
          %v578 = vunpack.c.l.b16 %v335
          %v579 = vunpack.c.h.b16 %v335
          %v580 = vunpack.c.l.b16 %v336
          %v581 = vunpack.c.h.b16 %v336
          %v582 = vpack.c.b16 %v462, %v454
          %v583 = vpack.c.b16 %v463, %v455
          %v584 = vpack.c.b16 %v464, %v456
          %v585 = vpack.c.b16 %v465, %v457
          %v586 = vpack.c.b16 %v466, %v458
          %v587 = vpack.c.b16 %v467, %v459
          %v588 = vpack.c.b16 %v468, %v460
          %v589 = vpack.c.b16 %v469, %v461
          %v590 = vpack.c.b16 %v478, %v470
          %v591 = vpack.c.b16 %v479, %v471
          %v592 = vpack.c.b16 %v480, %v472
          %v593 = vpack.c.b16 %v481, %v473
          %v594 = vpack.c.b16 %v482, %v474
          %v595 = vpack.c.b16 %v483, %v475
          %v596 = vpack.c.b16 %v484, %v476
          %v597 = vpack.c.b16 %v485, %v477
          %v598 = vpack.c.b16 %v494, %v486
          %v599 = vpack.c.b16 %v495, %v487
          %v600 = vpack.c.b16 %v496, %v488
          %v601 = vpack.c.b16 %v497, %v489
          %v602 = vpack.c.b16 %v498, %v490
          %v603 = vpack.c.b16 %v499, %v491
          %v604 = vpack.c.b16 %v500, %v492
          %v605 = vpack.c.b16 %v501, %v493
          %v606 = vpack.c.b16 %v510, %v502
          %v607 = vpack.c.b16 %v511, %v503
          %v608 = vpack.c.b16 %v512, %v504
          %v609 = vpack.c.b16 %v513, %v505
          %v610 = vpack.c.b16 %v514, %v506
          %v611 = vpack.c.b16 %v515, %v507
          %v612 = vpack.c.b16 %v516, %v508
          %v613 = vpack.c.b16 %v517, %v509
          %v614 = vpack.c.b16 %v526, %v518
          %v615 = vpack.c.b16 %v527, %v519
          %v616 = vpack.c.b16 %v528, %v520
          %v617 = vpack.c.b16 %v529, %v521
          %v618 = vpack.c.b16 %v530, %v522
          %v619 = vpack.c.b16 %v531, %v523
          %v620 = vpack.c.b16 %v532, %v524
          %v621 = vpack.c.b16 %v533, %v525
          %v622 = vpack.c.b16 %v542, %v534
          %v623 = vpack.c.b16 %v543, %v535
          %v624 = vpack.c.b16 %v544, %v536
          %v625 = vpack.c.b16 %v545, %v537
          %v626 = vpack.c.b16 %v546, %v538
          %v627 = vpack.c.b16 %v547, %v539
          %v628 = vpack.c.b16 %v548, %v540
          %v629 = vpack.c.b16 %v549, %v541
          %v630 = vpack.c.b16 %v558, %v550
          %v631 = vpack.c.b16 %v559, %v551
          %v632 = vpack.c.b16 %v560, %v552
          %v633 = vpack.c.b16 %v561, %v553
          %v634 = vpack.c.b16 %v562, %v554
          %v635 = vpack.c.b16 %v563, %v555
          %v636 = vpack.c.b16 %v564, %v556
          %v637 = vpack.c.b16 %v565, %v557
          %v638 = vpack.c.b16 %v574, %v566
          %v639 = vpack.c.b16 %v575, %v567
          %v640 = vpack.c.b16 %v576, %v568
          %v641 = vpack.c.b16 %v577, %v569
          %v642 = vpack.c.b16 %v578, %v570
          %v643 = vpack.c.b16 %v579, %v571
          %v644 = vpack.c.b16 %v580, %v572
          %v645 = vpack.c.b16 %v581, %v573
          %710 = vmatprep.subr.bf16.mxu0 %v583
          %711 = vmatpush1.bf16.msra.mxu0 %v582
          %712 = vmatprep.subr.bf16.mxu0 %v591
          %713 = vmatpush1.bf16.msra.mxu0 %v590
          %714 = vmatprep.subr.bf16.mxu0 %v599
          %715 = vmatpush1.bf16.msra.mxu0 %v598
          %716 = vmatprep.subr.bf16.mxu0 %v607
          %717 = vmatpush1.bf16.msra.mxu0 %v606
          %718 = vmatprep.subr.bf16.mxu0 %v615
          %719 = vmatpush1.bf16.msra.mxu0 %v614
          %720 = vmatprep.subr.bf16.mxu0 %v623
          %721 = vmatpush1.bf16.msra.mxu0 %v622
          %722 = vmatprep.subr.bf16.mxu0 %v631
          %723 = vmatpush1.bf16.msra.mxu0 %v630
          %724 = vmatprep.subr.bf16.mxu0 %v639
          %725 = vmatpush1.bf16.msra.mxu0 %v638
          %726 = vmatprep.subr.bf16.mxu0 0
          %727 = vmatpush1.bf16.msra.mxu0 0
          %728 = vmatprep.subr.bf16.mxu0 0
          %729 = vmatpush1.bf16.msra.mxu0 0
          %730 = vmatprep.subr.bf16.mxu0 0
          %731 = vmatpush1.bf16.msra.mxu0 0
          %732 = vmatprep.subr.bf16.mxu0 0
          %733 = vmatpush1.bf16.msra.mxu0 0
          %734 = vmatprep.subr.bf16.mxu0 0
          %735 = vmatpush1.bf16.msra.mxu0 0
          %736 = vmatprep.subr.bf16.mxu0 0
          %737 = vmatpush1.bf16.msra.mxu0 0
          %738 = vmatprep.subr.bf16.mxu0 0
          %739 = vmatpush1.bf16.msra.mxu0 0
          %740 = vmatprep.subr.bf16.mxu0 0
          %741 = vmatpush1.bf16.msra.mxu0 0
          %742 = vmatprep.mubr.bf16.mxu0 0
          %743 = vmatmul.mubr.bf16.gmra.mrb[0].mxu0 %v386
          %v744 = vpop.f32.mrb[0].mxu0
          %v745 = vadd.f32 %v341, %v744
          %v746 = vpop.f32.mrb[0].mxu0
          %v747 = vadd.f32 %v345, %v746
          %v748 = vpop.f32.mrb[0].mxu0
          %v749 = vadd.f32 %v341, %v748
          %v750 = vpop.f32.mrb[0].mxu0
          %v751 = vadd.f32 %v345, %v750
          %752 = vmatprep.mubr.bf16.mxu0 0
          %753 = vmatmul.mubr.bf16.gmra.mrb[0].mxu0 %v387
          %v754 = vpop.f32.mrb[0].mxu0
          %v755 = vadd.f32 %v341, %v754
          %v756 = vpop.f32.mrb[0].mxu0
          %v757 = vadd.f32 %v345, %v756
          %v758 = vpop.f32.mrb[0].mxu0
          %v759 = vadd.f32 %v341, %v758
          %v760 = vpop.f32.mrb[0].mxu0
          %v761 = vadd.f32 %v345, %v760
          %762 = vdwg.mxu0
          %763 = vmatprep.subr.bf16.mxu0 %v585
          %764 = vmatpush1.bf16.msra.mxu0 %v584
          %765 = vmatprep.subr.bf16.mxu0 %v593
          %766 = vmatpush1.bf16.msra.mxu0 %v592
          %767 = vmatprep.subr.bf16.mxu0 %v601
          %768 = vmatpush1.bf16.msra.mxu0 %v600
          %769 = vmatprep.subr.bf16.mxu0 %v609
          %770 = vmatpush1.bf16.msra.mxu0 %v608
          %771 = vmatprep.subr.bf16.mxu0 %v617
          %772 = vmatpush1.bf16.msra.mxu0 %v616
          %773 = vmatprep.subr.bf16.mxu0 %v625
          %774 = vmatpush1.bf16.msra.mxu0 %v624
          %775 = vmatprep.subr.bf16.mxu0 %v633
          %776 = vmatpush1.bf16.msra.mxu0 %v632
          %777 = vmatprep.subr.bf16.mxu0 %v641
          %778 = vmatpush1.bf16.msra.mxu0 %v640
          %779 = vmatprep.subr.bf16.mxu0 0
          %780 = vmatpush1.bf16.msra.mxu0 0
          %781 = vmatprep.subr.bf16.mxu0 0
          %782 = vmatpush1.bf16.msra.mxu0 0
          %783 = vmatprep.subr.bf16.mxu0 0
          %784 = vmatpush1.bf16.msra.mxu0 0
          %785 = vmatprep.subr.bf16.mxu0 0
          %786 = vmatpush1.bf16.msra.mxu0 0
          %787 = vmatprep.subr.bf16.mxu0 0
          %788 = vmatpush1.bf16.msra.mxu0 0
          %789 = vmatprep.subr.bf16.mxu0 0
          %790 = vmatpush1.bf16.msra.mxu0 0
          %791 = vmatprep.subr.bf16.mxu0 0
          %792 = vmatpush1.bf16.msra.mxu0 0
          %793 = vmatprep.subr.bf16.mxu0 0
          %794 = vmatpush1.bf16.msra.mxu0 0
          %795 = vmatprep.mubr.bf16.mxu0 0
          %796 = vmatmul.mubr.bf16.gmra.mrb[0].mxu0 %v386
          %v797 = vpop.f32.mrb[0].mxu0
          %v798 = vadd.f32 %v349, %v797
          %v799 = vpop.f32.mrb[0].mxu0
          %v800 = vadd.f32 %v353, %v799
          %v801 = vpop.f32.mrb[0].mxu0
          %v802 = vadd.f32 %v349, %v801
          %v803 = vpop.f32.mrb[0].mxu0
          %v804 = vadd.f32 %v353, %v803
          %805 = vmatprep.mubr.bf16.mxu0 0
          %806 = vmatmul.mubr.bf16.gmra.mrb[0].mxu0 %v387
          %v807 = vpop.f32.mrb[0].mxu0
          %v808 = vadd.f32 %v349, %v807
          %v809 = vpop.f32.mrb[0].mxu0
          %v810 = vadd.f32 %v353, %v809
          %v811 = vpop.f32.mrb[0].mxu0
          %v812 = vadd.f32 %v349, %v811
          %v813 = vpop.f32.mrb[0].mxu0
          %v814 = vadd.f32 %v353, %v813
          %815 = vdwg.mxu0
          %816 = vmatprep.subr.bf16.mxu0 %v587
          %817 = vmatpush1.bf16.msra.mxu0 %v586
          %818 = vmatprep.subr.bf16.mxu0 %v595
          %819 = vmatpush1.bf16.msra.mxu0 %v594
          %820 = vmatprep.subr.bf16.mxu0 %v603
          %821 = vmatpush1.bf16.msra.mxu0 %v602
          %822 = vmatprep.subr.bf16.mxu0 %v611
          %823 = vmatpush1.bf16.msra.mxu0 %v610
          %824 = vmatprep.subr.bf16.mxu0 %v619
          %825 = vmatpush1.bf16.msra.mxu0 %v618
          %826 = vmatprep.subr.bf16.mxu0 %v627
          %827 = vmatpush1.bf16.msra.mxu0 %v626
          %828 = vmatprep.subr.bf16.mxu0 %v635
          %829 = vmatpush1.bf16.msra.mxu0 %v634
          %830 = vmatprep.subr.bf16.mxu0 %v643
          %831 = vmatpush1.bf16.msra.mxu0 %v642
          %832 = vmatprep.subr.bf16.mxu0 0
          %833 = vmatpush1.bf16.msra.mxu0 0
          %834 = vmatprep.subr.bf16.mxu0 0
          %835 = vmatpush1.bf16.msra.mxu0 0
          %836 = vmatprep.subr.bf16.mxu0 0
          %837 = vmatpush1.bf16.msra.mxu0 0
          %838 = vmatprep.subr.bf16.mxu0 0
          %839 = vmatpush1.bf16.msra.mxu0 0
          %840 = vmatprep.subr.bf16.mxu0 0
          %841 = vmatpush1.bf16.msra.mxu0 0
          %842 = vmatprep.subr.bf16.mxu0 0
          %843 = vmatpush1.bf16.msra.mxu0 0
          %844 = vmatprep.subr.bf16.mxu0 0
          %845 = vmatpush1.bf16.msra.mxu0 0
          %846 = vmatprep.subr.bf16.mxu0 0
          %847 = vmatpush1.bf16.msra.mxu0 0
          %848 = vmatprep.mubr.bf16.mxu0 0
          %849 = vmatmul.mubr.bf16.gmra.mrb[0].mxu0 %v386
          %v850 = vpop.f32.mrb[0].mxu0
          %v851 = vadd.f32 %v357, %v850
          %v852 = vpop.f32.mrb[0].mxu0
          %v853 = vadd.f32 %v361, %v852
          %v854 = vpop.f32.mrb[0].mxu0
          %v855 = vadd.f32 %v357, %v854
          %v856 = vpop.f32.mrb[0].mxu0
          %v857 = vadd.f32 %v361, %v856
          %858 = vmatprep.mubr.bf16.mxu0 0
          %859 = vmatmul.mubr.bf16.gmra.mrb[0].mxu0 %v387
          %v860 = vpop.f32.mrb[0].mxu0
          %v861 = vadd.f32 %v357, %v860
          %v862 = vpop.f32.mrb[0].mxu0
          %v863 = vadd.f32 %v361, %v862
          %v864 = vpop.f32.mrb[0].mxu0
          %v865 = vadd.f32 %v357, %v864
          %v866 = vpop.f32.mrb[0].mxu0
          %v867 = vadd.f32 %v361, %v866
          %868 = vdwg.mxu0
          %869 = vmatprep.subr.bf16.mxu0 %v589
          %870 = vmatpush1.bf16.msra.mxu0 %v588
          %871 = vmatprep.subr.bf16.mxu0 %v597
          %872 = vmatpush1.bf16.msra.mxu0 %v596
          %873 = vmatprep.subr.bf16.mxu0 %v605
          %874 = vmatpush1.bf16.msra.mxu0 %v604
          %875 = vmatprep.subr.bf16.mxu0 %v613
          %876 = vmatpush1.bf16.msra.mxu0 %v612
          %877 = vmatprep.subr.bf16.mxu0 %v621
          %878 = vmatpush1.bf16.msra.mxu0 %v620
          %879 = vmatprep.subr.bf16.mxu0 %v629
          %880 = vmatpush1.bf16.msra.mxu0 %v628
          %881 = vmatprep.subr.bf16.mxu0 %v637
          %882 = vmatpush1.bf16.msra.mxu0 %v636
          %883 = vmatprep.subr.bf16.mxu0 %v645
          %884 = vmatpush1.bf16.msra.mxu0 %v644
          %885 = vmatprep.subr.bf16.mxu0 0
          %886 = vmatpush1.bf16.msra.mxu0 0
          %887 = vmatprep.subr.bf16.mxu0 0
          %888 = vmatpush1.bf16.msra.mxu0 0
          %889 = vmatprep.subr.bf16.mxu0 0
          %890 = vmatpush1.bf16.msra.mxu0 0
          %891 = vmatprep.subr.bf16.mxu0 0
          %892 = vmatpush1.bf16.msra.mxu0 0
          %893 = vmatprep.subr.bf16.mxu0 0
          %894 = vmatpush1.bf16.msra.mxu0 0
          %895 = vmatprep.subr.bf16.mxu0 0
          %896 = vmatpush1.bf16.msra.mxu0 0
          %897 = vmatprep.subr.bf16.mxu0 0
          %898 = vmatpush1.bf16.msra.mxu0 0
          %899 = vmatprep.subr.bf16.mxu0 0
          %900 = vmatpush1.bf16.msra.mxu0 0
          %901 = vmatprep.mubr.bf16.mxu0 0
          %902 = vmatmul.mubr.bf16.gmra.mrb[0].mxu0 %v386
          %v903 = vpop.f32.mrb[0].mxu0
          %v904 = vadd.f32 %v365, %v903
          %v905 = vpop.f32.mrb[0].mxu0
          %v906 = vadd.f32 %v369, %v905
          %v907 = vpop.f32.mrb[0].mxu0
          %v908 = vadd.f32 %v365, %v907
          %v909 = vpop.f32.mrb[0].mxu0
          %v910 = vadd.f32 %v369, %v909
          %911 = vmatprep.mubr.bf16.mxu0 0
          %912 = vmatmul.mubr.bf16.gmra.mrb[0].mxu0 %v387
          %v913 = vpop.f32.mrb[0].mxu0
          %v914 = vadd.f32 %v365, %v913
          %v915 = vpop.f32.mrb[0].mxu0
          %v916 = vadd.f32 %v369, %v915
          %v917 = vpop.f32.mrb[0].mxu0
          %v918 = vadd.f32 %v365, %v917
          %v919 = vpop.f32.mrb[0].mxu0
          %v920 = vadd.f32 %v369, %v919
          %921 = vdwg.mxu0
          %v922 = vmax.f32 %v745, 0.0
          %v923 = vmax.f32 %v747, 0.0
          %v924 = vmax.f32 %v798, 0.0
          %v925 = vmax.f32 %v800, 0.0
          %v926 = vmax.f32 %v851, 0.0
          %v927 = vmax.f32 %v853, 0.0
          %v928 = vmax.f32 %v904, 0.0
          %v929 = vmax.f32 %v906, 0.0
          %v930 = vmax.f32 %v749, 0.0
          %v931 = vmax.f32 %v751, 0.0
          %v932 = vmax.f32 %v802, 0.0
          %v933 = vmax.f32 %v804, 0.0
          %v934 = vmax.f32 %v855, 0.0
          %v935 = vmax.f32 %v857, 0.0
          %v936 = vmax.f32 %v908, 0.0
          %v937 = vmax.f32 %v910, 0.0
          %v938 = vmax.f32 %v755, 0.0
          %v939 = vmax.f32 %v757, 0.0
          %v940 = vmax.f32 %v808, 0.0
          %v941 = vmax.f32 %v810, 0.0
          %v942 = vmax.f32 %v861, 0.0
          %v943 = vmax.f32 %v863, 0.0
          %v944 = vmax.f32 %v914, 0.0
          %v945 = vmax.f32 %v916, 0.0
          %v946 = vmax.f32 %v759, 0.0
          %v947 = vmax.f32 %v761, 0.0
          %v948 = vmax.f32 %v812, 0.0
          %v949 = vmax.f32 %v814, 0.0
          %v950 = vmax.f32 %v865, 0.0
          %v951 = vmax.f32 %v867, 0.0
          %v952 = vmax.f32 %v918, 0.0
          %v953 = vmax.f32 %v920, 0.0
          %v954 = vlaneseq
          %v955 = vshrl.u32 %v954, 7
          %v956 = vadd.s32 %v955, 8
          %vm957 = vcmp.lt.s32.totalorder %v955, 16
          %vm958 = vcmp.lt.s32.totalorder %v956, 16
          %v959 = vsel %vm957, %v922, 0.0
          %v960 = vsel %vm957, %v923, 0.0
          %v961 = vsel %vm957, %v924, 0.0
          %v962 = vsel %vm957, %v925, 0.0
          %v963 = vsel %vm957, %v926, 0.0
          %v964 = vsel %vm957, %v927, 0.0
          %v965 = vsel %vm957, %v928, 0.0
          %v966 = vsel %vm957, %v929, 0.0
          %v967 = vsel %vm958, %v930, 0.0
          %v968 = vsel %vm958, %v931, 0.0
          %v969 = vsel %vm958, %v932, 0.0
          %v970 = vsel %vm958, %v933, 0.0
          %v971 = vsel %vm958, %v934, 0.0
          %v972 = vsel %vm958, %v935, 0.0
          %v973 = vsel %vm958, %v936, 0.0
          %v974 = vsel %vm958, %v937, 0.0
          %v975 = vsel %vm957, %v938, 0.0
          %v976 = vsel %vm957, %v939, 0.0
          %v977 = vsel %vm957, %v940, 0.0
          %v978 = vsel %vm957, %v941, 0.0
          %v979 = vsel %vm957, %v942, 0.0
          %v980 = vsel %vm957, %v943, 0.0
          %v981 = vsel %vm957, %v944, 0.0
          %v982 = vsel %vm957, %v945, 0.0
          %v983 = vsel %vm958, %v946, 0.0
          %v984 = vsel %vm958, %v947, 0.0
          %v985 = vsel %vm958, %v948, 0.0
          %v986 = vsel %vm958, %v949, 0.0
          %v987 = vsel %vm958, %v950, 0.0
          %v988 = vsel %vm958, %v951, 0.0
          %v989 = vsel %vm958, %v952, 0.0
          %v990 = vsel %vm958, %v953, 0.0
          %v991 = vmax.f32 %v959, %v967
          %v992 = vrot.slane %v991, 4
          %v993 = vmax.f32 %v991, %v992
          %v994 = vrot.slane %v993, 2
          %v995 = vmax.f32 %v993, %v994
          %v996 = vrot.slane %v995, 1
          %v997 = vmax.f32 %v995, %v996
          %v998 = vmax.f32 %v960, %v968
          %v999 = vrot.slane %v998, 4
          %v1000 = vmax.f32 %v998, %v999
          %v1001 = vrot.slane %v1000, 2
          %v1002 = vmax.f32 %v1000, %v1001
          %v1003 = vrot.slane %v1002, 1
          %v1004 = vmax.f32 %v1002, %v1003
          %v1005 = vmax.f32 %v961, %v969
          %v1006 = vrot.slane %v1005, 4
          %v1007 = vmax.f32 %v1005, %v1006
          %v1008 = vrot.slane %v1007, 2
          %v1009 = vmax.f32 %v1007, %v1008
          %v1010 = vrot.slane %v1009, 1
          %v1011 = vmax.f32 %v1009, %v1010
          %v1012 = vmax.f32 %v962, %v970
          %v1013 = vrot.slane %v1012, 4
          %v1014 = vmax.f32 %v1012, %v1013
          %v1015 = vrot.slane %v1014, 2
          %v1016 = vmax.f32 %v1014, %v1015
          %v1017 = vrot.slane %v1016, 1
          %v1018 = vmax.f32 %v1016, %v1017
          %v1019 = vmax.f32 %v963, %v971
          %v1020 = vrot.slane %v1019, 4
          %v1021 = vmax.f32 %v1019, %v1020
          %v1022 = vrot.slane %v1021, 2
          %v1023 = vmax.f32 %v1021, %v1022
          %v1024 = vrot.slane %v1023, 1
          %v1025 = vmax.f32 %v1023, %v1024
          %v1026 = vmax.f32 %v964, %v972
          %v1027 = vrot.slane %v1026, 4
          %v1028 = vmax.f32 %v1026, %v1027
          %v1029 = vrot.slane %v1028, 2
          %v1030 = vmax.f32 %v1028, %v1029
          %v1031 = vrot.slane %v1030, 1
          %v1032 = vmax.f32 %v1030, %v1031
          %v1033 = vmax.f32 %v965, %v973
          %v1034 = vrot.slane %v1033, 4
          %v1035 = vmax.f32 %v1033, %v1034
          %v1036 = vrot.slane %v1035, 2
          %v1037 = vmax.f32 %v1035, %v1036
          %v1038 = vrot.slane %v1037, 1
          %v1039 = vmax.f32 %v1037, %v1038
          %v1040 = vmax.f32 %v966, %v974
          %v1041 = vrot.slane %v1040, 4
          %v1042 = vmax.f32 %v1040, %v1041
          %v1043 = vrot.slane %v1042, 2
          %v1044 = vmax.f32 %v1042, %v1043
          %v1045 = vrot.slane %v1044, 1
          %v1046 = vmax.f32 %v1044, %v1045
          %v1047 = vmax.f32 %v975, %v983
          %v1048 = vrot.slane %v1047, 4
          %v1049 = vmax.f32 %v1047, %v1048
          %v1050 = vrot.slane %v1049, 2
          %v1051 = vmax.f32 %v1049, %v1050
          %v1052 = vrot.slane %v1051, 1
          %v1053 = vmax.f32 %v1051, %v1052
          %v1054 = vmax.f32 %v976, %v984
          %v1055 = vrot.slane %v1054, 4
          %v1056 = vmax.f32 %v1054, %v1055
          %v1057 = vrot.slane %v1056, 2
          %v1058 = vmax.f32 %v1056, %v1057
          %v1059 = vrot.slane %v1058, 1
          %v1060 = vmax.f32 %v1058, %v1059
          %v1061 = vmax.f32 %v977, %v985
          %v1062 = vrot.slane %v1061, 4
          %v1063 = vmax.f32 %v1061, %v1062
          %v1064 = vrot.slane %v1063, 2
          %v1065 = vmax.f32 %v1063, %v1064
          %v1066 = vrot.slane %v1065, 1
          %v1067 = vmax.f32 %v1065, %v1066
          %v1068 = vmax.f32 %v978, %v986
          %v1069 = vrot.slane %v1068, 4
          %v1070 = vmax.f32 %v1068, %v1069
          %v1071 = vrot.slane %v1070, 2
          %v1072 = vmax.f32 %v1070, %v1071
          %v1073 = vrot.slane %v1072, 1
          %v1074 = vmax.f32 %v1072, %v1073
          %v1075 = vmax.f32 %v979, %v987
          %v1076 = vrot.slane %v1075, 4
          %v1077 = vmax.f32 %v1075, %v1076
          %v1078 = vrot.slane %v1077, 2
          %v1079 = vmax.f32 %v1077, %v1078
          %v1080 = vrot.slane %v1079, 1
          %v1081 = vmax.f32 %v1079, %v1080
          %v1082 = vmax.f32 %v980, %v988
          %v1083 = vrot.slane %v1082, 4
          %v1084 = vmax.f32 %v1082, %v1083
          %v1085 = vrot.slane %v1084, 2
          %v1086 = vmax.f32 %v1084, %v1085
          %v1087 = vrot.slane %v1086, 1
          %v1088 = vmax.f32 %v1086, %v1087
          %v1089 = vmax.f32 %v981, %v989
          %v1090 = vrot.slane %v1089, 4
          %v1091 = vmax.f32 %v1089, %v1090
          %v1092 = vrot.slane %v1091, 2
          %v1093 = vmax.f32 %v1091, %v1092
          %v1094 = vrot.slane %v1093, 1
          %v1095 = vmax.f32 %v1093, %v1094
          %v1096 = vmax.f32 %v982, %v990
          %v1097 = vrot.slane %v1096, 4
          %v1098 = vmax.f32 %v1096, %v1097
          %v1099 = vrot.slane %v1098, 2
          %v1100 = vmax.f32 %v1098, %v1099
          %v1101 = vrot.slane %v1100, 1
          %v1102 = vmax.f32 %v1100, %v1101
          %v1119 = vcombine.low %v997, %v1004
          %v1120 = vcombine.low %v1011, %v1018
          %v1122 = vunpack.c.l.s4 1983009808
          %v1123 = vunpack.c.0.s8 %v1122
          %v1124 = vlaneseq
          %v1125 = vshrl.u32 %v1124, 7
          %v1126 = vsub.s32 %v1123, %v1125
          %v1127 = vrot.slane %v1119, %v1126
          %v1129 = vunpack.c.l.s4 1983009808
          %v1130 = vunpack.c.0.s8 %v1129
          %v1131 = vlaneseq
          %v1132 = vshrl.u32 %v1131, 7
          %v1133 = vsub.s32 %v1130, %v1132
          %v1134 = vrot.slane %v1120, %v1133
          %v1135 = vcombine.low %v1127, %v1134
          %v1136 = vcombine.low %v1025, %v1032
          %v1137 = vcombine.low %v1039, %v1046
          %v1139 = vunpack.c.l.s4 1983009808
          %v1140 = vunpack.c.0.s8 %v1139
          %v1141 = vlaneseq
          %v1142 = vshrl.u32 %v1141, 7
          %v1143 = vsub.s32 %v1140, %v1142
          %v1144 = vrot.slane %v1136, %v1143
          %v1146 = vunpack.c.l.s4 1983009808
          %v1147 = vunpack.c.0.s8 %v1146
          %v1148 = vlaneseq
          %v1149 = vshrl.u32 %v1148, 7
          %v1150 = vsub.s32 %v1147, %v1149
          %v1151 = vrot.slane %v1137, %v1150
          %v1152 = vcombine.low %v1144, %v1151
          %v1153 = vcombine.low %v1053, %v1060
          %v1154 = vcombine.low %v1067, %v1074
          %v1156 = vunpack.c.l.s4 1983009808
          %v1157 = vunpack.c.0.s8 %v1156
          %v1158 = vlaneseq
          %v1159 = vshrl.u32 %v1158, 7
          %v1160 = vsub.s32 %v1157, %v1159
          %v1161 = vrot.slane %v1153, %v1160
          %v1163 = vunpack.c.l.s4 1983009808
          %v1164 = vunpack.c.0.s8 %v1163
          %v1165 = vlaneseq
          %v1166 = vshrl.u32 %v1165, 7
          %v1167 = vsub.s32 %v1164, %v1166
          %v1168 = vrot.slane %v1154, %v1167
          %v1169 = vcombine.low %v1161, %v1168
          %v1170 = vcombine.low %v1081, %v1088
          %v1171 = vcombine.low %v1095, %v1102
          %v1173 = vunpack.c.l.s4 1983009808
          %v1174 = vunpack.c.0.s8 %v1173
          %v1175 = vlaneseq
          %v1176 = vshrl.u32 %v1175, 7
          %v1177 = vsub.s32 %v1174, %v1176
          %v1178 = vrot.slane %v1170, %v1177
          %v1180 = vunpack.c.l.s4 1983009808
          %v1181 = vunpack.c.0.s8 %v1180
          %v1182 = vlaneseq
          %v1183 = vshrl.u32 %v1182, 7
          %v1184 = vsub.s32 %v1181, %v1183
          %v1185 = vrot.slane %v1171, %v1184
          %v1186 = vcombine.low %v1178, %v1185
          %vm1187 = vcmask 1044484
          %v1188 = vsel %vm1187, %v1135, %v1135
          %vm1189 = vcmask 1046534
          %v1190 = vsel %vm1189, %v1135, %v1188
          %v1191 = vrot.slane %v1169, 7
          %vm1192 = vcmask 1041409
          %v1193 = vsel %vm1192, %v1191, %v1190
          %vm1194 = vcmask 1043459
          %v1195 = vsel %vm1194, %v1191, %v1193
          %vm1196 = vcmask 1045509
          %v1197 = vsel %vm1196, %v1191, %v1195
          %vm1198 = vcmask 1047559
          %v1199 = vsel %vm1198, %v1191, %v1197
          %v1200 = vsel %vm1187, %v1152, %v1152
          %v1201 = vsel %vm1189, %v1152, %v1200
          %v1202 = vrot.slane %v1186, 7
          %v1203 = vsel %vm1192, %v1202, %v1201
          %v1204 = vsel %vm1194, %v1202, %v1203
          %v1205 = vsel %vm1196, %v1202, %v1204
          %v1206 = vsel %vm1198, %v1202, %v1205
          %1209 = vst [vmem:[%s260] sm:$0xff] %v1199
          %1210 = vst [vmem:[%s260 + $0x8] sm:$0xff] %v1206
          %v1211 = vld [vmem:[%s233 + $0x8] sm:$0xff]
          %v1212 = vld [vmem:[#allocation2] sm:$0xf]
          %v1213 = vld [vmem:[#allocation2 + $0x4] sm:$0xf]
          %v1214 = vld [vmem:[#allocation2 + $0x8] sm:$0xf]
          %v1215 = vld [vmem:[#allocation2 + $0xc] sm:$0xf]
          %s1216 = scalar_lea.vmem %s224, 512 [#allocation5]
          %v1217 = vld [vmem:[%s1216] sm:$0xff]
          %v1218 = vld [vmem:[%s1216 + $0x8] sm:$0xff]
          %v1219 = vld [vmem:[%s1216 + $0x10] sm:$0xff]
          %v1220 = vld [vmem:[%s1216 + $0x18] sm:$0xff]
          %v1221 = vld [vmem:[%s1216 + $0x20] sm:$0xff]
          %v1222 = vld [vmem:[%s1216 + $0x28] sm:$0xff]
          %v1223 = vld [vmem:[%s1216 + $0x30] sm:$0xff]
          %v1224 = vld [vmem:[%s1216 + $0x38] sm:$0xff]
          %v1225 = vld [vmem:[%s1216 + $0x40] sm:$0xff]
          %v1226 = vld [vmem:[%s1216 + $0x48] sm:$0xff]
          %v1227 = vld [vmem:[%s1216 + $0x50] sm:$0xff]
          %v1228 = vld [vmem:[%s1216 + $0x58] sm:$0xff]
          %v1229 = vld [vmem:[%s1216 + $0x60] sm:$0xff]
          %v1230 = vld [vmem:[%s1216 + $0x68] sm:$0xff]
          %v1231 = vld [vmem:[%s1216 + $0x70] sm:$0xff]
          %v1232 = vld [vmem:[%s1216 + $0x78] sm:$0xff]
          %v1233 = vld [vmem:[%s1216 + $0x80] sm:$0xff]
          %v1234 = vld [vmem:[%s1216 + $0x88] sm:$0xff]
          %v1235 = vld [vmem:[%s1216 + $0x90] sm:$0xff]
          %v1236 = vld [vmem:[%s1216 + $0x98] sm:$0xff]
          %v1237 = vld [vmem:[%s1216 + $0xa0] sm:$0xff]
          %v1238 = vld [vmem:[%s1216 + $0xa8] sm:$0xff]
          %v1239 = vld [vmem:[%s1216 + $0xb0] sm:$0xff]
          %v1240 = vld [vmem:[%s1216 + $0xb8] sm:$0xff]
          %v1241 = vld [vmem:[%s1216 + $0xc0] sm:$0xff]
          %v1242 = vld [vmem:[%s1216 + $0xc8] sm:$0xff]
          %v1243 = vld [vmem:[%s1216 + $0xd0] sm:$0xff]
          %v1244 = vld [vmem:[%s1216 + $0xd8] sm:$0xff]
          %v1245 = vld [vmem:[%s1216 + $0xe0] sm:$0xff]
          %v1246 = vld [vmem:[%s1216 + $0xe8] sm:$0xff]
          %v1247 = vld [vmem:[%s1216 + $0xf0] sm:$0xff]
          %v1248 = vld [vmem:[%s1216 + $0xf8] sm:$0xff]
          %v1249 = vld [vmem:[%s1216 + $0x100] sm:$0xff]
          %v1250 = vld [vmem:[%s1216 + $0x108] sm:$0xff]
          %v1251 = vld [vmem:[%s1216 + $0x110] sm:$0xff]
          %v1252 = vld [vmem:[%s1216 + $0x118] sm:$0xff]
          %v1253 = vld [vmem:[%s1216 + $0x120] sm:$0xff]
          %v1254 = vld [vmem:[%s1216 + $0x128] sm:$0xff]
          %v1255 = vld [vmem:[%s1216 + $0x130] sm:$0xff]
          %v1256 = vld [vmem:[%s1216 + $0x138] sm:$0xff]
          %v1257 = vld [vmem:[%s1216 + $0x140] sm:$0xff]
          %v1258 = vld [vmem:[%s1216 + $0x148] sm:$0xff]
          %v1259 = vld [vmem:[%s1216 + $0x150] sm:$0xff]
          %v1260 = vld [vmem:[%s1216 + $0x158] sm:$0xff]
          %v1261 = vld [vmem:[%s1216 + $0x160] sm:$0xff]
          %v1262 = vld [vmem:[%s1216 + $0x168] sm:$0xff]
          %v1263 = vld [vmem:[%s1216 + $0x170] sm:$0xff]
          %v1264 = vld [vmem:[%s1216 + $0x178] sm:$0xff]
          %v1265 = vld [vmem:[%s1216 + $0x180] sm:$0xff]
          %v1266 = vld [vmem:[%s1216 + $0x188] sm:$0xff]
          %v1267 = vld [vmem:[%s1216 + $0x190] sm:$0xff]
          %v1268 = vld [vmem:[%s1216 + $0x198] sm:$0xff]
          %v1269 = vld [vmem:[%s1216 + $0x1a0] sm:$0xff]
          %v1270 = vld [vmem:[%s1216 + $0x1a8] sm:$0xff]
          %v1271 = vld [vmem:[%s1216 + $0x1b0] sm:$0xff]
          %v1272 = vld [vmem:[%s1216 + $0x1b8] sm:$0xff]
          %v1273 = vld [vmem:[%s1216 + $0x1c0] sm:$0xff]
          %v1274 = vld [vmem:[%s1216 + $0x1c8] sm:$0xff]
          %v1275 = vld [vmem:[%s1216 + $0x1d0] sm:$0xff]
          %v1276 = vld [vmem:[%s1216 + $0x1d8] sm:$0xff]
          %v1277 = vld [vmem:[%s1216 + $0x1e0] sm:$0xff]
          %v1278 = vld [vmem:[%s1216 + $0x1e8] sm:$0xff]
          %v1279 = vld [vmem:[%s1216 + $0x1f0] sm:$0xff]
          %v1280 = vld [vmem:[%s1216 + $0x1f8] sm:$0xff]
          %s1281 = scalar_lea.vmem [#allocation2], 16
          %v1282 = vld [vmem:[%s1281] sm:$0xf]
          %v1283 = vld [vmem:[%s1281 + $0x4] sm:$0xf]
          %v1284 = vld [vmem:[%s1281 + $0x8] sm:$0xf]
          %v1285 = vld [vmem:[%s1281 + $0xc] sm:$0xf]
          %s1286 = scalar_lea.vmem %s224, 1024 [#allocation5]
          %v1287 = vld [vmem:[%s1286] sm:$0xff]
          %v1288 = vld [vmem:[%s1286 + $0x8] sm:$0xff]
          %v1289 = vld [vmem:[%s1286 + $0x10] sm:$0xff]
          %v1290 = vld [vmem:[%s1286 + $0x18] sm:$0xff]
          %v1291 = vld [vmem:[%s1286 + $0x20] sm:$0xff]
          %v1292 = vld [vmem:[%s1286 + $0x28] sm:$0xff]
          %v1293 = vld [vmem:[%s1286 + $0x30] sm:$0xff]
          %v1294 = vld [vmem:[%s1286 + $0x38] sm:$0xff]
          %v1295 = vld [vmem:[%s1286 + $0x40] sm:$0xff]
          %v1296 = vld [vmem:[%s1286 + $0x48] sm:$0xff]
          %v1297 = vld [vmem:[%s1286 + $0x50] sm:$0xff]
          %v1298 = vld [vmem:[%s1286 + $0x58] sm:$0xff]
          %v1299 = vld [vmem:[%s1286 + $0x60] sm:$0xff]
          %v1300 = vld [vmem:[%s1286 + $0x68] sm:$0xff]
          %v1301 = vld [vmem:[%s1286 + $0x70] sm:$0xff]
          %v1302 = vld [vmem:[%s1286 + $0x78] sm:$0xff]
          %v1303 = vld [vmem:[%s1286 + $0x80] sm:$0xff]
          %v1304 = vld [vmem:[%s1286 + $0x88] sm:$0xff]
          %v1305 = vld [vmem:[%s1286 + $0x90] sm:$0xff]
          %v1306 = vld [vmem:[%s1286 + $0x98] sm:$0xff]
          %v1307 = vld [vmem:[%s1286 + $0xa0] sm:$0xff]
          %v1308 = vld [vmem:[%s1286 + $0xa8] sm:$0xff]
          %v1309 = vld [vmem:[%s1286 + $0xb0] sm:$0xff]
          %v1310 = vld [vmem:[%s1286 + $0xb8] sm:$0xff]
          %v1311 = vld [vmem:[%s1286 + $0xc0] sm:$0xff]
          %v1312 = vld [vmem:[%s1286 + $0xc8] sm:$0xff]
          %v1313 = vld [vmem:[%s1286 + $0xd0] sm:$0xff]
          %v1314 = vld [vmem:[%s1286 + $0xd8] sm:$0xff]
          %v1315 = vld [vmem:[%s1286 + $0xe0] sm:$0xff]
          %v1316 = vld [vmem:[%s1286 + $0xe8] sm:$0xff]
          %v1317 = vld [vmem:[%s1286 + $0xf0] sm:$0xff]
          %v1318 = vld [vmem:[%s1286 + $0xf8] sm:$0xff]
          %v1319 = vld [vmem:[%s1286 + $0x100] sm:$0xff]
          %v1320 = vld [vmem:[%s1286 + $0x108] sm:$0xff]
          %v1321 = vld [vmem:[%s1286 + $0x110] sm:$0xff]
          %v1322 = vld [vmem:[%s1286 + $0x118] sm:$0xff]
          %v1323 = vld [vmem:[%s1286 + $0x120] sm:$0xff]
          %v1324 = vld [vmem:[%s1286 + $0x128] sm:$0xff]
          %v1325 = vld [vmem:[%s1286 + $0x130] sm:$0xff]
          %v1326 = vld [vmem:[%s1286 + $0x138] sm:$0xff]
          %v1327 = vld [vmem:[%s1286 + $0x140] sm:$0xff]
          %v1328 = vld [vmem:[%s1286 + $0x148] sm:$0xff]
          %v1329 = vld [vmem:[%s1286 + $0x150] sm:$0xff]
          %v1330 = vld [vmem:[%s1286 + $0x158] sm:$0xff]
          %v1331 = vld [vmem:[%s1286 + $0x160] sm:$0xff]
          %v1332 = vld [vmem:[%s1286 + $0x168] sm:$0xff]
          %v1333 = vld [vmem:[%s1286 + $0x170] sm:$0xff]
          %v1334 = vld [vmem:[%s1286 + $0x178] sm:$0xff]
          %v1335 = vld [vmem:[%s1286 + $0x180] sm:$0xff]
          %v1336 = vld [vmem:[%s1286 + $0x188] sm:$0xff]
          %v1337 = vld [vmem:[%s1286 + $0x190] sm:$0xff]
          %v1338 = vld [vmem:[%s1286 + $0x198] sm:$0xff]
          %v1339 = vld [vmem:[%s1286 + $0x1a0] sm:$0xff]
          %v1340 = vld [vmem:[%s1286 + $0x1a8] sm:$0xff]
          %v1341 = vld [vmem:[%s1286 + $0x1b0] sm:$0xff]
          %v1342 = vld [vmem:[%s1286 + $0x1b8] sm:$0xff]
          %v1343 = vld [vmem:[%s1286 + $0x1c0] sm:$0xff]
          %v1344 = vld [vmem:[%s1286 + $0x1c8] sm:$0xff]
          %v1345 = vld [vmem:[%s1286 + $0x1d0] sm:$0xff]
          %v1346 = vld [vmem:[%s1286 + $0x1d8] sm:$0xff]
          %v1347 = vld [vmem:[%s1286 + $0x1e0] sm:$0xff]
          %v1348 = vld [vmem:[%s1286 + $0x1e8] sm:$0xff]
          %v1349 = vld [vmem:[%s1286 + $0x1f0] sm:$0xff]
          %v1350 = vld [vmem:[%s1286 + $0x1f8] sm:$0xff]
          %v1355 = vunpack.c.l.b16 %v1282
          %v1356 = vunpack.c.l.b16 %v1283
          %v1357 = vunpack.c.l.b16 %v1284
          %v1358 = vunpack.c.l.b16 %v1285
          %v1359 = vpack.c.b16 %v1356, %v1355
          %v1360 = vpack.c.b16 %v1358, %v1357
          %v1427 = vunpack.c.l.b16 %v1287
          %v1428 = vunpack.c.h.b16 %v1287
          %v1429 = vunpack.c.l.b16 %v1288
          %v1430 = vunpack.c.h.b16 %v1288
          %v1431 = vunpack.c.l.b16 %v1289
          %v1432 = vunpack.c.h.b16 %v1289
          %v1433 = vunpack.c.l.b16 %v1290
          %v1434 = vunpack.c.h.b16 %v1290
          %v1435 = vunpack.c.l.b16 %v1291
          %v1436 = vunpack.c.h.b16 %v1291
          %v1437 = vunpack.c.l.b16 %v1292
          %v1438 = vunpack.c.h.b16 %v1292
          %v1439 = vunpack.c.l.b16 %v1293
          %v1440 = vunpack.c.h.b16 %v1293
          %v1441 = vunpack.c.l.b16 %v1294
          %v1442 = vunpack.c.h.b16 %v1294
          %v1443 = vunpack.c.l.b16 %v1295
          %v1444 = vunpack.c.h.b16 %v1295
          %v1445 = vunpack.c.l.b16 %v1296
          %v1446 = vunpack.c.h.b16 %v1296
          %v1447 = vunpack.c.l.b16 %v1297
          %v1448 = vunpack.c.h.b16 %v1297
          %v1449 = vunpack.c.l.b16 %v1298
          %v1450 = vunpack.c.h.b16 %v1298
          %v1451 = vunpack.c.l.b16 %v1299
          %v1452 = vunpack.c.h.b16 %v1299
          %v1453 = vunpack.c.l.b16 %v1300
          %v1454 = vunpack.c.h.b16 %v1300
          %v1455 = vunpack.c.l.b16 %v1301
          %v1456 = vunpack.c.h.b16 %v1301
          %v1457 = vunpack.c.l.b16 %v1302
          %v1458 = vunpack.c.h.b16 %v1302
          %v1459 = vunpack.c.l.b16 %v1303
          %v1460 = vunpack.c.h.b16 %v1303
          %v1461 = vunpack.c.l.b16 %v1304
          %v1462 = vunpack.c.h.b16 %v1304
          %v1463 = vunpack.c.l.b16 %v1305
          %v1464 = vunpack.c.h.b16 %v1305
          %v1465 = vunpack.c.l.b16 %v1306
          %v1466 = vunpack.c.h.b16 %v1306
          %v1467 = vunpack.c.l.b16 %v1307
          %v1468 = vunpack.c.h.b16 %v1307
          %v1469 = vunpack.c.l.b16 %v1308
          %v1470 = vunpack.c.h.b16 %v1308
          %v1471 = vunpack.c.l.b16 %v1309
          %v1472 = vunpack.c.h.b16 %v1309
          %v1473 = vunpack.c.l.b16 %v1310
          %v1474 = vunpack.c.h.b16 %v1310
          %v1475 = vunpack.c.l.b16 %v1311
          %v1476 = vunpack.c.h.b16 %v1311
          %v1477 = vunpack.c.l.b16 %v1312
          %v1478 = vunpack.c.h.b16 %v1312
          %v1479 = vunpack.c.l.b16 %v1313
          %v1480 = vunpack.c.h.b16 %v1313
          %v1481 = vunpack.c.l.b16 %v1314
          %v1482 = vunpack.c.h.b16 %v1314
          %v1483 = vunpack.c.l.b16 %v1315
          %v1484 = vunpack.c.h.b16 %v1315
          %v1485 = vunpack.c.l.b16 %v1316
          %v1486 = vunpack.c.h.b16 %v1316
          %v1487 = vunpack.c.l.b16 %v1317
          %v1488 = vunpack.c.h.b16 %v1317
          %v1489 = vunpack.c.l.b16 %v1318
          %v1490 = vunpack.c.h.b16 %v1318
          %v1491 = vunpack.c.l.b16 %v1319
          %v1492 = vunpack.c.h.b16 %v1319
          %v1493 = vunpack.c.l.b16 %v1320
          %v1494 = vunpack.c.h.b16 %v1320
          %v1495 = vunpack.c.l.b16 %v1321
          %v1496 = vunpack.c.h.b16 %v1321
          %v1497 = vunpack.c.l.b16 %v1322
          %v1498 = vunpack.c.h.b16 %v1322
          %v1499 = vunpack.c.l.b16 %v1323
          %v1500 = vunpack.c.h.b16 %v1323
          %v1501 = vunpack.c.l.b16 %v1324
          %v1502 = vunpack.c.h.b16 %v1324
          %v1503 = vunpack.c.l.b16 %v1325
          %v1504 = vunpack.c.h.b16 %v1325
          %v1505 = vunpack.c.l.b16 %v1326
          %v1506 = vunpack.c.h.b16 %v1326
          %v1507 = vunpack.c.l.b16 %v1327
          %v1508 = vunpack.c.h.b16 %v1327
          %v1509 = vunpack.c.l.b16 %v1328
          %v1510 = vunpack.c.h.b16 %v1328
          %v1511 = vunpack.c.l.b16 %v1329
          %v1512 = vunpack.c.h.b16 %v1329
          %v1513 = vunpack.c.l.b16 %v1330
          %v1514 = vunpack.c.h.b16 %v1330
          %v1515 = vunpack.c.l.b16 %v1331
          %v1516 = vunpack.c.h.b16 %v1331
          %v1517 = vunpack.c.l.b16 %v1332
          %v1518 = vunpack.c.h.b16 %v1332
          %v1519 = vunpack.c.l.b16 %v1333
          %v1520 = vunpack.c.h.b16 %v1333
          %v1521 = vunpack.c.l.b16 %v1334
          %v1522 = vunpack.c.h.b16 %v1334
          %v1523 = vunpack.c.l.b16 %v1335
          %v1524 = vunpack.c.h.b16 %v1335
          %v1525 = vunpack.c.l.b16 %v1336
          %v1526 = vunpack.c.h.b16 %v1336
          %v1527 = vunpack.c.l.b16 %v1337
          %v1528 = vunpack.c.h.b16 %v1337
          %v1529 = vunpack.c.l.b16 %v1338
          %v1530 = vunpack.c.h.b16 %v1338
          %v1531 = vunpack.c.l.b16 %v1339
          %v1532 = vunpack.c.h.b16 %v1339
          %v1533 = vunpack.c.l.b16 %v1340
          %v1534 = vunpack.c.h.b16 %v1340
          %v1535 = vunpack.c.l.b16 %v1341
          %v1536 = vunpack.c.h.b16 %v1341
          %v1537 = vunpack.c.l.b16 %v1342
          %v1538 = vunpack.c.h.b16 %v1342
          %v1539 = vunpack.c.l.b16 %v1343
          %v1540 = vunpack.c.h.b16 %v1343
          %v1541 = vunpack.c.l.b16 %v1344
          %v1542 = vunpack.c.h.b16 %v1344
          %v1543 = vunpack.c.l.b16 %v1345
          %v1544 = vunpack.c.h.b16 %v1345
          %v1545 = vunpack.c.l.b16 %v1346
          %v1546 = vunpack.c.h.b16 %v1346
          %v1547 = vunpack.c.l.b16 %v1347
          %v1548 = vunpack.c.h.b16 %v1347
          %v1549 = vunpack.c.l.b16 %v1348
          %v1550 = vunpack.c.h.b16 %v1348
          %v1551 = vunpack.c.l.b16 %v1349
          %v1552 = vunpack.c.h.b16 %v1349
          %v1553 = vunpack.c.l.b16 %v1350
          %v1554 = vunpack.c.h.b16 %v1350
          %v1555 = vpack.c.b16 %v1435, %v1427
          %v1556 = vpack.c.b16 %v1436, %v1428
          %v1557 = vpack.c.b16 %v1437, %v1429
          %v1558 = vpack.c.b16 %v1438, %v1430
          %v1559 = vpack.c.b16 %v1439, %v1431
          %v1560 = vpack.c.b16 %v1440, %v1432
          %v1561 = vpack.c.b16 %v1441, %v1433
          %v1562 = vpack.c.b16 %v1442, %v1434
          %v1563 = vpack.c.b16 %v1451, %v1443
          %v1564 = vpack.c.b16 %v1452, %v1444
          %v1565 = vpack.c.b16 %v1453, %v1445
          %v1566 = vpack.c.b16 %v1454, %v1446
          %v1567 = vpack.c.b16 %v1455, %v1447
          %v1568 = vpack.c.b16 %v1456, %v1448
          %v1569 = vpack.c.b16 %v1457, %v1449
          %v1570 = vpack.c.b16 %v1458, %v1450
          %v1571 = vpack.c.b16 %v1467, %v1459
          %v1572 = vpack.c.b16 %v1468, %v1460
          %v1573 = vpack.c.b16 %v1469, %v1461
          %v1574 = vpack.c.b16 %v1470, %v1462
          %v1575 = vpack.c.b16 %v1471, %v1463
          %v1576 = vpack.c.b16 %v1472, %v1464
          %v1577 = vpack.c.b16 %v1473, %v1465
          %v1578 = vpack.c.b16 %v1474, %v1466
          %v1579 = vpack.c.b16 %v1483, %v1475
          %v1580 = vpack.c.b16 %v1484, %v1476
          %v1581 = vpack.c.b16 %v1485, %v1477
          %v1582 = vpack.c.b16 %v1486, %v1478
          %v1583 = vpack.c.b16 %v1487, %v1479
          %v1584 = vpack.c.b16 %v1488, %v1480
          %v1585 = vpack.c.b16 %v1489, %v1481
          %v1586 = vpack.c.b16 %v1490, %v1482
          %v1587 = vpack.c.b16 %v1499, %v1491
          %v1588 = vpack.c.b16 %v1500, %v1492
          %v1589 = vpack.c.b16 %v1501, %v1493
          %v1590 = vpack.c.b16 %v1502, %v1494
          %v1591 = vpack.c.b16 %v1503, %v1495
          %v1592 = vpack.c.b16 %v1504, %v1496
          %v1593 = vpack.c.b16 %v1505, %v1497
          %v1594 = vpack.c.b16 %v1506, %v1498
          %v1595 = vpack.c.b16 %v1515, %v1507
          %v1596 = vpack.c.b16 %v1516, %v1508
          %v1597 = vpack.c.b16 %v1517, %v1509
          %v1598 = vpack.c.b16 %v1518, %v1510
          %v1599 = vpack.c.b16 %v1519, %v1511
          %v1600 = vpack.c.b16 %v1520, %v1512
          %v1601 = vpack.c.b16 %v1521, %v1513
          %v1602 = vpack.c.b16 %v1522, %v1514
          %v1603 = vpack.c.b16 %v1531, %v1523
          %v1604 = vpack.c.b16 %v1532, %v1524
          %v1605 = vpack.c.b16 %v1533, %v1525
          %v1606 = vpack.c.b16 %v1534, %v1526
          %v1607 = vpack.c.b16 %v1535, %v1527
          %v1608 = vpack.c.b16 %v1536, %v1528
          %v1609 = vpack.c.b16 %v1537, %v1529
          %v1610 = vpack.c.b16 %v1538, %v1530
          %v1611 = vpack.c.b16 %v1547, %v1539
          %v1612 = vpack.c.b16 %v1548, %v1540
          %v1613 = vpack.c.b16 %v1549, %v1541
          %v1614 = vpack.c.b16 %v1550, %v1542
          %v1615 = vpack.c.b16 %v1551, %v1543
          %v1616 = vpack.c.b16 %v1552, %v1544
          %v1617 = vpack.c.b16 %v1553, %v1545
          %v1618 = vpack.c.b16 %v1554, %v1546
          %1683 = vmatprep.subr.bf16.mxu0 %v1556
          %1684 = vmatpush1.bf16.msra.mxu0 %v1555
          %1685 = vmatprep.subr.bf16.mxu0 %v1564
          %1686 = vmatpush1.bf16.msra.mxu0 %v1563
          %1687 = vmatprep.subr.bf16.mxu0 %v1572
          %1688 = vmatpush1.bf16.msra.mxu0 %v1571
          %1689 = vmatprep.subr.bf16.mxu0 %v1580
          %1690 = vmatpush1.bf16.msra.mxu0 %v1579
          %1691 = vmatprep.subr.bf16.mxu0 %v1588
          %1692 = vmatpush1.bf16.msra.mxu0 %v1587
          %1693 = vmatprep.subr.bf16.mxu0 %v1596
          %1694 = vmatpush1.bf16.msra.mxu0 %v1595
          %1695 = vmatprep.subr.bf16.mxu0 %v1604
          %1696 = vmatpush1.bf16.msra.mxu0 %v1603
          %1697 = vmatprep.subr.bf16.mxu0 %v1612
          %1698 = vmatpush1.bf16.msra.mxu0 %v1611
          %1699 = vmatprep.subr.bf16.mxu0 0
          %1700 = vmatpush1.bf16.msra.mxu0 0
          %1701 = vmatprep.subr.bf16.mxu0 0
          %1702 = vmatpush1.bf16.msra.mxu0 0
          %1703 = vmatprep.subr.bf16.mxu0 0
          %1704 = vmatpush1.bf16.msra.mxu0 0
          %1705 = vmatprep.subr.bf16.mxu0 0
          %1706 = vmatpush1.bf16.msra.mxu0 0
          %1707 = vmatprep.subr.bf16.mxu0 0
          %1708 = vmatpush1.bf16.msra.mxu0 0
          %1709 = vmatprep.subr.bf16.mxu0 0
          %1710 = vmatpush1.bf16.msra.mxu0 0
          %1711 = vmatprep.subr.bf16.mxu0 0
          %1712 = vmatpush1.bf16.msra.mxu0 0
          %1713 = vmatprep.subr.bf16.mxu0 0
          %1714 = vmatpush1.bf16.msra.mxu0 0
          %1715 = vmatprep.mubr.bf16.mxu0 0
          %1716 = vmatmul.mubr.bf16.gmra.mrb[0].mxu0 %v1359
          %v1717 = vpop.f32.mrb[0].mxu0
          %v1718 = vadd.f32 0.0, %v1717
          %v1719 = vpop.f32.mrb[0].mxu0
          %v1720 = vadd.f32 0.0, %v1719
          %v1721 = vpop.f32.mrb[0].mxu0
          %v1722 = vadd.f32 0.0, %v1721
          %v1723 = vpop.f32.mrb[0].mxu0
          %v1724 = vadd.f32 0.0, %v1723
          %1725 = vmatprep.mubr.bf16.mxu0 0
          %1726 = vmatmul.mubr.bf16.gmra.mrb[0].mxu0 %v1360
          %v1727 = vpop.f32.mrb[0].mxu0
          %v1728 = vadd.f32 0.0, %v1727
          %v1729 = vpop.f32.mrb[0].mxu0
          %v1730 = vadd.f32 0.0, %v1729
          %v1731 = vpop.f32.mrb[0].mxu0
          %v1732 = vadd.f32 0.0, %v1731
          %v1733 = vpop.f32.mrb[0].mxu0
          %v1734 = vadd.f32 0.0, %v1733
          %1735 = vdwg.mxu0
          %1736 = vmatprep.subr.bf16.mxu0 %v1558
          %1737 = vmatpush1.bf16.msra.mxu0 %v1557
          %1738 = vmatprep.subr.bf16.mxu0 %v1566
          %1739 = vmatpush1.bf16.msra.mxu0 %v1565
          %1740 = vmatprep.subr.bf16.mxu0 %v1574
          %1741 = vmatpush1.bf16.msra.mxu0 %v1573
          %1742 = vmatprep.subr.bf16.mxu0 %v1582
          %1743 = vmatpush1.bf16.msra.mxu0 %v1581
          %1744 = vmatprep.subr.bf16.mxu0 %v1590
          %1745 = vmatpush1.bf16.msra.mxu0 %v1589
          %1746 = vmatprep.subr.bf16.mxu0 %v1598
          %1747 = vmatpush1.bf16.msra.mxu0 %v1597
          %1748 = vmatprep.subr.bf16.mxu0 %v1606
          %1749 = vmatpush1.bf16.msra.mxu0 %v1605
          %1750 = vmatprep.subr.bf16.mxu0 %v1614
          %1751 = vmatpush1.bf16.msra.mxu0 %v1613
          %1752 = vmatprep.subr.bf16.mxu0 0
          %1753 = vmatpush1.bf16.msra.mxu0 0
          %1754 = vmatprep.subr.bf16.mxu0 0
          %1755 = vmatpush1.bf16.msra.mxu0 0
          %1756 = vmatprep.subr.bf16.mxu0 0
          %1757 = vmatpush1.bf16.msra.mxu0 0
          %1758 = vmatprep.subr.bf16.mxu0 0
          %1759 = vmatpush1.bf16.msra.mxu0 0
          %1760 = vmatprep.subr.bf16.mxu0 0
          %1761 = vmatpush1.bf16.msra.mxu0 0
          %1762 = vmatprep.subr.bf16.mxu0 0
          %1763 = vmatpush1.bf16.msra.mxu0 0
          %1764 = vmatprep.subr.bf16.mxu0 0
          %1765 = vmatpush1.bf16.msra.mxu0 0
          %1766 = vmatprep.subr.bf16.mxu0 0
          %1767 = vmatpush1.bf16.msra.mxu0 0
          %1768 = vmatprep.mubr.bf16.mxu0 0
          %1769 = vmatmul.mubr.bf16.gmra.mrb[0].mxu0 %v1359
          %v1770 = vpop.f32.mrb[0].mxu0
          %v1771 = vadd.f32 0.0, %v1770
          %v1772 = vpop.f32.mrb[0].mxu0
          %v1773 = vadd.f32 0.0, %v1772
          %v1774 = vpop.f32.mrb[0].mxu0
          %v1775 = vadd.f32 0.0, %v1774
          %v1776 = vpop.f32.mrb[0].mxu0
          %v1777 = vadd.f32 0.0, %v1776
          %1778 = vmatprep.mubr.bf16.mxu0 0
          %1779 = vmatmul.mubr.bf16.gmra.mrb[0].mxu0 %v1360
          %v1780 = vpop.f32.mrb[0].mxu0
          %v1781 = vadd.f32 0.0, %v1780
          %v1782 = vpop.f32.mrb[0].mxu0
          %v1783 = vadd.f32 0.0, %v1782
          %v1784 = vpop.f32.mrb[0].mxu0
          %v1785 = vadd.f32 0.0, %v1784
          %v1786 = vpop.f32.mrb[0].mxu0
          %v1787 = vadd.f32 0.0, %v1786
          %1788 = vdwg.mxu0
          %1789 = vmatprep.subr.bf16.mxu0 %v1560
          %1790 = vmatpush1.bf16.msra.mxu0 %v1559
          %1791 = vmatprep.subr.bf16.mxu0 %v1568
          %1792 = vmatpush1.bf16.msra.mxu0 %v1567
          %1793 = vmatprep.subr.bf16.mxu0 %v1576
          %1794 = vmatpush1.bf16.msra.mxu0 %v1575
          %1795 = vmatprep.subr.bf16.mxu0 %v1584
          %1796 = vmatpush1.bf16.msra.mxu0 %v1583
          %1797 = vmatprep.subr.bf16.mxu0 %v1592
          %1798 = vmatpush1.bf16.msra.mxu0 %v1591
          %1799 = vmatprep.subr.bf16.mxu0 %v1600
          %1800 = vmatpush1.bf16.msra.mxu0 %v1599
          %1801 = vmatprep.subr.bf16.mxu0 %v1608
          %1802 = vmatpush1.bf16.msra.mxu0 %v1607
          %1803 = vmatprep.subr.bf16.mxu0 %v1616
          %1804 = vmatpush1.bf16.msra.mxu0 %v1615
          %1805 = vmatprep.subr.bf16.mxu0 0
          %1806 = vmatpush1.bf16.msra.mxu0 0
          %1807 = vmatprep.subr.bf16.mxu0 0
          %1808 = vmatpush1.bf16.msra.mxu0 0
          %1809 = vmatprep.subr.bf16.mxu0 0
          %1810 = vmatpush1.bf16.msra.mxu0 0
          %1811 = vmatprep.subr.bf16.mxu0 0
          %1812 = vmatpush1.bf16.msra.mxu0 0
          %1813 = vmatprep.subr.bf16.mxu0 0
          %1814 = vmatpush1.bf16.msra.mxu0 0
          %1815 = vmatprep.subr.bf16.mxu0 0
          %1816 = vmatpush1.bf16.msra.mxu0 0
          %1817 = vmatprep.subr.bf16.mxu0 0
          %1818 = vmatpush1.bf16.msra.mxu0 0
          %1819 = vmatprep.subr.bf16.mxu0 0
          %1820 = vmatpush1.bf16.msra.mxu0 0
          %1821 = vmatprep.mubr.bf16.mxu0 0
          %1822 = vmatmul.mubr.bf16.gmra.mrb[0].mxu0 %v1359
          %v1823 = vpop.f32.mrb[0].mxu0
          %v1824 = vadd.f32 0.0, %v1823
          %v1825 = vpop.f32.mrb[0].mxu0
          %v1826 = vadd.f32 0.0, %v1825
          %v1827 = vpop.f32.mrb[0].mxu0
          %v1828 = vadd.f32 0.0, %v1827
          %v1829 = vpop.f32.mrb[0].mxu0
          %v1830 = vadd.f32 0.0, %v1829
          %1831 = vmatprep.mubr.bf16.mxu0 0
          %1832 = vmatmul.mubr.bf16.gmra.mrb[0].mxu0 %v1360
          %v1833 = vpop.f32.mrb[0].mxu0
          %v1834 = vadd.f32 0.0, %v1833
          %v1835 = vpop.f32.mrb[0].mxu0
          %v1836 = vadd.f32 0.0, %v1835
          %v1837 = vpop.f32.mrb[0].mxu0
          %v1838 = vadd.f32 0.0, %v1837
          %v1839 = vpop.f32.mrb[0].mxu0
          %v1840 = vadd.f32 0.0, %v1839
          %1841 = vdwg.mxu0
          %1842 = vmatprep.subr.bf16.mxu0 %v1562
          %1843 = vmatpush1.bf16.msra.mxu0 %v1561
          %1844 = vmatprep.subr.bf16.mxu0 %v1570
          %1845 = vmatpush1.bf16.msra.mxu0 %v1569
          %1846 = vmatprep.subr.bf16.mxu0 %v1578
          %1847 = vmatpush1.bf16.msra.mxu0 %v1577
          %1848 = vmatprep.subr.bf16.mxu0 %v1586
          %1849 = vmatpush1.bf16.msra.mxu0 %v1585
          %1850 = vmatprep.subr.bf16.mxu0 %v1594
          %1851 = vmatpush1.bf16.msra.mxu0 %v1593
          %1852 = vmatprep.subr.bf16.mxu0 %v1602
          %1853 = vmatpush1.bf16.msra.mxu0 %v1601
          %1854 = vmatprep.subr.bf16.mxu0 %v1610
          %1855 = vmatpush1.bf16.msra.mxu0 %v1609
          %1856 = vmatprep.subr.bf16.mxu0 %v1618
          %1857 = vmatpush1.bf16.msra.mxu0 %v1617
          %1858 = vmatprep.subr.bf16.mxu0 0
          %1859 = vmatpush1.bf16.msra.mxu0 0
          %1860 = vmatprep.subr.bf16.mxu0 0
          %1861 = vmatpush1.bf16.msra.mxu0 0
          %1862 = vmatprep.subr.bf16.mxu0 0
          %1863 = vmatpush1.bf16.msra.mxu0 0
          %1864 = vmatprep.subr.bf16.mxu0 0
          %1865 = vmatpush1.bf16.msra.mxu0 0
          %1866 = vmatprep.subr.bf16.mxu0 0
          %1867 = vmatpush1.bf16.msra.mxu0 0
          %1868 = vmatprep.subr.bf16.mxu0 0
          %1869 = vmatpush1.bf16.msra.mxu0 0
          %1870 = vmatprep.subr.bf16.mxu0 0
          %1871 = vmatpush1.bf16.msra.mxu0 0
          %1872 = vmatprep.subr.bf16.mxu0 0
          %1873 = vmatpush1.bf16.msra.mxu0 0
          %1874 = vmatprep.mubr.bf16.mxu0 0
          %1875 = vmatmul.mubr.bf16.gmra.mrb[0].mxu0 %v1359
          %v1876 = vpop.f32.mrb[0].mxu0
          %v1877 = vadd.f32 0.0, %v1876
          %v1878 = vpop.f32.mrb[0].mxu0
          %v1879 = vadd.f32 0.0, %v1878
          %v1880 = vpop.f32.mrb[0].mxu0
          %v1881 = vadd.f32 0.0, %v1880
          %v1882 = vpop.f32.mrb[0].mxu0
          %v1883 = vadd.f32 0.0, %v1882
          %1884 = vmatprep.mubr.bf16.mxu0 0
          %1885 = vmatmul.mubr.bf16.gmra.mrb[0].mxu0 %v1360
          %v1886 = vpop.f32.mrb[0].mxu0
          %v1887 = vadd.f32 0.0, %v1886
          %v1888 = vpop.f32.mrb[0].mxu0
          %v1889 = vadd.f32 0.0, %v1888
          %v1890 = vpop.f32.mrb[0].mxu0
          %v1891 = vadd.f32 0.0, %v1890
          %v1892 = vpop.f32.mrb[0].mxu0
          %v1893 = vadd.f32 0.0, %v1892
          %1894 = vdwg.mxu0
          %v1899 = vunpack.c.l.b16 %v1212
          %v1900 = vunpack.c.l.b16 %v1213
          %v1901 = vunpack.c.l.b16 %v1214
          %v1902 = vunpack.c.l.b16 %v1215
          %v1903 = vpack.c.b16 %v1900, %v1899
          %v1904 = vpack.c.b16 %v1902, %v1901
          %v1971 = vunpack.c.l.b16 %v1217
          %v1972 = vunpack.c.h.b16 %v1217
          %v1973 = vunpack.c.l.b16 %v1218
          %v1974 = vunpack.c.h.b16 %v1218
          %v1975 = vunpack.c.l.b16 %v1219
          %v1976 = vunpack.c.h.b16 %v1219
          %v1977 = vunpack.c.l.b16 %v1220
          %v1978 = vunpack.c.h.b16 %v1220
          %v1979 = vunpack.c.l.b16 %v1221
          %v1980 = vunpack.c.h.b16 %v1221
          %v1981 = vunpack.c.l.b16 %v1222
          %v1982 = vunpack.c.h.b16 %v1222
          %v1983 = vunpack.c.l.b16 %v1223
          %v1984 = vunpack.c.h.b16 %v1223
          %v1985 = vunpack.c.l.b16 %v1224
          %v1986 = vunpack.c.h.b16 %v1224
          %v1987 = vunpack.c.l.b16 %v1225
          %v1988 = vunpack.c.h.b16 %v1225
          %v1989 = vunpack.c.l.b16 %v1226
          %v1990 = vunpack.c.h.b16 %v1226
          %v1991 = vunpack.c.l.b16 %v1227
          %v1992 = vunpack.c.h.b16 %v1227
          %v1993 = vunpack.c.l.b16 %v1228
          %v1994 = vunpack.c.h.b16 %v1228
          %v1995 = vunpack.c.l.b16 %v1229
          %v1996 = vunpack.c.h.b16 %v1229
          %v1997 = vunpack.c.l.b16 %v1230
          %v1998 = vunpack.c.h.b16 %v1230
          %v1999 = vunpack.c.l.b16 %v1231
          %v2000 = vunpack.c.h.b16 %v1231
          %v2001 = vunpack.c.l.b16 %v1232
          %v2002 = vunpack.c.h.b16 %v1232
          %v2003 = vunpack.c.l.b16 %v1233
          %v2004 = vunpack.c.h.b16 %v1233
          %v2005 = vunpack.c.l.b16 %v1234
          %v2006 = vunpack.c.h.b16 %v1234
          %v2007 = vunpack.c.l.b16 %v1235
          %v2008 = vunpack.c.h.b16 %v1235
          %v2009 = vunpack.c.l.b16 %v1236
          %v2010 = vunpack.c.h.b16 %v1236
          %v2011 = vunpack.c.l.b16 %v1237
          %v2012 = vunpack.c.h.b16 %v1237
          %v2013 = vunpack.c.l.b16 %v1238
          %v2014 = vunpack.c.h.b16 %v1238
          %v2015 = vunpack.c.l.b16 %v1239
          %v2016 = vunpack.c.h.b16 %v1239
          %v2017 = vunpack.c.l.b16 %v1240
          %v2018 = vunpack.c.h.b16 %v1240
          %v2019 = vunpack.c.l.b16 %v1241
          %v2020 = vunpack.c.h.b16 %v1241
          %v2021 = vunpack.c.l.b16 %v1242
          %v2022 = vunpack.c.h.b16 %v1242
          %v2023 = vunpack.c.l.b16 %v1243
          %v2024 = vunpack.c.h.b16 %v1243
          %v2025 = vunpack.c.l.b16 %v1244
          %v2026 = vunpack.c.h.b16 %v1244
          %v2027 = vunpack.c.l.b16 %v1245
          %v2028 = vunpack.c.h.b16 %v1245
          %v2029 = vunpack.c.l.b16 %v1246
          %v2030 = vunpack.c.h.b16 %v1246
          %v2031 = vunpack.c.l.b16 %v1247
          %v2032 = vunpack.c.h.b16 %v1247
          %v2033 = vunpack.c.l.b16 %v1248
          %v2034 = vunpack.c.h.b16 %v1248
          %v2035 = vunpack.c.l.b16 %v1249
          %v2036 = vunpack.c.h.b16 %v1249
          %v2037 = vunpack.c.l.b16 %v1250
          %v2038 = vunpack.c.h.b16 %v1250
          %v2039 = vunpack.c.l.b16 %v1251
          %v2040 = vunpack.c.h.b16 %v1251
          %v2041 = vunpack.c.l.b16 %v1252
          %v2042 = vunpack.c.h.b16 %v1252
          %v2043 = vunpack.c.l.b16 %v1253
          %v2044 = vunpack.c.h.b16 %v1253
          %v2045 = vunpack.c.l.b16 %v1254
          %v2046 = vunpack.c.h.b16 %v1254
          %v2047 = vunpack.c.l.b16 %v1255
          %v2048 = vunpack.c.h.b16 %v1255
          %v2049 = vunpack.c.l.b16 %v1256
          %v2050 = vunpack.c.h.b16 %v1256
          %v2051 = vunpack.c.l.b16 %v1257
          %v2052 = vunpack.c.h.b16 %v1257
          %v2053 = vunpack.c.l.b16 %v1258
          %v2054 = vunpack.c.h.b16 %v1258
          %v2055 = vunpack.c.l.b16 %v1259
          %v2056 = vunpack.c.h.b16 %v1259
          %v2057 = vunpack.c.l.b16 %v1260
          %v2058 = vunpack.c.h.b16 %v1260
          %v2059 = vunpack.c.l.b16 %v1261
          %v2060 = vunpack.c.h.b16 %v1261
          %v2061 = vunpack.c.l.b16 %v1262
          %v2062 = vunpack.c.h.b16 %v1262
          %v2063 = vunpack.c.l.b16 %v1263
          %v2064 = vunpack.c.h.b16 %v1263
          %v2065 = vunpack.c.l.b16 %v1264
          %v2066 = vunpack.c.h.b16 %v1264
          %v2067 = vunpack.c.l.b16 %v1265
          %v2068 = vunpack.c.h.b16 %v1265
          %v2069 = vunpack.c.l.b16 %v1266
          %v2070 = vunpack.c.h.b16 %v1266
          %v2071 = vunpack.c.l.b16 %v1267
          %v2072 = vunpack.c.h.b16 %v1267
          %v2073 = vunpack.c.l.b16 %v1268
          %v2074 = vunpack.c.h.b16 %v1268
          %v2075 = vunpack.c.l.b16 %v1269
          %v2076 = vunpack.c.h.b16 %v1269
          %v2077 = vunpack.c.l.b16 %v1270
          %v2078 = vunpack.c.h.b16 %v1270
          %v2079 = vunpack.c.l.b16 %v1271
          %v2080 = vunpack.c.h.b16 %v1271
          %v2081 = vunpack.c.l.b16 %v1272
          %v2082 = vunpack.c.h.b16 %v1272
          %v2083 = vunpack.c.l.b16 %v1273
          %v2084 = vunpack.c.h.b16 %v1273
          %v2085 = vunpack.c.l.b16 %v1274
          %v2086 = vunpack.c.h.b16 %v1274
          %v2087 = vunpack.c.l.b16 %v1275
          %v2088 = vunpack.c.h.b16 %v1275
          %v2089 = vunpack.c.l.b16 %v1276
          %v2090 = vunpack.c.h.b16 %v1276
          %v2091 = vunpack.c.l.b16 %v1277
          %v2092 = vunpack.c.h.b16 %v1277
          %v2093 = vunpack.c.l.b16 %v1278
          %v2094 = vunpack.c.h.b16 %v1278
          %v2095 = vunpack.c.l.b16 %v1279
          %v2096 = vunpack.c.h.b16 %v1279
          %v2097 = vunpack.c.l.b16 %v1280
          %v2098 = vunpack.c.h.b16 %v1280
          %v2099 = vpack.c.b16 %v1979, %v1971
          %v2100 = vpack.c.b16 %v1980, %v1972
          %v2101 = vpack.c.b16 %v1981, %v1973
          %v2102 = vpack.c.b16 %v1982, %v1974
          %v2103 = vpack.c.b16 %v1983, %v1975
          %v2104 = vpack.c.b16 %v1984, %v1976
          %v2105 = vpack.c.b16 %v1985, %v1977
          %v2106 = vpack.c.b16 %v1986, %v1978
          %v2107 = vpack.c.b16 %v1995, %v1987
          %v2108 = vpack.c.b16 %v1996, %v1988
          %v2109 = vpack.c.b16 %v1997, %v1989
          %v2110 = vpack.c.b16 %v1998, %v1990
          %v2111 = vpack.c.b16 %v1999, %v1991
          %v2112 = vpack.c.b16 %v2000, %v1992
          %v2113 = vpack.c.b16 %v2001, %v1993
          %v2114 = vpack.c.b16 %v2002, %v1994
          %v2115 = vpack.c.b16 %v2011, %v2003
          %v2116 = vpack.c.b16 %v2012, %v2004
          %v2117 = vpack.c.b16 %v2013, %v2005
          %v2118 = vpack.c.b16 %v2014, %v2006
          %v2119 = vpack.c.b16 %v2015, %v2007
          %v2120 = vpack.c.b16 %v2016, %v2008
          %v2121 = vpack.c.b16 %v2017, %v2009
          %v2122 = vpack.c.b16 %v2018, %v2010
          %v2123 = vpack.c.b16 %v2027, %v2019
          %v2124 = vpack.c.b16 %v2028, %v2020
          %v2125 = vpack.c.b16 %v2029, %v2021
          %v2126 = vpack.c.b16 %v2030, %v2022
          %v2127 = vpack.c.b16 %v2031, %v2023
          %v2128 = vpack.c.b16 %v2032, %v2024
          %v2129 = vpack.c.b16 %v2033, %v2025
          %v2130 = vpack.c.b16 %v2034, %v2026
          %v2131 = vpack.c.b16 %v2043, %v2035
          %v2132 = vpack.c.b16 %v2044, %v2036
          %v2133 = vpack.c.b16 %v2045, %v2037
          %v2134 = vpack.c.b16 %v2046, %v2038
          %v2135 = vpack.c.b16 %v2047, %v2039
          %v2136 = vpack.c.b16 %v2048, %v2040
          %v2137 = vpack.c.b16 %v2049, %v2041
          %v2138 = vpack.c.b16 %v2050, %v2042
          %v2139 = vpack.c.b16 %v2059, %v2051
          %v2140 = vpack.c.b16 %v2060, %v2052
          %v2141 = vpack.c.b16 %v2061, %v2053
          %v2142 = vpack.c.b16 %v2062, %v2054
          %v2143 = vpack.c.b16 %v2063, %v2055
          %v2144 = vpack.c.b16 %v2064, %v2056
          %v2145 = vpack.c.b16 %v2065, %v2057
          %v2146 = vpack.c.b16 %v2066, %v2058
          %v2147 = vpack.c.b16 %v2075, %v2067
          %v2148 = vpack.c.b16 %v2076, %v2068
          %v2149 = vpack.c.b16 %v2077, %v2069
          %v2150 = vpack.c.b16 %v2078, %v2070
          %v2151 = vpack.c.b16 %v2079, %v2071
          %v2152 = vpack.c.b16 %v2080, %v2072
          %v2153 = vpack.c.b16 %v2081, %v2073
          %v2154 = vpack.c.b16 %v2082, %v2074
          %v2155 = vpack.c.b16 %v2091, %v2083
          %v2156 = vpack.c.b16 %v2092, %v2084
          %v2157 = vpack.c.b16 %v2093, %v2085
          %v2158 = vpack.c.b16 %v2094, %v2086
          %v2159 = vpack.c.b16 %v2095, %v2087
          %v2160 = vpack.c.b16 %v2096, %v2088
          %v2161 = vpack.c.b16 %v2097, %v2089
          %v2162 = vpack.c.b16 %v2098, %v2090
          %2227 = vmatprep.subr.bf16.mxu0 %v2100
          %2228 = vmatpush1.bf16.msra.mxu0 %v2099
          %2229 = vmatprep.subr.bf16.mxu0 %v2108
          %2230 = vmatpush1.bf16.msra.mxu0 %v2107
          %2231 = vmatprep.subr.bf16.mxu0 %v2116
          %2232 = vmatpush1.bf16.msra.mxu0 %v2115
          %2233 = vmatprep.subr.bf16.mxu0 %v2124
          %2234 = vmatpush1.bf16.msra.mxu0 %v2123
          %2235 = vmatprep.subr.bf16.mxu0 %v2132
          %2236 = vmatpush1.bf16.msra.mxu0 %v2131
          %2237 = vmatprep.subr.bf16.mxu0 %v2140
          %2238 = vmatpush1.bf16.msra.mxu0 %v2139
          %2239 = vmatprep.subr.bf16.mxu0 %v2148
          %2240 = vmatpush1.bf16.msra.mxu0 %v2147
          %2241 = vmatprep.subr.bf16.mxu0 %v2156
          %2242 = vmatpush1.bf16.msra.mxu0 %v2155
          %2243 = vmatprep.subr.bf16.mxu0 0
          %2244 = vmatpush1.bf16.msra.mxu0 0
          %2245 = vmatprep.subr.bf16.mxu0 0
          %2246 = vmatpush1.bf16.msra.mxu0 0
          %2247 = vmatprep.subr.bf16.mxu0 0
          %2248 = vmatpush1.bf16.msra.mxu0 0
          %2249 = vmatprep.subr.bf16.mxu0 0
          %2250 = vmatpush1.bf16.msra.mxu0 0
          %2251 = vmatprep.subr.bf16.mxu0 0
          %2252 = vmatpush1.bf16.msra.mxu0 0
          %2253 = vmatprep.subr.bf16.mxu0 0
          %2254 = vmatpush1.bf16.msra.mxu0 0
          %2255 = vmatprep.subr.bf16.mxu0 0
          %2256 = vmatpush1.bf16.msra.mxu0 0
          %2257 = vmatprep.subr.bf16.mxu0 0
          %2258 = vmatpush1.bf16.msra.mxu0 0
          %2259 = vmatprep.mubr.bf16.mxu0 0
          %2260 = vmatmul.mubr.bf16.gmra.mrb[0].mxu0 %v1903
          %v2261 = vpop.f32.mrb[0].mxu0
          %v2262 = vadd.f32 %v1718, %v2261
          %v2263 = vpop.f32.mrb[0].mxu0
          %v2264 = vadd.f32 %v1720, %v2263
          %v2265 = vpop.f32.mrb[0].mxu0
          %v2266 = vadd.f32 %v1722, %v2265
          %v2267 = vpop.f32.mrb[0].mxu0
          %v2268 = vadd.f32 %v1724, %v2267
          %2269 = vmatprep.mubr.bf16.mxu0 0
          %2270 = vmatmul.mubr.bf16.gmra.mrb[0].mxu0 %v1904
          %v2271 = vpop.f32.mrb[0].mxu0
          %v2272 = vadd.f32 %v1728, %v2271
          %v2273 = vpop.f32.mrb[0].mxu0
          %v2274 = vadd.f32 %v1730, %v2273
          %v2275 = vpop.f32.mrb[0].mxu0
          %v2276 = vadd.f32 %v1732, %v2275
          %v2277 = vpop.f32.mrb[0].mxu0
          %v2278 = vadd.f32 %v1734, %v2277
          %2279 = vdwg.mxu0
          %2280 = vmatprep.subr.bf16.mxu0 %v2102
          %2281 = vmatpush1.bf16.msra.mxu0 %v2101
          %2282 = vmatprep.subr.bf16.mxu0 %v2110
          %2283 = vmatpush1.bf16.msra.mxu0 %v2109
          %2284 = vmatprep.subr.bf16.mxu0 %v2118
          %2285 = vmatpush1.bf16.msra.mxu0 %v2117
          %2286 = vmatprep.subr.bf16.mxu0 %v2126
          %2287 = vmatpush1.bf16.msra.mxu0 %v2125
          %2288 = vmatprep.subr.bf16.mxu0 %v2134
          %2289 = vmatpush1.bf16.msra.mxu0 %v2133
          %2290 = vmatprep.subr.bf16.mxu0 %v2142
          %2291 = vmatpush1.bf16.msra.mxu0 %v2141
          %2292 = vmatprep.subr.bf16.mxu0 %v2150
          %2293 = vmatpush1.bf16.msra.mxu0 %v2149
          %2294 = vmatprep.subr.bf16.mxu0 %v2158
          %2295 = vmatpush1.bf16.msra.mxu0 %v2157
          %2296 = vmatprep.subr.bf16.mxu0 0
          %2297 = vmatpush1.bf16.msra.mxu0 0
          %2298 = vmatprep.subr.bf16.mxu0 0
          %2299 = vmatpush1.bf16.msra.mxu0 0
          %2300 = vmatprep.subr.bf16.mxu0 0
          %2301 = vmatpush1.bf16.msra.mxu0 0
          %2302 = vmatprep.subr.bf16.mxu0 0
          %2303 = vmatpush1.bf16.msra.mxu0 0
          %2304 = vmatprep.subr.bf16.mxu0 0
          %2305 = vmatpush1.bf16.msra.mxu0 0
          %2306 = vmatprep.subr.bf16.mxu0 0
          %2307 = vmatpush1.bf16.msra.mxu0 0
          %2308 = vmatprep.subr.bf16.mxu0 0
          %2309 = vmatpush1.bf16.msra.mxu0 0
          %2310 = vmatprep.subr.bf16.mxu0 0
          %2311 = vmatpush1.bf16.msra.mxu0 0
          %2312 = vmatprep.mubr.bf16.mxu0 0
          %2313 = vmatmul.mubr.bf16.gmra.mrb[0].mxu0 %v1903
          %v2314 = vpop.f32.mrb[0].mxu0
          %v2315 = vadd.f32 %v1771, %v2314
          %v2316 = vpop.f32.mrb[0].mxu0
          %v2317 = vadd.f32 %v1773, %v2316
          %v2318 = vpop.f32.mrb[0].mxu0
          %v2319 = vadd.f32 %v1775, %v2318
          %v2320 = vpop.f32.mrb[0].mxu0
          %v2321 = vadd.f32 %v1777, %v2320
          %2322 = vmatprep.mubr.bf16.mxu0 0
          %2323 = vmatmul.mubr.bf16.gmra.mrb[0].mxu0 %v1904
          %v2324 = vpop.f32.mrb[0].mxu0
          %v2325 = vadd.f32 %v1781, %v2324
          %v2326 = vpop.f32.mrb[0].mxu0
          %v2327 = vadd.f32 %v1783, %v2326
          %v2328 = vpop.f32.mrb[0].mxu0
          %v2329 = vadd.f32 %v1785, %v2328
          %v2330 = vpop.f32.mrb[0].mxu0
          %v2331 = vadd.f32 %v1787, %v2330
          %2332 = vdwg.mxu0
          %2333 = vmatprep.subr.bf16.mxu0 %v2104
          %2334 = vmatpush1.bf16.msra.mxu0 %v2103
          %2335 = vmatprep.subr.bf16.mxu0 %v2112
          %2336 = vmatpush1.bf16.msra.mxu0 %v2111
          %2337 = vmatprep.subr.bf16.mxu0 %v2120
          %2338 = vmatpush1.bf16.msra.mxu0 %v2119
          %2339 = vmatprep.subr.bf16.mxu0 %v2128
          %2340 = vmatpush1.bf16.msra.mxu0 %v2127
          %2341 = vmatprep.subr.bf16.mxu0 %v2136
          %2342 = vmatpush1.bf16.msra.mxu0 %v2135
          %2343 = vmatprep.subr.bf16.mxu0 %v2144
          %2344 = vmatpush1.bf16.msra.mxu0 %v2143
          %2345 = vmatprep.subr.bf16.mxu0 %v2152
          %2346 = vmatpush1.bf16.msra.mxu0 %v2151
          %2347 = vmatprep.subr.bf16.mxu0 %v2160
          %2348 = vmatpush1.bf16.msra.mxu0 %v2159
          %2349 = vmatprep.subr.bf16.mxu0 0
          %2350 = vmatpush1.bf16.msra.mxu0 0
          %2351 = vmatprep.subr.bf16.mxu0 0
          %2352 = vmatpush1.bf16.msra.mxu0 0
          %2353 = vmatprep.subr.bf16.mxu0 0
          %2354 = vmatpush1.bf16.msra.mxu0 0
          %2355 = vmatprep.subr.bf16.mxu0 0
          %2356 = vmatpush1.bf16.msra.mxu0 0
          %2357 = vmatprep.subr.bf16.mxu0 0
          %2358 = vmatpush1.bf16.msra.mxu0 0
          %2359 = vmatprep.subr.bf16.mxu0 0
          %2360 = vmatpush1.bf16.msra.mxu0 0
          %2361 = vmatprep.subr.bf16.mxu0 0
          %2362 = vmatpush1.bf16.msra.mxu0 0
          %2363 = vmatprep.subr.bf16.mxu0 0
          %2364 = vmatpush1.bf16.msra.mxu0 0
          %2365 = vmatprep.mubr.bf16.mxu0 0
          %2366 = vmatmul.mubr.bf16.gmra.mrb[0].mxu0 %v1903
          %v2367 = vpop.f32.mrb[0].mxu0
          %v2368 = vadd.f32 %v1824, %v2367
          %v2369 = vpop.f32.mrb[0].mxu0
          %v2370 = vadd.f32 %v1826, %v2369
          %v2371 = vpop.f32.mrb[0].mxu0
          %v2372 = vadd.f32 %v1828, %v2371
          %v2373 = vpop.f32.mrb[0].mxu0
          %v2374 = vadd.f32 %v1830, %v2373
          %2375 = vmatprep.mubr.bf16.mxu0 0
          %2376 = vmatmul.mubr.bf16.gmra.mrb[0].mxu0 %v1904
          %v2377 = vpop.f32.mrb[0].mxu0
          %v2378 = vadd.f32 %v1834, %v2377
          %v2379 = vpop.f32.mrb[0].mxu0
          %v2380 = vadd.f32 %v1836, %v2379
          %v2381 = vpop.f32.mrb[0].mxu0
          %v2382 = vadd.f32 %v1838, %v2381
          %v2383 = vpop.f32.mrb[0].mxu0
          %v2384 = vadd.f32 %v1840, %v2383
          %2385 = vdwg.mxu0
          %2386 = vmatprep.subr.bf16.mxu0 %v2106
          %2387 = vmatpush1.bf16.msra.mxu0 %v2105
          %2388 = vmatprep.subr.bf16.mxu0 %v2114
          %2389 = vmatpush1.bf16.msra.mxu0 %v2113
          %2390 = vmatprep.subr.bf16.mxu0 %v2122
          %2391 = vmatpush1.bf16.msra.mxu0 %v2121
          %2392 = vmatprep.subr.bf16.mxu0 %v2130
          %2393 = vmatpush1.bf16.msra.mxu0 %v2129
          %2394 = vmatprep.subr.bf16.mxu0 %v2138
          %2395 = vmatpush1.bf16.msra.mxu0 %v2137
          %2396 = vmatprep.subr.bf16.mxu0 %v2146
          %2397 = vmatpush1.bf16.msra.mxu0 %v2145
          %2398 = vmatprep.subr.bf16.mxu0 %v2154
          %2399 = vmatpush1.bf16.msra.mxu0 %v2153
          %2400 = vmatprep.subr.bf16.mxu0 %v2162
          %2401 = vmatpush1.bf16.msra.mxu0 %v2161
          %2402 = vmatprep.subr.bf16.mxu0 0
          %2403 = vmatpush1.bf16.msra.mxu0 0
          %2404 = vmatprep.subr.bf16.mxu0 0
          %2405 = vmatpush1.bf16.msra.mxu0 0
          %2406 = vmatprep.subr.bf16.mxu0 0
          %2407 = vmatpush1.bf16.msra.mxu0 0
          %2408 = vmatprep.subr.bf16.mxu0 0
          %2409 = vmatpush1.bf16.msra.mxu0 0
          %2410 = vmatprep.subr.bf16.mxu0 0
          %2411 = vmatpush1.bf16.msra.mxu0 0
          %2412 = vmatprep.subr.bf16.mxu0 0
          %2413 = vmatpush1.bf16.msra.mxu0 0
          %2414 = vmatprep.subr.bf16.mxu0 0
          %2415 = vmatpush1.bf16.msra.mxu0 0
          %2416 = vmatprep.subr.bf16.mxu0 0
          %2417 = vmatpush1.bf16.msra.mxu0 0
          %2418 = vmatprep.mubr.bf16.mxu0 0
          %2419 = vmatmul.mubr.bf16.gmra.mrb[0].mxu0 %v1903
          %v2420 = vpop.f32.mrb[0].mxu0
          %v2421 = vadd.f32 %v1877, %v2420
          %v2422 = vpop.f32.mrb[0].mxu0
          %v2423 = vadd.f32 %v1879, %v2422
          %v2424 = vpop.f32.mrb[0].mxu0
          %v2425 = vadd.f32 %v1881, %v2424
          %v2426 = vpop.f32.mrb[0].mxu0
          %v2427 = vadd.f32 %v1883, %v2426
          %2428 = vmatprep.mubr.bf16.mxu0 0
          %2429 = vmatmul.mubr.bf16.gmra.mrb[0].mxu0 %v1904
          %v2430 = vpop.f32.mrb[0].mxu0
          %v2431 = vadd.f32 %v1887, %v2430
          %v2432 = vpop.f32.mrb[0].mxu0
          %v2433 = vadd.f32 %v1889, %v2432
          %v2434 = vpop.f32.mrb[0].mxu0
          %v2435 = vadd.f32 %v1891, %v2434
          %v2436 = vpop.f32.mrb[0].mxu0
          %v2437 = vadd.f32 %v1893, %v2436
          %2438 = vdwg.mxu0
          %s2439 = scalar_lea.vmem [#allocation2], 32
          %v2440 = vld [vmem:[%s2439] sm:$0xf]
          %v2441 = vld [vmem:[%s2439 + $0x4] sm:$0xf]
          %v2442 = vld [vmem:[%s2439 + $0x8] sm:$0xf]
          %v2443 = vld [vmem:[%s2439 + $0xc] sm:$0xf]
          %s2444 = scalar_lea.vmem %s224, 1536 [#allocation5]
          %v2445 = vld [vmem:[%s2444] sm:$0xff]
          %v2446 = vld [vmem:[%s2444 + $0x8] sm:$0xff]
          %v2447 = vld [vmem:[%s2444 + $0x10] sm:$0xff]
          %v2448 = vld [vmem:[%s2444 + $0x18] sm:$0xff]
          %v2449 = vld [vmem:[%s2444 + $0x20] sm:$0xff]
          %v2450 = vld [vmem:[%s2444 + $0x28] sm:$0xff]
          %v2451 = vld [vmem:[%s2444 + $0x30] sm:$0xff]
          %v2452 = vld [vmem:[%s2444 + $0x38] sm:$0xff]
          %v2453 = vld [vmem:[%s2444 + $0x40] sm:$0xff]
          %v2454 = vld [vmem:[%s2444 + $0x48] sm:$0xff]
          %v2455 = vld [vmem:[%s2444 + $0x50] sm:$0xff]
          %v2456 = vld [vmem:[%s2444 + $0x58] sm:$0xff]
          %v2457 = vld [vmem:[%s2444 + $0x60] sm:$0xff]
          %v2458 = vld [vmem:[%s2444 + $0x68] sm:$0xff]
          %v2459 = vld [vmem:[%s2444 + $0x70] sm:$0xff]
          %v2460 = vld [vmem:[%s2444 + $0x78] sm:$0xff]
          %v2461 = vld [vmem:[%s2444 + $0x80] sm:$0xff]
          %v2462 = vld [vmem:[%s2444 + $0x88] sm:$0xff]
          %v2463 = vld [vmem:[%s2444 + $0x90] sm:$0xff]
          %v2464 = vld [vmem:[%s2444 + $0x98] sm:$0xff]
          %v2465 = vld [vmem:[%s2444 + $0xa0] sm:$0xff]
          %v2466 = vld [vmem:[%s2444 + $0xa8] sm:$0xff]
          %v2467 = vld [vmem:[%s2444 + $0xb0] sm:$0xff]
          %v2468 = vld [vmem:[%s2444 + $0xb8] sm:$0xff]
          %v2469 = vld [vmem:[%s2444 + $0xc0] sm:$0xff]
          %v2470 = vld [vmem:[%s2444 + $0xc8] sm:$0xff]
          %v2471 = vld [vmem:[%s2444 + $0xd0] sm:$0xff]
          %v2472 = vld [vmem:[%s2444 + $0xd8] sm:$0xff]
          %v2473 = vld [vmem:[%s2444 + $0xe0] sm:$0xff]
          %v2474 = vld [vmem:[%s2444 + $0xe8] sm:$0xff]
          %v2475 = vld [vmem:[%s2444 + $0xf0] sm:$0xff]
          %v2476 = vld [vmem:[%s2444 + $0xf8] sm:$0xff]
          %v2477 = vld [vmem:[%s2444 + $0x100] sm:$0xff]
          %v2478 = vld [vmem:[%s2444 + $0x108] sm:$0xff]
          %v2479 = vld [vmem:[%s2444 + $0x110] sm:$0xff]
          %v2480 = vld [vmem:[%s2444 + $0x118] sm:$0xff]
          %v2481 = vld [vmem:[%s2444 + $0x120] sm:$0xff]
          %v2482 = vld [vmem:[%s2444 + $0x128] sm:$0xff]
          %v2483 = vld [vmem:[%s2444 + $0x130] sm:$0xff]
          %v2484 = vld [vmem:[%s2444 + $0x138] sm:$0xff]
          %v2485 = vld [vmem:[%s2444 + $0x140] sm:$0xff]
          %v2486 = vld [vmem:[%s2444 + $0x148] sm:$0xff]
          %v2487 = vld [vmem:[%s2444 + $0x150] sm:$0xff]
          %v2488 = vld [vmem:[%s2444 + $0x158] sm:$0xff]
          %v2489 = vld [vmem:[%s2444 + $0x160] sm:$0xff]
          %v2490 = vld [vmem:[%s2444 + $0x168] sm:$0xff]
          %v2491 = vld [vmem:[%s2444 + $0x170] sm:$0xff]
          %v2492 = vld [vmem:[%s2444 + $0x178] sm:$0xff]
          %v2493 = vld [vmem:[%s2444 + $0x180] sm:$0xff]
          %v2494 = vld [vmem:[%s2444 + $0x188] sm:$0xff]
          %v2495 = vld [vmem:[%s2444 + $0x190] sm:$0xff]
          %v2496 = vld [vmem:[%s2444 + $0x198] sm:$0xff]
          %v2497 = vld [vmem:[%s2444 + $0x1a0] sm:$0xff]
          %v2498 = vld [vmem:[%s2444 + $0x1a8] sm:$0xff]
          %v2499 = vld [vmem:[%s2444 + $0x1b0] sm:$0xff]
          %v2500 = vld [vmem:[%s2444 + $0x1b8] sm:$0xff]
          %v2501 = vld [vmem:[%s2444 + $0x1c0] sm:$0xff]
          %v2502 = vld [vmem:[%s2444 + $0x1c8] sm:$0xff]
          %v2503 = vld [vmem:[%s2444 + $0x1d0] sm:$0xff]
          %v2504 = vld [vmem:[%s2444 + $0x1d8] sm:$0xff]
          %v2505 = vld [vmem:[%s2444 + $0x1e0] sm:$0xff]
          %v2506 = vld [vmem:[%s2444 + $0x1e8] sm:$0xff]
          %v2507 = vld [vmem:[%s2444 + $0x1f0] sm:$0xff]
          %v2508 = vld [vmem:[%s2444 + $0x1f8] sm:$0xff]
          %v2513 = vunpack.c.l.b16 %v2440
          %v2514 = vunpack.c.l.b16 %v2441
          %v2515 = vunpack.c.l.b16 %v2442
          %v2516 = vunpack.c.l.b16 %v2443
          %v2517 = vpack.c.b16 %v2514, %v2513
          %v2518 = vpack.c.b16 %v2516, %v2515
          %v2585 = vunpack.c.l.b16 %v2445
          %v2586 = vunpack.c.h.b16 %v2445
          %v2587 = vunpack.c.l.b16 %v2446
          %v2588 = vunpack.c.h.b16 %v2446
          %v2589 = vunpack.c.l.b16 %v2447
          %v2590 = vunpack.c.h.b16 %v2447
          %v2591 = vunpack.c.l.b16 %v2448
          %v2592 = vunpack.c.h.b16 %v2448
          %v2593 = vunpack.c.l.b16 %v2449
          %v2594 = vunpack.c.h.b16 %v2449
          %v2595 = vunpack.c.l.b16 %v2450
          %v2596 = vunpack.c.h.b16 %v2450
          %v2597 = vunpack.c.l.b16 %v2451
          %v2598 = vunpack.c.h.b16 %v2451
          %v2599 = vunpack.c.l.b16 %v2452
          %v2600 = vunpack.c.h.b16 %v2452
          %v2601 = vunpack.c.l.b16 %v2453
          %v2602 = vunpack.c.h.b16 %v2453
          %v2603 = vunpack.c.l.b16 %v2454
          %v2604 = vunpack.c.h.b16 %v2454
          %v2605 = vunpack.c.l.b16 %v2455
          %v2606 = vunpack.c.h.b16 %v2455
          %v2607 = vunpack.c.l.b16 %v2456
          %v2608 = vunpack.c.h.b16 %v2456
          %v2609 = vunpack.c.l.b16 %v2457
          %v2610 = vunpack.c.h.b16 %v2457
          %v2611 = vunpack.c.l.b16 %v2458
          %v2612 = vunpack.c.h.b16 %v2458
          %v2613 = vunpack.c.l.b16 %v2459
          %v2614 = vunpack.c.h.b16 %v2459
          %v2615 = vunpack.c.l.b16 %v2460
          %v2616 = vunpack.c.h.b16 %v2460
          %v2617 = vunpack.c.l.b16 %v2461
          %v2618 = vunpack.c.h.b16 %v2461
          %v2619 = vunpack.c.l.b16 %v2462
          %v2620 = vunpack.c.h.b16 %v2462
          %v2621 = vunpack.c.l.b16 %v2463
          %v2622 = vunpack.c.h.b16 %v2463
          %v2623 = vunpack.c.l.b16 %v2464
          %v2624 = vunpack.c.h.b16 %v2464
          %v2625 = vunpack.c.l.b16 %v2465
          %v2626 = vunpack.c.h.b16 %v2465
          %v2627 = vunpack.c.l.b16 %v2466
          %v2628 = vunpack.c.h.b16 %v2466
          %v2629 = vunpack.c.l.b16 %v2467
          %v2630 = vunpack.c.h.b16 %v2467
          %v2631 = vunpack.c.l.b16 %v2468
          %v2632 = vunpack.c.h.b16 %v2468
          %v2633 = vunpack.c.l.b16 %v2469
          %v2634 = vunpack.c.h.b16 %v2469
          %v2635 = vunpack.c.l.b16 %v2470
          %v2636 = vunpack.c.h.b16 %v2470
          %v2637 = vunpack.c.l.b16 %v2471
          %v2638 = vunpack.c.h.b16 %v2471
          %v2639 = vunpack.c.l.b16 %v2472
          %v2640 = vunpack.c.h.b16 %v2472
          %v2641 = vunpack.c.l.b16 %v2473
          %v2642 = vunpack.c.h.b16 %v2473
          %v2643 = vunpack.c.l.b16 %v2474
          %v2644 = vunpack.c.h.b16 %v2474
          %v2645 = vunpack.c.l.b16 %v2475
          %v2646 = vunpack.c.h.b16 %v2475
          %v2647 = vunpack.c.l.b16 %v2476
          %v2648 = vunpack.c.h.b16 %v2476
          %v2649 = vunpack.c.l.b16 %v2477
          %v2650 = vunpack.c.h.b16 %v2477
          %v2651 = vunpack.c.l.b16 %v2478
          %v2652 = vunpack.c.h.b16 %v2478
          %v2653 = vunpack.c.l.b16 %v2479
          %v2654 = vunpack.c.h.b16 %v2479
          %v2655 = vunpack.c.l.b16 %v2480
          %v2656 = vunpack.c.h.b16 %v2480
          %v2657 = vunpack.c.l.b16 %v2481
          %v2658 = vunpack.c.h.b16 %v2481
          %v2659 = vunpack.c.l.b16 %v2482
          %v2660 = vunpack.c.h.b16 %v2482
          %v2661 = vunpack.c.l.b16 %v2483
          %v2662 = vunpack.c.h.b16 %v2483
          %v2663 = vunpack.c.l.b16 %v2484
          %v2664 = vunpack.c.h.b16 %v2484
          %v2665 = vunpack.c.l.b16 %v2485
          %v2666 = vunpack.c.h.b16 %v2485
          %v2667 = vunpack.c.l.b16 %v2486
          %v2668 = vunpack.c.h.b16 %v2486
          %v2669 = vunpack.c.l.b16 %v2487
          %v2670 = vunpack.c.h.b16 %v2487
          %v2671 = vunpack.c.l.b16 %v2488
          %v2672 = vunpack.c.h.b16 %v2488
          %v2673 = vunpack.c.l.b16 %v2489
          %v2674 = vunpack.c.h.b16 %v2489
          %v2675 = vunpack.c.l.b16 %v2490
          %v2676 = vunpack.c.h.b16 %v2490
          %v2677 = vunpack.c.l.b16 %v2491
          %v2678 = vunpack.c.h.b16 %v2491
          %v2679 = vunpack.c.l.b16 %v2492
          %v2680 = vunpack.c.h.b16 %v2492
          %v2681 = vunpack.c.l.b16 %v2493
          %v2682 = vunpack.c.h.b16 %v2493
          %v2683 = vunpack.c.l.b16 %v2494
          %v2684 = vunpack.c.h.b16 %v2494
          %v2685 = vunpack.c.l.b16 %v2495
          %v2686 = vunpack.c.h.b16 %v2495
          %v2687 = vunpack.c.l.b16 %v2496
          %v2688 = vunpack.c.h.b16 %v2496
          %v2689 = vunpack.c.l.b16 %v2497
          %v2690 = vunpack.c.h.b16 %v2497
          %v2691 = vunpack.c.l.b16 %v2498
          %v2692 = vunpack.c.h.b16 %v2498
          %v2693 = vunpack.c.l.b16 %v2499
          %v2694 = vunpack.c.h.b16 %v2499
          %v2695 = vunpack.c.l.b16 %v2500
          %v2696 = vunpack.c.h.b16 %v2500
          %v2697 = vunpack.c.l.b16 %v2501
          %v2698 = vunpack.c.h.b16 %v2501
          %v2699 = vunpack.c.l.b16 %v2502
          %v2700 = vunpack.c.h.b16 %v2502
          %v2701 = vunpack.c.l.b16 %v2503
          %v2702 = vunpack.c.h.b16 %v2503
          %v2703 = vunpack.c.l.b16 %v2504
          %v2704 = vunpack.c.h.b16 %v2504
          %v2705 = vunpack.c.l.b16 %v2505
          %v2706 = vunpack.c.h.b16 %v2505
          %v2707 = vunpack.c.l.b16 %v2506
          %v2708 = vunpack.c.h.b16 %v2506
          %v2709 = vunpack.c.l.b16 %v2507
          %v2710 = vunpack.c.h.b16 %v2507
          %v2711 = vunpack.c.l.b16 %v2508
          %v2712 = vunpack.c.h.b16 %v2508
          %v2713 = vpack.c.b16 %v2593, %v2585
          %v2714 = vpack.c.b16 %v2594, %v2586
          %v2715 = vpack.c.b16 %v2595, %v2587
          %v2716 = vpack.c.b16 %v2596, %v2588
          %v2717 = vpack.c.b16 %v2597, %v2589
          %v2718 = vpack.c.b16 %v2598, %v2590
          %v2719 = vpack.c.b16 %v2599, %v2591
          %v2720 = vpack.c.b16 %v2600, %v2592
          %v2721 = vpack.c.b16 %v2609, %v2601
          %v2722 = vpack.c.b16 %v2610, %v2602
          %v2723 = vpack.c.b16 %v2611, %v2603
          %v2724 = vpack.c.b16 %v2612, %v2604
          %v2725 = vpack.c.b16 %v2613, %v2605
          %v2726 = vpack.c.b16 %v2614, %v2606
          %v2727 = vpack.c.b16 %v2615, %v2607
          %v2728 = vpack.c.b16 %v2616, %v2608
          %v2729 = vpack.c.b16 %v2625, %v2617
          %v2730 = vpack.c.b16 %v2626, %v2618
          %v2731 = vpack.c.b16 %v2627, %v2619
          %v2732 = vpack.c.b16 %v2628, %v2620
          %v2733 = vpack.c.b16 %v2629, %v2621
          %v2734 = vpack.c.b16 %v2630, %v2622
          %v2735 = vpack.c.b16 %v2631, %v2623
          %v2736 = vpack.c.b16 %v2632, %v2624
          %v2737 = vpack.c.b16 %v2641, %v2633
          %v2738 = vpack.c.b16 %v2642, %v2634
          %v2739 = vpack.c.b16 %v2643, %v2635
          %v2740 = vpack.c.b16 %v2644, %v2636
          %v2741 = vpack.c.b16 %v2645, %v2637
          %v2742 = vpack.c.b16 %v2646, %v2638
          %v2743 = vpack.c.b16 %v2647, %v2639
          %v2744 = vpack.c.b16 %v2648, %v2640
          %v2745 = vpack.c.b16 %v2657, %v2649
          %v2746 = vpack.c.b16 %v2658, %v2650
          %v2747 = vpack.c.b16 %v2659, %v2651
          %v2748 = vpack.c.b16 %v2660, %v2652
          %v2749 = vpack.c.b16 %v2661, %v2653
          %v2750 = vpack.c.b16 %v2662, %v2654
          %v2751 = vpack.c.b16 %v2663, %v2655
          %v2752 = vpack.c.b16 %v2664, %v2656
          %v2753 = vpack.c.b16 %v2673, %v2665
          %v2754 = vpack.c.b16 %v2674, %v2666
          %v2755 = vpack.c.b16 %v2675, %v2667
          %v2756 = vpack.c.b16 %v2676, %v2668
          %v2757 = vpack.c.b16 %v2677, %v2669
          %v2758 = vpack.c.b16 %v2678, %v2670
          %v2759 = vpack.c.b16 %v2679, %v2671
          %v2760 = vpack.c.b16 %v2680, %v2672
          %v2761 = vpack.c.b16 %v2689, %v2681
          %v2762 = vpack.c.b16 %v2690, %v2682
          %v2763 = vpack.c.b16 %v2691, %v2683
          %v2764 = vpack.c.b16 %v2692, %v2684
          %v2765 = vpack.c.b16 %v2693, %v2685
          %v2766 = vpack.c.b16 %v2694, %v2686
          %v2767 = vpack.c.b16 %v2695, %v2687
          %v2768 = vpack.c.b16 %v2696, %v2688
          %v2769 = vpack.c.b16 %v2705, %v2697
          %v2770 = vpack.c.b16 %v2706, %v2698
          %v2771 = vpack.c.b16 %v2707, %v2699
          %v2772 = vpack.c.b16 %v2708, %v2700
          %v2773 = vpack.c.b16 %v2709, %v2701
          %v2774 = vpack.c.b16 %v2710, %v2702
          %v2775 = vpack.c.b16 %v2711, %v2703
          %v2776 = vpack.c.b16 %v2712, %v2704
          %2841 = vmatprep.subr.bf16.mxu0 %v2714
          %2842 = vmatpush1.bf16.msra.mxu0 %v2713
          %2843 = vmatprep.subr.bf16.mxu0 %v2722
          %2844 = vmatpush1.bf16.msra.mxu0 %v2721
          %2845 = vmatprep.subr.bf16.mxu0 %v2730
          %2846 = vmatpush1.bf16.msra.mxu0 %v2729
          %2847 = vmatprep.subr.bf16.mxu0 %v2738
          %2848 = vmatpush1.bf16.msra.mxu0 %v2737
          %2849 = vmatprep.subr.bf16.mxu0 %v2746
          %2850 = vmatpush1.bf16.msra.mxu0 %v2745
          %2851 = vmatprep.subr.bf16.mxu0 %v2754
          %2852 = vmatpush1.bf16.msra.mxu0 %v2753
          %2853 = vmatprep.subr.bf16.mxu0 %v2762
          %2854 = vmatpush1.bf16.msra.mxu0 %v2761
          %2855 = vmatprep.subr.bf16.mxu0 %v2770
          %2856 = vmatpush1.bf16.msra.mxu0 %v2769
          %2857 = vmatprep.subr.bf16.mxu0 0
          %2858 = vmatpush1.bf16.msra.mxu0 0
          %2859 = vmatprep.subr.bf16.mxu0 0
          %2860 = vmatpush1.bf16.msra.mxu0 0
          %2861 = vmatprep.subr.bf16.mxu0 0
          %2862 = vmatpush1.bf16.msra.mxu0 0
          %2863 = vmatprep.subr.bf16.mxu0 0
          %2864 = vmatpush1.bf16.msra.mxu0 0
          %2865 = vmatprep.subr.bf16.mxu0 0
          %2866 = vmatpush1.bf16.msra.mxu0 0
          %2867 = vmatprep.subr.bf16.mxu0 0
          %2868 = vmatpush1.bf16.msra.mxu0 0
          %2869 = vmatprep.subr.bf16.mxu0 0
          %2870 = vmatpush1.bf16.msra.mxu0 0
          %2871 = vmatprep.subr.bf16.mxu0 0
          %2872 = vmatpush1.bf16.msra.mxu0 0
          %2873 = vmatprep.mubr.bf16.mxu0 0
          %2874 = vmatmul.mubr.bf16.gmra.mrb[0].mxu0 %v2517
          %v2875 = vpop.f32.mrb[0].mxu0
          %v2876 = vadd.f32 0.0, %v2875
          %v2877 = vpop.f32.mrb[0].mxu0
          %v2878 = vadd.f32 0.0, %v2877
          %v2879 = vpop.f32.mrb[0].mxu0
          %v2880 = vadd.f32 0.0, %v2879
          %v2881 = vpop.f32.mrb[0].mxu0
          %v2882 = vadd.f32 0.0, %v2881
          %2883 = vmatprep.mubr.bf16.mxu0 0
          %2884 = vmatmul.mubr.bf16.gmra.mrb[0].mxu0 %v2518
          %v2885 = vpop.f32.mrb[0].mxu0
          %v2886 = vadd.f32 0.0, %v2885
          %v2887 = vpop.f32.mrb[0].mxu0
          %v2888 = vadd.f32 0.0, %v2887
          %v2889 = vpop.f32.mrb[0].mxu0
          %v2890 = vadd.f32 0.0, %v2889
          %v2891 = vpop.f32.mrb[0].mxu0
          %v2892 = vadd.f32 0.0, %v2891
          %2893 = vdwg.mxu0
          %2894 = vmatprep.subr.bf16.mxu0 %v2716
          %2895 = vmatpush1.bf16.msra.mxu0 %v2715
          %2896 = vmatprep.subr.bf16.mxu0 %v2724
          %2897 = vmatpush1.bf16.msra.mxu0 %v2723
          %2898 = vmatprep.subr.bf16.mxu0 %v2732
          %2899 = vmatpush1.bf16.msra.mxu0 %v2731
          %2900 = vmatprep.subr.bf16.mxu0 %v2740
          %2901 = vmatpush1.bf16.msra.mxu0 %v2739
          %2902 = vmatprep.subr.bf16.mxu0 %v2748
          %2903 = vmatpush1.bf16.msra.mxu0 %v2747
          %2904 = vmatprep.subr.bf16.mxu0 %v2756
          %2905 = vmatpush1.bf16.msra.mxu0 %v2755
          %2906 = vmatprep.subr.bf16.mxu0 %v2764
          %2907 = vmatpush1.bf16.msra.mxu0 %v2763
          %2908 = vmatprep.subr.bf16.mxu0 %v2772
          %2909 = vmatpush1.bf16.msra.mxu0 %v2771
          %2910 = vmatprep.subr.bf16.mxu0 0
          %2911 = vmatpush1.bf16.msra.mxu0 0
          %2912 = vmatprep.subr.bf16.mxu0 0
          %2913 = vmatpush1.bf16.msra.mxu0 0
          %2914 = vmatprep.subr.bf16.mxu0 0
          %2915 = vmatpush1.bf16.msra.mxu0 0
          %2916 = vmatprep.subr.bf16.mxu0 0
          %2917 = vmatpush1.bf16.msra.mxu0 0
          %2918 = vmatprep.subr.bf16.mxu0 0
          %2919 = vmatpush1.bf16.msra.mxu0 0
          %2920 = vmatprep.subr.bf16.mxu0 0
          %2921 = vmatpush1.bf16.msra.mxu0 0
          %2922 = vmatprep.subr.bf16.mxu0 0
          %2923 = vmatpush1.bf16.msra.mxu0 0
          %2924 = vmatprep.subr.bf16.mxu0 0
          %2925 = vmatpush1.bf16.msra.mxu0 0
          %2926 = vmatprep.mubr.bf16.mxu0 0
          %2927 = vmatmul.mubr.bf16.gmra.mrb[0].mxu0 %v2517
          %v2928 = vpop.f32.mrb[0].mxu0
          %v2929 = vadd.f32 0.0, %v2928
          %v2930 = vpop.f32.mrb[0].mxu0
          %v2931 = vadd.f32 0.0, %v2930
          %v2932 = vpop.f32.mrb[0].mxu0
          %v2933 = vadd.f32 0.0, %v2932
          %v2934 = vpop.f32.mrb[0].mxu0
          %v2935 = vadd.f32 0.0, %v2934
          %2936 = vmatprep.mubr.bf16.mxu0 0
          %2937 = vmatmul.mubr.bf16.gmra.mrb[0].mxu0 %v2518
          %v2938 = vpop.f32.mrb[0].mxu0
          %v2939 = vadd.f32 0.0, %v2938
          %v2940 = vpop.f32.mrb[0].mxu0
          %v2941 = vadd.f32 0.0, %v2940
          %v2942 = vpop.f32.mrb[0].mxu0
          %v2943 = vadd.f32 0.0, %v2942
          %v2944 = vpop.f32.mrb[0].mxu0
          %v2945 = vadd.f32 0.0, %v2944
          %2946 = vdwg.mxu0
          %2947 = vmatprep.subr.bf16.mxu0 %v2718
          %2948 = vmatpush1.bf16.msra.mxu0 %v2717
          %2949 = vmatprep.subr.bf16.mxu0 %v2726
          %2950 = vmatpush1.bf16.msra.mxu0 %v2725
          %2951 = vmatprep.subr.bf16.mxu0 %v2734
          %2952 = vmatpush1.bf16.msra.mxu0 %v2733
          %2953 = vmatprep.subr.bf16.mxu0 %v2742
          %2954 = vmatpush1.bf16.msra.mxu0 %v2741
          %2955 = vmatprep.subr.bf16.mxu0 %v2750
          %2956 = vmatpush1.bf16.msra.mxu0 %v2749
          %2957 = vmatprep.subr.bf16.mxu0 %v2758
          %2958 = vmatpush1.bf16.msra.mxu0 %v2757
          %2959 = vmatprep.subr.bf16.mxu0 %v2766
          %2960 = vmatpush1.bf16.msra.mxu0 %v2765
          %2961 = vmatprep.subr.bf16.mxu0 %v2774
          %2962 = vmatpush1.bf16.msra.mxu0 %v2773
          %2963 = vmatprep.subr.bf16.mxu0 0
          %2964 = vmatpush1.bf16.msra.mxu0 0
          %2965 = vmatprep.subr.bf16.mxu0 0
          %2966 = vmatpush1.bf16.msra.mxu0 0
          %2967 = vmatprep.subr.bf16.mxu0 0
          %2968 = vmatpush1.bf16.msra.mxu0 0
          %2969 = vmatprep.subr.bf16.mxu0 0
          %2970 = vmatpush1.bf16.msra.mxu0 0
          %2971 = vmatprep.subr.bf16.mxu0 0
          %2972 = vmatpush1.bf16.msra.mxu0 0
          %2973 = vmatprep.subr.bf16.mxu0 0
          %2974 = vmatpush1.bf16.msra.mxu0 0
          %2975 = vmatprep.subr.bf16.mxu0 0
          %2976 = vmatpush1.bf16.msra.mxu0 0
          %2977 = vmatprep.subr.bf16.mxu0 0
          %2978 = vmatpush1.bf16.msra.mxu0 0
          %2979 = vmatprep.mubr.bf16.mxu0 0
          %2980 = vmatmul.mubr.bf16.gmra.mrb[0].mxu0 %v2517
          %v2981 = vpop.f32.mrb[0].mxu0
          %v2982 = vadd.f32 0.0, %v2981
          %v2983 = vpop.f32.mrb[0].mxu0
          %v2984 = vadd.f32 0.0, %v2983
          %v2985 = vpop.f32.mrb[0].mxu0
          %v2986 = vadd.f32 0.0, %v2985
          %v2987 = vpop.f32.mrb[0].mxu0
          %v2988 = vadd.f32 0.0, %v2987
          %2989 = vmatprep.mubr.bf16.mxu0 0
          %2990 = vmatmul.mubr.bf16.gmra.mrb[0].mxu0 %v2518
          %v2991 = vpop.f32.mrb[0].mxu0
          %v2992 = vadd.f32 0.0, %v2991
          %v2993 = vpop.f32.mrb[0].mxu0
          %v2994 = vadd.f32 0.0, %v2993
          %v2995 = vpop.f32.mrb[0].mxu0
          %v2996 = vadd.f32 0.0, %v2995
          %v2997 = vpop.f32.mrb[0].mxu0
          %v2998 = vadd.f32 0.0, %v2997
          %2999 = vdwg.mxu0
          %3000 = vmatprep.subr.bf16.mxu0 %v2720
          %3001 = vmatpush1.bf16.msra.mxu0 %v2719
          %3002 = vmatprep.subr.bf16.mxu0 %v2728
          %3003 = vmatpush1.bf16.msra.mxu0 %v2727
          %3004 = vmatprep.subr.bf16.mxu0 %v2736
          %3005 = vmatpush1.bf16.msra.mxu0 %v2735
          %3006 = vmatprep.subr.bf16.mxu0 %v2744
          %3007 = vmatpush1.bf16.msra.mxu0 %v2743
          %3008 = vmatprep.subr.bf16.mxu0 %v2752
          %3009 = vmatpush1.bf16.msra.mxu0 %v2751
          %3010 = vmatprep.subr.bf16.mxu0 %v2760
          %3011 = vmatpush1.bf16.msra.mxu0 %v2759
          %3012 = vmatprep.subr.bf16.mxu0 %v2768
          %3013 = vmatpush1.bf16.msra.mxu0 %v2767
          %3014 = vmatprep.subr.bf16.mxu0 %v2776
          %3015 = vmatpush1.bf16.msra.mxu0 %v2775
          %3016 = vmatprep.subr.bf16.mxu0 0
          %3017 = vmatpush1.bf16.msra.mxu0 0
          %3018 = vmatprep.subr.bf16.mxu0 0
          %3019 = vmatpush1.bf16.msra.mxu0 0
          %3020 = vmatprep.subr.bf16.mxu0 0
          %3021 = vmatpush1.bf16.msra.mxu0 0
          %3022 = vmatprep.subr.bf16.mxu0 0
          %3023 = vmatpush1.bf16.msra.mxu0 0
          %3024 = vmatprep.subr.bf16.mxu0 0
          %3025 = vmatpush1.bf16.msra.mxu0 0
          %3026 = vmatprep.subr.bf16.mxu0 0
          %3027 = vmatpush1.bf16.msra.mxu0 0
          %3028 = vmatprep.subr.bf16.mxu0 0
          %3029 = vmatpush1.bf16.msra.mxu0 0
          %3030 = vmatprep.subr.bf16.mxu0 0
          %3031 = vmatpush1.bf16.msra.mxu0 0
          %3032 = vmatprep.mubr.bf16.mxu0 0
          %3033 = vmatmul.mubr.bf16.gmra.mrb[0].mxu0 %v2517
          %v3034 = vpop.f32.mrb[0].mxu0
          %v3035 = vadd.f32 0.0, %v3034
          %v3036 = vpop.f32.mrb[0].mxu0
          %v3037 = vadd.f32 0.0, %v3036
          %v3038 = vpop.f32.mrb[0].mxu0
          %v3039 = vadd.f32 0.0, %v3038
          %v3040 = vpop.f32.mrb[0].mxu0
          %v3041 = vadd.f32 0.0, %v3040
          %3042 = vmatprep.mubr.bf16.mxu0 0
          %3043 = vmatmul.mubr.bf16.gmra.mrb[0].mxu0 %v2518
          %v3044 = vpop.f32.mrb[0].mxu0
          %v3045 = vadd.f32 0.0, %v3044
          %v3046 = vpop.f32.mrb[0].mxu0
          %v3047 = vadd.f32 0.0, %v3046
          %v3048 = vpop.f32.mrb[0].mxu0
          %v3049 = vadd.f32 0.0, %v3048
          %v3050 = vpop.f32.mrb[0].mxu0
          %v3051 = vadd.f32 0.0, %v3050
          %3052 = vdwg.mxu0
          %v3053 = vadd.f32 %v2262, %v2876
          %v3054 = vadd.f32 %v2264, %v2878
          %v3055 = vadd.f32 %v2315, %v2929
          %v3056 = vadd.f32 %v2317, %v2931
          %v3057 = vadd.f32 %v2368, %v2982
          %v3058 = vadd.f32 %v2370, %v2984
          %v3059 = vadd.f32 %v2421, %v3035
          %v3060 = vadd.f32 %v2423, %v3037
          %v3061 = vadd.f32 %v2266, %v2880
          %v3062 = vadd.f32 %v2268, %v2882
          %v3063 = vadd.f32 %v2319, %v2933
          %v3064 = vadd.f32 %v2321, %v2935
          %v3065 = vadd.f32 %v2372, %v2986
          %v3066 = vadd.f32 %v2374, %v2988
          %v3067 = vadd.f32 %v2425, %v3039
          %v3068 = vadd.f32 %v2427, %v3041
          %v3069 = vadd.f32 %v2272, %v2886
          %v3070 = vadd.f32 %v2274, %v2888
          %v3071 = vadd.f32 %v2325, %v2939
          %v3072 = vadd.f32 %v2327, %v2941
          %v3073 = vadd.f32 %v2378, %v2992
          %v3074 = vadd.f32 %v2380, %v2994
          %v3075 = vadd.f32 %v2431, %v3045
          %v3076 = vadd.f32 %v2433, %v3047
          %v3077 = vadd.f32 %v2276, %v2890
          %v3078 = vadd.f32 %v2278, %v2892
          %v3079 = vadd.f32 %v2329, %v2943
          %v3080 = vadd.f32 %v2331, %v2945
          %v3081 = vadd.f32 %v2382, %v2996
          %v3082 = vadd.f32 %v2384, %v2998
          %v3083 = vadd.f32 %v2435, %v3049
          %v3084 = vadd.f32 %v2437, %v3051
          %s3085 = scalar_lea.vmem [#allocation2], 48
          %v3086 = vld [vmem:[%s3085] sm:$0xf]
          %v3087 = vld [vmem:[%s3085 + $0x4] sm:$0xf]
          %v3088 = vld [vmem:[%s3085 + $0x8] sm:$0xf]
          %v3089 = vld [vmem:[%s3085 + $0xc] sm:$0xf]
          %s3090 = scalar_lea.vmem %s224, 2048 [#allocation5]
          %v3091 = vld [vmem:[%s3090] sm:$0xff]
          %v3092 = vld [vmem:[%s3090 + $0x8] sm:$0xff]
          %v3093 = vld [vmem:[%s3090 + $0x10] sm:$0xff]
          %v3094 = vld [vmem:[%s3090 + $0x18] sm:$0xff]
          %v3095 = vld [vmem:[%s3090 + $0x20] sm:$0xff]
          %v3096 = vld [vmem:[%s3090 + $0x28] sm:$0xff]
          %v3097 = vld [vmem:[%s3090 + $0x30] sm:$0xff]
          %v3098 = vld [vmem:[%s3090 + $0x38] sm:$0xff]
          %v3099 = vld [vmem:[%s3090 + $0x40] sm:$0xff]
          %v3100 = vld [vmem:[%s3090 + $0x48] sm:$0xff]
          %v3101 = vld [vmem:[%s3090 + $0x50] sm:$0xff]
          %v3102 = vld [vmem:[%s3090 + $0x58] sm:$0xff]
          %v3103 = vld [vmem:[%s3090 + $0x60] sm:$0xff]
          %v3104 = vld [vmem:[%s3090 + $0x68] sm:$0xff]
          %v3105 = vld [vmem:[%s3090 + $0x70] sm:$0xff]
          %v3106 = vld [vmem:[%s3090 + $0x78] sm:$0xff]
          %v3107 = vld [vmem:[%s3090 + $0x80] sm:$0xff]
          %v3108 = vld [vmem:[%s3090 + $0x88] sm:$0xff]
          %v3109 = vld [vmem:[%s3090 + $0x90] sm:$0xff]
          %v3110 = vld [vmem:[%s3090 + $0x98] sm:$0xff]
          %v3111 = vld [vmem:[%s3090 + $0xa0] sm:$0xff]
          %v3112 = vld [vmem:[%s3090 + $0xa8] sm:$0xff]
          %v3113 = vld [vmem:[%s3090 + $0xb0] sm:$0xff]
          %v3114 = vld [vmem:[%s3090 + $0xb8] sm:$0xff]
          %v3115 = vld [vmem:[%s3090 + $0xc0] sm:$0xff]
          %v3116 = vld [vmem:[%s3090 + $0xc8] sm:$0xff]
          %v3117 = vld [vmem:[%s3090 + $0xd0] sm:$0xff]
          %v3118 = vld [vmem:[%s3090 + $0xd8] sm:$0xff]
          %v3119 = vld [vmem:[%s3090 + $0xe0] sm:$0xff]
          %v3120 = vld [vmem:[%s3090 + $0xe8] sm:$0xff]
          %v3121 = vld [vmem:[%s3090 + $0xf0] sm:$0xff]
          %v3122 = vld [vmem:[%s3090 + $0xf8] sm:$0xff]
          %v3123 = vld [vmem:[%s3090 + $0x100] sm:$0xff]
          %v3124 = vld [vmem:[%s3090 + $0x108] sm:$0xff]
          %v3125 = vld [vmem:[%s3090 + $0x110] sm:$0xff]
          %v3126 = vld [vmem:[%s3090 + $0x118] sm:$0xff]
          %v3127 = vld [vmem:[%s3090 + $0x120] sm:$0xff]
          %v3128 = vld [vmem:[%s3090 + $0x128] sm:$0xff]
          %v3129 = vld [vmem:[%s3090 + $0x130] sm:$0xff]
          %v3130 = vld [vmem:[%s3090 + $0x138] sm:$0xff]
          %v3131 = vld [vmem:[%s3090 + $0x140] sm:$0xff]
          %v3132 = vld [vmem:[%s3090 + $0x148] sm:$0xff]
          %v3133 = vld [vmem:[%s3090 + $0x150] sm:$0xff]
          %v3134 = vld [vmem:[%s3090 + $0x158] sm:$0xff]
          %v3135 = vld [vmem:[%s3090 + $0x160] sm:$0xff]
          %v3136 = vld [vmem:[%s3090 + $0x168] sm:$0xff]
          %v3137 = vld [vmem:[%s3090 + $0x170] sm:$0xff]
          %v3138 = vld [vmem:[%s3090 + $0x178] sm:$0xff]
          %v3139 = vld [vmem:[%s3090 + $0x180] sm:$0xff]
          %v3140 = vld [vmem:[%s3090 + $0x188] sm:$0xff]
          %v3141 = vld [vmem:[%s3090 + $0x190] sm:$0xff]
          %v3142 = vld [vmem:[%s3090 + $0x198] sm:$0xff]
          %v3143 = vld [vmem:[%s3090 + $0x1a0] sm:$0xff]
          %v3144 = vld [vmem:[%s3090 + $0x1a8] sm:$0xff]
          %v3145 = vld [vmem:[%s3090 + $0x1b0] sm:$0xff]
          %v3146 = vld [vmem:[%s3090 + $0x1b8] sm:$0xff]
          %v3147 = vld [vmem:[%s3090 + $0x1c0] sm:$0xff]
          %v3148 = vld [vmem:[%s3090 + $0x1c8] sm:$0xff]
          %v3149 = vld [vmem:[%s3090 + $0x1d0] sm:$0xff]
          %v3150 = vld [vmem:[%s3090 + $0x1d8] sm:$0xff]
          %v3151 = vld [vmem:[%s3090 + $0x1e0] sm:$0xff]
          %v3152 = vld [vmem:[%s3090 + $0x1e8] sm:$0xff]
          %v3153 = vld [vmem:[%s3090 + $0x1f0] sm:$0xff]
          %v3154 = vld [vmem:[%s3090 + $0x1f8] sm:$0xff]
          %v3159 = vunpack.c.l.b16 %v3086
          %v3160 = vunpack.c.l.b16 %v3087
          %v3161 = vunpack.c.l.b16 %v3088
          %v3162 = vunpack.c.l.b16 %v3089
          %v3163 = vpack.c.b16 %v3160, %v3159
          %v3164 = vpack.c.b16 %v3162, %v3161
          %v3231 = vunpack.c.l.b16 %v3091
          %v3232 = vunpack.c.h.b16 %v3091
          %v3233 = vunpack.c.l.b16 %v3092
          %v3234 = vunpack.c.h.b16 %v3092
          %v3235 = vunpack.c.l.b16 %v3093
          %v3236 = vunpack.c.h.b16 %v3093
          %v3237 = vunpack.c.l.b16 %v3094
          %v3238 = vunpack.c.h.b16 %v3094
          %v3239 = vunpack.c.l.b16 %v3095
          %v3240 = vunpack.c.h.b16 %v3095
          %v3241 = vunpack.c.l.b16 %v3096
          %v3242 = vunpack.c.h.b16 %v3096
          %v3243 = vunpack.c.l.b16 %v3097
          %v3244 = vunpack.c.h.b16 %v3097
          %v3245 = vunpack.c.l.b16 %v3098
          %v3246 = vunpack.c.h.b16 %v3098
          %v3247 = vunpack.c.l.b16 %v3099
          %v3248 = vunpack.c.h.b16 %v3099
          %v3249 = vunpack.c.l.b16 %v3100
          %v3250 = vunpack.c.h.b16 %v3100
          %v3251 = vunpack.c.l.b16 %v3101
          %v3252 = vunpack.c.h.b16 %v3101
          %v3253 = vunpack.c.l.b16 %v3102
          %v3254 = vunpack.c.h.b16 %v3102
          %v3255 = vunpack.c.l.b16 %v3103
          %v3256 = vunpack.c.h.b16 %v3103
          %v3257 = vunpack.c.l.b16 %v3104
          %v3258 = vunpack.c.h.b16 %v3104
          %v3259 = vunpack.c.l.b16 %v3105
          %v3260 = vunpack.c.h.b16 %v3105
          %v3261 = vunpack.c.l.b16 %v3106
          %v3262 = vunpack.c.h.b16 %v3106
          %v3263 = vunpack.c.l.b16 %v3107
          %v3264 = vunpack.c.h.b16 %v3107
          %v3265 = vunpack.c.l.b16 %v3108
          %v3266 = vunpack.c.h.b16 %v3108
          %v3267 = vunpack.c.l.b16 %v3109
          %v3268 = vunpack.c.h.b16 %v3109
          %v3269 = vunpack.c.l.b16 %v3110
          %v3270 = vunpack.c.h.b16 %v3110
          %v3271 = vunpack.c.l.b16 %v3111
          %v3272 = vunpack.c.h.b16 %v3111
          %v3273 = vunpack.c.l.b16 %v3112
          %v3274 = vunpack.c.h.b16 %v3112
          %v3275 = vunpack.c.l.b16 %v3113
          %v3276 = vunpack.c.h.b16 %v3113
          %v3277 = vunpack.c.l.b16 %v3114
          %v3278 = vunpack.c.h.b16 %v3114
          %v3279 = vunpack.c.l.b16 %v3115
          %v3280 = vunpack.c.h.b16 %v3115
          %v3281 = vunpack.c.l.b16 %v3116
          %v3282 = vunpack.c.h.b16 %v3116
          %v3283 = vunpack.c.l.b16 %v3117
          %v3284 = vunpack.c.h.b16 %v3117
          %v3285 = vunpack.c.l.b16 %v3118
          %v3286 = vunpack.c.h.b16 %v3118
          %v3287 = vunpack.c.l.b16 %v3119
          %v3288 = vunpack.c.h.b16 %v3119
          %v3289 = vunpack.c.l.b16 %v3120
          %v3290 = vunpack.c.h.b16 %v3120
          %v3291 = vunpack.c.l.b16 %v3121
          %v3292 = vunpack.c.h.b16 %v3121
          %v3293 = vunpack.c.l.b16 %v3122
          %v3294 = vunpack.c.h.b16 %v3122
          %v3295 = vunpack.c.l.b16 %v3123
          %v3296 = vunpack.c.h.b16 %v3123
          %v3297 = vunpack.c.l.b16 %v3124
          %v3298 = vunpack.c.h.b16 %v3124
          %v3299 = vunpack.c.l.b16 %v3125
          %v3300 = vunpack.c.h.b16 %v3125
          %v3301 = vunpack.c.l.b16 %v3126
          %v3302 = vunpack.c.h.b16 %v3126
          %v3303 = vunpack.c.l.b16 %v3127
          %v3304 = vunpack.c.h.b16 %v3127
          %v3305 = vunpack.c.l.b16 %v3128
          %v3306 = vunpack.c.h.b16 %v3128
          %v3307 = vunpack.c.l.b16 %v3129
          %v3308 = vunpack.c.h.b16 %v3129
          %v3309 = vunpack.c.l.b16 %v3130
          %v3310 = vunpack.c.h.b16 %v3130
          %v3311 = vunpack.c.l.b16 %v3131
          %v3312 = vunpack.c.h.b16 %v3131
          %v3313 = vunpack.c.l.b16 %v3132
          %v3314 = vunpack.c.h.b16 %v3132
          %v3315 = vunpack.c.l.b16 %v3133
          %v3316 = vunpack.c.h.b16 %v3133
          %v3317 = vunpack.c.l.b16 %v3134
          %v3318 = vunpack.c.h.b16 %v3134
          %v3319 = vunpack.c.l.b16 %v3135
          %v3320 = vunpack.c.h.b16 %v3135
          %v3321 = vunpack.c.l.b16 %v3136
          %v3322 = vunpack.c.h.b16 %v3136
          %v3323 = vunpack.c.l.b16 %v3137
          %v3324 = vunpack.c.h.b16 %v3137
          %v3325 = vunpack.c.l.b16 %v3138
          %v3326 = vunpack.c.h.b16 %v3138
          %v3327 = vunpack.c.l.b16 %v3139
          %v3328 = vunpack.c.h.b16 %v3139
          %v3329 = vunpack.c.l.b16 %v3140
          %v3330 = vunpack.c.h.b16 %v3140
          %v3331 = vunpack.c.l.b16 %v3141
          %v3332 = vunpack.c.h.b16 %v3141
          %v3333 = vunpack.c.l.b16 %v3142
          %v3334 = vunpack.c.h.b16 %v3142
          %v3335 = vunpack.c.l.b16 %v3143
          %v3336 = vunpack.c.h.b16 %v3143
          %v3337 = vunpack.c.l.b16 %v3144
          %v3338 = vunpack.c.h.b16 %v3144
          %v3339 = vunpack.c.l.b16 %v3145
          %v3340 = vunpack.c.h.b16 %v3145
          %v3341 = vunpack.c.l.b16 %v3146
          %v3342 = vunpack.c.h.b16 %v3146
          %v3343 = vunpack.c.l.b16 %v3147
          %v3344 = vunpack.c.h.b16 %v3147
          %v3345 = vunpack.c.l.b16 %v3148
          %v3346 = vunpack.c.h.b16 %v3148
          %v3347 = vunpack.c.l.b16 %v3149
          %v3348 = vunpack.c.h.b16 %v3149
          %v3349 = vunpack.c.l.b16 %v3150
          %v3350 = vunpack.c.h.b16 %v3150
          %v3351 = vunpack.c.l.b16 %v3151
          %v3352 = vunpack.c.h.b16 %v3151
          %v3353 = vunpack.c.l.b16 %v3152
          %v3354 = vunpack.c.h.b16 %v3152
          %v3355 = vunpack.c.l.b16 %v3153
          %v3356 = vunpack.c.h.b16 %v3153
          %v3357 = vunpack.c.l.b16 %v3154
          %v3358 = vunpack.c.h.b16 %v3154
          %v3359 = vpack.c.b16 %v3239, %v3231
          %v3360 = vpack.c.b16 %v3240, %v3232
          %v3361 = vpack.c.b16 %v3241, %v3233
          %v3362 = vpack.c.b16 %v3242, %v3234
          %v3363 = vpack.c.b16 %v3243, %v3235
          %v3364 = vpack.c.b16 %v3244, %v3236
          %v3365 = vpack.c.b16 %v3245, %v3237
          %v3366 = vpack.c.b16 %v3246, %v3238
          %v3367 = vpack.c.b16 %v3255, %v3247
          %v3368 = vpack.c.b16 %v3256, %v3248
          %v3369 = vpack.c.b16 %v3257, %v3249
          %v3370 = vpack.c.b16 %v3258, %v3250
          %v3371 = vpack.c.b16 %v3259, %v3251
          %v3372 = vpack.c.b16 %v3260, %v3252
          %v3373 = vpack.c.b16 %v3261, %v3253
          %v3374 = vpack.c.b16 %v3262, %v3254
          %v3375 = vpack.c.b16 %v3271, %v3263
          %v3376 = vpack.c.b16 %v3272, %v3264
          %v3377 = vpack.c.b16 %v3273, %v3265
          %v3378 = vpack.c.b16 %v3274, %v3266
          %v3379 = vpack.c.b16 %v3275, %v3267
          %v3380 = vpack.c.b16 %v3276, %v3268
          %v3381 = vpack.c.b16 %v3277, %v3269
          %v3382 = vpack.c.b16 %v3278, %v3270
          %v3383 = vpack.c.b16 %v3287, %v3279
          %v3384 = vpack.c.b16 %v3288, %v3280
          %v3385 = vpack.c.b16 %v3289, %v3281
          %v3386 = vpack.c.b16 %v3290, %v3282
          %v3387 = vpack.c.b16 %v3291, %v3283
          %v3388 = vpack.c.b16 %v3292, %v3284
          %v3389 = vpack.c.b16 %v3293, %v3285
          %v3390 = vpack.c.b16 %v3294, %v3286
          %v3391 = vpack.c.b16 %v3303, %v3295
          %v3392 = vpack.c.b16 %v3304, %v3296
          %v3393 = vpack.c.b16 %v3305, %v3297
          %v3394 = vpack.c.b16 %v3306, %v3298
          %v3395 = vpack.c.b16 %v3307, %v3299
          %v3396 = vpack.c.b16 %v3308, %v3300
          %v3397 = vpack.c.b16 %v3309, %v3301
          %v3398 = vpack.c.b16 %v3310, %v3302
          %v3399 = vpack.c.b16 %v3319, %v3311
          %v3400 = vpack.c.b16 %v3320, %v3312
          %v3401 = vpack.c.b16 %v3321, %v3313
          %v3402 = vpack.c.b16 %v3322, %v3314
          %v3403 = vpack.c.b16 %v3323, %v3315
          %v3404 = vpack.c.b16 %v3324, %v3316
          %v3405 = vpack.c.b16 %v3325, %v3317
          %v3406 = vpack.c.b16 %v3326, %v3318
          %v3407 = vpack.c.b16 %v3335, %v3327
          %v3408 = vpack.c.b16 %v3336, %v3328
          %v3409 = vpack.c.b16 %v3337, %v3329
          %v3410 = vpack.c.b16 %v3338, %v3330
          %v3411 = vpack.c.b16 %v3339, %v3331
          %v3412 = vpack.c.b16 %v3340, %v3332
          %v3413 = vpack.c.b16 %v3341, %v3333
          %v3414 = vpack.c.b16 %v3342, %v3334
          %v3415 = vpack.c.b16 %v3351, %v3343
          %v3416 = vpack.c.b16 %v3352, %v3344
          %v3417 = vpack.c.b16 %v3353, %v3345
          %v3418 = vpack.c.b16 %v3354, %v3346
          %v3419 = vpack.c.b16 %v3355, %v3347
          %v3420 = vpack.c.b16 %v3356, %v3348
          %v3421 = vpack.c.b16 %v3357, %v3349
          %v3422 = vpack.c.b16 %v3358, %v3350
          %3487 = vmatprep.subr.bf16.mxu0 %v3360
          %3488 = vmatpush1.bf16.msra.mxu0 %v3359
          %3489 = vmatprep.subr.bf16.mxu0 %v3368
          %3490 = vmatpush1.bf16.msra.mxu0 %v3367
          %3491 = vmatprep.subr.bf16.mxu0 %v3376
          %3492 = vmatpush1.bf16.msra.mxu0 %v3375
          %3493 = vmatprep.subr.bf16.mxu0 %v3384
          %3494 = vmatpush1.bf16.msra.mxu0 %v3383
          %3495 = vmatprep.subr.bf16.mxu0 %v3392
          %3496 = vmatpush1.bf16.msra.mxu0 %v3391
          %3497 = vmatprep.subr.bf16.mxu0 %v3400
          %3498 = vmatpush1.bf16.msra.mxu0 %v3399
          %3499 = vmatprep.subr.bf16.mxu0 %v3408
          %3500 = vmatpush1.bf16.msra.mxu0 %v3407
          %3501 = vmatprep.subr.bf16.mxu0 %v3416
          %3502 = vmatpush1.bf16.msra.mxu0 %v3415
          %3503 = vmatprep.subr.bf16.mxu0 0
          %3504 = vmatpush1.bf16.msra.mxu0 0
          %3505 = vmatprep.subr.bf16.mxu0 0
          %3506 = vmatpush1.bf16.msra.mxu0 0
          %3507 = vmatprep.subr.bf16.mxu0 0
          %3508 = vmatpush1.bf16.msra.mxu0 0
          %3509 = vmatprep.subr.bf16.mxu0 0
          %3510 = vmatpush1.bf16.msra.mxu0 0
          %3511 = vmatprep.subr.bf16.mxu0 0
          %3512 = vmatpush1.bf16.msra.mxu0 0
          %3513 = vmatprep.subr.bf16.mxu0 0
          %3514 = vmatpush1.bf16.msra.mxu0 0
          %3515 = vmatprep.subr.bf16.mxu0 0
          %3516 = vmatpush1.bf16.msra.mxu0 0
          %3517 = vmatprep.subr.bf16.mxu0 0
          %3518 = vmatpush1.bf16.msra.mxu0 0
          %3519 = vmatprep.mubr.bf16.mxu0 0
          %3520 = vmatmul.mubr.bf16.gmra.mrb[0].mxu0 %v3163
          %v3521 = vpop.f32.mrb[0].mxu0
          %v3522 = vadd.f32 0.0, %v3521
          %v3523 = vpop.f32.mrb[0].mxu0
          %v3524 = vadd.f32 0.0, %v3523
          %v3525 = vpop.f32.mrb[0].mxu0
          %v3526 = vadd.f32 0.0, %v3525
          %v3527 = vpop.f32.mrb[0].mxu0
          %v3528 = vadd.f32 0.0, %v3527
          %3529 = vmatprep.mubr.bf16.mxu0 0
          %3530 = vmatmul.mubr.bf16.gmra.mrb[0].mxu0 %v3164
          %v3531 = vpop.f32.mrb[0].mxu0
          %v3532 = vadd.f32 0.0, %v3531
          %v3533 = vpop.f32.mrb[0].mxu0
          %v3534 = vadd.f32 0.0, %v3533
          %v3535 = vpop.f32.mrb[0].mxu0
          %v3536 = vadd.f32 0.0, %v3535
          %v3537 = vpop.f32.mrb[0].mxu0
          %v3538 = vadd.f32 0.0, %v3537
          %3539 = vdwg.mxu0
          %3540 = vmatprep.subr.bf16.mxu0 %v3362
          %3541 = vmatpush1.bf16.msra.mxu0 %v3361
          %3542 = vmatprep.subr.bf16.mxu0 %v3370
          %3543 = vmatpush1.bf16.msra.mxu0 %v3369
          %3544 = vmatprep.subr.bf16.mxu0 %v3378
          %3545 = vmatpush1.bf16.msra.mxu0 %v3377
          %3546 = vmatprep.subr.bf16.mxu0 %v3386
          %3547 = vmatpush1.bf16.msra.mxu0 %v3385
          %3548 = vmatprep.subr.bf16.mxu0 %v3394
          %3549 = vmatpush1.bf16.msra.mxu0 %v3393
          %3550 = vmatprep.subr.bf16.mxu0 %v3402
          %3551 = vmatpush1.bf16.msra.mxu0 %v3401
          %3552 = vmatprep.subr.bf16.mxu0 %v3410
          %3553 = vmatpush1.bf16.msra.mxu0 %v3409
          %3554 = vmatprep.subr.bf16.mxu0 %v3418
          %3555 = vmatpush1.bf16.msra.mxu0 %v3417
          %3556 = vmatprep.subr.bf16.mxu0 0
          %3557 = vmatpush1.bf16.msra.mxu0 0
          %3558 = vmatprep.subr.bf16.mxu0 0
          %3559 = vmatpush1.bf16.msra.mxu0 0
          %3560 = vmatprep.subr.bf16.mxu0 0
          %3561 = vmatpush1.bf16.msra.mxu0 0
          %3562 = vmatprep.subr.bf16.mxu0 0
          %3563 = vmatpush1.bf16.msra.mxu0 0
          %3564 = vmatprep.subr.bf16.mxu0 0
          %3565 = vmatpush1.bf16.msra.mxu0 0
          %3566 = vmatprep.subr.bf16.mxu0 0
          %3567 = vmatpush1.bf16.msra.mxu0 0
          %3568 = vmatprep.subr.bf16.mxu0 0
          %3569 = vmatpush1.bf16.msra.mxu0 0
          %3570 = vmatprep.subr.bf16.mxu0 0
          %3571 = vmatpush1.bf16.msra.mxu0 0
          %3572 = vmatprep.mubr.bf16.mxu0 0
          %3573 = vmatmul.mubr.bf16.gmra.mrb[0].mxu0 %v3163
          %v3574 = vpop.f32.mrb[0].mxu0
          %v3575 = vadd.f32 0.0, %v3574
          %v3576 = vpop.f32.mrb[0].mxu0
          %v3577 = vadd.f32 0.0, %v3576
          %v3578 = vpop.f32.mrb[0].mxu0
          %v3579 = vadd.f32 0.0, %v3578
          %v3580 = vpop.f32.mrb[0].mxu0
          %v3581 = vadd.f32 0.0, %v3580
          %3582 = vmatprep.mubr.bf16.mxu0 0
          %3583 = vmatmul.mubr.bf16.gmra.mrb[0].mxu0 %v3164
          %v3584 = vpop.f32.mrb[0].mxu0
          %v3585 = vadd.f32 0.0, %v3584
          %v3586 = vpop.f32.mrb[0].mxu0
          %v3587 = vadd.f32 0.0, %v3586
          %v3588 = vpop.f32.mrb[0].mxu0
          %v3589 = vadd.f32 0.0, %v3588
          %v3590 = vpop.f32.mrb[0].mxu0
          %v3591 = vadd.f32 0.0, %v3590
          %3592 = vdwg.mxu0
          %3593 = vmatprep.subr.bf16.mxu0 %v3364
          %3594 = vmatpush1.bf16.msra.mxu0 %v3363
          %3595 = vmatprep.subr.bf16.mxu0 %v3372
          %3596 = vmatpush1.bf16.msra.mxu0 %v3371
          %3597 = vmatprep.subr.bf16.mxu0 %v3380
          %3598 = vmatpush1.bf16.msra.mxu0 %v3379
          %3599 = vmatprep.subr.bf16.mxu0 %v3388
          %3600 = vmatpush1.bf16.msra.mxu0 %v3387
          %3601 = vmatprep.subr.bf16.mxu0 %v3396
          %3602 = vmatpush1.bf16.msra.mxu0 %v3395
          %3603 = vmatprep.subr.bf16.mxu0 %v3404
          %3604 = vmatpush1.bf16.msra.mxu0 %v3403
          %3605 = vmatprep.subr.bf16.mxu0 %v3412
          %3606 = vmatpush1.bf16.msra.mxu0 %v3411
          %3607 = vmatprep.subr.bf16.mxu0 %v3420
          %3608 = vmatpush1.bf16.msra.mxu0 %v3419
          %3609 = vmatprep.subr.bf16.mxu0 0
          %3610 = vmatpush1.bf16.msra.mxu0 0
          %3611 = vmatprep.subr.bf16.mxu0 0
          %3612 = vmatpush1.bf16.msra.mxu0 0
          %3613 = vmatprep.subr.bf16.mxu0 0
          %3614 = vmatpush1.bf16.msra.mxu0 0
          %3615 = vmatprep.subr.bf16.mxu0 0
          %3616 = vmatpush1.bf16.msra.mxu0 0
          %3617 = vmatprep.subr.bf16.mxu0 0
          %3618 = vmatpush1.bf16.msra.mxu0 0
          %3619 = vmatprep.subr.bf16.mxu0 0
          %3620 = vmatpush1.bf16.msra.mxu0 0
          %3621 = vmatprep.subr.bf16.mxu0 0
          %3622 = vmatpush1.bf16.msra.mxu0 0
          %3623 = vmatprep.subr.bf16.mxu0 0
          %3624 = vmatpush1.bf16.msra.mxu0 0
          %3625 = vmatprep.mubr.bf16.mxu0 0
          %3626 = vmatmul.mubr.bf16.gmra.mrb[0].mxu0 %v3163
          %v3627 = vpop.f32.mrb[0].mxu0
          %v3628 = vadd.f32 0.0, %v3627
          %v3629 = vpop.f32.mrb[0].mxu0
          %v3630 = vadd.f32 0.0, %v3629
          %v3631 = vpop.f32.mrb[0].mxu0
          %v3632 = vadd.f32 0.0, %v3631
          %v3633 = vpop.f32.mrb[0].mxu0
          %v3634 = vadd.f32 0.0, %v3633
          %3635 = vmatprep.mubr.bf16.mxu0 0
          %3636 = vmatmul.mubr.bf16.gmra.mrb[0].mxu0 %v3164
          %v3637 = vpop.f32.mrb[0].mxu0
          %v3638 = vadd.f32 0.0, %v3637
          %v3639 = vpop.f32.mrb[0].mxu0
          %v3640 = vadd.f32 0.0, %v3639
          %v3641 = vpop.f32.mrb[0].mxu0
          %v3642 = vadd.f32 0.0, %v3641
          %v3643 = vpop.f32.mrb[0].mxu0
          %v3644 = vadd.f32 0.0, %v3643
          %3645 = vdwg.mxu0
          %3646 = vmatprep.subr.bf16.mxu0 %v3366
          %3647 = vmatpush1.bf16.msra.mxu0 %v3365
          %3648 = vmatprep.subr.bf16.mxu0 %v3374
          %3649 = vmatpush1.bf16.msra.mxu0 %v3373
          %3650 = vmatprep.subr.bf16.mxu0 %v3382
          %3651 = vmatpush1.bf16.msra.mxu0 %v3381
          %3652 = vmatprep.subr.bf16.mxu0 %v3390
          %3653 = vmatpush1.bf16.msra.mxu0 %v3389
          %3654 = vmatprep.subr.bf16.mxu0 %v3398
          %3655 = vmatpush1.bf16.msra.mxu0 %v3397
          %3656 = vmatprep.subr.bf16.mxu0 %v3406
          %3657 = vmatpush1.bf16.msra.mxu0 %v3405
          %3658 = vmatprep.subr.bf16.mxu0 %v3414
          %3659 = vmatpush1.bf16.msra.mxu0 %v3413
          %3660 = vmatprep.subr.bf16.mxu0 %v3422
          %3661 = vmatpush1.bf16.msra.mxu0 %v3421
          %3662 = vmatprep.subr.bf16.mxu0 0
          %3663 = vmatpush1.bf16.msra.mxu0 0
          %3664 = vmatprep.subr.bf16.mxu0 0
          %3665 = vmatpush1.bf16.msra.mxu0 0
          %3666 = vmatprep.subr.bf16.mxu0 0
          %3667 = vmatpush1.bf16.msra.mxu0 0
          %3668 = vmatprep.subr.bf16.mxu0 0
          %3669 = vmatpush1.bf16.msra.mxu0 0
          %3670 = vmatprep.subr.bf16.mxu0 0
          %3671 = vmatpush1.bf16.msra.mxu0 0
          %3672 = vmatprep.subr.bf16.mxu0 0
          %3673 = vmatpush1.bf16.msra.mxu0 0
          %3674 = vmatprep.subr.bf16.mxu0 0
          %3675 = vmatpush1.bf16.msra.mxu0 0
          %3676 = vmatprep.subr.bf16.mxu0 0
          %3677 = vmatpush1.bf16.msra.mxu0 0
          %3678 = vmatprep.mubr.bf16.mxu0 0
          %3679 = vmatmul.mubr.bf16.gmra.mrb[0].mxu0 %v3163
          %v3680 = vpop.f32.mrb[0].mxu0
          %v3681 = vadd.f32 0.0, %v3680
          %v3682 = vpop.f32.mrb[0].mxu0
          %v3683 = vadd.f32 0.0, %v3682
          %v3684 = vpop.f32.mrb[0].mxu0
          %v3685 = vadd.f32 0.0, %v3684
          %v3686 = vpop.f32.mrb[0].mxu0
          %v3687 = vadd.f32 0.0, %v3686
          %3688 = vmatprep.mubr.bf16.mxu0 0
          %3689 = vmatmul.mubr.bf16.gmra.mrb[0].mxu0 %v3164
          %v3690 = vpop.f32.mrb[0].mxu0
          %v3691 = vadd.f32 0.0, %v3690
          %v3692 = vpop.f32.mrb[0].mxu0
          %v3693 = vadd.f32 0.0, %v3692
          %v3694 = vpop.f32.mrb[0].mxu0
          %v3695 = vadd.f32 0.0, %v3694
          %v3696 = vpop.f32.mrb[0].mxu0
          %v3697 = vadd.f32 0.0, %v3696
          %3698 = vdwg.mxu0
          %v3699 = vadd.f32 %v3053, %v3522
          %v3700 = vadd.f32 %v3054, %v3524
          %v3701 = vadd.f32 %v3055, %v3575
          %v3702 = vadd.f32 %v3056, %v3577
          %v3703 = vadd.f32 %v3057, %v3628
          %v3704 = vadd.f32 %v3058, %v3630
          %v3705 = vadd.f32 %v3059, %v3681
          %v3706 = vadd.f32 %v3060, %v3683
          %v3707 = vadd.f32 %v3061, %v3526
          %v3708 = vadd.f32 %v3062, %v3528
          %v3709 = vadd.f32 %v3063, %v3579
          %v3710 = vadd.f32 %v3064, %v3581
          %v3711 = vadd.f32 %v3065, %v3632
          %v3712 = vadd.f32 %v3066, %v3634
          %v3713 = vadd.f32 %v3067, %v3685
          %v3714 = vadd.f32 %v3068, %v3687
          %v3715 = vadd.f32 %v3069, %v3532
          %v3716 = vadd.f32 %v3070, %v3534
          %v3717 = vadd.f32 %v3071, %v3585
          %v3718 = vadd.f32 %v3072, %v3587
          %v3719 = vadd.f32 %v3073, %v3638
          %v3720 = vadd.f32 %v3074, %v3640
          %v3721 = vadd.f32 %v3075, %v3691
          %v3722 = vadd.f32 %v3076, %v3693
          %v3723 = vadd.f32 %v3077, %v3536
          %v3724 = vadd.f32 %v3078, %v3538
          %v3725 = vadd.f32 %v3079, %v3589
          %v3726 = vadd.f32 %v3080, %v3591
          %v3727 = vadd.f32 %v3081, %v3642
          %v3728 = vadd.f32 %v3082, %v3644
          %v3729 = vadd.f32 %v3083, %v3695
          %v3730 = vadd.f32 %v3084, %v3697
          %v3732 = vlaneseq
          %v3733 = vshrl.u32 %v3732, 7
          %v3734 = vsub.s32 0, %v3733
          %v3735 = vrot.slane %v1211, %v3734
          %v3736 = vlaneseq
          %v3737 = vshrl.u32 %v3736, 7
          %v3738 = vsub.s32 1, %v3737
          %v3739 = vrot.slane %v1211, %v3738
          %v3740 = vlaneseq
          %v3741 = vshrl.u32 %v3740, 7
          %v3742 = vsub.s32 2, %v3741
          %v3743 = vrot.slane %v1211, %v3742
          %v3744 = vlaneseq
          %v3745 = vshrl.u32 %v3744, 7
          %v3746 = vsub.s32 3, %v3745
          %v3747 = vrot.slane %v1211, %v3746
          %v3748 = vlaneseq
          %v3749 = vshrl.u32 %v3748, 7
          %v3750 = vsub.s32 4, %v3749
          %v3751 = vrot.slane %v1211, %v3750
          %v3752 = vlaneseq
          %v3753 = vshrl.u32 %v3752, 7
          %v3754 = vsub.s32 5, %v3753
          %v3755 = vrot.slane %v1211, %v3754
          %v3756 = vlaneseq
          %v3757 = vshrl.u32 %v3756, 7
          %v3758 = vsub.s32 6, %v3757
          %v3759 = vrot.slane %v1211, %v3758
          %v3760 = vlaneseq
          %v3761 = vshrl.u32 %v3760, 7
          %v3762 = vsub.s32 7, %v3761
          %v3763 = vrot.slane %v1211, %v3762
          %v3772 = vadd.f32 %v3699, %v3735
          %v3773 = vadd.f32 %v3700, %v3739
          %v3774 = vadd.f32 %v3701, %v3743
          %v3775 = vadd.f32 %v3702, %v3747
          %v3776 = vadd.f32 %v3703, %v3751
          %v3777 = vadd.f32 %v3704, %v3755
          %v3778 = vadd.f32 %v3705, %v3759
          %v3779 = vadd.f32 %v3706, %v3763
          %v3780 = vadd.f32 %v3707, %v3735
          %v3781 = vadd.f32 %v3708, %v3739
          %v3782 = vadd.f32 %v3709, %v3743
          %v3783 = vadd.f32 %v3710, %v3747
          %v3784 = vadd.f32 %v3711, %v3751
          %v3785 = vadd.f32 %v3712, %v3755
          %v3786 = vadd.f32 %v3713, %v3759
          %v3787 = vadd.f32 %v3714, %v3763
          %v3788 = vadd.f32 %v3715, %v3735
          %v3789 = vadd.f32 %v3716, %v3739
          %v3790 = vadd.f32 %v3717, %v3743
          %v3791 = vadd.f32 %v3718, %v3747
          %v3792 = vadd.f32 %v3719, %v3751
          %v3793 = vadd.f32 %v3720, %v3755
          %v3794 = vadd.f32 %v3721, %v3759
          %v3795 = vadd.f32 %v3722, %v3763
          %v3796 = vadd.f32 %v3723, %v3735
          %v3797 = vadd.f32 %v3724, %v3739
          %v3798 = vadd.f32 %v3725, %v3743
          %v3799 = vadd.f32 %v3726, %v3747
          %v3800 = vadd.f32 %v3727, %v3751
          %v3801 = vadd.f32 %v3728, %v3755
          %v3802 = vadd.f32 %v3729, %v3759
          %v3803 = vadd.f32 %v3730, %v3763
          %v3804 = vmax.f32 %v3772, 0.0
          %v3805 = vmax.f32 %v3773, 0.0
          %v3806 = vmax.f32 %v3774, 0.0
          %v3807 = vmax.f32 %v3775, 0.0
          %v3808 = vmax.f32 %v3776, 0.0
          %v3809 = vmax.f32 %v3777, 0.0
          %v3810 = vmax.f32 %v3778, 0.0
          %v3811 = vmax.f32 %v3779, 0.0
          %v3812 = vmax.f32 %v3780, 0.0
          %v3813 = vmax.f32 %v3781, 0.0
          %v3814 = vmax.f32 %v3782, 0.0
          %v3815 = vmax.f32 %v3783, 0.0
          %v3816 = vmax.f32 %v3784, 0.0
          %v3817 = vmax.f32 %v3785, 0.0
          %v3818 = vmax.f32 %v3786, 0.0
          %v3819 = vmax.f32 %v3787, 0.0
          %v3820 = vmax.f32 %v3788, 0.0
          %v3821 = vmax.f32 %v3789, 0.0
          %v3822 = vmax.f32 %v3790, 0.0
          %v3823 = vmax.f32 %v3791, 0.0
          %v3824 = vmax.f32 %v3792, 0.0
          %v3825 = vmax.f32 %v3793, 0.0
          %v3826 = vmax.f32 %v3794, 0.0
          %v3827 = vmax.f32 %v3795, 0.0
          %v3828 = vmax.f32 %v3796, 0.0
          %v3829 = vmax.f32 %v3797, 0.0
          %v3830 = vmax.f32 %v3798, 0.0
          %v3831 = vmax.f32 %v3799, 0.0
          %v3832 = vmax.f32 %v3800, 0.0
          %v3833 = vmax.f32 %v3801, 0.0
          %v3834 = vmax.f32 %v3802, 0.0
          %v3835 = vmax.f32 %v3803, 0.0
          %vm3836 = vcmp.lt.s32.totalorder %v955, 13
          %vm3837 = vcmp.lt.s32.totalorder %v956, 13
          %v3838 = vsel %vm3836, %v3804, 0.0
          %v3839 = vsel %vm3836, %v3805, 0.0
          %v3840 = vsel %vm3836, %v3806, 0.0
          %v3841 = vsel %vm3836, %v3807, 0.0
          %v3842 = vsel %vm3836, %v3808, 0.0
          %v3843 = vsel %vm3836, %v3809, 0.0
          %v3844 = vsel %vm3836, %v3810, 0.0
          %v3845 = vsel %vm3836, %v3811, 0.0
          %v3846 = vsel %vm3837, %v3812, 0.0
          %v3847 = vsel %vm3837, %v3813, 0.0
          %v3848 = vsel %vm3837, %v3814, 0.0
          %v3849 = vsel %vm3837, %v3815, 0.0
          %v3850 = vsel %vm3837, %v3816, 0.0
          %v3851 = vsel %vm3837, %v3817, 0.0
          %v3852 = vsel %vm3837, %v3818, 0.0
          %v3853 = vsel %vm3837, %v3819, 0.0
          %v3854 = vsel %vm3836, %v3820, 0.0
          %v3855 = vsel %vm3836, %v3821, 0.0
          %v3856 = vsel %vm3836, %v3822, 0.0
          %v3857 = vsel %vm3836, %v3823, 0.0
          %v3858 = vsel %vm3836, %v3824, 0.0
          %v3859 = vsel %vm3836, %v3825, 0.0
          %v3860 = vsel %vm3836, %v3826, 0.0
          %v3861 = vsel %vm3836, %v3827, 0.0
          %v3862 = vsel %vm3837, %v3828, 0.0
          %v3863 = vsel %vm3837, %v3829, 0.0
          %v3864 = vsel %vm3837, %v3830, 0.0
          %v3865 = vsel %vm3837, %v3831, 0.0
          %v3866 = vsel %vm3837, %v3832, 0.0
          %v3867 = vsel %vm3837, %v3833, 0.0
          %v3868 = vsel %vm3837, %v3834, 0.0
          %v3869 = vsel %vm3837, %v3835, 0.0
          %v3870 = vmax.f32 %v3838, %v3846
          %v3871 = vrot.slane %v3870, 4
          %v3872 = vmax.f32 %v3870, %v3871
          %v3873 = vrot.slane %v3872, 2
          %v3874 = vmax.f32 %v3872, %v3873
          %v3875 = vrot.slane %v3874, 1
          %v3876 = vmax.f32 %v3874, %v3875
          %v3877 = vmax.f32 %v3839, %v3847
          %v3878 = vrot.slane %v3877, 4
          %v3879 = vmax.f32 %v3877, %v3878
          %v3880 = vrot.slane %v3879, 2
          %v3881 = vmax.f32 %v3879, %v3880
          %v3882 = vrot.slane %v3881, 1
          %v3883 = vmax.f32 %v3881, %v3882
          %v3884 = vmax.f32 %v3840, %v3848
          %v3885 = vrot.slane %v3884, 4
          %v3886 = vmax.f32 %v3884, %v3885
          %v3887 = vrot.slane %v3886, 2
          %v3888 = vmax.f32 %v3886, %v3887
          %v3889 = vrot.slane %v3888, 1
          %v3890 = vmax.f32 %v3888, %v3889
          %v3891 = vmax.f32 %v3841, %v3849
          %v3892 = vrot.slane %v3891, 4
          %v3893 = vmax.f32 %v3891, %v3892
          %v3894 = vrot.slane %v3893, 2
          %v3895 = vmax.f32 %v3893, %v3894
          %v3896 = vrot.slane %v3895, 1
          %v3897 = vmax.f32 %v3895, %v3896
          %v3898 = vmax.f32 %v3842, %v3850
          %v3899 = vrot.slane %v3898, 4
          %v3900 = vmax.f32 %v3898, %v3899
          %v3901 = vrot.slane %v3900, 2
          %v3902 = vmax.f32 %v3900, %v3901
          %v3903 = vrot.slane %v3902, 1
          %v3904 = vmax.f32 %v3902, %v3903
          %v3905 = vmax.f32 %v3843, %v3851
          %v3906 = vrot.slane %v3905, 4
          %v3907 = vmax.f32 %v3905, %v3906
          %v3908 = vrot.slane %v3907, 2
          %v3909 = vmax.f32 %v3907, %v3908
          %v3910 = vrot.slane %v3909, 1
          %v3911 = vmax.f32 %v3909, %v3910
          %v3912 = vmax.f32 %v3844, %v3852
          %v3913 = vrot.slane %v3912, 4
          %v3914 = vmax.f32 %v3912, %v3913
          %v3915 = vrot.slane %v3914, 2
          %v3916 = vmax.f32 %v3914, %v3915
          %v3917 = vrot.slane %v3916, 1
          %v3918 = vmax.f32 %v3916, %v3917
          %v3919 = vmax.f32 %v3845, %v3853
          %v3920 = vrot.slane %v3919, 4
          %v3921 = vmax.f32 %v3919, %v3920
          %v3922 = vrot.slane %v3921, 2
          %v3923 = vmax.f32 %v3921, %v3922
          %v3924 = vrot.slane %v3923, 1
          %v3925 = vmax.f32 %v3923, %v3924
          %v3926 = vmax.f32 %v3854, %v3862
          %v3927 = vrot.slane %v3926, 4
          %v3928 = vmax.f32 %v3926, %v3927
          %v3929 = vrot.slane %v3928, 2
          %v3930 = vmax.f32 %v3928, %v3929
          %v3931 = vrot.slane %v3930, 1
          %v3932 = vmax.f32 %v3930, %v3931
          %v3933 = vmax.f32 %v3855, %v3863
          %v3934 = vrot.slane %v3933, 4
          %v3935 = vmax.f32 %v3933, %v3934
          %v3936 = vrot.slane %v3935, 2
          %v3937 = vmax.f32 %v3935, %v3936
          %v3938 = vrot.slane %v3937, 1
          %v3939 = vmax.f32 %v3937, %v3938
          %v3940 = vmax.f32 %v3856, %v3864
          %v3941 = vrot.slane %v3940, 4
          %v3942 = vmax.f32 %v3940, %v3941
          %v3943 = vrot.slane %v3942, 2
          %v3944 = vmax.f32 %v3942, %v3943
          %v3945 = vrot.slane %v3944, 1
          %v3946 = vmax.f32 %v3944, %v3945
          %v3947 = vmax.f32 %v3857, %v3865
          %v3948 = vrot.slane %v3947, 4
          %v3949 = vmax.f32 %v3947, %v3948
          %v3950 = vrot.slane %v3949, 2
          %v3951 = vmax.f32 %v3949, %v3950
          %v3952 = vrot.slane %v3951, 1
          %v3953 = vmax.f32 %v3951, %v3952
          %v3954 = vmax.f32 %v3858, %v3866
          %v3955 = vrot.slane %v3954, 4
          %v3956 = vmax.f32 %v3954, %v3955
          %v3957 = vrot.slane %v3956, 2
          %v3958 = vmax.f32 %v3956, %v3957
          %v3959 = vrot.slane %v3958, 1
          %v3960 = vmax.f32 %v3958, %v3959
          %v3961 = vmax.f32 %v3859, %v3867
          %v3962 = vrot.slane %v3961, 4
          %v3963 = vmax.f32 %v3961, %v3962
          %v3964 = vrot.slane %v3963, 2
          %v3965 = vmax.f32 %v3963, %v3964
          %v3966 = vrot.slane %v3965, 1
          %v3967 = vmax.f32 %v3965, %v3966
          %v3968 = vmax.f32 %v3860, %v3868
          %v3969 = vrot.slane %v3968, 4
          %v3970 = vmax.f32 %v3968, %v3969
          %v3971 = vrot.slane %v3970, 2
          %v3972 = vmax.f32 %v3970, %v3971
          %v3973 = vrot.slane %v3972, 1
          %v3974 = vmax.f32 %v3972, %v3973
          %v3975 = vmax.f32 %v3861, %v3869
          %v3976 = vrot.slane %v3975, 4
          %v3977 = vmax.f32 %v3975, %v3976
          %v3978 = vrot.slane %v3977, 2
          %v3979 = vmax.f32 %v3977, %v3978
          %v3980 = vrot.slane %v3979, 1
          %v3981 = vmax.f32 %v3979, %v3980
          %v3998 = vcombine.low %v3876, %v3883
          %v3999 = vcombine.low %v3890, %v3897
          %v4001 = vunpack.c.l.s4 1983009808
          %v4002 = vunpack.c.0.s8 %v4001
          %v4003 = vlaneseq
          %v4004 = vshrl.u32 %v4003, 7
          %v4005 = vsub.s32 %v4002, %v4004
          %v4006 = vrot.slane %v3998, %v4005
          %v4008 = vunpack.c.l.s4 1983009808
          %v4009 = vunpack.c.0.s8 %v4008
          %v4010 = vlaneseq
          %v4011 = vshrl.u32 %v4010, 7
          %v4012 = vsub.s32 %v4009, %v4011
          %v4013 = vrot.slane %v3999, %v4012
          %v4014 = vcombine.low %v4006, %v4013
          %v4015 = vcombine.low %v3904, %v3911
          %v4016 = vcombine.low %v3918, %v3925
          %v4018 = vunpack.c.l.s4 1983009808
          %v4019 = vunpack.c.0.s8 %v4018
          %v4020 = vlaneseq
          %v4021 = vshrl.u32 %v4020, 7
          %v4022 = vsub.s32 %v4019, %v4021
          %v4023 = vrot.slane %v4015, %v4022
          %v4025 = vunpack.c.l.s4 1983009808
          %v4026 = vunpack.c.0.s8 %v4025
          %v4027 = vlaneseq
          %v4028 = vshrl.u32 %v4027, 7
          %v4029 = vsub.s32 %v4026, %v4028
          %v4030 = vrot.slane %v4016, %v4029
          %v4031 = vcombine.low %v4023, %v4030
          %v4032 = vcombine.low %v3932, %v3939
          %v4033 = vcombine.low %v3946, %v3953
          %v4035 = vunpack.c.l.s4 1983009808
          %v4036 = vunpack.c.0.s8 %v4035
          %v4037 = vlaneseq
          %v4038 = vshrl.u32 %v4037, 7
          %v4039 = vsub.s32 %v4036, %v4038
          %v4040 = vrot.slane %v4032, %v4039
          %v4042 = vunpack.c.l.s4 1983009808
          %v4043 = vunpack.c.0.s8 %v4042
          %v4044 = vlaneseq
          %v4045 = vshrl.u32 %v4044, 7
          %v4046 = vsub.s32 %v4043, %v4045
          %v4047 = vrot.slane %v4033, %v4046
          %v4048 = vcombine.low %v4040, %v4047
          %v4049 = vcombine.low %v3960, %v3967
          %v4050 = vcombine.low %v3974, %v3981
          %v4052 = vunpack.c.l.s4 1983009808
          %v4053 = vunpack.c.0.s8 %v4052
          %v4054 = vlaneseq
          %v4055 = vshrl.u32 %v4054, 7
          %v4056 = vsub.s32 %v4053, %v4055
          %v4057 = vrot.slane %v4049, %v4056
          %v4059 = vunpack.c.l.s4 1983009808
          %v4060 = vunpack.c.0.s8 %v4059
          %v4061 = vlaneseq
          %v4062 = vshrl.u32 %v4061, 7
          %v4063 = vsub.s32 %v4060, %v4062
          %v4064 = vrot.slane %v4050, %v4063
          %v4065 = vcombine.low %v4057, %v4064
          %v4066 = vsel %vm1187, %v4014, %v4014
          %v4067 = vsel %vm1189, %v4014, %v4066
          %v4068 = vrot.slane %v4048, 7
          %v4069 = vsel %vm1192, %v4068, %v4067
          %v4070 = vsel %vm1194, %v4068, %v4069
          %v4071 = vsel %vm1196, %v4068, %v4070
          %v4072 = vsel %vm1198, %v4068, %v4071
          %v4073 = vsel %vm1187, %v4031, %v4031
          %v4074 = vsel %vm1189, %v4031, %v4073
          %v4075 = vrot.slane %v4065, 7
          %v4076 = vsel %vm1192, %v4075, %v4074
          %v4077 = vsel %vm1194, %v4075, %v4076
          %v4078 = vsel %vm1196, %v4075, %v4077
          %v4079 = vsel %vm1198, %v4075, %v4078
          %4082 = vst [vmem:[%s260 + $0x10] sm:$0xff] %v4072
          %4083 = vst [vmem:[%s260 + $0x18] sm:$0xff] %v4079
        $region48: #{tpu_custom_call.1} parent=31 // pred_fallthru
          _
        %p4084 = scmp.eq.s32.totalorder %s25, 1
        // Predicated region
        $region49: #{tpu_custom_call.1} parent=31 // pred_check
          %p4085 = pneg %p4084
        $region50: #{tpu_custom_call.1} parent=31 // pred_check_branch
          %4087 = sbr.rel (%p4085) target = $region52
        $region51: #{tpu_custom_call.1} parent=31 // pred_region
          %v4088 = vld [vmem:[%s233] sm:$0xff]
          %v4089 = vld [vmem:[#allocation2] sm:$0xf]
          %v4090 = vld [vmem:[#allocation2 + $0x4] sm:$0xf]
          %v4091 = vld [vmem:[#allocation2 + $0x8] sm:$0xf]
          %v4092 = vld [vmem:[#allocation2 + $0xc] sm:$0xf]
          %v4093 = vld [vmem:[%s224] sm:$0xff]
          %v4094 = vld [vmem:[%s224 + $0x8] sm:$0xff]
          %v4095 = vld [vmem:[%s224 + $0x10] sm:$0xff]
          %v4096 = vld [vmem:[%s224 + $0x18] sm:$0xff]
          %v4097 = vld [vmem:[%s224 + $0x20] sm:$0xff]
          %v4098 = vld [vmem:[%s224 + $0x28] sm:$0xff]
          %v4099 = vld [vmem:[%s224 + $0x30] sm:$0xff]
          %v4100 = vld [vmem:[%s224 + $0x38] sm:$0xff]
          %v4101 = vld [vmem:[%s224 + $0x40] sm:$0xff]
          %v4102 = vld [vmem:[%s224 + $0x48] sm:$0xff]
          %v4103 = vld [vmem:[%s224 + $0x50] sm:$0xff]
          %v4104 = vld [vmem:[%s224 + $0x58] sm:$0xff]
          %v4105 = vld [vmem:[%s224 + $0x60] sm:$0xff]
          %v4106 = vld [vmem:[%s224 + $0x68] sm:$0xff]
          %v4107 = vld [vmem:[%s224 + $0x70] sm:$0xff]
          %v4108 = vld [vmem:[%s224 + $0x78] sm:$0xff]
          %v4109 = vld [vmem:[%s224 + $0x80] sm:$0xff]
          %v4110 = vld [vmem:[%s224 + $0x88] sm:$0xff]
          %v4111 = vld [vmem:[%s224 + $0x90] sm:$0xff]
          %v4112 = vld [vmem:[%s224 + $0x98] sm:$0xff]
          %v4113 = vld [vmem:[%s224 + $0xa0] sm:$0xff]
          %v4114 = vld [vmem:[%s224 + $0xa8] sm:$0xff]
          %v4115 = vld [vmem:[%s224 + $0xb0] sm:$0xff]
          %v4116 = vld [vmem:[%s224 + $0xb8] sm:$0xff]
          %v4117 = vld [vmem:[%s224 + $0xc0] sm:$0xff]
          %v4118 = vld [vmem:[%s224 + $0xc8] sm:$0xff]
          %v4119 = vld [vmem:[%s224 + $0xd0] sm:$0xff]
          %v4120 = vld [vmem:[%s224 + $0xd8] sm:$0xff]
          %v4121 = vld [vmem:[%s224 + $0xe0] sm:$0xff]
          %v4122 = vld [vmem:[%s224 + $0xe8] sm:$0xff]
          %v4123 = vld [vmem:[%s224 + $0xf0] sm:$0xff]
          %v4124 = vld [vmem:[%s224 + $0xf8] sm:$0xff]
          %v4125 = vld [vmem:[%s224 + $0x100] sm:$0xff]
          %v4126 = vld [vmem:[%s224 + $0x108] sm:$0xff]
          %v4127 = vld [vmem:[%s224 + $0x110] sm:$0xff]
          %v4128 = vld [vmem:[%s224 + $0x118] sm:$0xff]
          %v4129 = vld [vmem:[%s224 + $0x120] sm:$0xff]
          %v4130 = vld [vmem:[%s224 + $0x128] sm:$0xff]
          %v4131 = vld [vmem:[%s224 + $0x130] sm:$0xff]
          %v4132 = vld [vmem:[%s224 + $0x138] sm:$0xff]
          %v4133 = vld [vmem:[%s224 + $0x140] sm:$0xff]
          %v4134 = vld [vmem:[%s224 + $0x148] sm:$0xff]
          %v4135 = vld [vmem:[%s224 + $0x150] sm:$0xff]
          %v4136 = vld [vmem:[%s224 + $0x158] sm:$0xff]
          %v4137 = vld [vmem:[%s224 + $0x160] sm:$0xff]
          %v4138 = vld [vmem:[%s224 + $0x168] sm:$0xff]
          %v4139 = vld [vmem:[%s224 + $0x170] sm:$0xff]
          %v4140 = vld [vmem:[%s224 + $0x178] sm:$0xff]
          %v4141 = vld [vmem:[%s224 + $0x180] sm:$0xff]
          %v4142 = vld [vmem:[%s224 + $0x188] sm:$0xff]
          %v4143 = vld [vmem:[%s224 + $0x190] sm:$0xff]
          %v4144 = vld [vmem:[%s224 + $0x198] sm:$0xff]
          %v4145 = vld [vmem:[%s224 + $0x1a0] sm:$0xff]
          %v4146 = vld [vmem:[%s224 + $0x1a8] sm:$0xff]
          %v4147 = vld [vmem:[%s224 + $0x1b0] sm:$0xff]
          %v4148 = vld [vmem:[%s224 + $0x1b8] sm:$0xff]
          %v4149 = vld [vmem:[%s224 + $0x1c0] sm:$0xff]
          %v4150 = vld [vmem:[%s224 + $0x1c8] sm:$0xff]
          %v4151 = vld [vmem:[%s224 + $0x1d0] sm:$0xff]
          %v4152 = vld [vmem:[%s224 + $0x1d8] sm:$0xff]
          %v4153 = vld [vmem:[%s224 + $0x1e0] sm:$0xff]
          %v4154 = vld [vmem:[%s224 + $0x1e8] sm:$0xff]
          %v4155 = vld [vmem:[%s224 + $0x1f0] sm:$0xff]
          %v4156 = vld [vmem:[%s224 + $0x1f8] sm:$0xff]
          %s4157 = scalar_lea.vmem [#allocation2], 16
          %v4158 = vld [vmem:[%s4157] sm:$0xf]
          %v4159 = vld [vmem:[%s4157 + $0x4] sm:$0xf]
          %v4160 = vld [vmem:[%s4157 + $0x8] sm:$0xf]
          %v4161 = vld [vmem:[%s4157 + $0xc] sm:$0xf]
          %s4162 = scalar_lea.vmem %s224, 512 [#allocation5]
          %v4163 = vld [vmem:[%s4162] sm:$0xff]
          %v4164 = vld [vmem:[%s4162 + $0x8] sm:$0xff]
          %v4165 = vld [vmem:[%s4162 + $0x10] sm:$0xff]
          %v4166 = vld [vmem:[%s4162 + $0x18] sm:$0xff]
          %v4167 = vld [vmem:[%s4162 + $0x20] sm:$0xff]
          %v4168 = vld [vmem:[%s4162 + $0x28] sm:$0xff]
          %v4169 = vld [vmem:[%s4162 + $0x30] sm:$0xff]
          %v4170 = vld [vmem:[%s4162 + $0x38] sm:$0xff]
          %v4171 = vld [vmem:[%s4162 + $0x40] sm:$0xff]
          %v4172 = vld [vmem:[%s4162 + $0x48] sm:$0xff]
          %v4173 = vld [vmem:[%s4162 + $0x50] sm:$0xff]
          %v4174 = vld [vmem:[%s4162 + $0x58] sm:$0xff]
          %v4175 = vld [vmem:[%s4162 + $0x60] sm:$0xff]
          %v4176 = vld [vmem:[%s4162 + $0x68] sm:$0xff]
          %v4177 = vld [vmem:[%s4162 + $0x70] sm:$0xff]
          %v4178 = vld [vmem:[%s4162 + $0x78] sm:$0xff]
          %v4179 = vld [vmem:[%s4162 + $0x80] sm:$0xff]
          %v4180 = vld [vmem:[%s4162 + $0x88] sm:$0xff]
          %v4181 = vld [vmem:[%s4162 + $0x90] sm:$0xff]
          %v4182 = vld [vmem:[%s4162 + $0x98] sm:$0xff]
          %v4183 = vld [vmem:[%s4162 + $0xa0] sm:$0xff]
          %v4184 = vld [vmem:[%s4162 + $0xa8] sm:$0xff]
          %v4185 = vld [vmem:[%s4162 + $0xb0] sm:$0xff]
          %v4186 = vld [vmem:[%s4162 + $0xb8] sm:$0xff]
          %v4187 = vld [vmem:[%s4162 + $0xc0] sm:$0xff]
          %v4188 = vld [vmem:[%s4162 + $0xc8] sm:$0xff]
          %v4189 = vld [vmem:[%s4162 + $0xd0] sm:$0xff]
          %v4190 = vld [vmem:[%s4162 + $0xd8] sm:$0xff]
          %v4191 = vld [vmem:[%s4162 + $0xe0] sm:$0xff]
          %v4192 = vld [vmem:[%s4162 + $0xe8] sm:$0xff]
          %v4193 = vld [vmem:[%s4162 + $0xf0] sm:$0xff]
          %v4194 = vld [vmem:[%s4162 + $0xf8] sm:$0xff]
          %v4195 = vld [vmem:[%s4162 + $0x100] sm:$0xff]
          %v4196 = vld [vmem:[%s4162 + $0x108] sm:$0xff]
          %v4197 = vld [vmem:[%s4162 + $0x110] sm:$0xff]
          %v4198 = vld [vmem:[%s4162 + $0x118] sm:$0xff]
          %v4199 = vld [vmem:[%s4162 + $0x120] sm:$0xff]
          %v4200 = vld [vmem:[%s4162 + $0x128] sm:$0xff]
          %v4201 = vld [vmem:[%s4162 + $0x130] sm:$0xff]
          %v4202 = vld [vmem:[%s4162 + $0x138] sm:$0xff]
          %v4203 = vld [vmem:[%s4162 + $0x140] sm:$0xff]
          %v4204 = vld [vmem:[%s4162 + $0x148] sm:$0xff]
          %v4205 = vld [vmem:[%s4162 + $0x150] sm:$0xff]
          %v4206 = vld [vmem:[%s4162 + $0x158] sm:$0xff]
          %v4207 = vld [vmem:[%s4162 + $0x160] sm:$0xff]
          %v4208 = vld [vmem:[%s4162 + $0x168] sm:$0xff]
          %v4209 = vld [vmem:[%s4162 + $0x170] sm:$0xff]
          %v4210 = vld [vmem:[%s4162 + $0x178] sm:$0xff]
          %v4211 = vld [vmem:[%s4162 + $0x180] sm:$0xff]
          %v4212 = vld [vmem:[%s4162 + $0x188] sm:$0xff]
          %v4213 = vld [vmem:[%s4162 + $0x190] sm:$0xff]
          %v4214 = vld [vmem:[%s4162 + $0x198] sm:$0xff]
          %v4215 = vld [vmem:[%s4162 + $0x1a0] sm:$0xff]
          %v4216 = vld [vmem:[%s4162 + $0x1a8] sm:$0xff]
          %v4217 = vld [vmem:[%s4162 + $0x1b0] sm:$0xff]
          %v4218 = vld [vmem:[%s4162 + $0x1b8] sm:$0xff]
          %v4219 = vld [vmem:[%s4162 + $0x1c0] sm:$0xff]
          %v4220 = vld [vmem:[%s4162 + $0x1c8] sm:$0xff]
          %v4221 = vld [vmem:[%s4162 + $0x1d0] sm:$0xff]
          %v4222 = vld [vmem:[%s4162 + $0x1d8] sm:$0xff]
          %v4223 = vld [vmem:[%s4162 + $0x1e0] sm:$0xff]
          %v4224 = vld [vmem:[%s4162 + $0x1e8] sm:$0xff]
          %v4225 = vld [vmem:[%s4162 + $0x1f0] sm:$0xff]
          %v4226 = vld [vmem:[%s4162 + $0x1f8] sm:$0xff]
          %v4231 = vunpack.c.l.b16 %v4158
          %v4232 = vunpack.c.l.b16 %v4159
          %v4233 = vunpack.c.l.b16 %v4160
          %v4234 = vunpack.c.l.b16 %v4161
          %v4235 = vpack.c.b16 %v4232, %v4231
          %v4236 = vpack.c.b16 %v4234, %v4233
          %v4303 = vunpack.c.l.b16 %v4163
          %v4304 = vunpack.c.h.b16 %v4163
          %v4305 = vunpack.c.l.b16 %v4164
          %v4306 = vunpack.c.h.b16 %v4164
          %v4307 = vunpack.c.l.b16 %v4165
          %v4308 = vunpack.c.h.b16 %v4165
          %v4309 = vunpack.c.l.b16 %v4166
          %v4310 = vunpack.c.h.b16 %v4166
          %v4311 = vunpack.c.l.b16 %v4167
          %v4312 = vunpack.c.h.b16 %v4167
          %v4313 = vunpack.c.l.b16 %v4168
          %v4314 = vunpack.c.h.b16 %v4168
          %v4315 = vunpack.c.l.b16 %v4169
          %v4316 = vunpack.c.h.b16 %v4169
          %v4317 = vunpack.c.l.b16 %v4170
          %v4318 = vunpack.c.h.b16 %v4170
          %v4319 = vunpack.c.l.b16 %v4171
          %v4320 = vunpack.c.h.b16 %v4171
          %v4321 = vunpack.c.l.b16 %v4172
          %v4322 = vunpack.c.h.b16 %v4172
          %v4323 = vunpack.c.l.b16 %v4173
          %v4324 = vunpack.c.h.b16 %v4173
          %v4325 = vunpack.c.l.b16 %v4174
          %v4326 = vunpack.c.h.b16 %v4174
          %v4327 = vunpack.c.l.b16 %v4175
          %v4328 = vunpack.c.h.b16 %v4175
          %v4329 = vunpack.c.l.b16 %v4176
          %v4330 = vunpack.c.h.b16 %v4176
          %v4331 = vunpack.c.l.b16 %v4177
          %v4332 = vunpack.c.h.b16 %v4177
          %v4333 = vunpack.c.l.b16 %v4178
          %v4334 = vunpack.c.h.b16 %v4178
          %v4335 = vunpack.c.l.b16 %v4179
          %v4336 = vunpack.c.h.b16 %v4179
          %v4337 = vunpack.c.l.b16 %v4180
          %v4338 = vunpack.c.h.b16 %v4180
          %v4339 = vunpack.c.l.b16 %v4181
          %v4340 = vunpack.c.h.b16 %v4181
          %v4341 = vunpack.c.l.b16 %v4182
          %v4342 = vunpack.c.h.b16 %v4182
          %v4343 = vunpack.c.l.b16 %v4183
          %v4344 = vunpack.c.h.b16 %v4183
          %v4345 = vunpack.c.l.b16 %v4184
          %v4346 = vunpack.c.h.b16 %v4184
          %v4347 = vunpack.c.l.b16 %v4185
          %v4348 = vunpack.c.h.b16 %v4185
          %v4349 = vunpack.c.l.b16 %v4186
          %v4350 = vunpack.c.h.b16 %v4186
          %v4351 = vunpack.c.l.b16 %v4187
          %v4352 = vunpack.c.h.b16 %v4187
          %v4353 = vunpack.c.l.b16 %v4188
          %v4354 = vunpack.c.h.b16 %v4188
          %v4355 = vunpack.c.l.b16 %v4189
          %v4356 = vunpack.c.h.b16 %v4189
          %v4357 = vunpack.c.l.b16 %v4190
          %v4358 = vunpack.c.h.b16 %v4190
          %v4359 = vunpack.c.l.b16 %v4191
          %v4360 = vunpack.c.h.b16 %v4191
          %v4361 = vunpack.c.l.b16 %v4192
          %v4362 = vunpack.c.h.b16 %v4192
          %v4363 = vunpack.c.l.b16 %v4193
          %v4364 = vunpack.c.h.b16 %v4193
          %v4365 = vunpack.c.l.b16 %v4194
          %v4366 = vunpack.c.h.b16 %v4194
          %v4367 = vunpack.c.l.b16 %v4195
          %v4368 = vunpack.c.h.b16 %v4195
          %v4369 = vunpack.c.l.b16 %v4196
          %v4370 = vunpack.c.h.b16 %v4196
          %v4371 = vunpack.c.l.b16 %v4197
          %v4372 = vunpack.c.h.b16 %v4197
          %v4373 = vunpack.c.l.b16 %v4198
          %v4374 = vunpack.c.h.b16 %v4198
          %v4375 = vunpack.c.l.b16 %v4199
          %v4376 = vunpack.c.h.b16 %v4199
          %v4377 = vunpack.c.l.b16 %v4200
          %v4378 = vunpack.c.h.b16 %v4200
          %v4379 = vunpack.c.l.b16 %v4201
          %v4380 = vunpack.c.h.b16 %v4201
          %v4381 = vunpack.c.l.b16 %v4202
          %v4382 = vunpack.c.h.b16 %v4202
          %v4383 = vunpack.c.l.b16 %v4203
          %v4384 = vunpack.c.h.b16 %v4203
          %v4385 = vunpack.c.l.b16 %v4204
          %v4386 = vunpack.c.h.b16 %v4204
          %v4387 = vunpack.c.l.b16 %v4205
          %v4388 = vunpack.c.h.b16 %v4205
          %v4389 = vunpack.c.l.b16 %v4206
          %v4390 = vunpack.c.h.b16 %v4206
          %v4391 = vunpack.c.l.b16 %v4207
          %v4392 = vunpack.c.h.b16 %v4207
          %v4393 = vunpack.c.l.b16 %v4208
          %v4394 = vunpack.c.h.b16 %v4208
          %v4395 = vunpack.c.l.b16 %v4209
          %v4396 = vunpack.c.h.b16 %v4209
          %v4397 = vunpack.c.l.b16 %v4210
          %v4398 = vunpack.c.h.b16 %v4210
          %v4399 = vunpack.c.l.b16 %v4211
          %v4400 = vunpack.c.h.b16 %v4211
          %v4401 = vunpack.c.l.b16 %v4212
          %v4402 = vunpack.c.h.b16 %v4212
          %v4403 = vunpack.c.l.b16 %v4213
          %v4404 = vunpack.c.h.b16 %v4213
          %v4405 = vunpack.c.l.b16 %v4214
          %v4406 = vunpack.c.h.b16 %v4214
          %v4407 = vunpack.c.l.b16 %v4215
          %v4408 = vunpack.c.h.b16 %v4215
          %v4409 = vunpack.c.l.b16 %v4216
          %v4410 = vunpack.c.h.b16 %v4216
          %v4411 = vunpack.c.l.b16 %v4217
          %v4412 = vunpack.c.h.b16 %v4217
          %v4413 = vunpack.c.l.b16 %v4218
          %v4414 = vunpack.c.h.b16 %v4218
          %v4415 = vunpack.c.l.b16 %v4219
          %v4416 = vunpack.c.h.b16 %v4219
          %v4417 = vunpack.c.l.b16 %v4220
          %v4418 = vunpack.c.h.b16 %v4220
          %v4419 = vunpack.c.l.b16 %v4221
          %v4420 = vunpack.c.h.b16 %v4221
          %v4421 = vunpack.c.l.b16 %v4222
          %v4422 = vunpack.c.h.b16 %v4222
          %v4423 = vunpack.c.l.b16 %v4223
          %v4424 = vunpack.c.h.b16 %v4223
          %v4425 = vunpack.c.l.b16 %v4224
          %v4426 = vunpack.c.h.b16 %v4224
          %v4427 = vunpack.c.l.b16 %v4225
          %v4428 = vunpack.c.h.b16 %v4225
          %v4429 = vunpack.c.l.b16 %v4226
          %v4430 = vunpack.c.h.b16 %v4226
          %v4431 = vpack.c.b16 %v4311, %v4303
          %v4432 = vpack.c.b16 %v4312, %v4304
          %v4433 = vpack.c.b16 %v4313, %v4305
          %v4434 = vpack.c.b16 %v4314, %v4306
          %v4435 = vpack.c.b16 %v4315, %v4307
          %v4436 = vpack.c.b16 %v4316, %v4308
          %v4437 = vpack.c.b16 %v4317, %v4309
          %v4438 = vpack.c.b16 %v4318, %v4310
          %v4439 = vpack.c.b16 %v4327, %v4319
          %v4440 = vpack.c.b16 %v4328, %v4320
          %v4441 = vpack.c.b16 %v4329, %v4321
          %v4442 = vpack.c.b16 %v4330, %v4322
          %v4443 = vpack.c.b16 %v4331, %v4323
          %v4444 = vpack.c.b16 %v4332, %v4324
          %v4445 = vpack.c.b16 %v4333, %v4325
          %v4446 = vpack.c.b16 %v4334, %v4326
          %v4447 = vpack.c.b16 %v4343, %v4335
          %v4448 = vpack.c.b16 %v4344, %v4336
          %v4449 = vpack.c.b16 %v4345, %v4337
          %v4450 = vpack.c.b16 %v4346, %v4338
          %v4451 = vpack.c.b16 %v4347, %v4339
          %v4452 = vpack.c.b16 %v4348, %v4340
          %v4453 = vpack.c.b16 %v4349, %v4341
          %v4454 = vpack.c.b16 %v4350, %v4342
          %v4455 = vpack.c.b16 %v4359, %v4351
          %v4456 = vpack.c.b16 %v4360, %v4352
          %v4457 = vpack.c.b16 %v4361, %v4353
          %v4458 = vpack.c.b16 %v4362, %v4354
          %v4459 = vpack.c.b16 %v4363, %v4355
          %v4460 = vpack.c.b16 %v4364, %v4356
          %v4461 = vpack.c.b16 %v4365, %v4357
          %v4462 = vpack.c.b16 %v4366, %v4358
          %v4463 = vpack.c.b16 %v4375, %v4367
          %v4464 = vpack.c.b16 %v4376, %v4368
          %v4465 = vpack.c.b16 %v4377, %v4369
          %v4466 = vpack.c.b16 %v4378, %v4370
          %v4467 = vpack.c.b16 %v4379, %v4371
          %v4468 = vpack.c.b16 %v4380, %v4372
          %v4469 = vpack.c.b16 %v4381, %v4373
          %v4470 = vpack.c.b16 %v4382, %v4374
          %v4471 = vpack.c.b16 %v4391, %v4383
          %v4472 = vpack.c.b16 %v4392, %v4384
          %v4473 = vpack.c.b16 %v4393, %v4385
          %v4474 = vpack.c.b16 %v4394, %v4386
          %v4475 = vpack.c.b16 %v4395, %v4387
          %v4476 = vpack.c.b16 %v4396, %v4388
          %v4477 = vpack.c.b16 %v4397, %v4389
          %v4478 = vpack.c.b16 %v4398, %v4390
          %v4479 = vpack.c.b16 %v4407, %v4399
          %v4480 = vpack.c.b16 %v4408, %v4400
          %v4481 = vpack.c.b16 %v4409, %v4401
          %v4482 = vpack.c.b16 %v4410, %v4402
          %v4483 = vpack.c.b16 %v4411, %v4403
          %v4484 = vpack.c.b16 %v4412, %v4404
          %v4485 = vpack.c.b16 %v4413, %v4405
          %v4486 = vpack.c.b16 %v4414, %v4406
          %v4487 = vpack.c.b16 %v4423, %v4415
          %v4488 = vpack.c.b16 %v4424, %v4416
          %v4489 = vpack.c.b16 %v4425, %v4417
          %v4490 = vpack.c.b16 %v4426, %v4418
          %v4491 = vpack.c.b16 %v4427, %v4419
          %v4492 = vpack.c.b16 %v4428, %v4420
          %v4493 = vpack.c.b16 %v4429, %v4421
          %v4494 = vpack.c.b16 %v4430, %v4422
          %4559 = vmatprep.subr.bf16.mxu0 %v4432
          %4560 = vmatpush1.bf16.msra.mxu0 %v4431
          %4561 = vmatprep.subr.bf16.mxu0 %v4440
          %4562 = vmatpush1.bf16.msra.mxu0 %v4439
          %4563 = vmatprep.subr.bf16.mxu0 %v4448
          %4564 = vmatpush1.bf16.msra.mxu0 %v4447
          %4565 = vmatprep.subr.bf16.mxu0 %v4456
          %4566 = vmatpush1.bf16.msra.mxu0 %v4455
          %4567 = vmatprep.subr.bf16.mxu0 %v4464
          %4568 = vmatpush1.bf16.msra.mxu0 %v4463
          %4569 = vmatprep.subr.bf16.mxu0 %v4472
          %4570 = vmatpush1.bf16.msra.mxu0 %v4471
          %4571 = vmatprep.subr.bf16.mxu0 %v4480
          %4572 = vmatpush1.bf16.msra.mxu0 %v4479
          %4573 = vmatprep.subr.bf16.mxu0 %v4488
          %4574 = vmatpush1.bf16.msra.mxu0 %v4487
          %4575 = vmatprep.subr.bf16.mxu0 0
          %4576 = vmatpush1.bf16.msra.mxu0 0
          %4577 = vmatprep.subr.bf16.mxu0 0
          %4578 = vmatpush1.bf16.msra.mxu0 0
          %4579 = vmatprep.subr.bf16.mxu0 0
          %4580 = vmatpush1.bf16.msra.mxu0 0
          %4581 = vmatprep.subr.bf16.mxu0 0
          %4582 = vmatpush1.bf16.msra.mxu0 0
          %4583 = vmatprep.subr.bf16.mxu0 0
          %4584 = vmatpush1.bf16.msra.mxu0 0
          %4585 = vmatprep.subr.bf16.mxu0 0
          %4586 = vmatpush1.bf16.msra.mxu0 0
          %4587 = vmatprep.subr.bf16.mxu0 0
          %4588 = vmatpush1.bf16.msra.mxu0 0
          %4589 = vmatprep.subr.bf16.mxu0 0
          %4590 = vmatpush1.bf16.msra.mxu0 0
          %4591 = vmatprep.mubr.bf16.mxu0 0
          %4592 = vmatmul.mubr.bf16.gmra.mrb[0].mxu0 %v4235
          %v4593 = vpop.f32.mrb[0].mxu0
          %v4594 = vadd.f32 0.0, %v4593
          %v4595 = vpop.f32.mrb[0].mxu0
          %v4596 = vadd.f32 0.0, %v4595
          %v4597 = vpop.f32.mrb[0].mxu0
          %v4598 = vadd.f32 0.0, %v4597
          %v4599 = vpop.f32.mrb[0].mxu0
          %v4600 = vadd.f32 0.0, %v4599
          %4601 = vmatprep.mubr.bf16.mxu0 0
          %4602 = vmatmul.mubr.bf16.gmra.mrb[0].mxu0 %v4236
          %v4603 = vpop.f32.mrb[0].mxu0
          %v4604 = vadd.f32 0.0, %v4603
          %v4605 = vpop.f32.mrb[0].mxu0
          %v4606 = vadd.f32 0.0, %v4605
          %v4607 = vpop.f32.mrb[0].mxu0
          %v4608 = vadd.f32 0.0, %v4607
          %v4609 = vpop.f32.mrb[0].mxu0
          %v4610 = vadd.f32 0.0, %v4609
          %4611 = vdwg.mxu0
          %4612 = vmatprep.subr.bf16.mxu0 %v4434
          %4613 = vmatpush1.bf16.msra.mxu0 %v4433
          %4614 = vmatprep.subr.bf16.mxu0 %v4442
          %4615 = vmatpush1.bf16.msra.mxu0 %v4441
          %4616 = vmatprep.subr.bf16.mxu0 %v4450
          %4617 = vmatpush1.bf16.msra.mxu0 %v4449
          %4618 = vmatprep.subr.bf16.mxu0 %v4458
          %4619 = vmatpush1.bf16.msra.mxu0 %v4457
          %4620 = vmatprep.subr.bf16.mxu0 %v4466
          %4621 = vmatpush1.bf16.msra.mxu0 %v4465
          %4622 = vmatprep.subr.bf16.mxu0 %v4474
          %4623 = vmatpush1.bf16.msra.mxu0 %v4473
          %4624 = vmatprep.subr.bf16.mxu0 %v4482
          %4625 = vmatpush1.bf16.msra.mxu0 %v4481
          %4626 = vmatprep.subr.bf16.mxu0 %v4490
          %4627 = vmatpush1.bf16.msra.mxu0 %v4489
          %4628 = vmatprep.subr.bf16.mxu0 0
          %4629 = vmatpush1.bf16.msra.mxu0 0
          %4630 = vmatprep.subr.bf16.mxu0 0
          %4631 = vmatpush1.bf16.msra.mxu0 0
          %4632 = vmatprep.subr.bf16.mxu0 0
          %4633 = vmatpush1.bf16.msra.mxu0 0
          %4634 = vmatprep.subr.bf16.mxu0 0
          %4635 = vmatpush1.bf16.msra.mxu0 0
          %4636 = vmatprep.subr.bf16.mxu0 0
          %4637 = vmatpush1.bf16.msra.mxu0 0
          %4638 = vmatprep.subr.bf16.mxu0 0
          %4639 = vmatpush1.bf16.msra.mxu0 0
          %4640 = vmatprep.subr.bf16.mxu0 0
          %4641 = vmatpush1.bf16.msra.mxu0 0
          %4642 = vmatprep.subr.bf16.mxu0 0
          %4643 = vmatpush1.bf16.msra.mxu0 0
          %4644 = vmatprep.mubr.bf16.mxu0 0
          %4645 = vmatmul.mubr.bf16.gmra.mrb[0].mxu0 %v4235
          %v4646 = vpop.f32.mrb[0].mxu0
          %v4647 = vadd.f32 0.0, %v4646
          %v4648 = vpop.f32.mrb[0].mxu0
          %v4649 = vadd.f32 0.0, %v4648
          %v4650 = vpop.f32.mrb[0].mxu0
          %v4651 = vadd.f32 0.0, %v4650
          %v4652 = vpop.f32.mrb[0].mxu0
          %v4653 = vadd.f32 0.0, %v4652
          %4654 = vmatprep.mubr.bf16.mxu0 0
          %4655 = vmatmul.mubr.bf16.gmra.mrb[0].mxu0 %v4236
          %v4656 = vpop.f32.mrb[0].mxu0
          %v4657 = vadd.f32 0.0, %v4656
          %v4658 = vpop.f32.mrb[0].mxu0
          %v4659 = vadd.f32 0.0, %v4658
          %v4660 = vpop.f32.mrb[0].mxu0
          %v4661 = vadd.f32 0.0, %v4660
          %v4662 = vpop.f32.mrb[0].mxu0
          %v4663 = vadd.f32 0.0, %v4662
          %4664 = vdwg.mxu0
          %4665 = vmatprep.subr.bf16.mxu0 %v4436
          %4666 = vmatpush1.bf16.msra.mxu0 %v4435
          %4667 = vmatprep.subr.bf16.mxu0 %v4444
          %4668 = vmatpush1.bf16.msra.mxu0 %v4443
          %4669 = vmatprep.subr.bf16.mxu0 %v4452
          %4670 = vmatpush1.bf16.msra.mxu0 %v4451
          %4671 = vmatprep.subr.bf16.mxu0 %v4460
          %4672 = vmatpush1.bf16.msra.mxu0 %v4459
          %4673 = vmatprep.subr.bf16.mxu0 %v4468
          %4674 = vmatpush1.bf16.msra.mxu0 %v4467
          %4675 = vmatprep.subr.bf16.mxu0 %v4476
          %4676 = vmatpush1.bf16.msra.mxu0 %v4475
          %4677 = vmatprep.subr.bf16.mxu0 %v4484
          %4678 = vmatpush1.bf16.msra.mxu0 %v4483
          %4679 = vmatprep.subr.bf16.mxu0 %v4492
          %4680 = vmatpush1.bf16.msra.mxu0 %v4491
          %4681 = vmatprep.subr.bf16.mxu0 0
          %4682 = vmatpush1.bf16.msra.mxu0 0
          %4683 = vmatprep.subr.bf16.mxu0 0
          %4684 = vmatpush1.bf16.msra.mxu0 0
          %4685 = vmatprep.subr.bf16.mxu0 0
          %4686 = vmatpush1.bf16.msra.mxu0 0
          %4687 = vmatprep.subr.bf16.mxu0 0
          %4688 = vmatpush1.bf16.msra.mxu0 0
          %4689 = vmatprep.subr.bf16.mxu0 0
          %4690 = vmatpush1.bf16.msra.mxu0 0
          %4691 = vmatprep.subr.bf16.mxu0 0
          %4692 = vmatpush1.bf16.msra.mxu0 0
          %4693 = vmatprep.subr.bf16.mxu0 0
          %4694 = vmatpush1.bf16.msra.mxu0 0
          %4695 = vmatprep.subr.bf16.mxu0 0
          %4696 = vmatpush1.bf16.msra.mxu0 0
          %4697 = vmatprep.mubr.bf16.mxu0 0
          %4698 = vmatmul.mubr.bf16.gmra.mrb[0].mxu0 %v4235
          %v4699 = vpop.f32.mrb[0].mxu0
          %v4700 = vadd.f32 0.0, %v4699
          %v4701 = vpop.f32.mrb[0].mxu0
          %v4702 = vadd.f32 0.0, %v4701
          %v4703 = vpop.f32.mrb[0].mxu0
          %v4704 = vadd.f32 0.0, %v4703
          %v4705 = vpop.f32.mrb[0].mxu0
          %v4706 = vadd.f32 0.0, %v4705
          %4707 = vmatprep.mubr.bf16.mxu0 0
          %4708 = vmatmul.mubr.bf16.gmra.mrb[0].mxu0 %v4236
          %v4709 = vpop.f32.mrb[0].mxu0
          %v4710 = vadd.f32 0.0, %v4709
          %v4711 = vpop.f32.mrb[0].mxu0
          %v4712 = vadd.f32 0.0, %v4711
          %v4713 = vpop.f32.mrb[0].mxu0
          %v4714 = vadd.f32 0.0, %v4713
          %v4715 = vpop.f32.mrb[0].mxu0
          %v4716 = vadd.f32 0.0, %v4715
          %4717 = vdwg.mxu0
          %4718 = vmatprep.subr.bf16.mxu0 %v4438
          %4719 = vmatpush1.bf16.msra.mxu0 %v4437
          %4720 = vmatprep.subr.bf16.mxu0 %v4446
          %4721 = vmatpush1.bf16.msra.mxu0 %v4445
          %4722 = vmatprep.subr.bf16.mxu0 %v4454
          %4723 = vmatpush1.bf16.msra.mxu0 %v4453
          %4724 = vmatprep.subr.bf16.mxu0 %v4462
          %4725 = vmatpush1.bf16.msra.mxu0 %v4461
          %4726 = vmatprep.subr.bf16.mxu0 %v4470
          %4727 = vmatpush1.bf16.msra.mxu0 %v4469
          %4728 = vmatprep.subr.bf16.mxu0 %v4478
          %4729 = vmatpush1.bf16.msra.mxu0 %v4477
          %4730 = vmatprep.subr.bf16.mxu0 %v4486
          %4731 = vmatpush1.bf16.msra.mxu0 %v4485
          %4732 = vmatprep.subr.bf16.mxu0 %v4494
          %4733 = vmatpush1.bf16.msra.mxu0 %v4493
          %4734 = vmatprep.subr.bf16.mxu0 0
          %4735 = vmatpush1.bf16.msra.mxu0 0
          %4736 = vmatprep.subr.bf16.mxu0 0
          %4737 = vmatpush1.bf16.msra.mxu0 0
          %4738 = vmatprep.subr.bf16.mxu0 0
          %4739 = vmatpush1.bf16.msra.mxu0 0
          %4740 = vmatprep.subr.bf16.mxu0 0
          %4741 = vmatpush1.bf16.msra.mxu0 0
          %4742 = vmatprep.subr.bf16.mxu0 0
          %4743 = vmatpush1.bf16.msra.mxu0 0
          %4744 = vmatprep.subr.bf16.mxu0 0
          %4745 = vmatpush1.bf16.msra.mxu0 0
          %4746 = vmatprep.subr.bf16.mxu0 0
          %4747 = vmatpush1.bf16.msra.mxu0 0
          %4748 = vmatprep.subr.bf16.mxu0 0
          %4749 = vmatpush1.bf16.msra.mxu0 0
          %4750 = vmatprep.mubr.bf16.mxu0 0
          %4751 = vmatmul.mubr.bf16.gmra.mrb[0].mxu0 %v4235
          %v4752 = vpop.f32.mrb[0].mxu0
          %v4753 = vadd.f32 0.0, %v4752
          %v4754 = vpop.f32.mrb[0].mxu0
          %v4755 = vadd.f32 0.0, %v4754
          %v4756 = vpop.f32.mrb[0].mxu0
          %v4757 = vadd.f32 0.0, %v4756
          %v4758 = vpop.f32.mrb[0].mxu0
          %v4759 = vadd.f32 0.0, %v4758
          %4760 = vmatprep.mubr.bf16.mxu0 0
          %4761 = vmatmul.mubr.bf16.gmra.mrb[0].mxu0 %v4236
          %v4762 = vpop.f32.mrb[0].mxu0
          %v4763 = vadd.f32 0.0, %v4762
          %v4764 = vpop.f32.mrb[0].mxu0
          %v4765 = vadd.f32 0.0, %v4764
          %v4766 = vpop.f32.mrb[0].mxu0
          %v4767 = vadd.f32 0.0, %v4766
          %v4768 = vpop.f32.mrb[0].mxu0
          %v4769 = vadd.f32 0.0, %v4768
          %4770 = vdwg.mxu0
          %v4775 = vunpack.c.l.b16 %v4089
          %v4776 = vunpack.c.l.b16 %v4090
          %v4777 = vunpack.c.l.b16 %v4091
          %v4778 = vunpack.c.l.b16 %v4092
          %v4779 = vpack.c.b16 %v4776, %v4775
          %v4780 = vpack.c.b16 %v4778, %v4777
          %v4847 = vunpack.c.l.b16 %v4093
          %v4848 = vunpack.c.h.b16 %v4093
          %v4849 = vunpack.c.l.b16 %v4094
          %v4850 = vunpack.c.h.b16 %v4094
          %v4851 = vunpack.c.l.b16 %v4095
          %v4852 = vunpack.c.h.b16 %v4095
          %v4853 = vunpack.c.l.b16 %v4096
          %v4854 = vunpack.c.h.b16 %v4096
          %v4855 = vunpack.c.l.b16 %v4097
          %v4856 = vunpack.c.h.b16 %v4097
          %v4857 = vunpack.c.l.b16 %v4098
          %v4858 = vunpack.c.h.b16 %v4098
          %v4859 = vunpack.c.l.b16 %v4099
          %v4860 = vunpack.c.h.b16 %v4099
          %v4861 = vunpack.c.l.b16 %v4100
          %v4862 = vunpack.c.h.b16 %v4100
          %v4863 = vunpack.c.l.b16 %v4101
          %v4864 = vunpack.c.h.b16 %v4101
          %v4865 = vunpack.c.l.b16 %v4102
          %v4866 = vunpack.c.h.b16 %v4102
          %v4867 = vunpack.c.l.b16 %v4103
          %v4868 = vunpack.c.h.b16 %v4103
          %v4869 = vunpack.c.l.b16 %v4104
          %v4870 = vunpack.c.h.b16 %v4104
          %v4871 = vunpack.c.l.b16 %v4105
          %v4872 = vunpack.c.h.b16 %v4105
          %v4873 = vunpack.c.l.b16 %v4106
          %v4874 = vunpack.c.h.b16 %v4106
          %v4875 = vunpack.c.l.b16 %v4107
          %v4876 = vunpack.c.h.b16 %v4107
          %v4877 = vunpack.c.l.b16 %v4108
          %v4878 = vunpack.c.h.b16 %v4108
          %v4879 = vunpack.c.l.b16 %v4109
          %v4880 = vunpack.c.h.b16 %v4109
          %v4881 = vunpack.c.l.b16 %v4110
          %v4882 = vunpack.c.h.b16 %v4110
          %v4883 = vunpack.c.l.b16 %v4111
          %v4884 = vunpack.c.h.b16 %v4111
          %v4885 = vunpack.c.l.b16 %v4112
          %v4886 = vunpack.c.h.b16 %v4112
          %v4887 = vunpack.c.l.b16 %v4113
          %v4888 = vunpack.c.h.b16 %v4113
          %v4889 = vunpack.c.l.b16 %v4114
          %v4890 = vunpack.c.h.b16 %v4114
          %v4891 = vunpack.c.l.b16 %v4115
          %v4892 = vunpack.c.h.b16 %v4115
          %v4893 = vunpack.c.l.b16 %v4116
          %v4894 = vunpack.c.h.b16 %v4116
          %v4895 = vunpack.c.l.b16 %v4117
          %v4896 = vunpack.c.h.b16 %v4117
          %v4897 = vunpack.c.l.b16 %v4118
          %v4898 = vunpack.c.h.b16 %v4118
          %v4899 = vunpack.c.l.b16 %v4119
          %v4900 = vunpack.c.h.b16 %v4119
          %v4901 = vunpack.c.l.b16 %v4120
          %v4902 = vunpack.c.h.b16 %v4120
          %v4903 = vunpack.c.l.b16 %v4121
          %v4904 = vunpack.c.h.b16 %v4121
          %v4905 = vunpack.c.l.b16 %v4122
          %v4906 = vunpack.c.h.b16 %v4122
          %v4907 = vunpack.c.l.b16 %v4123
          %v4908 = vunpack.c.h.b16 %v4123
          %v4909 = vunpack.c.l.b16 %v4124
          %v4910 = vunpack.c.h.b16 %v4124
          %v4911 = vunpack.c.l.b16 %v4125
          %v4912 = vunpack.c.h.b16 %v4125
          %v4913 = vunpack.c.l.b16 %v4126
          %v4914 = vunpack.c.h.b16 %v4126
          %v4915 = vunpack.c.l.b16 %v4127
          %v4916 = vunpack.c.h.b16 %v4127
          %v4917 = vunpack.c.l.b16 %v4128
          %v4918 = vunpack.c.h.b16 %v4128
          %v4919 = vunpack.c.l.b16 %v4129
          %v4920 = vunpack.c.h.b16 %v4129
          %v4921 = vunpack.c.l.b16 %v4130
          %v4922 = vunpack.c.h.b16 %v4130
          %v4923 = vunpack.c.l.b16 %v4131
          %v4924 = vunpack.c.h.b16 %v4131
          %v4925 = vunpack.c.l.b16 %v4132
          %v4926 = vunpack.c.h.b16 %v4132
          %v4927 = vunpack.c.l.b16 %v4133
          %v4928 = vunpack.c.h.b16 %v4133
          %v4929 = vunpack.c.l.b16 %v4134
          %v4930 = vunpack.c.h.b16 %v4134
          %v4931 = vunpack.c.l.b16 %v4135
          %v4932 = vunpack.c.h.b16 %v4135
          %v4933 = vunpack.c.l.b16 %v4136
          %v4934 = vunpack.c.h.b16 %v4136
          %v4935 = vunpack.c.l.b16 %v4137
          %v4936 = vunpack.c.h.b16 %v4137
          %v4937 = vunpack.c.l.b16 %v4138
          %v4938 = vunpack.c.h.b16 %v4138
          %v4939 = vunpack.c.l.b16 %v4139
          %v4940 = vunpack.c.h.b16 %v4139
          %v4941 = vunpack.c.l.b16 %v4140
          %v4942 = vunpack.c.h.b16 %v4140
          %v4943 = vunpack.c.l.b16 %v4141
          %v4944 = vunpack.c.h.b16 %v4141
          %v4945 = vunpack.c.l.b16 %v4142
          %v4946 = vunpack.c.h.b16 %v4142
          %v4947 = vunpack.c.l.b16 %v4143
          %v4948 = vunpack.c.h.b16 %v4143
          %v4949 = vunpack.c.l.b16 %v4144
          %v4950 = vunpack.c.h.b16 %v4144
          %v4951 = vunpack.c.l.b16 %v4145
          %v4952 = vunpack.c.h.b16 %v4145
          %v4953 = vunpack.c.l.b16 %v4146
          %v4954 = vunpack.c.h.b16 %v4146
          %v4955 = vunpack.c.l.b16 %v4147
          %v4956 = vunpack.c.h.b16 %v4147
          %v4957 = vunpack.c.l.b16 %v4148
          %v4958 = vunpack.c.h.b16 %v4148
          %v4959 = vunpack.c.l.b16 %v4149
          %v4960 = vunpack.c.h.b16 %v4149
          %v4961 = vunpack.c.l.b16 %v4150
          %v4962 = vunpack.c.h.b16 %v4150
          %v4963 = vunpack.c.l.b16 %v4151
          %v4964 = vunpack.c.h.b16 %v4151
          %v4965 = vunpack.c.l.b16 %v4152
          %v4966 = vunpack.c.h.b16 %v4152
          %v4967 = vunpack.c.l.b16 %v4153
          %v4968 = vunpack.c.h.b16 %v4153
          %v4969 = vunpack.c.l.b16 %v4154
          %v4970 = vunpack.c.h.b16 %v4154
          %v4971 = vunpack.c.l.b16 %v4155
          %v4972 = vunpack.c.h.b16 %v4155
          %v4973 = vunpack.c.l.b16 %v4156
          %v4974 = vunpack.c.h.b16 %v4156
          %v4975 = vpack.c.b16 %v4855, %v4847
          %v4976 = vpack.c.b16 %v4856, %v4848
          %v4977 = vpack.c.b16 %v4857, %v4849
          %v4978 = vpack.c.b16 %v4858, %v4850
          %v4979 = vpack.c.b16 %v4859, %v4851
          %v4980 = vpack.c.b16 %v4860, %v4852
          %v4981 = vpack.c.b16 %v4861, %v4853
          %v4982 = vpack.c.b16 %v4862, %v4854
          %v4983 = vpack.c.b16 %v4871, %v4863
          %v4984 = vpack.c.b16 %v4872, %v4864
          %v4985 = vpack.c.b16 %v4873, %v4865
          %v4986 = vpack.c.b16 %v4874, %v4866
          %v4987 = vpack.c.b16 %v4875, %v4867
          %v4988 = vpack.c.b16 %v4876, %v4868
          %v4989 = vpack.c.b16 %v4877, %v4869
          %v4990 = vpack.c.b16 %v4878, %v4870
          %v4991 = vpack.c.b16 %v4887, %v4879
          %v4992 = vpack.c.b16 %v4888, %v4880
          %v4993 = vpack.c.b16 %v4889, %v4881
          %v4994 = vpack.c.b16 %v4890, %v4882
          %v4995 = vpack.c.b16 %v4891, %v4883
          %v4996 = vpack.c.b16 %v4892, %v4884
          %v4997 = vpack.c.b16 %v4893, %v4885
          %v4998 = vpack.c.b16 %v4894, %v4886
          %v4999 = vpack.c.b16 %v4903, %v4895
          %v5000 = vpack.c.b16 %v4904, %v4896
          %v5001 = vpack.c.b16 %v4905, %v4897
          %v5002 = vpack.c.b16 %v4906, %v4898
          %v5003 = vpack.c.b16 %v4907, %v4899
          %v5004 = vpack.c.b16 %v4908, %v4900
          %v5005 = vpack.c.b16 %v4909, %v4901
          %v5006 = vpack.c.b16 %v4910, %v4902
          %v5007 = vpack.c.b16 %v4919, %v4911
          %v5008 = vpack.c.b16 %v4920, %v4912
          %v5009 = vpack.c.b16 %v4921, %v4913
          %v5010 = vpack.c.b16 %v4922, %v4914
          %v5011 = vpack.c.b16 %v4923, %v4915
          %v5012 = vpack.c.b16 %v4924, %v4916
          %v5013 = vpack.c.b16 %v4925, %v4917
          %v5014 = vpack.c.b16 %v4926, %v4918
          %v5015 = vpack.c.b16 %v4935, %v4927
          %v5016 = vpack.c.b16 %v4936, %v4928
          %v5017 = vpack.c.b16 %v4937, %v4929
          %v5018 = vpack.c.b16 %v4938, %v4930
          %v5019 = vpack.c.b16 %v4939, %v4931
          %v5020 = vpack.c.b16 %v4940, %v4932
          %v5021 = vpack.c.b16 %v4941, %v4933
          %v5022 = vpack.c.b16 %v4942, %v4934
          %v5023 = vpack.c.b16 %v4951, %v4943
          %v5024 = vpack.c.b16 %v4952, %v4944
          %v5025 = vpack.c.b16 %v4953, %v4945
          %v5026 = vpack.c.b16 %v4954, %v4946
          %v5027 = vpack.c.b16 %v4955, %v4947
          %v5028 = vpack.c.b16 %v4956, %v4948
          %v5029 = vpack.c.b16 %v4957, %v4949
          %v5030 = vpack.c.b16 %v4958, %v4950
          %v5031 = vpack.c.b16 %v4967, %v4959
          %v5032 = vpack.c.b16 %v4968, %v4960
          %v5033 = vpack.c.b16 %v4969, %v4961
          %v5034 = vpack.c.b16 %v4970, %v4962
          %v5035 = vpack.c.b16 %v4971, %v4963
          %v5036 = vpack.c.b16 %v4972, %v4964
          %v5037 = vpack.c.b16 %v4973, %v4965
          %v5038 = vpack.c.b16 %v4974, %v4966
          %5103 = vmatprep.subr.bf16.mxu0 %v4976
          %5104 = vmatpush1.bf16.msra.mxu0 %v4975
          %5105 = vmatprep.subr.bf16.mxu0 %v4984
          %5106 = vmatpush1.bf16.msra.mxu0 %v4983
          %5107 = vmatprep.subr.bf16.mxu0 %v4992
          %5108 = vmatpush1.bf16.msra.mxu0 %v4991
          %5109 = vmatprep.subr.bf16.mxu0 %v5000
          %5110 = vmatpush1.bf16.msra.mxu0 %v4999
          %5111 = vmatprep.subr.bf16.mxu0 %v5008
          %5112 = vmatpush1.bf16.msra.mxu0 %v5007
          %5113 = vmatprep.subr.bf16.mxu0 %v5016
          %5114 = vmatpush1.bf16.msra.mxu0 %v5015
          %5115 = vmatprep.subr.bf16.mxu0 %v5024
          %5116 = vmatpush1.bf16.msra.mxu0 %v5023
          %5117 = vmatprep.subr.bf16.mxu0 %v5032
          %5118 = vmatpush1.bf16.msra.mxu0 %v5031
          %5119 = vmatprep.subr.bf16.mxu0 0
          %5120 = vmatpush1.bf16.msra.mxu0 0
          %5121 = vmatprep.subr.bf16.mxu0 0
          %5122 = vmatpush1.bf16.msra.mxu0 0
          %5123 = vmatprep.subr.bf16.mxu0 0
          %5124 = vmatpush1.bf16.msra.mxu0 0
          %5125 = vmatprep.subr.bf16.mxu0 0
          %5126 = vmatpush1.bf16.msra.mxu0 0
          %5127 = vmatprep.subr.bf16.mxu0 0
          %5128 = vmatpush1.bf16.msra.mxu0 0
          %5129 = vmatprep.subr.bf16.mxu0 0
          %5130 = vmatpush1.bf16.msra.mxu0 0
          %5131 = vmatprep.subr.bf16.mxu0 0
          %5132 = vmatpush1.bf16.msra.mxu0 0
          %5133 = vmatprep.subr.bf16.mxu0 0
          %5134 = vmatpush1.bf16.msra.mxu0 0
          %5135 = vmatprep.mubr.bf16.mxu0 0
          %5136 = vmatmul.mubr.bf16.gmra.mrb[0].mxu0 %v4779
          %v5137 = vpop.f32.mrb[0].mxu0
          %v5138 = vadd.f32 %v4594, %v5137
          %v5139 = vpop.f32.mrb[0].mxu0
          %v5140 = vadd.f32 %v4596, %v5139
          %v5141 = vpop.f32.mrb[0].mxu0
          %v5142 = vadd.f32 %v4598, %v5141
          %v5143 = vpop.f32.mrb[0].mxu0
          %v5144 = vadd.f32 %v4600, %v5143
          %5145 = vmatprep.mubr.bf16.mxu0 0
          %5146 = vmatmul.mubr.bf16.gmra.mrb[0].mxu0 %v4780
          %v5147 = vpop.f32.mrb[0].mxu0
          %v5148 = vadd.f32 %v4604, %v5147
          %v5149 = vpop.f32.mrb[0].mxu0
          %v5150 = vadd.f32 %v4606, %v5149
          %v5151 = vpop.f32.mrb[0].mxu0
          %v5152 = vadd.f32 %v4608, %v5151
          %v5153 = vpop.f32.mrb[0].mxu0
          %v5154 = vadd.f32 %v4610, %v5153
          %5155 = vdwg.mxu0
          %5156 = vmatprep.subr.bf16.mxu0 %v4978
          %5157 = vmatpush1.bf16.msra.mxu0 %v4977
          %5158 = vmatprep.subr.bf16.mxu0 %v4986
          %5159 = vmatpush1.bf16.msra.mxu0 %v4985
          %5160 = vmatprep.subr.bf16.mxu0 %v4994
          %5161 = vmatpush1.bf16.msra.mxu0 %v4993
          %5162 = vmatprep.subr.bf16.mxu0 %v5002
          %5163 = vmatpush1.bf16.msra.mxu0 %v5001
          %5164 = vmatprep.subr.bf16.mxu0 %v5010
          %5165 = vmatpush1.bf16.msra.mxu0 %v5009
          %5166 = vmatprep.subr.bf16.mxu0 %v5018
          %5167 = vmatpush1.bf16.msra.mxu0 %v5017
          %5168 = vmatprep.subr.bf16.mxu0 %v5026
          %5169 = vmatpush1.bf16.msra.mxu0 %v5025
          %5170 = vmatprep.subr.bf16.mxu0 %v5034
          %5171 = vmatpush1.bf16.msra.mxu0 %v5033
          %5172 = vmatprep.subr.bf16.mxu0 0
          %5173 = vmatpush1.bf16.msra.mxu0 0
          %5174 = vmatprep.subr.bf16.mxu0 0
          %5175 = vmatpush1.bf16.msra.mxu0 0
          %5176 = vmatprep.subr.bf16.mxu0 0
          %5177 = vmatpush1.bf16.msra.mxu0 0
          %5178 = vmatprep.subr.bf16.mxu0 0
          %5179 = vmatpush1.bf16.msra.mxu0 0
          %5180 = vmatprep.subr.bf16.mxu0 0
          %5181 = vmatpush1.bf16.msra.mxu0 0
          %5182 = vmatprep.subr.bf16.mxu0 0
          %5183 = vmatpush1.bf16.msra.mxu0 0
          %5184 = vmatprep.subr.bf16.mxu0 0
          %5185 = vmatpush1.bf16.msra.mxu0 0
          %5186 = vmatprep.subr.bf16.mxu0 0
          %5187 = vmatpush1.bf16.msra.mxu0 0
          %5188 = vmatprep.mubr.bf16.mxu0 0
          %5189 = vmatmul.mubr.bf16.gmra.mrb[0].mxu0 %v4779
          %v5190 = vpop.f32.mrb[0].mxu0
          %v5191 = vadd.f32 %v4647, %v5190
          %v5192 = vpop.f32.mrb[0].mxu0
          %v5193 = vadd.f32 %v4649, %v5192
          %v5194 = vpop.f32.mrb[0].mxu0
          %v5195 = vadd.f32 %v4651, %v5194
          %v5196 = vpop.f32.mrb[0].mxu0
          %v5197 = vadd.f32 %v4653, %v5196
          %5198 = vmatprep.mubr.bf16.mxu0 0
          %5199 = vmatmul.mubr.bf16.gmra.mrb[0].mxu0 %v4780
          %v5200 = vpop.f32.mrb[0].mxu0
          %v5201 = vadd.f32 %v4657, %v5200
          %v5202 = vpop.f32.mrb[0].mxu0
          %v5203 = vadd.f32 %v4659, %v5202
          %v5204 = vpop.f32.mrb[0].mxu0
          %v5205 = vadd.f32 %v4661, %v5204
          %v5206 = vpop.f32.mrb[0].mxu0
          %v5207 = vadd.f32 %v4663, %v5206
          %5208 = vdwg.mxu0
          %5209 = vmatprep.subr.bf16.mxu0 %v4980
          %5210 = vmatpush1.bf16.msra.mxu0 %v4979
          %5211 = vmatprep.subr.bf16.mxu0 %v4988
          %5212 = vmatpush1.bf16.msra.mxu0 %v4987
          %5213 = vmatprep.subr.bf16.mxu0 %v4996
          %5214 = vmatpush1.bf16.msra.mxu0 %v4995
          %5215 = vmatprep.subr.bf16.mxu0 %v5004
          %5216 = vmatpush1.bf16.msra.mxu0 %v5003
          %5217 = vmatprep.subr.bf16.mxu0 %v5012
          %5218 = vmatpush1.bf16.msra.mxu0 %v5011
          %5219 = vmatprep.subr.bf16.mxu0 %v5020
          %5220 = vmatpush1.bf16.msra.mxu0 %v5019
          %5221 = vmatprep.subr.bf16.mxu0 %v5028
          %5222 = vmatpush1.bf16.msra.mxu0 %v5027
          %5223 = vmatprep.subr.bf16.mxu0 %v5036
          %5224 = vmatpush1.bf16.msra.mxu0 %v5035
          %5225 = vmatprep.subr.bf16.mxu0 0
          %5226 = vmatpush1.bf16.msra.mxu0 0
          %5227 = vmatprep.subr.bf16.mxu0 0
          %5228 = vmatpush1.bf16.msra.mxu0 0
          %5229 = vmatprep.subr.bf16.mxu0 0
          %5230 = vmatpush1.bf16.msra.mxu0 0
          %5231 = vmatprep.subr.bf16.mxu0 0
          %5232 = vmatpush1.bf16.msra.mxu0 0
          %5233 = vmatprep.subr.bf16.mxu0 0
          %5234 = vmatpush1.bf16.msra.mxu0 0
          %5235 = vmatprep.subr.bf16.mxu0 0
          %5236 = vmatpush1.bf16.msra.mxu0 0
          %5237 = vmatprep.subr.bf16.mxu0 0
          %5238 = vmatpush1.bf16.msra.mxu0 0
          %5239 = vmatprep.subr.bf16.mxu0 0
          %5240 = vmatpush1.bf16.msra.mxu0 0
          %5241 = vmatprep.mubr.bf16.mxu0 0
          %5242 = vmatmul.mubr.bf16.gmra.mrb[0].mxu0 %v4779
          %v5243 = vpop.f32.mrb[0].mxu0
          %v5244 = vadd.f32 %v4700, %v5243
          %v5245 = vpop.f32.mrb[0].mxu0
          %v5246 = vadd.f32 %v4702, %v5245
          %v5247 = vpop.f32.mrb[0].mxu0
          %v5248 = vadd.f32 %v4704, %v5247
          %v5249 = vpop.f32.mrb[0].mxu0
          %v5250 = vadd.f32 %v4706, %v5249
          %5251 = vmatprep.mubr.bf16.mxu0 0
          %5252 = vmatmul.mubr.bf16.gmra.mrb[0].mxu0 %v4780
          %v5253 = vpop.f32.mrb[0].mxu0
          %v5254 = vadd.f32 %v4710, %v5253
          %v5255 = vpop.f32.mrb[0].mxu0
          %v5256 = vadd.f32 %v4712, %v5255
          %v5257 = vpop.f32.mrb[0].mxu0
          %v5258 = vadd.f32 %v4714, %v5257
          %v5259 = vpop.f32.mrb[0].mxu0
          %v5260 = vadd.f32 %v4716, %v5259
          %5261 = vdwg.mxu0
          %5262 = vmatprep.subr.bf16.mxu0 %v4982
          %5263 = vmatpush1.bf16.msra.mxu0 %v4981
          %5264 = vmatprep.subr.bf16.mxu0 %v4990
          %5265 = vmatpush1.bf16.msra.mxu0 %v4989
          %5266 = vmatprep.subr.bf16.mxu0 %v4998
          %5267 = vmatpush1.bf16.msra.mxu0 %v4997
          %5268 = vmatprep.subr.bf16.mxu0 %v5006
          %5269 = vmatpush1.bf16.msra.mxu0 %v5005
          %5270 = vmatprep.subr.bf16.mxu0 %v5014
          %5271 = vmatpush1.bf16.msra.mxu0 %v5013
          %5272 = vmatprep.subr.bf16.mxu0 %v5022
          %5273 = vmatpush1.bf16.msra.mxu0 %v5021
          %5274 = vmatprep.subr.bf16.mxu0 %v5030
          %5275 = vmatpush1.bf16.msra.mxu0 %v5029
          %5276 = vmatprep.subr.bf16.mxu0 %v5038
          %5277 = vmatpush1.bf16.msra.mxu0 %v5037
          %5278 = vmatprep.subr.bf16.mxu0 0
          %5279 = vmatpush1.bf16.msra.mxu0 0
          %5280 = vmatprep.subr.bf16.mxu0 0
          %5281 = vmatpush1.bf16.msra.mxu0 0
          %5282 = vmatprep.subr.bf16.mxu0 0
          %5283 = vmatpush1.bf16.msra.mxu0 0
          %5284 = vmatprep.subr.bf16.mxu0 0
          %5285 = vmatpush1.bf16.msra.mxu0 0
          %5286 = vmatprep.subr.bf16.mxu0 0
          %5287 = vmatpush1.bf16.msra.mxu0 0
          %5288 = vmatprep.subr.bf16.mxu0 0
          %5289 = vmatpush1.bf16.msra.mxu0 0
          %5290 = vmatprep.subr.bf16.mxu0 0
          %5291 = vmatpush1.bf16.msra.mxu0 0
          %5292 = vmatprep.subr.bf16.mxu0 0
          %5293 = vmatpush1.bf16.msra.mxu0 0
          %5294 = vmatprep.mubr.bf16.mxu0 0
          %5295 = vmatmul.mubr.bf16.gmra.mrb[0].mxu0 %v4779
          %v5296 = vpop.f32.mrb[0].mxu0
          %v5297 = vadd.f32 %v4753, %v5296
          %v5298 = vpop.f32.mrb[0].mxu0
          %v5299 = vadd.f32 %v4755, %v5298
          %v5300 = vpop.f32.mrb[0].mxu0
          %v5301 = vadd.f32 %v4757, %v5300
          %v5302 = vpop.f32.mrb[0].mxu0
          %v5303 = vadd.f32 %v4759, %v5302
          %5304 = vmatprep.mubr.bf16.mxu0 0
          %5305 = vmatmul.mubr.bf16.gmra.mrb[0].mxu0 %v4780
          %v5306 = vpop.f32.mrb[0].mxu0
          %v5307 = vadd.f32 %v4763, %v5306
          %v5308 = vpop.f32.mrb[0].mxu0
          %v5309 = vadd.f32 %v4765, %v5308
          %v5310 = vpop.f32.mrb[0].mxu0
          %v5311 = vadd.f32 %v4767, %v5310
          %v5312 = vpop.f32.mrb[0].mxu0
          %v5313 = vadd.f32 %v4769, %v5312
          %5314 = vdwg.mxu0
          %v5316 = vlaneseq
          %v5317 = vshrl.u32 %v5316, 7
          %v5318 = vsub.s32 0, %v5317
          %v5319 = vrot.slane %v4088, %v5318
          %v5320 = vlaneseq
          %v5321 = vshrl.u32 %v5320, 7
          %v5322 = vsub.s32 1, %v5321
          %v5323 = vrot.slane %v4088, %v5322
          %v5324 = vlaneseq
          %v5325 = vshrl.u32 %v5324, 7
          %v5326 = vsub.s32 2, %v5325
          %v5327 = vrot.slane %v4088, %v5326
          %v5328 = vlaneseq
          %v5329 = vshrl.u32 %v5328, 7
          %v5330 = vsub.s32 3, %v5329
          %v5331 = vrot.slane %v4088, %v5330
          %v5332 = vlaneseq
          %v5333 = vshrl.u32 %v5332, 7
          %v5334 = vsub.s32 4, %v5333
          %v5335 = vrot.slane %v4088, %v5334
          %v5336 = vlaneseq
          %v5337 = vshrl.u32 %v5336, 7
          %v5338 = vsub.s32 5, %v5337
          %v5339 = vrot.slane %v4088, %v5338
          %v5340 = vlaneseq
          %v5341 = vshrl.u32 %v5340, 7
          %v5342 = vsub.s32 6, %v5341
          %v5343 = vrot.slane %v4088, %v5342
          %v5344 = vlaneseq
          %v5345 = vshrl.u32 %v5344, 7
          %v5346 = vsub.s32 7, %v5345
          %v5347 = vrot.slane %v4088, %v5346
          %v5356 = vadd.f32 %v5138, %v5319
          %v5357 = vadd.f32 %v5140, %v5323
          %v5358 = vadd.f32 %v5191, %v5327
          %v5359 = vadd.f32 %v5193, %v5331
          %v5360 = vadd.f32 %v5244, %v5335
          %v5361 = vadd.f32 %v5246, %v5339
          %v5362 = vadd.f32 %v5297, %v5343
          %v5363 = vadd.f32 %v5299, %v5347
          %v5364 = vadd.f32 %v5142, %v5319
          %v5365 = vadd.f32 %v5144, %v5323
          %v5366 = vadd.f32 %v5195, %v5327
          %v5367 = vadd.f32 %v5197, %v5331
          %v5368 = vadd.f32 %v5248, %v5335
          %v5369 = vadd.f32 %v5250, %v5339
          %v5370 = vadd.f32 %v5301, %v5343
          %v5371 = vadd.f32 %v5303, %v5347
          %v5372 = vadd.f32 %v5148, %v5319
          %v5373 = vadd.f32 %v5150, %v5323
          %v5374 = vadd.f32 %v5201, %v5327
          %v5375 = vadd.f32 %v5203, %v5331
          %v5376 = vadd.f32 %v5254, %v5335
          %v5377 = vadd.f32 %v5256, %v5339
          %v5378 = vadd.f32 %v5307, %v5343
          %v5379 = vadd.f32 %v5309, %v5347
          %v5380 = vadd.f32 %v5152, %v5319
          %v5381 = vadd.f32 %v5154, %v5323
          %v5382 = vadd.f32 %v5205, %v5327
          %v5383 = vadd.f32 %v5207, %v5331
          %v5384 = vadd.f32 %v5258, %v5335
          %v5385 = vadd.f32 %v5260, %v5339
          %v5386 = vadd.f32 %v5311, %v5343
          %v5387 = vadd.f32 %v5313, %v5347
          %v5388 = vmax.f32 %v5356, 0.0
          %v5389 = vmax.f32 %v5357, 0.0
          %v5390 = vmax.f32 %v5358, 0.0
          %v5391 = vmax.f32 %v5359, 0.0
          %v5392 = vmax.f32 %v5360, 0.0
          %v5393 = vmax.f32 %v5361, 0.0
          %v5394 = vmax.f32 %v5362, 0.0
          %v5395 = vmax.f32 %v5363, 0.0
          %v5396 = vmax.f32 %v5364, 0.0
          %v5397 = vmax.f32 %v5365, 0.0
          %v5398 = vmax.f32 %v5366, 0.0
          %v5399 = vmax.f32 %v5367, 0.0
          %v5400 = vmax.f32 %v5368, 0.0
          %v5401 = vmax.f32 %v5369, 0.0
          %v5402 = vmax.f32 %v5370, 0.0
          %v5403 = vmax.f32 %v5371, 0.0
          %v5404 = vmax.f32 %v5372, 0.0
          %v5405 = vmax.f32 %v5373, 0.0
          %v5406 = vmax.f32 %v5374, 0.0
          %v5407 = vmax.f32 %v5375, 0.0
          %v5408 = vmax.f32 %v5376, 0.0
          %v5409 = vmax.f32 %v5377, 0.0
          %v5410 = vmax.f32 %v5378, 0.0
          %v5411 = vmax.f32 %v5379, 0.0
          %v5412 = vmax.f32 %v5380, 0.0
          %v5413 = vmax.f32 %v5381, 0.0
          %v5414 = vmax.f32 %v5382, 0.0
          %v5415 = vmax.f32 %v5383, 0.0
          %v5416 = vmax.f32 %v5384, 0.0
          %v5417 = vmax.f32 %v5385, 0.0
          %v5418 = vmax.f32 %v5386, 0.0
          %v5419 = vmax.f32 %v5387, 0.0
          %v5420 = vlaneseq
          %v5421 = vshrl.u32 %v5420, 7
          %v5422 = vadd.s32 %v5421, 8
          %vm5423 = vcmp.lt.s32.totalorder %v5421, 15
          %vm5424 = vcmp.lt.s32.totalorder %v5422, 15
          %v5425 = vsel %vm5423, %v5388, 0.0
          %v5426 = vsel %vm5423, %v5389, 0.0
          %v5427 = vsel %vm5423, %v5390, 0.0
          %v5428 = vsel %vm5423, %v5391, 0.0
          %v5429 = vsel %vm5423, %v5392, 0.0
          %v5430 = vsel %vm5423, %v5393, 0.0
          %v5431 = vsel %vm5423, %v5394, 0.0
          %v5432 = vsel %vm5423, %v5395, 0.0
          %v5433 = vsel %vm5424, %v5396, 0.0
          %v5434 = vsel %vm5424, %v5397, 0.0
          %v5435 = vsel %vm5424, %v5398, 0.0
          %v5436 = vsel %vm5424, %v5399, 0.0
          %v5437 = vsel %vm5424, %v5400, 0.0
          %v5438 = vsel %vm5424, %v5401, 0.0
          %v5439 = vsel %vm5424, %v5402, 0.0
          %v5440 = vsel %vm5424, %v5403, 0.0
          %v5441 = vsel %vm5423, %v5404, 0.0
          %v5442 = vsel %vm5423, %v5405, 0.0
          %v5443 = vsel %vm5423, %v5406, 0.0
          %v5444 = vsel %vm5423, %v5407, 0.0
          %v5445 = vsel %vm5423, %v5408, 0.0
          %v5446 = vsel %vm5423, %v5409, 0.0
          %v5447 = vsel %vm5423, %v5410, 0.0
          %v5448 = vsel %vm5423, %v5411, 0.0
          %v5449 = vsel %vm5424, %v5412, 0.0
          %v5450 = vsel %vm5424, %v5413, 0.0
          %v5451 = vsel %vm5424, %v5414, 0.0
          %v5452 = vsel %vm5424, %v5415, 0.0
          %v5453 = vsel %vm5424, %v5416, 0.0
          %v5454 = vsel %vm5424, %v5417, 0.0
          %v5455 = vsel %vm5424, %v5418, 0.0
          %v5456 = vsel %vm5424, %v5419, 0.0
          %v5457 = vmax.f32 %v5425, %v5433
          %v5458 = vrot.slane %v5457, 4
          %v5459 = vmax.f32 %v5457, %v5458
          %v5460 = vrot.slane %v5459, 2
          %v5461 = vmax.f32 %v5459, %v5460
          %v5462 = vrot.slane %v5461, 1
          %v5463 = vmax.f32 %v5461, %v5462
          %v5464 = vmax.f32 %v5426, %v5434
          %v5465 = vrot.slane %v5464, 4
          %v5466 = vmax.f32 %v5464, %v5465
          %v5467 = vrot.slane %v5466, 2
          %v5468 = vmax.f32 %v5466, %v5467
          %v5469 = vrot.slane %v5468, 1
          %v5470 = vmax.f32 %v5468, %v5469
          %v5471 = vmax.f32 %v5427, %v5435
          %v5472 = vrot.slane %v5471, 4
          %v5473 = vmax.f32 %v5471, %v5472
          %v5474 = vrot.slane %v5473, 2
          %v5475 = vmax.f32 %v5473, %v5474
          %v5476 = vrot.slane %v5475, 1
          %v5477 = vmax.f32 %v5475, %v5476
          %v5478 = vmax.f32 %v5428, %v5436
          %v5479 = vrot.slane %v5478, 4
          %v5480 = vmax.f32 %v5478, %v5479
          %v5481 = vrot.slane %v5480, 2
          %v5482 = vmax.f32 %v5480, %v5481
          %v5483 = vrot.slane %v5482, 1
          %v5484 = vmax.f32 %v5482, %v5483
          %v5485 = vmax.f32 %v5429, %v5437
          %v5486 = vrot.slane %v5485, 4
          %v5487 = vmax.f32 %v5485, %v5486
          %v5488 = vrot.slane %v5487, 2
          %v5489 = vmax.f32 %v5487, %v5488
          %v5490 = vrot.slane %v5489, 1
          %v5491 = vmax.f32 %v5489, %v5490
          %v5492 = vmax.f32 %v5430, %v5438
          %v5493 = vrot.slane %v5492, 4
          %v5494 = vmax.f32 %v5492, %v5493
          %v5495 = vrot.slane %v5494, 2
          %v5496 = vmax.f32 %v5494, %v5495
          %v5497 = vrot.slane %v5496, 1
          %v5498 = vmax.f32 %v5496, %v5497
          %v5499 = vmax.f32 %v5431, %v5439
          %v5500 = vrot.slane %v5499, 4
          %v5501 = vmax.f32 %v5499, %v5500
          %v5502 = vrot.slane %v5501, 2
          %v5503 = vmax.f32 %v5501, %v5502
          %v5504 = vrot.slane %v5503, 1
          %v5505 = vmax.f32 %v5503, %v5504
          %v5506 = vmax.f32 %v5432, %v5440
          %v5507 = vrot.slane %v5506, 4
          %v5508 = vmax.f32 %v5506, %v5507
          %v5509 = vrot.slane %v5508, 2
          %v5510 = vmax.f32 %v5508, %v5509
          %v5511 = vrot.slane %v5510, 1
          %v5512 = vmax.f32 %v5510, %v5511
          %v5513 = vmax.f32 %v5441, %v5449
          %v5514 = vrot.slane %v5513, 4
          %v5515 = vmax.f32 %v5513, %v5514
          %v5516 = vrot.slane %v5515, 2
          %v5517 = vmax.f32 %v5515, %v5516
          %v5518 = vrot.slane %v5517, 1
          %v5519 = vmax.f32 %v5517, %v5518
          %v5520 = vmax.f32 %v5442, %v5450
          %v5521 = vrot.slane %v5520, 4
          %v5522 = vmax.f32 %v5520, %v5521
          %v5523 = vrot.slane %v5522, 2
          %v5524 = vmax.f32 %v5522, %v5523
          %v5525 = vrot.slane %v5524, 1
          %v5526 = vmax.f32 %v5524, %v5525
          %v5527 = vmax.f32 %v5443, %v5451
          %v5528 = vrot.slane %v5527, 4
          %v5529 = vmax.f32 %v5527, %v5528
          %v5530 = vrot.slane %v5529, 2
          %v5531 = vmax.f32 %v5529, %v5530
          %v5532 = vrot.slane %v5531, 1
          %v5533 = vmax.f32 %v5531, %v5532
          %v5534 = vmax.f32 %v5444, %v5452
          %v5535 = vrot.slane %v5534, 4
          %v5536 = vmax.f32 %v5534, %v5535
          %v5537 = vrot.slane %v5536, 2
          %v5538 = vmax.f32 %v5536, %v5537
          %v5539 = vrot.slane %v5538, 1
          %v5540 = vmax.f32 %v5538, %v5539
          %v5541 = vmax.f32 %v5445, %v5453
          %v5542 = vrot.slane %v5541, 4
          %v5543 = vmax.f32 %v5541, %v5542
          %v5544 = vrot.slane %v5543, 2
          %v5545 = vmax.f32 %v5543, %v5544
          %v5546 = vrot.slane %v5545, 1
          %v5547 = vmax.f32 %v5545, %v5546
          %v5548 = vmax.f32 %v5446, %v5454
          %v5549 = vrot.slane %v5548, 4
          %v5550 = vmax.f32 %v5548, %v5549
          %v5551 = vrot.slane %v5550, 2
          %v5552 = vmax.f32 %v5550, %v5551
          %v5553 = vrot.slane %v5552, 1
          %v5554 = vmax.f32 %v5552, %v5553
          %v5555 = vmax.f32 %v5447, %v5455
          %v5556 = vrot.slane %v5555, 4
          %v5557 = vmax.f32 %v5555, %v5556
          %v5558 = vrot.slane %v5557, 2
          %v5559 = vmax.f32 %v5557, %v5558
          %v5560 = vrot.slane %v5559, 1
          %v5561 = vmax.f32 %v5559, %v5560
          %v5562 = vmax.f32 %v5448, %v5456
          %v5563 = vrot.slane %v5562, 4
          %v5564 = vmax.f32 %v5562, %v5563
          %v5565 = vrot.slane %v5564, 2
          %v5566 = vmax.f32 %v5564, %v5565
          %v5567 = vrot.slane %v5566, 1
          %v5568 = vmax.f32 %v5566, %v5567
          %v5585 = vcombine.low %v5463, %v5470
          %v5586 = vcombine.low %v5477, %v5484
          %v5588 = vunpack.c.l.s4 1983009808
          %v5589 = vunpack.c.0.s8 %v5588
          %v5590 = vlaneseq
          %v5591 = vshrl.u32 %v5590, 7
          %v5592 = vsub.s32 %v5589, %v5591
          %v5593 = vrot.slane %v5585, %v5592
          %v5595 = vunpack.c.l.s4 1983009808
          %v5596 = vunpack.c.0.s8 %v5595
          %v5597 = vlaneseq
          %v5598 = vshrl.u32 %v5597, 7
          %v5599 = vsub.s32 %v5596, %v5598
          %v5600 = vrot.slane %v5586, %v5599
          %v5601 = vcombine.low %v5593, %v5600
          %v5602 = vcombine.low %v5491, %v5498
          %v5603 = vcombine.low %v5505, %v5512
          %v5605 = vunpack.c.l.s4 1983009808
          %v5606 = vunpack.c.0.s8 %v5605
          %v5607 = vlaneseq
          %v5608 = vshrl.u32 %v5607, 7
          %v5609 = vsub.s32 %v5606, %v5608
          %v5610 = vrot.slane %v5602, %v5609
          %v5612 = vunpack.c.l.s4 1983009808
          %v5613 = vunpack.c.0.s8 %v5612
          %v5614 = vlaneseq
          %v5615 = vshrl.u32 %v5614, 7
          %v5616 = vsub.s32 %v5613, %v5615
          %v5617 = vrot.slane %v5603, %v5616
          %v5618 = vcombine.low %v5610, %v5617
          %v5619 = vcombine.low %v5519, %v5526
          %v5620 = vcombine.low %v5533, %v5540
          %v5622 = vunpack.c.l.s4 1983009808
          %v5623 = vunpack.c.0.s8 %v5622
          %v5624 = vlaneseq
          %v5625 = vshrl.u32 %v5624, 7
          %v5626 = vsub.s32 %v5623, %v5625
          %v5627 = vrot.slane %v5619, %v5626
          %v5629 = vunpack.c.l.s4 1983009808
          %v5630 = vunpack.c.0.s8 %v5629
          %v5631 = vlaneseq
          %v5632 = vshrl.u32 %v5631, 7
          %v5633 = vsub.s32 %v5630, %v5632
          %v5634 = vrot.slane %v5620, %v5633
          %v5635 = vcombine.low %v5627, %v5634
          %v5636 = vcombine.low %v5547, %v5554
          %v5637 = vcombine.low %v5561, %v5568
          %v5639 = vunpack.c.l.s4 1983009808
          %v5640 = vunpack.c.0.s8 %v5639
          %v5641 = vlaneseq
          %v5642 = vshrl.u32 %v5641, 7
          %v5643 = vsub.s32 %v5640, %v5642
          %v5644 = vrot.slane %v5636, %v5643
          %v5646 = vunpack.c.l.s4 1983009808
          %v5647 = vunpack.c.0.s8 %v5646
          %v5648 = vlaneseq
          %v5649 = vshrl.u32 %v5648, 7
          %v5650 = vsub.s32 %v5647, %v5649
          %v5651 = vrot.slane %v5637, %v5650
          %v5652 = vcombine.low %v5644, %v5651
          %vm5653 = vcmask 1044484
          %v5654 = vsel %vm5653, %v5601, %v5601
          %vm5655 = vcmask 1046534
          %v5656 = vsel %vm5655, %v5601, %v5654
          %v5657 = vrot.slane %v5635, 7
          %vm5658 = vcmask 1041409
          %v5659 = vsel %vm5658, %v5657, %v5656
          %vm5660 = vcmask 1043459
          %v5661 = vsel %vm5660, %v5657, %v5659
          %vm5662 = vcmask 1045509
          %v5663 = vsel %vm5662, %v5657, %v5661
          %vm5664 = vcmask 1047559
          %v5665 = vsel %vm5664, %v5657, %v5663
          %v5666 = vsel %vm5653, %v5618, %v5618
          %v5667 = vsel %vm5655, %v5618, %v5666
          %v5668 = vrot.slane %v5652, 7
          %v5669 = vsel %vm5658, %v5668, %v5667
          %v5670 = vsel %vm5660, %v5668, %v5669
          %v5671 = vsel %vm5662, %v5668, %v5670
          %v5672 = vsel %vm5664, %v5668, %v5671
          %5675 = vst [vmem:[%s260] sm:$0xff] %v5665
          %5676 = vst [vmem:[%s260 + $0x8] sm:$0xff] %v5672
          %v5677 = vld [vmem:[%s233 + $0x8] sm:$0xff]
          %v5678 = vld [vmem:[#allocation2] sm:$0xf]
          %v5679 = vld [vmem:[#allocation2 + $0x4] sm:$0xf]
          %v5680 = vld [vmem:[#allocation2 + $0x8] sm:$0xf]
          %v5681 = vld [vmem:[#allocation2 + $0xc] sm:$0xf]
          %s5682 = scalar_lea.vmem %s224, 1024 [#allocation5]
          %v5683 = vld [vmem:[%s5682] sm:$0xff]
          %v5684 = vld [vmem:[%s5682 + $0x8] sm:$0xff]
          %v5685 = vld [vmem:[%s5682 + $0x10] sm:$0xff]
          %v5686 = vld [vmem:[%s5682 + $0x18] sm:$0xff]
          %v5687 = vld [vmem:[%s5682 + $0x20] sm:$0xff]
          %v5688 = vld [vmem:[%s5682 + $0x28] sm:$0xff]
          %v5689 = vld [vmem:[%s5682 + $0x30] sm:$0xff]
          %v5690 = vld [vmem:[%s5682 + $0x38] sm:$0xff]
          %v5691 = vld [vmem:[%s5682 + $0x40] sm:$0xff]
          %v5692 = vld [vmem:[%s5682 + $0x48] sm:$0xff]
          %v5693 = vld [vmem:[%s5682 + $0x50] sm:$0xff]
          %v5694 = vld [vmem:[%s5682 + $0x58] sm:$0xff]
          %v5695 = vld [vmem:[%s5682 + $0x60] sm:$0xff]
          %v5696 = vld [vmem:[%s5682 + $0x68] sm:$0xff]
          %v5697 = vld [vmem:[%s5682 + $0x70] sm:$0xff]
          %v5698 = vld [vmem:[%s5682 + $0x78] sm:$0xff]
          %v5699 = vld [vmem:[%s5682 + $0x80] sm:$0xff]
          %v5700 = vld [vmem:[%s5682 + $0x88] sm:$0xff]
          %v5701 = vld [vmem:[%s5682 + $0x90] sm:$0xff]
          %v5702 = vld [vmem:[%s5682 + $0x98] sm:$0xff]
          %v5703 = vld [vmem:[%s5682 + $0xa0] sm:$0xff]
          %v5704 = vld [vmem:[%s5682 + $0xa8] sm:$0xff]
          %v5705 = vld [vmem:[%s5682 + $0xb0] sm:$0xff]
          %v5706 = vld [vmem:[%s5682 + $0xb8] sm:$0xff]
          %v5707 = vld [vmem:[%s5682 + $0xc0] sm:$0xff]
          %v5708 = vld [vmem:[%s5682 + $0xc8] sm:$0xff]
          %v5709 = vld [vmem:[%s5682 + $0xd0] sm:$0xff]
          %v5710 = vld [vmem:[%s5682 + $0xd8] sm:$0xff]
          %v5711 = vld [vmem:[%s5682 + $0xe0] sm:$0xff]
          %v5712 = vld [vmem:[%s5682 + $0xe8] sm:$0xff]
          %v5713 = vld [vmem:[%s5682 + $0xf0] sm:$0xff]
          %v5714 = vld [vmem:[%s5682 + $0xf8] sm:$0xff]
          %v5715 = vld [vmem:[%s5682 + $0x100] sm:$0xff]
          %v5716 = vld [vmem:[%s5682 + $0x108] sm:$0xff]
          %v5717 = vld [vmem:[%s5682 + $0x110] sm:$0xff]
          %v5718 = vld [vmem:[%s5682 + $0x118] sm:$0xff]
          %v5719 = vld [vmem:[%s5682 + $0x120] sm:$0xff]
          %v5720 = vld [vmem:[%s5682 + $0x128] sm:$0xff]
          %v5721 = vld [vmem:[%s5682 + $0x130] sm:$0xff]
          %v5722 = vld [vmem:[%s5682 + $0x138] sm:$0xff]
          %v5723 = vld [vmem:[%s5682 + $0x140] sm:$0xff]
          %v5724 = vld [vmem:[%s5682 + $0x148] sm:$0xff]
          %v5725 = vld [vmem:[%s5682 + $0x150] sm:$0xff]
          %v5726 = vld [vmem:[%s5682 + $0x158] sm:$0xff]
          %v5727 = vld [vmem:[%s5682 + $0x160] sm:$0xff]
          %v5728 = vld [vmem:[%s5682 + $0x168] sm:$0xff]
          %v5729 = vld [vmem:[%s5682 + $0x170] sm:$0xff]
          %v5730 = vld [vmem:[%s5682 + $0x178] sm:$0xff]
          %v5731 = vld [vmem:[%s5682 + $0x180] sm:$0xff]
          %v5732 = vld [vmem:[%s5682 + $0x188] sm:$0xff]
          %v5733 = vld [vmem:[%s5682 + $0x190] sm:$0xff]
          %v5734 = vld [vmem:[%s5682 + $0x198] sm:$0xff]
          %v5735 = vld [vmem:[%s5682 + $0x1a0] sm:$0xff]
          %v5736 = vld [vmem:[%s5682 + $0x1a8] sm:$0xff]
          %v5737 = vld [vmem:[%s5682 + $0x1b0] sm:$0xff]
          %v5738 = vld [vmem:[%s5682 + $0x1b8] sm:$0xff]
          %v5739 = vld [vmem:[%s5682 + $0x1c0] sm:$0xff]
          %v5740 = vld [vmem:[%s5682 + $0x1c8] sm:$0xff]
          %v5741 = vld [vmem:[%s5682 + $0x1d0] sm:$0xff]
          %v5742 = vld [vmem:[%s5682 + $0x1d8] sm:$0xff]
          %v5743 = vld [vmem:[%s5682 + $0x1e0] sm:$0xff]
          %v5744 = vld [vmem:[%s5682 + $0x1e8] sm:$0xff]
          %v5745 = vld [vmem:[%s5682 + $0x1f0] sm:$0xff]
          %v5746 = vld [vmem:[%s5682 + $0x1f8] sm:$0xff]
          %v5747 = vld [vmem:[%s4157] sm:$0xf]
          %v5748 = vld [vmem:[%s4157 + $0x4] sm:$0xf]
          %v5749 = vld [vmem:[%s4157 + $0x8] sm:$0xf]
          %v5750 = vld [vmem:[%s4157 + $0xc] sm:$0xf]
          %s5751 = scalar_lea.vmem %s224, 1536 [#allocation5]
          %v5752 = vld [vmem:[%s5751] sm:$0xff]
          %v5753 = vld [vmem:[%s5751 + $0x8] sm:$0xff]
          %v5754 = vld [vmem:[%s5751 + $0x10] sm:$0xff]
          %v5755 = vld [vmem:[%s5751 + $0x18] sm:$0xff]
          %v5756 = vld [vmem:[%s5751 + $0x20] sm:$0xff]
          %v5757 = vld [vmem:[%s5751 + $0x28] sm:$0xff]
          %v5758 = vld [vmem:[%s5751 + $0x30] sm:$0xff]
          %v5759 = vld [vmem:[%s5751 + $0x38] sm:$0xff]
          %v5760 = vld [vmem:[%s5751 + $0x40] sm:$0xff]
          %v5761 = vld [vmem:[%s5751 + $0x48] sm:$0xff]
          %v5762 = vld [vmem:[%s5751 + $0x50] sm:$0xff]
          %v5763 = vld [vmem:[%s5751 + $0x58] sm:$0xff]
          %v5764 = vld [vmem:[%s5751 + $0x60] sm:$0xff]
          %v5765 = vld [vmem:[%s5751 + $0x68] sm:$0xff]
          %v5766 = vld [vmem:[%s5751 + $0x70] sm:$0xff]
          %v5767 = vld [vmem:[%s5751 + $0x78] sm:$0xff]
          %v5768 = vld [vmem:[%s5751 + $0x80] sm:$0xff]
          %v5769 = vld [vmem:[%s5751 + $0x88] sm:$0xff]
          %v5770 = vld [vmem:[%s5751 + $0x90] sm:$0xff]
          %v5771 = vld [vmem:[%s5751 + $0x98] sm:$0xff]
          %v5772 = vld [vmem:[%s5751 + $0xa0] sm:$0xff]
          %v5773 = vld [vmem:[%s5751 + $0xa8] sm:$0xff]
          %v5774 = vld [vmem:[%s5751 + $0xb0] sm:$0xff]
          %v5775 = vld [vmem:[%s5751 + $0xb8] sm:$0xff]
          %v5776 = vld [vmem:[%s5751 + $0xc0] sm:$0xff]
          %v5777 = vld [vmem:[%s5751 + $0xc8] sm:$0xff]
          %v5778 = vld [vmem:[%s5751 + $0xd0] sm:$0xff]
          %v5779 = vld [vmem:[%s5751 + $0xd8] sm:$0xff]
          %v5780 = vld [vmem:[%s5751 + $0xe0] sm:$0xff]
          %v5781 = vld [vmem:[%s5751 + $0xe8] sm:$0xff]
          %v5782 = vld [vmem:[%s5751 + $0xf0] sm:$0xff]
          %v5783 = vld [vmem:[%s5751 + $0xf8] sm:$0xff]
          %v5784 = vld [vmem:[%s5751 + $0x100] sm:$0xff]
          %v5785 = vld [vmem:[%s5751 + $0x108] sm:$0xff]
          %v5786 = vld [vmem:[%s5751 + $0x110] sm:$0xff]
          %v5787 = vld [vmem:[%s5751 + $0x118] sm:$0xff]
          %v5788 = vld [vmem:[%s5751 + $0x120] sm:$0xff]
          %v5789 = vld [vmem:[%s5751 + $0x128] sm:$0xff]
          %v5790 = vld [vmem:[%s5751 + $0x130] sm:$0xff]
          %v5791 = vld [vmem:[%s5751 + $0x138] sm:$0xff]
          %v5792 = vld [vmem:[%s5751 + $0x140] sm:$0xff]
          %v5793 = vld [vmem:[%s5751 + $0x148] sm:$0xff]
          %v5794 = vld [vmem:[%s5751 + $0x150] sm:$0xff]
          %v5795 = vld [vmem:[%s5751 + $0x158] sm:$0xff]
          %v5796 = vld [vmem:[%s5751 + $0x160] sm:$0xff]
          %v5797 = vld [vmem:[%s5751 + $0x168] sm:$0xff]
          %v5798 = vld [vmem:[%s5751 + $0x170] sm:$0xff]
          %v5799 = vld [vmem:[%s5751 + $0x178] sm:$0xff]
          %v5800 = vld [vmem:[%s5751 + $0x180] sm:$0xff]
          %v5801 = vld [vmem:[%s5751 + $0x188] sm:$0xff]
          %v5802 = vld [vmem:[%s5751 + $0x190] sm:$0xff]
          %v5803 = vld [vmem:[%s5751 + $0x198] sm:$0xff]
          %v5804 = vld [vmem:[%s5751 + $0x1a0] sm:$0xff]
          %v5805 = vld [vmem:[%s5751 + $0x1a8] sm:$0xff]
          %v5806 = vld [vmem:[%s5751 + $0x1b0] sm:$0xff]
          %v5807 = vld [vmem:[%s5751 + $0x1b8] sm:$0xff]
          %v5808 = vld [vmem:[%s5751 + $0x1c0] sm:$0xff]
          %v5809 = vld [vmem:[%s5751 + $0x1c8] sm:$0xff]
          %v5810 = vld [vmem:[%s5751 + $0x1d0] sm:$0xff]
          %v5811 = vld [vmem:[%s5751 + $0x1d8] sm:$0xff]
          %v5812 = vld [vmem:[%s5751 + $0x1e0] sm:$0xff]
          %v5813 = vld [vmem:[%s5751 + $0x1e8] sm:$0xff]
          %v5814 = vld [vmem:[%s5751 + $0x1f0] sm:$0xff]
          %v5815 = vld [vmem:[%s5751 + $0x1f8] sm:$0xff]
          %v5820 = vunpack.c.l.b16 %v5747
          %v5821 = vunpack.c.l.b16 %v5748
          %v5822 = vunpack.c.l.b16 %v5749
          %v5823 = vunpack.c.l.b16 %v5750
          %v5824 = vpack.c.b16 %v5821, %v5820
          %v5825 = vpack.c.b16 %v5823, %v5822
          %v5892 = vunpack.c.l.b16 %v5752
          %v5893 = vunpack.c.h.b16 %v5752
          %v5894 = vunpack.c.l.b16 %v5753
          %v5895 = vunpack.c.h.b16 %v5753
          %v5896 = vunpack.c.l.b16 %v5754
          %v5897 = vunpack.c.h.b16 %v5754
          %v5898 = vunpack.c.l.b16 %v5755
          %v5899 = vunpack.c.h.b16 %v5755
          %v5900 = vunpack.c.l.b16 %v5756
          %v5901 = vunpack.c.h.b16 %v5756
          %v5902 = vunpack.c.l.b16 %v5757
          %v5903 = vunpack.c.h.b16 %v5757
          %v5904 = vunpack.c.l.b16 %v5758
          %v5905 = vunpack.c.h.b16 %v5758
          %v5906 = vunpack.c.l.b16 %v5759
          %v5907 = vunpack.c.h.b16 %v5759
          %v5908 = vunpack.c.l.b16 %v5760
          %v5909 = vunpack.c.h.b16 %v5760
          %v5910 = vunpack.c.l.b16 %v5761
          %v5911 = vunpack.c.h.b16 %v5761
          %v5912 = vunpack.c.l.b16 %v5762
          %v5913 = vunpack.c.h.b16 %v5762
          %v5914 = vunpack.c.l.b16 %v5763
          %v5915 = vunpack.c.h.b16 %v5763
          %v5916 = vunpack.c.l.b16 %v5764
          %v5917 = vunpack.c.h.b16 %v5764
          %v5918 = vunpack.c.l.b16 %v5765
          %v5919 = vunpack.c.h.b16 %v5765
          %v5920 = vunpack.c.l.b16 %v5766
          %v5921 = vunpack.c.h.b16 %v5766
          %v5922 = vunpack.c.l.b16 %v5767
          %v5923 = vunpack.c.h.b16 %v5767
          %v5924 = vunpack.c.l.b16 %v5768
          %v5925 = vunpack.c.h.b16 %v5768
          %v5926 = vunpack.c.l.b16 %v5769
          %v5927 = vunpack.c.h.b16 %v5769
          %v5928 = vunpack.c.l.b16 %v5770
          %v5929 = vunpack.c.h.b16 %v5770
          %v5930 = vunpack.c.l.b16 %v5771
          %v5931 = vunpack.c.h.b16 %v5771
          %v5932 = vunpack.c.l.b16 %v5772
          %v5933 = vunpack.c.h.b16 %v5772
          %v5934 = vunpack.c.l.b16 %v5773
          %v5935 = vunpack.c.h.b16 %v5773
          %v5936 = vunpack.c.l.b16 %v5774
          %v5937 = vunpack.c.h.b16 %v5774
          %v5938 = vunpack.c.l.b16 %v5775
          %v5939 = vunpack.c.h.b16 %v5775
          %v5940 = vunpack.c.l.b16 %v5776
          %v5941 = vunpack.c.h.b16 %v5776
          %v5942 = vunpack.c.l.b16 %v5777
          %v5943 = vunpack.c.h.b16 %v5777
          %v5944 = vunpack.c.l.b16 %v5778
          %v5945 = vunpack.c.h.b16 %v5778
          %v5946 = vunpack.c.l.b16 %v5779
          %v5947 = vunpack.c.h.b16 %v5779
          %v5948 = vunpack.c.l.b16 %v5780
          %v5949 = vunpack.c.h.b16 %v5780
          %v5950 = vunpack.c.l.b16 %v5781
          %v5951 = vunpack.c.h.b16 %v5781
          %v5952 = vunpack.c.l.b16 %v5782
          %v5953 = vunpack.c.h.b16 %v5782
          %v5954 = vunpack.c.l.b16 %v5783
          %v5955 = vunpack.c.h.b16 %v5783
          %v5956 = vunpack.c.l.b16 %v5784
          %v5957 = vunpack.c.h.b16 %v5784
          %v5958 = vunpack.c.l.b16 %v5785
          %v5959 = vunpack.c.h.b16 %v5785
          %v5960 = vunpack.c.l.b16 %v5786
          %v5961 = vunpack.c.h.b16 %v5786
          %v5962 = vunpack.c.l.b16 %v5787
          %v5963 = vunpack.c.h.b16 %v5787
          %v5964 = vunpack.c.l.b16 %v5788
          %v5965 = vunpack.c.h.b16 %v5788
          %v5966 = vunpack.c.l.b16 %v5789
          %v5967 = vunpack.c.h.b16 %v5789
          %v5968 = vunpack.c.l.b16 %v5790
          %v5969 = vunpack.c.h.b16 %v5790
          %v5970 = vunpack.c.l.b16 %v5791
          %v5971 = vunpack.c.h.b16 %v5791
          %v5972 = vunpack.c.l.b16 %v5792
          %v5973 = vunpack.c.h.b16 %v5792
          %v5974 = vunpack.c.l.b16 %v5793
          %v5975 = vunpack.c.h.b16 %v5793
          %v5976 = vunpack.c.l.b16 %v5794
          %v5977 = vunpack.c.h.b16 %v5794
          %v5978 = vunpack.c.l.b16 %v5795
          %v5979 = vunpack.c.h.b16 %v5795
          %v5980 = vunpack.c.l.b16 %v5796
          %v5981 = vunpack.c.h.b16 %v5796
          %v5982 = vunpack.c.l.b16 %v5797
          %v5983 = vunpack.c.h.b16 %v5797
          %v5984 = vunpack.c.l.b16 %v5798
          %v5985 = vunpack.c.h.b16 %v5798
          %v5986 = vunpack.c.l.b16 %v5799
          %v5987 = vunpack.c.h.b16 %v5799
          %v5988 = vunpack.c.l.b16 %v5800
          %v5989 = vunpack.c.h.b16 %v5800
          %v5990 = vunpack.c.l.b16 %v5801
          %v5991 = vunpack.c.h.b16 %v5801
          %v5992 = vunpack.c.l.b16 %v5802
          %v5993 = vunpack.c.h.b16 %v5802
          %v5994 = vunpack.c.l.b16 %v5803
          %v5995 = vunpack.c.h.b16 %v5803
          %v5996 = vunpack.c.l.b16 %v5804
          %v5997 = vunpack.c.h.b16 %v5804
          %v5998 = vunpack.c.l.b16 %v5805
          %v5999 = vunpack.c.h.b16 %v5805
          %v6000 = vunpack.c.l.b16 %v5806
          %v6001 = vunpack.c.h.b16 %v5806
          %v6002 = vunpack.c.l.b16 %v5807
          %v6003 = vunpack.c.h.b16 %v5807
          %v6004 = vunpack.c.l.b16 %v5808
          %v6005 = vunpack.c.h.b16 %v5808
          %v6006 = vunpack.c.l.b16 %v5809
          %v6007 = vunpack.c.h.b16 %v5809
          %v6008 = vunpack.c.l.b16 %v5810
          %v6009 = vunpack.c.h.b16 %v5810
          %v6010 = vunpack.c.l.b16 %v5811
          %v6011 = vunpack.c.h.b16 %v5811
          %v6012 = vunpack.c.l.b16 %v5812
          %v6013 = vunpack.c.h.b16 %v5812
          %v6014 = vunpack.c.l.b16 %v5813
          %v6015 = vunpack.c.h.b16 %v5813
          %v6016 = vunpack.c.l.b16 %v5814
          %v6017 = vunpack.c.h.b16 %v5814
          %v6018 = vunpack.c.l.b16 %v5815
          %v6019 = vunpack.c.h.b16 %v5815
          %v6020 = vpack.c.b16 %v5900, %v5892
          %v6021 = vpack.c.b16 %v5901, %v5893
          %v6022 = vpack.c.b16 %v5902, %v5894
          %v6023 = vpack.c.b16 %v5903, %v5895
          %v6024 = vpack.c.b16 %v5904, %v5896
          %v6025 = vpack.c.b16 %v5905, %v5897
          %v6026 = vpack.c.b16 %v5906, %v5898
          %v6027 = vpack.c.b16 %v5907, %v5899
          %v6028 = vpack.c.b16 %v5916, %v5908
          %v6029 = vpack.c.b16 %v5917, %v5909
          %v6030 = vpack.c.b16 %v5918, %v5910
          %v6031 = vpack.c.b16 %v5919, %v5911
          %v6032 = vpack.c.b16 %v5920, %v5912
          %v6033 = vpack.c.b16 %v5921, %v5913
          %v6034 = vpack.c.b16 %v5922, %v5914
          %v6035 = vpack.c.b16 %v5923, %v5915
          %v6036 = vpack.c.b16 %v5932, %v5924
          %v6037 = vpack.c.b16 %v5933, %v5925
          %v6038 = vpack.c.b16 %v5934, %v5926
          %v6039 = vpack.c.b16 %v5935, %v5927
          %v6040 = vpack.c.b16 %v5936, %v5928
          %v6041 = vpack.c.b16 %v5937, %v5929
          %v6042 = vpack.c.b16 %v5938, %v5930
          %v6043 = vpack.c.b16 %v5939, %v5931
          %v6044 = vpack.c.b16 %v5948, %v5940
          %v6045 = vpack.c.b16 %v5949, %v5941
          %v6046 = vpack.c.b16 %v5950, %v5942
          %v6047 = vpack.c.b16 %v5951, %v5943
          %v6048 = vpack.c.b16 %v5952, %v5944
          %v6049 = vpack.c.b16 %v5953, %v5945
          %v6050 = vpack.c.b16 %v5954, %v5946
          %v6051 = vpack.c.b16 %v5955, %v5947
          %v6052 = vpack.c.b16 %v5964, %v5956
          %v6053 = vpack.c.b16 %v5965, %v5957
          %v6054 = vpack.c.b16 %v5966, %v5958
          %v6055 = vpack.c.b16 %v5967, %v5959
          %v6056 = vpack.c.b16 %v5968, %v5960
          %v6057 = vpack.c.b16 %v5969, %v5961
          %v6058 = vpack.c.b16 %v5970, %v5962
          %v6059 = vpack.c.b16 %v5971, %v5963
          %v6060 = vpack.c.b16 %v5980, %v5972
          %v6061 = vpack.c.b16 %v5981, %v5973
          %v6062 = vpack.c.b16 %v5982, %v5974
          %v6063 = vpack.c.b16 %v5983, %v5975
          %v6064 = vpack.c.b16 %v5984, %v5976
          %v6065 = vpack.c.b16 %v5985, %v5977
          %v6066 = vpack.c.b16 %v5986, %v5978
          %v6067 = vpack.c.b16 %v5987, %v5979
          %v6068 = vpack.c.b16 %v5996, %v5988
          %v6069 = vpack.c.b16 %v5997, %v5989
          %v6070 = vpack.c.b16 %v5998, %v5990
          %v6071 = vpack.c.b16 %v5999, %v5991
          %v6072 = vpack.c.b16 %v6000, %v5992
          %v6073 = vpack.c.b16 %v6001, %v5993
          %v6074 = vpack.c.b16 %v6002, %v5994
          %v6075 = vpack.c.b16 %v6003, %v5995
          %v6076 = vpack.c.b16 %v6012, %v6004
          %v6077 = vpack.c.b16 %v6013, %v6005
          %v6078 = vpack.c.b16 %v6014, %v6006
          %v6079 = vpack.c.b16 %v6015, %v6007
          %v6080 = vpack.c.b16 %v6016, %v6008
          %v6081 = vpack.c.b16 %v6017, %v6009
          %v6082 = vpack.c.b16 %v6018, %v6010
          %v6083 = vpack.c.b16 %v6019, %v6011
          %6148 = vmatprep.subr.bf16.mxu0 %v6021
          %6149 = vmatpush1.bf16.msra.mxu0 %v6020
          %6150 = vmatprep.subr.bf16.mxu0 %v6029
          %6151 = vmatpush1.bf16.msra.mxu0 %v6028
          %6152 = vmatprep.subr.bf16.mxu0 %v6037
          %6153 = vmatpush1.bf16.msra.mxu0 %v6036
          %6154 = vmatprep.subr.bf16.mxu0 %v6045
          %6155 = vmatpush1.bf16.msra.mxu0 %v6044
          %6156 = vmatprep.subr.bf16.mxu0 %v6053
          %6157 = vmatpush1.bf16.msra.mxu0 %v6052
          %6158 = vmatprep.subr.bf16.mxu0 %v6061
          %6159 = vmatpush1.bf16.msra.mxu0 %v6060
          %6160 = vmatprep.subr.bf16.mxu0 %v6069
          %6161 = vmatpush1.bf16.msra.mxu0 %v6068
          %6162 = vmatprep.subr.bf16.mxu0 %v6077
          %6163 = vmatpush1.bf16.msra.mxu0 %v6076
          %6164 = vmatprep.subr.bf16.mxu0 0
          %6165 = vmatpush1.bf16.msra.mxu0 0
          %6166 = vmatprep.subr.bf16.mxu0 0
          %6167 = vmatpush1.bf16.msra.mxu0 0
          %6168 = vmatprep.subr.bf16.mxu0 0
          %6169 = vmatpush1.bf16.msra.mxu0 0
          %6170 = vmatprep.subr.bf16.mxu0 0
          %6171 = vmatpush1.bf16.msra.mxu0 0
          %6172 = vmatprep.subr.bf16.mxu0 0
          %6173 = vmatpush1.bf16.msra.mxu0 0
          %6174 = vmatprep.subr.bf16.mxu0 0
          %6175 = vmatpush1.bf16.msra.mxu0 0
          %6176 = vmatprep.subr.bf16.mxu0 0
          %6177 = vmatpush1.bf16.msra.mxu0 0
          %6178 = vmatprep.subr.bf16.mxu0 0
          %6179 = vmatpush1.bf16.msra.mxu0 0
          %6180 = vmatprep.mubr.bf16.mxu0 0
          %6181 = vmatmul.mubr.bf16.gmra.mrb[0].mxu0 %v5824
          %v6182 = vpop.f32.mrb[0].mxu0
          %v6183 = vadd.f32 0.0, %v6182
          %v6184 = vpop.f32.mrb[0].mxu0
          %v6185 = vadd.f32 0.0, %v6184
          %v6186 = vpop.f32.mrb[0].mxu0
          %v6187 = vadd.f32 0.0, %v6186
          %v6188 = vpop.f32.mrb[0].mxu0
          %v6189 = vadd.f32 0.0, %v6188
          %6190 = vmatprep.mubr.bf16.mxu0 0
          %6191 = vmatmul.mubr.bf16.gmra.mrb[0].mxu0 %v5825
          %v6192 = vpop.f32.mrb[0].mxu0
          %v6193 = vadd.f32 0.0, %v6192
          %v6194 = vpop.f32.mrb[0].mxu0
          %v6195 = vadd.f32 0.0, %v6194
          %v6196 = vpop.f32.mrb[0].mxu0
          %v6197 = vadd.f32 0.0, %v6196
          %v6198 = vpop.f32.mrb[0].mxu0
          %v6199 = vadd.f32 0.0, %v6198
          %6200 = vdwg.mxu0
          %6201 = vmatprep.subr.bf16.mxu0 %v6023
          %6202 = vmatpush1.bf16.msra.mxu0 %v6022
          %6203 = vmatprep.subr.bf16.mxu0 %v6031
          %6204 = vmatpush1.bf16.msra.mxu0 %v6030
          %6205 = vmatprep.subr.bf16.mxu0 %v6039
          %6206 = vmatpush1.bf16.msra.mxu0 %v6038
          %6207 = vmatprep.subr.bf16.mxu0 %v6047
          %6208 = vmatpush1.bf16.msra.mxu0 %v6046
          %6209 = vmatprep.subr.bf16.mxu0 %v6055
          %6210 = vmatpush1.bf16.msra.mxu0 %v6054
          %6211 = vmatprep.subr.bf16.mxu0 %v6063
          %6212 = vmatpush1.bf16.msra.mxu0 %v6062
          %6213 = vmatprep.subr.bf16.mxu0 %v6071
          %6214 = vmatpush1.bf16.msra.mxu0 %v6070
          %6215 = vmatprep.subr.bf16.mxu0 %v6079
          %6216 = vmatpush1.bf16.msra.mxu0 %v6078
          %6217 = vmatprep.subr.bf16.mxu0 0
          %6218 = vmatpush1.bf16.msra.mxu0 0
          %6219 = vmatprep.subr.bf16.mxu0 0
          %6220 = vmatpush1.bf16.msra.mxu0 0
          %6221 = vmatprep.subr.bf16.mxu0 0
          %6222 = vmatpush1.bf16.msra.mxu0 0
          %6223 = vmatprep.subr.bf16.mxu0 0
          %6224 = vmatpush1.bf16.msra.mxu0 0
          %6225 = vmatprep.subr.bf16.mxu0 0
          %6226 = vmatpush1.bf16.msra.mxu0 0
          %6227 = vmatprep.subr.bf16.mxu0 0
          %6228 = vmatpush1.bf16.msra.mxu0 0
          %6229 = vmatprep.subr.bf16.mxu0 0
          %6230 = vmatpush1.bf16.msra.mxu0 0
          %6231 = vmatprep.subr.bf16.mxu0 0
          %6232 = vmatpush1.bf16.msra.mxu0 0
          %6233 = vmatprep.mubr.bf16.mxu0 0
          %6234 = vmatmul.mubr.bf16.gmra.mrb[0].mxu0 %v5824
          %v6235 = vpop.f32.mrb[0].mxu0
          %v6236 = vadd.f32 0.0, %v6235
          %v6237 = vpop.f32.mrb[0].mxu0
          %v6238 = vadd.f32 0.0, %v6237
          %v6239 = vpop.f32.mrb[0].mxu0
          %v6240 = vadd.f32 0.0, %v6239
          %v6241 = vpop.f32.mrb[0].mxu0
          %v6242 = vadd.f32 0.0, %v6241
          %6243 = vmatprep.mubr.bf16.mxu0 0
          %6244 = vmatmul.mubr.bf16.gmra.mrb[0].mxu0 %v5825
          %v6245 = vpop.f32.mrb[0].mxu0
          %v6246 = vadd.f32 0.0, %v6245
          %v6247 = vpop.f32.mrb[0].mxu0
          %v6248 = vadd.f32 0.0, %v6247
          %v6249 = vpop.f32.mrb[0].mxu0
          %v6250 = vadd.f32 0.0, %v6249
          %v6251 = vpop.f32.mrb[0].mxu0
          %v6252 = vadd.f32 0.0, %v6251
          %6253 = vdwg.mxu0
          %6254 = vmatprep.subr.bf16.mxu0 %v6025
          %6255 = vmatpush1.bf16.msra.mxu0 %v6024
          %6256 = vmatprep.subr.bf16.mxu0 %v6033
          %6257 = vmatpush1.bf16.msra.mxu0 %v6032
          %6258 = vmatprep.subr.bf16.mxu0 %v6041
          %6259 = vmatpush1.bf16.msra.mxu0 %v6040
          %6260 = vmatprep.subr.bf16.mxu0 %v6049
          %6261 = vmatpush1.bf16.msra.mxu0 %v6048
          %6262 = vmatprep.subr.bf16.mxu0 %v6057
          %6263 = vmatpush1.bf16.msra.mxu0 %v6056
          %6264 = vmatprep.subr.bf16.mxu0 %v6065
          %6265 = vmatpush1.bf16.msra.mxu0 %v6064
          %6266 = vmatprep.subr.bf16.mxu0 %v6073
          %6267 = vmatpush1.bf16.msra.mxu0 %v6072
          %6268 = vmatprep.subr.bf16.mxu0 %v6081
          %6269 = vmatpush1.bf16.msra.mxu0 %v6080
          %6270 = vmatprep.subr.bf16.mxu0 0
          %6271 = vmatpush1.bf16.msra.mxu0 0
          %6272 = vmatprep.subr.bf16.mxu0 0
          %6273 = vmatpush1.bf16.msra.mxu0 0
          %6274 = vmatprep.subr.bf16.mxu0 0
          %6275 = vmatpush1.bf16.msra.mxu0 0
          %6276 = vmatprep.subr.bf16.mxu0 0
          %6277 = vmatpush1.bf16.msra.mxu0 0
          %6278 = vmatprep.subr.bf16.mxu0 0
          %6279 = vmatpush1.bf16.msra.mxu0 0
          %6280 = vmatprep.subr.bf16.mxu0 0
          %6281 = vmatpush1.bf16.msra.mxu0 0
          %6282 = vmatprep.subr.bf16.mxu0 0
          %6283 = vmatpush1.bf16.msra.mxu0 0
          %6284 = vmatprep.subr.bf16.mxu0 0
          %6285 = vmatpush1.bf16.msra.mxu0 0
          %6286 = vmatprep.mubr.bf16.mxu0 0
          %6287 = vmatmul.mubr.bf16.gmra.mrb[0].mxu0 %v5824
          %v6288 = vpop.f32.mrb[0].mxu0
          %v6289 = vadd.f32 0.0, %v6288
          %v6290 = vpop.f32.mrb[0].mxu0
          %v6291 = vadd.f32 0.0, %v6290
          %v6292 = vpop.f32.mrb[0].mxu0
          %v6293 = vadd.f32 0.0, %v6292
          %v6294 = vpop.f32.mrb[0].mxu0
          %v6295 = vadd.f32 0.0, %v6294
          %6296 = vmatprep.mubr.bf16.mxu0 0
          %6297 = vmatmul.mubr.bf16.gmra.mrb[0].mxu0 %v5825
          %v6298 = vpop.f32.mrb[0].mxu0
          %v6299 = vadd.f32 0.0, %v6298
          %v6300 = vpop.f32.mrb[0].mxu0
          %v6301 = vadd.f32 0.0, %v6300
          %v6302 = vpop.f32.mrb[0].mxu0
          %v6303 = vadd.f32 0.0, %v6302
          %v6304 = vpop.f32.mrb[0].mxu0
          %v6305 = vadd.f32 0.0, %v6304
          %6306 = vdwg.mxu0
          %6307 = vmatprep.subr.bf16.mxu0 %v6027
          %6308 = vmatpush1.bf16.msra.mxu0 %v6026
          %6309 = vmatprep.subr.bf16.mxu0 %v6035
          %6310 = vmatpush1.bf16.msra.mxu0 %v6034
          %6311 = vmatprep.subr.bf16.mxu0 %v6043
          %6312 = vmatpush1.bf16.msra.mxu0 %v6042
          %6313 = vmatprep.subr.bf16.mxu0 %v6051
          %6314 = vmatpush1.bf16.msra.mxu0 %v6050
          %6315 = vmatprep.subr.bf16.mxu0 %v6059
          %6316 = vmatpush1.bf16.msra.mxu0 %v6058
          %6317 = vmatprep.subr.bf16.mxu0 %v6067
          %6318 = vmatpush1.bf16.msra.mxu0 %v6066
          %6319 = vmatprep.subr.bf16.mxu0 %v6075
          %6320 = vmatpush1.bf16.msra.mxu0 %v6074
          %6321 = vmatprep.subr.bf16.mxu0 %v6083
          %6322 = vmatpush1.bf16.msra.mxu0 %v6082
          %6323 = vmatprep.subr.bf16.mxu0 0
          %6324 = vmatpush1.bf16.msra.mxu0 0
          %6325 = vmatprep.subr.bf16.mxu0 0
          %6326 = vmatpush1.bf16.msra.mxu0 0
          %6327 = vmatprep.subr.bf16.mxu0 0
          %6328 = vmatpush1.bf16.msra.mxu0 0
          %6329 = vmatprep.subr.bf16.mxu0 0
          %6330 = vmatpush1.bf16.msra.mxu0 0
          %6331 = vmatprep.subr.bf16.mxu0 0
          %6332 = vmatpush1.bf16.msra.mxu0 0
          %6333 = vmatprep.subr.bf16.mxu0 0
          %6334 = vmatpush1.bf16.msra.mxu0 0
          %6335 = vmatprep.subr.bf16.mxu0 0
          %6336 = vmatpush1.bf16.msra.mxu0 0
          %6337 = vmatprep.subr.bf16.mxu0 0
          %6338 = vmatpush1.bf16.msra.mxu0 0
          %6339 = vmatprep.mubr.bf16.mxu0 0
          %6340 = vmatmul.mubr.bf16.gmra.mrb[0].mxu0 %v5824
          %v6341 = vpop.f32.mrb[0].mxu0
          %v6342 = vadd.f32 0.0, %v6341
          %v6343 = vpop.f32.mrb[0].mxu0
          %v6344 = vadd.f32 0.0, %v6343
          %v6345 = vpop.f32.mrb[0].mxu0
          %v6346 = vadd.f32 0.0, %v6345
          %v6347 = vpop.f32.mrb[0].mxu0
          %v6348 = vadd.f32 0.0, %v6347
          %6349 = vmatprep.mubr.bf16.mxu0 0
          %6350 = vmatmul.mubr.bf16.gmra.mrb[0].mxu0 %v5825
          %v6351 = vpop.f32.mrb[0].mxu0
          %v6352 = vadd.f32 0.0, %v6351
          %v6353 = vpop.f32.mrb[0].mxu0
          %v6354 = vadd.f32 0.0, %v6353
          %v6355 = vpop.f32.mrb[0].mxu0
          %v6356 = vadd.f32 0.0, %v6355
          %v6357 = vpop.f32.mrb[0].mxu0
          %v6358 = vadd.f32 0.0, %v6357
          %6359 = vdwg.mxu0
          %v6364 = vunpack.c.l.b16 %v5678
          %v6365 = vunpack.c.l.b16 %v5679
          %v6366 = vunpack.c.l.b16 %v5680
          %v6367 = vunpack.c.l.b16 %v5681
          %v6368 = vpack.c.b16 %v6365, %v6364
          %v6369 = vpack.c.b16 %v6367, %v6366
          %v6436 = vunpack.c.l.b16 %v5683
          %v6437 = vunpack.c.h.b16 %v5683
          %v6438 = vunpack.c.l.b16 %v5684
          %v6439 = vunpack.c.h.b16 %v5684
          %v6440 = vunpack.c.l.b16 %v5685
          %v6441 = vunpack.c.h.b16 %v5685
          %v6442 = vunpack.c.l.b16 %v5686
          %v6443 = vunpack.c.h.b16 %v5686
          %v6444 = vunpack.c.l.b16 %v5687
          %v6445 = vunpack.c.h.b16 %v5687
          %v6446 = vunpack.c.l.b16 %v5688
          %v6447 = vunpack.c.h.b16 %v5688
          %v6448 = vunpack.c.l.b16 %v5689
          %v6449 = vunpack.c.h.b16 %v5689
          %v6450 = vunpack.c.l.b16 %v5690
          %v6451 = vunpack.c.h.b16 %v5690
          %v6452 = vunpack.c.l.b16 %v5691
          %v6453 = vunpack.c.h.b16 %v5691
          %v6454 = vunpack.c.l.b16 %v5692
          %v6455 = vunpack.c.h.b16 %v5692
          %v6456 = vunpack.c.l.b16 %v5693
          %v6457 = vunpack.c.h.b16 %v5693
          %v6458 = vunpack.c.l.b16 %v5694
          %v6459 = vunpack.c.h.b16 %v5694
          %v6460 = vunpack.c.l.b16 %v5695
          %v6461 = vunpack.c.h.b16 %v5695
          %v6462 = vunpack.c.l.b16 %v5696
          %v6463 = vunpack.c.h.b16 %v5696
          %v6464 = vunpack.c.l.b16 %v5697
          %v6465 = vunpack.c.h.b16 %v5697
          %v6466 = vunpack.c.l.b16 %v5698
          %v6467 = vunpack.c.h.b16 %v5698
          %v6468 = vunpack.c.l.b16 %v5699
          %v6469 = vunpack.c.h.b16 %v5699
          %v6470 = vunpack.c.l.b16 %v5700
          %v6471 = vunpack.c.h.b16 %v5700
          %v6472 = vunpack.c.l.b16 %v5701
          %v6473 = vunpack.c.h.b16 %v5701
          %v6474 = vunpack.c.l.b16 %v5702
          %v6475 = vunpack.c.h.b16 %v5702
          %v6476 = vunpack.c.l.b16 %v5703
          %v6477 = vunpack.c.h.b16 %v5703
          %v6478 = vunpack.c.l.b16 %v5704
          %v6479 = vunpack.c.h.b16 %v5704
          %v6480 = vunpack.c.l.b16 %v5705
          %v6481 = vunpack.c.h.b16 %v5705
          %v6482 = vunpack.c.l.b16 %v5706
          %v6483 = vunpack.c.h.b16 %v5706
          %v6484 = vunpack.c.l.b16 %v5707
          %v6485 = vunpack.c.h.b16 %v5707
          %v6486 = vunpack.c.l.b16 %v5708
          %v6487 = vunpack.c.h.b16 %v5708
          %v6488 = vunpack.c.l.b16 %v5709
          %v6489 = vunpack.c.h.b16 %v5709
          %v6490 = vunpack.c.l.b16 %v5710
          %v6491 = vunpack.c.h.b16 %v5710
          %v6492 = vunpack.c.l.b16 %v5711
          %v6493 = vunpack.c.h.b16 %v5711
          %v6494 = vunpack.c.l.b16 %v5712
          %v6495 = vunpack.c.h.b16 %v5712
          %v6496 = vunpack.c.l.b16 %v5713
          %v6497 = vunpack.c.h.b16 %v5713
          %v6498 = vunpack.c.l.b16 %v5714
          %v6499 = vunpack.c.h.b16 %v5714
          %v6500 = vunpack.c.l.b16 %v5715
          %v6501 = vunpack.c.h.b16 %v5715
          %v6502 = vunpack.c.l.b16 %v5716
          %v6503 = vunpack.c.h.b16 %v5716
          %v6504 = vunpack.c.l.b16 %v5717
          %v6505 = vunpack.c.h.b16 %v5717
          %v6506 = vunpack.c.l.b16 %v5718
          %v6507 = vunpack.c.h.b16 %v5718
          %v6508 = vunpack.c.l.b16 %v5719
          %v6509 = vunpack.c.h.b16 %v5719
          %v6510 = vunpack.c.l.b16 %v5720
          %v6511 = vunpack.c.h.b16 %v5720
          %v6512 = vunpack.c.l.b16 %v5721
          %v6513 = vunpack.c.h.b16 %v5721
          %v6514 = vunpack.c.l.b16 %v5722
          %v6515 = vunpack.c.h.b16 %v5722
          %v6516 = vunpack.c.l.b16 %v5723
          %v6517 = vunpack.c.h.b16 %v5723
          %v6518 = vunpack.c.l.b16 %v5724
          %v6519 = vunpack.c.h.b16 %v5724
          %v6520 = vunpack.c.l.b16 %v5725
          %v6521 = vunpack.c.h.b16 %v5725
          %v6522 = vunpack.c.l.b16 %v5726
          %v6523 = vunpack.c.h.b16 %v5726
          %v6524 = vunpack.c.l.b16 %v5727
          %v6525 = vunpack.c.h.b16 %v5727
          %v6526 = vunpack.c.l.b16 %v5728
          %v6527 = vunpack.c.h.b16 %v5728
          %v6528 = vunpack.c.l.b16 %v5729
          %v6529 = vunpack.c.h.b16 %v5729
          %v6530 = vunpack.c.l.b16 %v5730
          %v6531 = vunpack.c.h.b16 %v5730
          %v6532 = vunpack.c.l.b16 %v5731
          %v6533 = vunpack.c.h.b16 %v5731
          %v6534 = vunpack.c.l.b16 %v5732
          %v6535 = vunpack.c.h.b16 %v5732
          %v6536 = vunpack.c.l.b16 %v5733
          %v6537 = vunpack.c.h.b16 %v5733
          %v6538 = vunpack.c.l.b16 %v5734
          %v6539 = vunpack.c.h.b16 %v5734
          %v6540 = vunpack.c.l.b16 %v5735
          %v6541 = vunpack.c.h.b16 %v5735
          %v6542 = vunpack.c.l.b16 %v5736
          %v6543 = vunpack.c.h.b16 %v5736
          %v6544 = vunpack.c.l.b16 %v5737
          %v6545 = vunpack.c.h.b16 %v5737
          %v6546 = vunpack.c.l.b16 %v5738
          %v6547 = vunpack.c.h.b16 %v5738
          %v6548 = vunpack.c.l.b16 %v5739
          %v6549 = vunpack.c.h.b16 %v5739
          %v6550 = vunpack.c.l.b16 %v5740
          %v6551 = vunpack.c.h.b16 %v5740
          %v6552 = vunpack.c.l.b16 %v5741
          %v6553 = vunpack.c.h.b16 %v5741
          %v6554 = vunpack.c.l.b16 %v5742
          %v6555 = vunpack.c.h.b16 %v5742
          %v6556 = vunpack.c.l.b16 %v5743
          %v6557 = vunpack.c.h.b16 %v5743
          %v6558 = vunpack.c.l.b16 %v5744
          %v6559 = vunpack.c.h.b16 %v5744
          %v6560 = vunpack.c.l.b16 %v5745
          %v6561 = vunpack.c.h.b16 %v5745
          %v6562 = vunpack.c.l.b16 %v5746
          %v6563 = vunpack.c.h.b16 %v5746
          %v6564 = vpack.c.b16 %v6444, %v6436
          %v6565 = vpack.c.b16 %v6445, %v6437
          %v6566 = vpack.c.b16 %v6446, %v6438
          %v6567 = vpack.c.b16 %v6447, %v6439
          %v6568 = vpack.c.b16 %v6448, %v6440
          %v6569 = vpack.c.b16 %v6449, %v6441
          %v6570 = vpack.c.b16 %v6450, %v6442
          %v6571 = vpack.c.b16 %v6451, %v6443
          %v6572 = vpack.c.b16 %v6460, %v6452
          %v6573 = vpack.c.b16 %v6461, %v6453
          %v6574 = vpack.c.b16 %v6462, %v6454
          %v6575 = vpack.c.b16 %v6463, %v6455
          %v6576 = vpack.c.b16 %v6464, %v6456
          %v6577 = vpack.c.b16 %v6465, %v6457
          %v6578 = vpack.c.b16 %v6466, %v6458
          %v6579 = vpack.c.b16 %v6467, %v6459
          %v6580 = vpack.c.b16 %v6476, %v6468
          %v6581 = vpack.c.b16 %v6477, %v6469
          %v6582 = vpack.c.b16 %v6478, %v6470
          %v6583 = vpack.c.b16 %v6479, %v6471
          %v6584 = vpack.c.b16 %v6480, %v6472
          %v6585 = vpack.c.b16 %v6481, %v6473
          %v6586 = vpack.c.b16 %v6482, %v6474
          %v6587 = vpack.c.b16 %v6483, %v6475
          %v6588 = vpack.c.b16 %v6492, %v6484
          %v6589 = vpack.c.b16 %v6493, %v6485
          %v6590 = vpack.c.b16 %v6494, %v6486
          %v6591 = vpack.c.b16 %v6495, %v6487
          %v6592 = vpack.c.b16 %v6496, %v6488
          %v6593 = vpack.c.b16 %v6497, %v6489
          %v6594 = vpack.c.b16 %v6498, %v6490
          %v6595 = vpack.c.b16 %v6499, %v6491
          %v6596 = vpack.c.b16 %v6508, %v6500
          %v6597 = vpack.c.b16 %v6509, %v6501
          %v6598 = vpack.c.b16 %v6510, %v6502
          %v6599 = vpack.c.b16 %v6511, %v6503
          %v6600 = vpack.c.b16 %v6512, %v6504
          %v6601 = vpack.c.b16 %v6513, %v6505
          %v6602 = vpack.c.b16 %v6514, %v6506
          %v6603 = vpack.c.b16 %v6515, %v6507
          %v6604 = vpack.c.b16 %v6524, %v6516
          %v6605 = vpack.c.b16 %v6525, %v6517
          %v6606 = vpack.c.b16 %v6526, %v6518
          %v6607 = vpack.c.b16 %v6527, %v6519
          %v6608 = vpack.c.b16 %v6528, %v6520
          %v6609 = vpack.c.b16 %v6529, %v6521
          %v6610 = vpack.c.b16 %v6530, %v6522
          %v6611 = vpack.c.b16 %v6531, %v6523
          %v6612 = vpack.c.b16 %v6540, %v6532
          %v6613 = vpack.c.b16 %v6541, %v6533
          %v6614 = vpack.c.b16 %v6542, %v6534
          %v6615 = vpack.c.b16 %v6543, %v6535
          %v6616 = vpack.c.b16 %v6544, %v6536
          %v6617 = vpack.c.b16 %v6545, %v6537
          %v6618 = vpack.c.b16 %v6546, %v6538
          %v6619 = vpack.c.b16 %v6547, %v6539
          %v6620 = vpack.c.b16 %v6556, %v6548
          %v6621 = vpack.c.b16 %v6557, %v6549
          %v6622 = vpack.c.b16 %v6558, %v6550
          %v6623 = vpack.c.b16 %v6559, %v6551
          %v6624 = vpack.c.b16 %v6560, %v6552
          %v6625 = vpack.c.b16 %v6561, %v6553
          %v6626 = vpack.c.b16 %v6562, %v6554
          %v6627 = vpack.c.b16 %v6563, %v6555
          %6692 = vmatprep.subr.bf16.mxu0 %v6565
          %6693 = vmatpush1.bf16.msra.mxu0 %v6564
          %6694 = vmatprep.subr.bf16.mxu0 %v6573
          %6695 = vmatpush1.bf16.msra.mxu0 %v6572
          %6696 = vmatprep.subr.bf16.mxu0 %v6581
          %6697 = vmatpush1.bf16.msra.mxu0 %v6580
          %6698 = vmatprep.subr.bf16.mxu0 %v6589
          %6699 = vmatpush1.bf16.msra.mxu0 %v6588
          %6700 = vmatprep.subr.bf16.mxu0 %v6597
          %6701 = vmatpush1.bf16.msra.mxu0 %v6596
          %6702 = vmatprep.subr.bf16.mxu0 %v6605
          %6703 = vmatpush1.bf16.msra.mxu0 %v6604
          %6704 = vmatprep.subr.bf16.mxu0 %v6613
          %6705 = vmatpush1.bf16.msra.mxu0 %v6612
          %6706 = vmatprep.subr.bf16.mxu0 %v6621
          %6707 = vmatpush1.bf16.msra.mxu0 %v6620
          %6708 = vmatprep.subr.bf16.mxu0 0
          %6709 = vmatpush1.bf16.msra.mxu0 0
          %6710 = vmatprep.subr.bf16.mxu0 0
          %6711 = vmatpush1.bf16.msra.mxu0 0
          %6712 = vmatprep.subr.bf16.mxu0 0
          %6713 = vmatpush1.bf16.msra.mxu0 0
          %6714 = vmatprep.subr.bf16.mxu0 0
          %6715 = vmatpush1.bf16.msra.mxu0 0
          %6716 = vmatprep.subr.bf16.mxu0 0
          %6717 = vmatpush1.bf16.msra.mxu0 0
          %6718 = vmatprep.subr.bf16.mxu0 0
          %6719 = vmatpush1.bf16.msra.mxu0 0
          %6720 = vmatprep.subr.bf16.mxu0 0
          %6721 = vmatpush1.bf16.msra.mxu0 0
          %6722 = vmatprep.subr.bf16.mxu0 0
          %6723 = vmatpush1.bf16.msra.mxu0 0
          %6724 = vmatprep.mubr.bf16.mxu0 0
          %6725 = vmatmul.mubr.bf16.gmra.mrb[0].mxu0 %v6368
          %v6726 = vpop.f32.mrb[0].mxu0
          %v6727 = vadd.f32 %v6183, %v6726
          %v6728 = vpop.f32.mrb[0].mxu0
          %v6729 = vadd.f32 %v6185, %v6728
          %v6730 = vpop.f32.mrb[0].mxu0
          %v6731 = vadd.f32 %v6187, %v6730
          %v6732 = vpop.f32.mrb[0].mxu0
          %v6733 = vadd.f32 %v6189, %v6732
          %6734 = vmatprep.mubr.bf16.mxu0 0
          %6735 = vmatmul.mubr.bf16.gmra.mrb[0].mxu0 %v6369
          %v6736 = vpop.f32.mrb[0].mxu0
          %v6737 = vadd.f32 %v6193, %v6736
          %v6738 = vpop.f32.mrb[0].mxu0
          %v6739 = vadd.f32 %v6195, %v6738
          %v6740 = vpop.f32.mrb[0].mxu0
          %v6741 = vadd.f32 %v6197, %v6740
          %v6742 = vpop.f32.mrb[0].mxu0
          %v6743 = vadd.f32 %v6199, %v6742
          %6744 = vdwg.mxu0
          %6745 = vmatprep.subr.bf16.mxu0 %v6567
          %6746 = vmatpush1.bf16.msra.mxu0 %v6566
          %6747 = vmatprep.subr.bf16.mxu0 %v6575
          %6748 = vmatpush1.bf16.msra.mxu0 %v6574
          %6749 = vmatprep.subr.bf16.mxu0 %v6583
          %6750 = vmatpush1.bf16.msra.mxu0 %v6582
          %6751 = vmatprep.subr.bf16.mxu0 %v6591
          %6752 = vmatpush1.bf16.msra.mxu0 %v6590
          %6753 = vmatprep.subr.bf16.mxu0 %v6599
          %6754 = vmatpush1.bf16.msra.mxu0 %v6598
          %6755 = vmatprep.subr.bf16.mxu0 %v6607
          %6756 = vmatpush1.bf16.msra.mxu0 %v6606
          %6757 = vmatprep.subr.bf16.mxu0 %v6615
          %6758 = vmatpush1.bf16.msra.mxu0 %v6614
          %6759 = vmatprep.subr.bf16.mxu0 %v6623
          %6760 = vmatpush1.bf16.msra.mxu0 %v6622
          %6761 = vmatprep.subr.bf16.mxu0 0
          %6762 = vmatpush1.bf16.msra.mxu0 0
          %6763 = vmatprep.subr.bf16.mxu0 0
          %6764 = vmatpush1.bf16.msra.mxu0 0
          %6765 = vmatprep.subr.bf16.mxu0 0
          %6766 = vmatpush1.bf16.msra.mxu0 0
          %6767 = vmatprep.subr.bf16.mxu0 0
          %6768 = vmatpush1.bf16.msra.mxu0 0
          %6769 = vmatprep.subr.bf16.mxu0 0
          %6770 = vmatpush1.bf16.msra.mxu0 0
          %6771 = vmatprep.subr.bf16.mxu0 0
          %6772 = vmatpush1.bf16.msra.mxu0 0
          %6773 = vmatprep.subr.bf16.mxu0 0
          %6774 = vmatpush1.bf16.msra.mxu0 0
          %6775 = vmatprep.subr.bf16.mxu0 0
          %6776 = vmatpush1.bf16.msra.mxu0 0
          %6777 = vmatprep.mubr.bf16.mxu0 0
          %6778 = vmatmul.mubr.bf16.gmra.mrb[0].mxu0 %v6368
          %v6779 = vpop.f32.mrb[0].mxu0
          %v6780 = vadd.f32 %v6236, %v6779
          %v6781 = vpop.f32.mrb[0].mxu0
          %v6782 = vadd.f32 %v6238, %v6781
          %v6783 = vpop.f32.mrb[0].mxu0
          %v6784 = vadd.f32 %v6240, %v6783
          %v6785 = vpop.f32.mrb[0].mxu0
          %v6786 = vadd.f32 %v6242, %v6785
          %6787 = vmatprep.mubr.bf16.mxu0 0
          %6788 = vmatmul.mubr.bf16.gmra.mrb[0].mxu0 %v6369
          %v6789 = vpop.f32.mrb[0].mxu0
          %v6790 = vadd.f32 %v6246, %v6789
          %v6791 = vpop.f32.mrb[0].mxu0
          %v6792 = vadd.f32 %v6248, %v6791
          %v6793 = vpop.f32.mrb[0].mxu0
          %v6794 = vadd.f32 %v6250, %v6793
          %v6795 = vpop.f32.mrb[0].mxu0
          %v6796 = vadd.f32 %v6252, %v6795
          %6797 = vdwg.mxu0
          %6798 = vmatprep.subr.bf16.mxu0 %v6569
          %6799 = vmatpush1.bf16.msra.mxu0 %v6568
          %6800 = vmatprep.subr.bf16.mxu0 %v6577
          %6801 = vmatpush1.bf16.msra.mxu0 %v6576
          %6802 = vmatprep.subr.bf16.mxu0 %v6585
          %6803 = vmatpush1.bf16.msra.mxu0 %v6584
          %6804 = vmatprep.subr.bf16.mxu0 %v6593
          %6805 = vmatpush1.bf16.msra.mxu0 %v6592
          %6806 = vmatprep.subr.bf16.mxu0 %v6601
          %6807 = vmatpush1.bf16.msra.mxu0 %v6600
          %6808 = vmatprep.subr.bf16.mxu0 %v6609
          %6809 = vmatpush1.bf16.msra.mxu0 %v6608
          %6810 = vmatprep.subr.bf16.mxu0 %v6617
          %6811 = vmatpush1.bf16.msra.mxu0 %v6616
          %6812 = vmatprep.subr.bf16.mxu0 %v6625
          %6813 = vmatpush1.bf16.msra.mxu0 %v6624
          %6814 = vmatprep.subr.bf16.mxu0 0
          %6815 = vmatpush1.bf16.msra.mxu0 0
          %6816 = vmatprep.subr.bf16.mxu0 0
          %6817 = vmatpush1.bf16.msra.mxu0 0
          %6818 = vmatprep.subr.bf16.mxu0 0
          %6819 = vmatpush1.bf16.msra.mxu0 0
          %6820 = vmatprep.subr.bf16.mxu0 0
          %6821 = vmatpush1.bf16.msra.mxu0 0
          %6822 = vmatprep.subr.bf16.mxu0 0
          %6823 = vmatpush1.bf16.msra.mxu0 0
          %6824 = vmatprep.subr.bf16.mxu0 0
          %6825 = vmatpush1.bf16.msra.mxu0 0
          %6826 = vmatprep.subr.bf16.mxu0 0
          %6827 = vmatpush1.bf16.msra.mxu0 0
          %6828 = vmatprep.subr.bf16.mxu0 0
          %6829 = vmatpush1.bf16.msra.mxu0 0
          %6830 = vmatprep.mubr.bf16.mxu0 0
          %6831 = vmatmul.mubr.bf16.gmra.mrb[0].mxu0 %v6368
          %v6832 = vpop.f32.mrb[0].mxu0
          %v6833 = vadd.f32 %v6289, %v6832
          %v6834 = vpop.f32.mrb[0].mxu0
          %v6835 = vadd.f32 %v6291, %v6834
          %v6836 = vpop.f32.mrb[0].mxu0
          %v6837 = vadd.f32 %v6293, %v6836
          %v6838 = vpop.f32.mrb[0].mxu0
          %v6839 = vadd.f32 %v6295, %v6838
          %6840 = vmatprep.mubr.bf16.mxu0 0
          %6841 = vmatmul.mubr.bf16.gmra.mrb[0].mxu0 %v6369
          %v6842 = vpop.f32.mrb[0].mxu0
          %v6843 = vadd.f32 %v6299, %v6842
          %v6844 = vpop.f32.mrb[0].mxu0
          %v6845 = vadd.f32 %v6301, %v6844
          %v6846 = vpop.f32.mrb[0].mxu0
          %v6847 = vadd.f32 %v6303, %v6846
          %v6848 = vpop.f32.mrb[0].mxu0
          %v6849 = vadd.f32 %v6305, %v6848
          %6850 = vdwg.mxu0
          %6851 = vmatprep.subr.bf16.mxu0 %v6571
          %6852 = vmatpush1.bf16.msra.mxu0 %v6570
          %6853 = vmatprep.subr.bf16.mxu0 %v6579
          %6854 = vmatpush1.bf16.msra.mxu0 %v6578
          %6855 = vmatprep.subr.bf16.mxu0 %v6587
          %6856 = vmatpush1.bf16.msra.mxu0 %v6586
          %6857 = vmatprep.subr.bf16.mxu0 %v6595
          %6858 = vmatpush1.bf16.msra.mxu0 %v6594
          %6859 = vmatprep.subr.bf16.mxu0 %v6603
          %6860 = vmatpush1.bf16.msra.mxu0 %v6602
          %6861 = vmatprep.subr.bf16.mxu0 %v6611
          %6862 = vmatpush1.bf16.msra.mxu0 %v6610
          %6863 = vmatprep.subr.bf16.mxu0 %v6619
          %6864 = vmatpush1.bf16.msra.mxu0 %v6618
          %6865 = vmatprep.subr.bf16.mxu0 %v6627
          %6866 = vmatpush1.bf16.msra.mxu0 %v6626
          %6867 = vmatprep.subr.bf16.mxu0 0
          %6868 = vmatpush1.bf16.msra.mxu0 0
          %6869 = vmatprep.subr.bf16.mxu0 0
          %6870 = vmatpush1.bf16.msra.mxu0 0
          %6871 = vmatprep.subr.bf16.mxu0 0
          %6872 = vmatpush1.bf16.msra.mxu0 0
          %6873 = vmatprep.subr.bf16.mxu0 0
          %6874 = vmatpush1.bf16.msra.mxu0 0
          %6875 = vmatprep.subr.bf16.mxu0 0
          %6876 = vmatpush1.bf16.msra.mxu0 0
          %6877 = vmatprep.subr.bf16.mxu0 0
          %6878 = vmatpush1.bf16.msra.mxu0 0
          %6879 = vmatprep.subr.bf16.mxu0 0
          %6880 = vmatpush1.bf16.msra.mxu0 0
          %6881 = vmatprep.subr.bf16.mxu0 0
          %6882 = vmatpush1.bf16.msra.mxu0 0
          %6883 = vmatprep.mubr.bf16.mxu0 0
          %6884 = vmatmul.mubr.bf16.gmra.mrb[0].mxu0 %v6368
          %v6885 = vpop.f32.mrb[0].mxu0
          %v6886 = vadd.f32 %v6342, %v6885
          %v6887 = vpop.f32.mrb[0].mxu0
          %v6888 = vadd.f32 %v6344, %v6887
          %v6889 = vpop.f32.mrb[0].mxu0
          %v6890 = vadd.f32 %v6346, %v6889
          %v6891 = vpop.f32.mrb[0].mxu0
          %v6892 = vadd.f32 %v6348, %v6891
          %6893 = vmatprep.mubr.bf16.mxu0 0
          %6894 = vmatmul.mubr.bf16.gmra.mrb[0].mxu0 %v6369
          %v6895 = vpop.f32.mrb[0].mxu0
          %v6896 = vadd.f32 %v6352, %v6895
          %v6897 = vpop.f32.mrb[0].mxu0
          %v6898 = vadd.f32 %v6354, %v6897
          %v6899 = vpop.f32.mrb[0].mxu0
          %v6900 = vadd.f32 %v6356, %v6899
          %v6901 = vpop.f32.mrb[0].mxu0
          %v6902 = vadd.f32 %v6358, %v6901
          %6903 = vdwg.mxu0
          %s6904 = scalar_lea.vmem [#allocation2], 32
          %v6905 = vld [vmem:[%s6904] sm:$0xf]
          %v6906 = vld [vmem:[%s6904 + $0x4] sm:$0xf]
          %v6907 = vld [vmem:[%s6904 + $0x8] sm:$0xf]
          %v6908 = vld [vmem:[%s6904 + $0xc] sm:$0xf]
          %s6909 = scalar_lea.vmem %s224, 2048 [#allocation5]
          %v6910 = vld [vmem:[%s6909] sm:$0xff]
          %v6911 = vld [vmem:[%s6909 + $0x8] sm:$0xff]
          %v6912 = vld [vmem:[%s6909 + $0x10] sm:$0xff]
          %v6913 = vld [vmem:[%s6909 + $0x18] sm:$0xff]
          %v6914 = vld [vmem:[%s6909 + $0x20] sm:$0xff]
          %v6915 = vld [vmem:[%s6909 + $0x28] sm:$0xff]
          %v6916 = vld [vmem:[%s6909 + $0x30] sm:$0xff]
          %v6917 = vld [vmem:[%s6909 + $0x38] sm:$0xff]
          %v6918 = vld [vmem:[%s6909 + $0x40] sm:$0xff]
          %v6919 = vld [vmem:[%s6909 + $0x48] sm:$0xff]
          %v6920 = vld [vmem:[%s6909 + $0x50] sm:$0xff]
          %v6921 = vld [vmem:[%s6909 + $0x58] sm:$0xff]
          %v6922 = vld [vmem:[%s6909 + $0x60] sm:$0xff]
          %v6923 = vld [vmem:[%s6909 + $0x68] sm:$0xff]
          %v6924 = vld [vmem:[%s6909 + $0x70] sm:$0xff]
          %v6925 = vld [vmem:[%s6909 + $0x78] sm:$0xff]
          %v6926 = vld [vmem:[%s6909 + $0x80] sm:$0xff]
          %v6927 = vld [vmem:[%s6909 + $0x88] sm:$0xff]
          %v6928 = vld [vmem:[%s6909 + $0x90] sm:$0xff]
          %v6929 = vld [vmem:[%s6909 + $0x98] sm:$0xff]
          %v6930 = vld [vmem:[%s6909 + $0xa0] sm:$0xff]
          %v6931 = vld [vmem:[%s6909 + $0xa8] sm:$0xff]
          %v6932 = vld [vmem:[%s6909 + $0xb0] sm:$0xff]
          %v6933 = vld [vmem:[%s6909 + $0xb8] sm:$0xff]
          %v6934 = vld [vmem:[%s6909 + $0xc0] sm:$0xff]
          %v6935 = vld [vmem:[%s6909 + $0xc8] sm:$0xff]
          %v6936 = vld [vmem:[%s6909 + $0xd0] sm:$0xff]
          %v6937 = vld [vmem:[%s6909 + $0xd8] sm:$0xff]
          %v6938 = vld [vmem:[%s6909 + $0xe0] sm:$0xff]
          %v6939 = vld [vmem:[%s6909 + $0xe8] sm:$0xff]
          %v6940 = vld [vmem:[%s6909 + $0xf0] sm:$0xff]
          %v6941 = vld [vmem:[%s6909 + $0xf8] sm:$0xff]
          %v6942 = vld [vmem:[%s6909 + $0x100] sm:$0xff]
          %v6943 = vld [vmem:[%s6909 + $0x108] sm:$0xff]
          %v6944 = vld [vmem:[%s6909 + $0x110] sm:$0xff]
          %v6945 = vld [vmem:[%s6909 + $0x118] sm:$0xff]
          %v6946 = vld [vmem:[%s6909 + $0x120] sm:$0xff]
          %v6947 = vld [vmem:[%s6909 + $0x128] sm:$0xff]
          %v6948 = vld [vmem:[%s6909 + $0x130] sm:$0xff]
          %v6949 = vld [vmem:[%s6909 + $0x138] sm:$0xff]
          %v6950 = vld [vmem:[%s6909 + $0x140] sm:$0xff]
          %v6951 = vld [vmem:[%s6909 + $0x148] sm:$0xff]
          %v6952 = vld [vmem:[%s6909 + $0x150] sm:$0xff]
          %v6953 = vld [vmem:[%s6909 + $0x158] sm:$0xff]
          %v6954 = vld [vmem:[%s6909 + $0x160] sm:$0xff]
          %v6955 = vld [vmem:[%s6909 + $0x168] sm:$0xff]
          %v6956 = vld [vmem:[%s6909 + $0x170] sm:$0xff]
          %v6957 = vld [vmem:[%s6909 + $0x178] sm:$0xff]
          %v6958 = vld [vmem:[%s6909 + $0x180] sm:$0xff]
          %v6959 = vld [vmem:[%s6909 + $0x188] sm:$0xff]
          %v6960 = vld [vmem:[%s6909 + $0x190] sm:$0xff]
          %v6961 = vld [vmem:[%s6909 + $0x198] sm:$0xff]
          %v6962 = vld [vmem:[%s6909 + $0x1a0] sm:$0xff]
          %v6963 = vld [vmem:[%s6909 + $0x1a8] sm:$0xff]
          %v6964 = vld [vmem:[%s6909 + $0x1b0] sm:$0xff]
          %v6965 = vld [vmem:[%s6909 + $0x1b8] sm:$0xff]
          %v6966 = vld [vmem:[%s6909 + $0x1c0] sm:$0xff]
          %v6967 = vld [vmem:[%s6909 + $0x1c8] sm:$0xff]
          %v6968 = vld [vmem:[%s6909 + $0x1d0] sm:$0xff]
          %v6969 = vld [vmem:[%s6909 + $0x1d8] sm:$0xff]
          %v6970 = vld [vmem:[%s6909 + $0x1e0] sm:$0xff]
          %v6971 = vld [vmem:[%s6909 + $0x1e8] sm:$0xff]
          %v6972 = vld [vmem:[%s6909 + $0x1f0] sm:$0xff]
          %v6973 = vld [vmem:[%s6909 + $0x1f8] sm:$0xff]
          %v6978 = vunpack.c.l.b16 %v6905
          %v6979 = vunpack.c.l.b16 %v6906
          %v6980 = vunpack.c.l.b16 %v6907
          %v6981 = vunpack.c.l.b16 %v6908
          %v6982 = vpack.c.b16 %v6979, %v6978
          %v6983 = vpack.c.b16 %v6981, %v6980
          %v7050 = vunpack.c.l.b16 %v6910
          %v7051 = vunpack.c.h.b16 %v6910
          %v7052 = vunpack.c.l.b16 %v6911
          %v7053 = vunpack.c.h.b16 %v6911
          %v7054 = vunpack.c.l.b16 %v6912
          %v7055 = vunpack.c.h.b16 %v6912
          %v7056 = vunpack.c.l.b16 %v6913
          %v7057 = vunpack.c.h.b16 %v6913
          %v7058 = vunpack.c.l.b16 %v6914
          %v7059 = vunpack.c.h.b16 %v6914
          %v7060 = vunpack.c.l.b16 %v6915
          %v7061 = vunpack.c.h.b16 %v6915
          %v7062 = vunpack.c.l.b16 %v6916
          %v7063 = vunpack.c.h.b16 %v6916
          %v7064 = vunpack.c.l.b16 %v6917
          %v7065 = vunpack.c.h.b16 %v6917
          %v7066 = vunpack.c.l.b16 %v6918
          %v7067 = vunpack.c.h.b16 %v6918
          %v7068 = vunpack.c.l.b16 %v6919
          %v7069 = vunpack.c.h.b16 %v6919
          %v7070 = vunpack.c.l.b16 %v6920
          %v7071 = vunpack.c.h.b16 %v6920
          %v7072 = vunpack.c.l.b16 %v6921
          %v7073 = vunpack.c.h.b16 %v6921
          %v7074 = vunpack.c.l.b16 %v6922
          %v7075 = vunpack.c.h.b16 %v6922
          %v7076 = vunpack.c.l.b16 %v6923
          %v7077 = vunpack.c.h.b16 %v6923
          %v7078 = vunpack.c.l.b16 %v6924
          %v7079 = vunpack.c.h.b16 %v6924
          %v7080 = vunpack.c.l.b16 %v6925
          %v7081 = vunpack.c.h.b16 %v6925
          %v7082 = vunpack.c.l.b16 %v6926
          %v7083 = vunpack.c.h.b16 %v6926
          %v7084 = vunpack.c.l.b16 %v6927
          %v7085 = vunpack.c.h.b16 %v6927
          %v7086 = vunpack.c.l.b16 %v6928
          %v7087 = vunpack.c.h.b16 %v6928
          %v7088 = vunpack.c.l.b16 %v6929
          %v7089 = vunpack.c.h.b16 %v6929
          %v7090 = vunpack.c.l.b16 %v6930
          %v7091 = vunpack.c.h.b16 %v6930
          %v7092 = vunpack.c.l.b16 %v6931
          %v7093 = vunpack.c.h.b16 %v6931
          %v7094 = vunpack.c.l.b16 %v6932
          %v7095 = vunpack.c.h.b16 %v6932
          %v7096 = vunpack.c.l.b16 %v6933
          %v7097 = vunpack.c.h.b16 %v6933
          %v7098 = vunpack.c.l.b16 %v6934
          %v7099 = vunpack.c.h.b16 %v6934
          %v7100 = vunpack.c.l.b16 %v6935
          %v7101 = vunpack.c.h.b16 %v6935
          %v7102 = vunpack.c.l.b16 %v6936
          %v7103 = vunpack.c.h.b16 %v6936
          %v7104 = vunpack.c.l.b16 %v6937
          %v7105 = vunpack.c.h.b16 %v6937
          %v7106 = vunpack.c.l.b16 %v6938
          %v7107 = vunpack.c.h.b16 %v6938
          %v7108 = vunpack.c.l.b16 %v6939
          %v7109 = vunpack.c.h.b16 %v6939
          %v7110 = vunpack.c.l.b16 %v6940
          %v7111 = vunpack.c.h.b16 %v6940
          %v7112 = vunpack.c.l.b16 %v6941
          %v7113 = vunpack.c.h.b16 %v6941
          %v7114 = vunpack.c.l.b16 %v6942
          %v7115 = vunpack.c.h.b16 %v6942
          %v7116 = vunpack.c.l.b16 %v6943
          %v7117 = vunpack.c.h.b16 %v6943
          %v7118 = vunpack.c.l.b16 %v6944
          %v7119 = vunpack.c.h.b16 %v6944
          %v7120 = vunpack.c.l.b16 %v6945
          %v7121 = vunpack.c.h.b16 %v6945
          %v7122 = vunpack.c.l.b16 %v6946
          %v7123 = vunpack.c.h.b16 %v6946
          %v7124 = vunpack.c.l.b16 %v6947
          %v7125 = vunpack.c.h.b16 %v6947
          %v7126 = vunpack.c.l.b16 %v6948
          %v7127 = vunpack.c.h.b16 %v6948
          %v7128 = vunpack.c.l.b16 %v6949
          %v7129 = vunpack.c.h.b16 %v6949
          %v7130 = vunpack.c.l.b16 %v6950
          %v7131 = vunpack.c.h.b16 %v6950
          %v7132 = vunpack.c.l.b16 %v6951
          %v7133 = vunpack.c.h.b16 %v6951
          %v7134 = vunpack.c.l.b16 %v6952
          %v7135 = vunpack.c.h.b16 %v6952
          %v7136 = vunpack.c.l.b16 %v6953
          %v7137 = vunpack.c.h.b16 %v6953
          %v7138 = vunpack.c.l.b16 %v6954
          %v7139 = vunpack.c.h.b16 %v6954
          %v7140 = vunpack.c.l.b16 %v6955
          %v7141 = vunpack.c.h.b16 %v6955
          %v7142 = vunpack.c.l.b16 %v6956
          %v7143 = vunpack.c.h.b16 %v6956
          %v7144 = vunpack.c.l.b16 %v6957
          %v7145 = vunpack.c.h.b16 %v6957
          %v7146 = vunpack.c.l.b16 %v6958
          %v7147 = vunpack.c.h.b16 %v6958
          %v7148 = vunpack.c.l.b16 %v6959
          %v7149 = vunpack.c.h.b16 %v6959
          %v7150 = vunpack.c.l.b16 %v6960
          %v7151 = vunpack.c.h.b16 %v6960
          %v7152 = vunpack.c.l.b16 %v6961
          %v7153 = vunpack.c.h.b16 %v6961
          %v7154 = vunpack.c.l.b16 %v6962
          %v7155 = vunpack.c.h.b16 %v6962
          %v7156 = vunpack.c.l.b16 %v6963
          %v7157 = vunpack.c.h.b16 %v6963
          %v7158 = vunpack.c.l.b16 %v6964
          %v7159 = vunpack.c.h.b16 %v6964
          %v7160 = vunpack.c.l.b16 %v6965
          %v7161 = vunpack.c.h.b16 %v6965
          %v7162 = vunpack.c.l.b16 %v6966
          %v7163 = vunpack.c.h.b16 %v6966
          %v7164 = vunpack.c.l.b16 %v6967
          %v7165 = vunpack.c.h.b16 %v6967
          %v7166 = vunpack.c.l.b16 %v6968
          %v7167 = vunpack.c.h.b16 %v6968
          %v7168 = vunpack.c.l.b16 %v6969
          %v7169 = vunpack.c.h.b16 %v6969
          %v7170 = vunpack.c.l.b16 %v6970
          %v7171 = vunpack.c.h.b16 %v6970
          %v7172 = vunpack.c.l.b16 %v6971
          %v7173 = vunpack.c.h.b16 %v6971
          %v7174 = vunpack.c.l.b16 %v6972
          %v7175 = vunpack.c.h.b16 %v6972
          %v7176 = vunpack.c.l.b16 %v6973
          %v7177 = vunpack.c.h.b16 %v6973
          %v7178 = vpack.c.b16 %v7058, %v7050
          %v7179 = vpack.c.b16 %v7059, %v7051
          %v7180 = vpack.c.b16 %v7060, %v7052
          %v7181 = vpack.c.b16 %v7061, %v7053
          %v7182 = vpack.c.b16 %v7062, %v7054
          %v7183 = vpack.c.b16 %v7063, %v7055
          %v7184 = vpack.c.b16 %v7064, %v7056
          %v7185 = vpack.c.b16 %v7065, %v7057
          %v7186 = vpack.c.b16 %v7074, %v7066
          %v7187 = vpack.c.b16 %v7075, %v7067
          %v7188 = vpack.c.b16 %v7076, %v7068
          %v7189 = vpack.c.b16 %v7077, %v7069
          %v7190 = vpack.c.b16 %v7078, %v7070
          %v7191 = vpack.c.b16 %v7079, %v7071
          %v7192 = vpack.c.b16 %v7080, %v7072
          %v7193 = vpack.c.b16 %v7081, %v7073
          %v7194 = vpack.c.b16 %v7090, %v7082
          %v7195 = vpack.c.b16 %v7091, %v7083
          %v7196 = vpack.c.b16 %v7092, %v7084
          %v7197 = vpack.c.b16 %v7093, %v7085
          %v7198 = vpack.c.b16 %v7094, %v7086
          %v7199 = vpack.c.b16 %v7095, %v7087
          %v7200 = vpack.c.b16 %v7096, %v7088
          %v7201 = vpack.c.b16 %v7097, %v7089
          %v7202 = vpack.c.b16 %v7106, %v7098
          %v7203 = vpack.c.b16 %v7107, %v7099
          %v7204 = vpack.c.b16 %v7108, %v7100
          %v7205 = vpack.c.b16 %v7109, %v7101
          %v7206 = vpack.c.b16 %v7110, %v7102
          %v7207 = vpack.c.b16 %v7111, %v7103
          %v7208 = vpack.c.b16 %v7112, %v7104
          %v7209 = vpack.c.b16 %v7113, %v7105
          %v7210 = vpack.c.b16 %v7122, %v7114
          %v7211 = vpack.c.b16 %v7123, %v7115
          %v7212 = vpack.c.b16 %v7124, %v7116
          %v7213 = vpack.c.b16 %v7125, %v7117
          %v7214 = vpack.c.b16 %v7126, %v7118
          %v7215 = vpack.c.b16 %v7127, %v7119
          %v7216 = vpack.c.b16 %v7128, %v7120
          %v7217 = vpack.c.b16 %v7129, %v7121
          %v7218 = vpack.c.b16 %v7138, %v7130
          %v7219 = vpack.c.b16 %v7139, %v7131
          %v7220 = vpack.c.b16 %v7140, %v7132
          %v7221 = vpack.c.b16 %v7141, %v7133
          %v7222 = vpack.c.b16 %v7142, %v7134
          %v7223 = vpack.c.b16 %v7143, %v7135
          %v7224 = vpack.c.b16 %v7144, %v7136
          %v7225 = vpack.c.b16 %v7145, %v7137
          %v7226 = vpack.c.b16 %v7154, %v7146
          %v7227 = vpack.c.b16 %v7155, %v7147
          %v7228 = vpack.c.b16 %v7156, %v7148
          %v7229 = vpack.c.b16 %v7157, %v7149
          %v7230 = vpack.c.b16 %v7158, %v7150
          %v7231 = vpack.c.b16 %v7159, %v7151
          %v7232 = vpack.c.b16 %v7160, %v7152
          %v7233 = vpack.c.b16 %v7161, %v7153
          %v7234 = vpack.c.b16 %v7170, %v7162
          %v7235 = vpack.c.b16 %v7171, %v7163
          %v7236 = vpack.c.b16 %v7172, %v7164
          %v7237 = vpack.c.b16 %v7173, %v7165
          %v7238 = vpack.c.b16 %v7174, %v7166
          %v7239 = vpack.c.b16 %v7175, %v7167
          %v7240 = vpack.c.b16 %v7176, %v7168
          %v7241 = vpack.c.b16 %v7177, %v7169
          %7306 = vmatprep.subr.bf16.mxu0 %v7179
          %7307 = vmatpush1.bf16.msra.mxu0 %v7178
          %7308 = vmatprep.subr.bf16.mxu0 %v7187
          %7309 = vmatpush1.bf16.msra.mxu0 %v7186
          %7310 = vmatprep.subr.bf16.mxu0 %v7195
          %7311 = vmatpush1.bf16.msra.mxu0 %v7194
          %7312 = vmatprep.subr.bf16.mxu0 %v7203
          %7313 = vmatpush1.bf16.msra.mxu0 %v7202
          %7314 = vmatprep.subr.bf16.mxu0 %v7211
          %7315 = vmatpush1.bf16.msra.mxu0 %v7210
          %7316 = vmatprep.subr.bf16.mxu0 %v7219
          %7317 = vmatpush1.bf16.msra.mxu0 %v7218
          %7318 = vmatprep.subr.bf16.mxu0 %v7227
          %7319 = vmatpush1.bf16.msra.mxu0 %v7226
          %7320 = vmatprep.subr.bf16.mxu0 %v7235
          %7321 = vmatpush1.bf16.msra.mxu0 %v7234
          %7322 = vmatprep.subr.bf16.mxu0 0
          %7323 = vmatpush1.bf16.msra.mxu0 0
          %7324 = vmatprep.subr.bf16.mxu0 0
          %7325 = vmatpush1.bf16.msra.mxu0 0
          %7326 = vmatprep.subr.bf16.mxu0 0
          %7327 = vmatpush1.bf16.msra.mxu0 0
          %7328 = vmatprep.subr.bf16.mxu0 0
          %7329 = vmatpush1.bf16.msra.mxu0 0
          %7330 = vmatprep.subr.bf16.mxu0 0
          %7331 = vmatpush1.bf16.msra.mxu0 0
          %7332 = vmatprep.subr.bf16.mxu0 0
          %7333 = vmatpush1.bf16.msra.mxu0 0
          %7334 = vmatprep.subr.bf16.mxu0 0
          %7335 = vmatpush1.bf16.msra.mxu0 0
          %7336 = vmatprep.subr.bf16.mxu0 0
          %7337 = vmatpush1.bf16.msra.mxu0 0
          %7338 = vmatprep.mubr.bf16.mxu0 0
          %7339 = vmatmul.mubr.bf16.gmra.mrb[0].mxu0 %v6982
          %v7340 = vpop.f32.mrb[0].mxu0
          %v7341 = vadd.f32 0.0, %v7340
          %v7342 = vpop.f32.mrb[0].mxu0
          %v7343 = vadd.f32 0.0, %v7342
          %v7344 = vpop.f32.mrb[0].mxu0
          %v7345 = vadd.f32 0.0, %v7344
          %v7346 = vpop.f32.mrb[0].mxu0
          %v7347 = vadd.f32 0.0, %v7346
          %7348 = vmatprep.mubr.bf16.mxu0 0
          %7349 = vmatmul.mubr.bf16.gmra.mrb[0].mxu0 %v6983
          %v7350 = vpop.f32.mrb[0].mxu0
          %v7351 = vadd.f32 0.0, %v7350
          %v7352 = vpop.f32.mrb[0].mxu0
          %v7353 = vadd.f32 0.0, %v7352
          %v7354 = vpop.f32.mrb[0].mxu0
          %v7355 = vadd.f32 0.0, %v7354
          %v7356 = vpop.f32.mrb[0].mxu0
          %v7357 = vadd.f32 0.0, %v7356
          %7358 = vdwg.mxu0
          %7359 = vmatprep.subr.bf16.mxu0 %v7181
          %7360 = vmatpush1.bf16.msra.mxu0 %v7180
          %7361 = vmatprep.subr.bf16.mxu0 %v7189
          %7362 = vmatpush1.bf16.msra.mxu0 %v7188
          %7363 = vmatprep.subr.bf16.mxu0 %v7197
          %7364 = vmatpush1.bf16.msra.mxu0 %v7196
          %7365 = vmatprep.subr.bf16.mxu0 %v7205
          %7366 = vmatpush1.bf16.msra.mxu0 %v7204
          %7367 = vmatprep.subr.bf16.mxu0 %v7213
          %7368 = vmatpush1.bf16.msra.mxu0 %v7212
          %7369 = vmatprep.subr.bf16.mxu0 %v7221
          %7370 = vmatpush1.bf16.msra.mxu0 %v7220
          %7371 = vmatprep.subr.bf16.mxu0 %v7229
          %7372 = vmatpush1.bf16.msra.mxu0 %v7228
          %7373 = vmatprep.subr.bf16.mxu0 %v7237
          %7374 = vmatpush1.bf16.msra.mxu0 %v7236
          %7375 = vmatprep.subr.bf16.mxu0 0
          %7376 = vmatpush1.bf16.msra.mxu0 0
          %7377 = vmatprep.subr.bf16.mxu0 0
          %7378 = vmatpush1.bf16.msra.mxu0 0
          %7379 = vmatprep.subr.bf16.mxu0 0
          %7380 = vmatpush1.bf16.msra.mxu0 0
          %7381 = vmatprep.subr.bf16.mxu0 0
          %7382 = vmatpush1.bf16.msra.mxu0 0
          %7383 = vmatprep.subr.bf16.mxu0 0
          %7384 = vmatpush1.bf16.msra.mxu0 0
          %7385 = vmatprep.subr.bf16.mxu0 0
          %7386 = vmatpush1.bf16.msra.mxu0 0
          %7387 = vmatprep.subr.bf16.mxu0 0
          %7388 = vmatpush1.bf16.msra.mxu0 0
          %7389 = vmatprep.subr.bf16.mxu0 0
          %7390 = vmatpush1.bf16.msra.mxu0 0
          %7391 = vmatprep.mubr.bf16.mxu0 0
          %7392 = vmatmul.mubr.bf16.gmra.mrb[0].mxu0 %v6982
          %v7393 = vpop.f32.mrb[0].mxu0
          %v7394 = vadd.f32 0.0, %v7393
          %v7395 = vpop.f32.mrb[0].mxu0
          %v7396 = vadd.f32 0.0, %v7395
          %v7397 = vpop.f32.mrb[0].mxu0
          %v7398 = vadd.f32 0.0, %v7397
          %v7399 = vpop.f32.mrb[0].mxu0
          %v7400 = vadd.f32 0.0, %v7399
          %7401 = vmatprep.mubr.bf16.mxu0 0
          %7402 = vmatmul.mubr.bf16.gmra.mrb[0].mxu0 %v6983
          %v7403 = vpop.f32.mrb[0].mxu0
          %v7404 = vadd.f32 0.0, %v7403
          %v7405 = vpop.f32.mrb[0].mxu0
          %v7406 = vadd.f32 0.0, %v7405
          %v7407 = vpop.f32.mrb[0].mxu0
          %v7408 = vadd.f32 0.0, %v7407
          %v7409 = vpop.f32.mrb[0].mxu0
          %v7410 = vadd.f32 0.0, %v7409
          %7411 = vdwg.mxu0
          %7412 = vmatprep.subr.bf16.mxu0 %v7183
          %7413 = vmatpush1.bf16.msra.mxu0 %v7182
          %7414 = vmatprep.subr.bf16.mxu0 %v7191
          %7415 = vmatpush1.bf16.msra.mxu0 %v7190
          %7416 = vmatprep.subr.bf16.mxu0 %v7199
          %7417 = vmatpush1.bf16.msra.mxu0 %v7198
          %7418 = vmatprep.subr.bf16.mxu0 %v7207
          %7419 = vmatpush1.bf16.msra.mxu0 %v7206
          %7420 = vmatprep.subr.bf16.mxu0 %v7215
          %7421 = vmatpush1.bf16.msra.mxu0 %v7214
          %7422 = vmatprep.subr.bf16.mxu0 %v7223
          %7423 = vmatpush1.bf16.msra.mxu0 %v7222
          %7424 = vmatprep.subr.bf16.mxu0 %v7231
          %7425 = vmatpush1.bf16.msra.mxu0 %v7230
          %7426 = vmatprep.subr.bf16.mxu0 %v7239
          %7427 = vmatpush1.bf16.msra.mxu0 %v7238
          %7428 = vmatprep.subr.bf16.mxu0 0
          %7429 = vmatpush1.bf16.msra.mxu0 0
          %7430 = vmatprep.subr.bf16.mxu0 0
          %7431 = vmatpush1.bf16.msra.mxu0 0
          %7432 = vmatprep.subr.bf16.mxu0 0
          %7433 = vmatpush1.bf16.msra.mxu0 0
          %7434 = vmatprep.subr.bf16.mxu0 0
          %7435 = vmatpush1.bf16.msra.mxu0 0
          %7436 = vmatprep.subr.bf16.mxu0 0
          %7437 = vmatpush1.bf16.msra.mxu0 0
          %7438 = vmatprep.subr.bf16.mxu0 0
          %7439 = vmatpush1.bf16.msra.mxu0 0
          %7440 = vmatprep.subr.bf16.mxu0 0
          %7441 = vmatpush1.bf16.msra.mxu0 0
          %7442 = vmatprep.subr.bf16.mxu0 0
          %7443 = vmatpush1.bf16.msra.mxu0 0
          %7444 = vmatprep.mubr.bf16.mxu0 0
          %7445 = vmatmul.mubr.bf16.gmra.mrb[0].mxu0 %v6982
          %v7446 = vpop.f32.mrb[0].mxu0
          %v7447 = vadd.f32 0.0, %v7446
          %v7448 = vpop.f32.mrb[0].mxu0
          %v7449 = vadd.f32 0.0, %v7448
          %v7450 = vpop.f32.mrb[0].mxu0
          %v7451 = vadd.f32 0.0, %v7450
          %v7452 = vpop.f32.mrb[0].mxu0
          %v7453 = vadd.f32 0.0, %v7452
          %7454 = vmatprep.mubr.bf16.mxu0 0
          %7455 = vmatmul.mubr.bf16.gmra.mrb[0].mxu0 %v6983
          %v7456 = vpop.f32.mrb[0].mxu0
          %v7457 = vadd.f32 0.0, %v7456
          %v7458 = vpop.f32.mrb[0].mxu0
          %v7459 = vadd.f32 0.0, %v7458
          %v7460 = vpop.f32.mrb[0].mxu0
          %v7461 = vadd.f32 0.0, %v7460
          %v7462 = vpop.f32.mrb[0].mxu0
          %v7463 = vadd.f32 0.0, %v7462
          %7464 = vdwg.mxu0
          %7465 = vmatprep.subr.bf16.mxu0 %v7185
          %7466 = vmatpush1.bf16.msra.mxu0 %v7184
          %7467 = vmatprep.subr.bf16.mxu0 %v7193
          %7468 = vmatpush1.bf16.msra.mxu0 %v7192
          %7469 = vmatprep.subr.bf16.mxu0 %v7201
          %7470 = vmatpush1.bf16.msra.mxu0 %v7200
          %7471 = vmatprep.subr.bf16.mxu0 %v7209
          %7472 = vmatpush1.bf16.msra.mxu0 %v7208
          %7473 = vmatprep.subr.bf16.mxu0 %v7217
          %7474 = vmatpush1.bf16.msra.mxu0 %v7216
          %7475 = vmatprep.subr.bf16.mxu0 %v7225
          %7476 = vmatpush1.bf16.msra.mxu0 %v7224
          %7477 = vmatprep.subr.bf16.mxu0 %v7233
          %7478 = vmatpush1.bf16.msra.mxu0 %v7232
          %7479 = vmatprep.subr.bf16.mxu0 %v7241
          %7480 = vmatpush1.bf16.msra.mxu0 %v7240
          %7481 = vmatprep.subr.bf16.mxu0 0
          %7482 = vmatpush1.bf16.msra.mxu0 0
          %7483 = vmatprep.subr.bf16.mxu0 0
          %7484 = vmatpush1.bf16.msra.mxu0 0
          %7485 = vmatprep.subr.bf16.mxu0 0
          %7486 = vmatpush1.bf16.msra.mxu0 0
          %7487 = vmatprep.subr.bf16.mxu0 0
          %7488 = vmatpush1.bf16.msra.mxu0 0
          %7489 = vmatprep.subr.bf16.mxu0 0
          %7490 = vmatpush1.bf16.msra.mxu0 0
          %7491 = vmatprep.subr.bf16.mxu0 0
          %7492 = vmatpush1.bf16.msra.mxu0 0
          %7493 = vmatprep.subr.bf16.mxu0 0
          %7494 = vmatpush1.bf16.msra.mxu0 0
          %7495 = vmatprep.subr.bf16.mxu0 0
          %7496 = vmatpush1.bf16.msra.mxu0 0
          %7497 = vmatprep.mubr.bf16.mxu0 0
          %7498 = vmatmul.mubr.bf16.gmra.mrb[0].mxu0 %v6982
          %v7499 = vpop.f32.mrb[0].mxu0
          %v7500 = vadd.f32 0.0, %v7499
          %v7501 = vpop.f32.mrb[0].mxu0
          %v7502 = vadd.f32 0.0, %v7501
          %v7503 = vpop.f32.mrb[0].mxu0
          %v7504 = vadd.f32 0.0, %v7503
          %v7505 = vpop.f32.mrb[0].mxu0
          %v7506 = vadd.f32 0.0, %v7505
          %7507 = vmatprep.mubr.bf16.mxu0 0
          %7508 = vmatmul.mubr.bf16.gmra.mrb[0].mxu0 %v6983
          %v7509 = vpop.f32.mrb[0].mxu0
          %v7510 = vadd.f32 0.0, %v7509
          %v7511 = vpop.f32.mrb[0].mxu0
          %v7512 = vadd.f32 0.0, %v7511
          %v7513 = vpop.f32.mrb[0].mxu0
          %v7514 = vadd.f32 0.0, %v7513
          %v7515 = vpop.f32.mrb[0].mxu0
          %v7516 = vadd.f32 0.0, %v7515
          %7517 = vdwg.mxu0
          %v7518 = vadd.f32 %v6727, %v7341
          %v7519 = vadd.f32 %v6729, %v7343
          %v7520 = vadd.f32 %v6780, %v7394
          %v7521 = vadd.f32 %v6782, %v7396
          %v7522 = vadd.f32 %v6833, %v7447
          %v7523 = vadd.f32 %v6835, %v7449
          %v7524 = vadd.f32 %v6886, %v7500
          %v7525 = vadd.f32 %v6888, %v7502
          %v7526 = vadd.f32 %v6731, %v7345
          %v7527 = vadd.f32 %v6733, %v7347
          %v7528 = vadd.f32 %v6784, %v7398
          %v7529 = vadd.f32 %v6786, %v7400
          %v7530 = vadd.f32 %v6837, %v7451
          %v7531 = vadd.f32 %v6839, %v7453
          %v7532 = vadd.f32 %v6890, %v7504
          %v7533 = vadd.f32 %v6892, %v7506
          %v7534 = vadd.f32 %v6737, %v7351
          %v7535 = vadd.f32 %v6739, %v7353
          %v7536 = vadd.f32 %v6790, %v7404
          %v7537 = vadd.f32 %v6792, %v7406
          %v7538 = vadd.f32 %v6843, %v7457
          %v7539 = vadd.f32 %v6845, %v7459
          %v7540 = vadd.f32 %v6896, %v7510
          %v7541 = vadd.f32 %v6898, %v7512
          %v7542 = vadd.f32 %v6741, %v7355
          %v7543 = vadd.f32 %v6743, %v7357
          %v7544 = vadd.f32 %v6794, %v7408
          %v7545 = vadd.f32 %v6796, %v7410
          %v7546 = vadd.f32 %v6847, %v7461
          %v7547 = vadd.f32 %v6849, %v7463
          %v7548 = vadd.f32 %v6900, %v7514
          %v7549 = vadd.f32 %v6902, %v7516
          %v7551 = vlaneseq
          %v7552 = vshrl.u32 %v7551, 7
          %v7553 = vsub.s32 0, %v7552
          %v7554 = vrot.slane %v5677, %v7553
          %v7555 = vlaneseq
          %v7556 = vshrl.u32 %v7555, 7
          %v7557 = vsub.s32 1, %v7556
          %v7558 = vrot.slane %v5677, %v7557
          %v7559 = vlaneseq
          %v7560 = vshrl.u32 %v7559, 7
          %v7561 = vsub.s32 2, %v7560
          %v7562 = vrot.slane %v5677, %v7561
          %v7563 = vlaneseq
          %v7564 = vshrl.u32 %v7563, 7
          %v7565 = vsub.s32 3, %v7564
          %v7566 = vrot.slane %v5677, %v7565
          %v7567 = vlaneseq
          %v7568 = vshrl.u32 %v7567, 7
          %v7569 = vsub.s32 4, %v7568
          %v7570 = vrot.slane %v5677, %v7569
          %v7571 = vlaneseq
          %v7572 = vshrl.u32 %v7571, 7
          %v7573 = vsub.s32 5, %v7572
          %v7574 = vrot.slane %v5677, %v7573
          %v7575 = vlaneseq
          %v7576 = vshrl.u32 %v7575, 7
          %v7577 = vsub.s32 6, %v7576
          %v7578 = vrot.slane %v5677, %v7577
          %v7579 = vlaneseq
          %v7580 = vshrl.u32 %v7579, 7
          %v7581 = vsub.s32 7, %v7580
          %v7582 = vrot.slane %v5677, %v7581
          %v7591 = vadd.f32 %v7518, %v7554
          %v7592 = vadd.f32 %v7519, %v7558
          %v7593 = vadd.f32 %v7520, %v7562
          %v7594 = vadd.f32 %v7521, %v7566
          %v7595 = vadd.f32 %v7522, %v7570
          %v7596 = vadd.f32 %v7523, %v7574
          %v7597 = vadd.f32 %v7524, %v7578
          %v7598 = vadd.f32 %v7525, %v7582
          %v7599 = vadd.f32 %v7526, %v7554
          %v7600 = vadd.f32 %v7527, %v7558
          %v7601 = vadd.f32 %v7528, %v7562
          %v7602 = vadd.f32 %v7529, %v7566
          %v7603 = vadd.f32 %v7530, %v7570
          %v7604 = vadd.f32 %v7531, %v7574
          %v7605 = vadd.f32 %v7532, %v7578
          %v7606 = vadd.f32 %v7533, %v7582
          %v7607 = vadd.f32 %v7534, %v7554
          %v7608 = vadd.f32 %v7535, %v7558
          %v7609 = vadd.f32 %v7536, %v7562
          %v7610 = vadd.f32 %v7537, %v7566
          %v7611 = vadd.f32 %v7538, %v7570
          %v7612 = vadd.f32 %v7539, %v7574
          %v7613 = vadd.f32 %v7540, %v7578
          %v7614 = vadd.f32 %v7541, %v7582
          %v7615 = vadd.f32 %v7542, %v7554
          %v7616 = vadd.f32 %v7543, %v7558
          %v7617 = vadd.f32 %v7544, %v7562
          %v7618 = vadd.f32 %v7545, %v7566
          %v7619 = vadd.f32 %v7546, %v7570
          %v7620 = vadd.f32 %v7547, %v7574
          %v7621 = vadd.f32 %v7548, %v7578
          %v7622 = vadd.f32 %v7549, %v7582
          %v7623 = vmax.f32 %v7591, 0.0
          %v7624 = vmax.f32 %v7592, 0.0
          %v7625 = vmax.f32 %v7593, 0.0
          %v7626 = vmax.f32 %v7594, 0.0
          %v7627 = vmax.f32 %v7595, 0.0
          %v7628 = vmax.f32 %v7596, 0.0
          %v7629 = vmax.f32 %v7597, 0.0
          %v7630 = vmax.f32 %v7598, 0.0
          %v7631 = vmax.f32 %v7599, 0.0
          %v7632 = vmax.f32 %v7600, 0.0
          %v7633 = vmax.f32 %v7601, 0.0
          %v7634 = vmax.f32 %v7602, 0.0
          %v7635 = vmax.f32 %v7603, 0.0
          %v7636 = vmax.f32 %v7604, 0.0
          %v7637 = vmax.f32 %v7605, 0.0
          %v7638 = vmax.f32 %v7606, 0.0
          %v7639 = vmax.f32 %v7607, 0.0
          %v7640 = vmax.f32 %v7608, 0.0
          %v7641 = vmax.f32 %v7609, 0.0
          %v7642 = vmax.f32 %v7610, 0.0
          %v7643 = vmax.f32 %v7611, 0.0
          %v7644 = vmax.f32 %v7612, 0.0
          %v7645 = vmax.f32 %v7613, 0.0
          %v7646 = vmax.f32 %v7614, 0.0
          %v7647 = vmax.f32 %v7615, 0.0
          %v7648 = vmax.f32 %v7616, 0.0
          %v7649 = vmax.f32 %v7617, 0.0
          %v7650 = vmax.f32 %v7618, 0.0
          %v7651 = vmax.f32 %v7619, 0.0
          %v7652 = vmax.f32 %v7620, 0.0
          %v7653 = vmax.f32 %v7621, 0.0
          %v7654 = vmax.f32 %v7622, 0.0
          %vm7655 = vcmp.lt.s32.totalorder %v5421, 14
          %vm7656 = vcmp.lt.s32.totalorder %v5422, 14
          %v7657 = vsel %vm7655, %v7623, 0.0
          %v7658 = vsel %vm7655, %v7624, 0.0
          %v7659 = vsel %vm7655, %v7625, 0.0
          %v7660 = vsel %vm7655, %v7626, 0.0
          %v7661 = vsel %vm7655, %v7627, 0.0
          %v7662 = vsel %vm7655, %v7628, 0.0
          %v7663 = vsel %vm7655, %v7629, 0.0
          %v7664 = vsel %vm7655, %v7630, 0.0
          %v7665 = vsel %vm7656, %v7631, 0.0
          %v7666 = vsel %vm7656, %v7632, 0.0
          %v7667 = vsel %vm7656, %v7633, 0.0
          %v7668 = vsel %vm7656, %v7634, 0.0
          %v7669 = vsel %vm7656, %v7635, 0.0
          %v7670 = vsel %vm7656, %v7636, 0.0
          %v7671 = vsel %vm7656, %v7637, 0.0
          %v7672 = vsel %vm7656, %v7638, 0.0
          %v7673 = vsel %vm7655, %v7639, 0.0
          %v7674 = vsel %vm7655, %v7640, 0.0
          %v7675 = vsel %vm7655, %v7641, 0.0
          %v7676 = vsel %vm7655, %v7642, 0.0
          %v7677 = vsel %vm7655, %v7643, 0.0
          %v7678 = vsel %vm7655, %v7644, 0.0
          %v7679 = vsel %vm7655, %v7645, 0.0
          %v7680 = vsel %vm7655, %v7646, 0.0
          %v7681 = vsel %vm7656, %v7647, 0.0
          %v7682 = vsel %vm7656, %v7648, 0.0
          %v7683 = vsel %vm7656, %v7649, 0.0
          %v7684 = vsel %vm7656, %v7650, 0.0
          %v7685 = vsel %vm7656, %v7651, 0.0
          %v7686 = vsel %vm7656, %v7652, 0.0
          %v7687 = vsel %vm7656, %v7653, 0.0
          %v7688 = vsel %vm7656, %v7654, 0.0
          %v7689 = vmax.f32 %v7657, %v7665
          %v7690 = vrot.slane %v7689, 4
          %v7691 = vmax.f32 %v7689, %v7690
          %v7692 = vrot.slane %v7691, 2
          %v7693 = vmax.f32 %v7691, %v7692
          %v7694 = vrot.slane %v7693, 1
          %v7695 = vmax.f32 %v7693, %v7694
          %v7696 = vmax.f32 %v7658, %v7666
          %v7697 = vrot.slane %v7696, 4
          %v7698 = vmax.f32 %v7696, %v7697
          %v7699 = vrot.slane %v7698, 2
          %v7700 = vmax.f32 %v7698, %v7699
          %v7701 = vrot.slane %v7700, 1
          %v7702 = vmax.f32 %v7700, %v7701
          %v7703 = vmax.f32 %v7659, %v7667
          %v7704 = vrot.slane %v7703, 4
          %v7705 = vmax.f32 %v7703, %v7704
          %v7706 = vrot.slane %v7705, 2
          %v7707 = vmax.f32 %v7705, %v7706
          %v7708 = vrot.slane %v7707, 1
          %v7709 = vmax.f32 %v7707, %v7708
          %v7710 = vmax.f32 %v7660, %v7668
          %v7711 = vrot.slane %v7710, 4
          %v7712 = vmax.f32 %v7710, %v7711
          %v7713 = vrot.slane %v7712, 2
          %v7714 = vmax.f32 %v7712, %v7713
          %v7715 = vrot.slane %v7714, 1
          %v7716 = vmax.f32 %v7714, %v7715
          %v7717 = vmax.f32 %v7661, %v7669
          %v7718 = vrot.slane %v7717, 4
          %v7719 = vmax.f32 %v7717, %v7718
          %v7720 = vrot.slane %v7719, 2
          %v7721 = vmax.f32 %v7719, %v7720
          %v7722 = vrot.slane %v7721, 1
          %v7723 = vmax.f32 %v7721, %v7722
          %v7724 = vmax.f32 %v7662, %v7670
          %v7725 = vrot.slane %v7724, 4
          %v7726 = vmax.f32 %v7724, %v7725
          %v7727 = vrot.slane %v7726, 2
          %v7728 = vmax.f32 %v7726, %v7727
          %v7729 = vrot.slane %v7728, 1
          %v7730 = vmax.f32 %v7728, %v7729
          %v7731 = vmax.f32 %v7663, %v7671
          %v7732 = vrot.slane %v7731, 4
          %v7733 = vmax.f32 %v7731, %v7732
          %v7734 = vrot.slane %v7733, 2
          %v7735 = vmax.f32 %v7733, %v7734
          %v7736 = vrot.slane %v7735, 1
          %v7737 = vmax.f32 %v7735, %v7736
          %v7738 = vmax.f32 %v7664, %v7672
          %v7739 = vrot.slane %v7738, 4
          %v7740 = vmax.f32 %v7738, %v7739
          %v7741 = vrot.slane %v7740, 2
          %v7742 = vmax.f32 %v7740, %v7741
          %v7743 = vrot.slane %v7742, 1
          %v7744 = vmax.f32 %v7742, %v7743
          %v7745 = vmax.f32 %v7673, %v7681
          %v7746 = vrot.slane %v7745, 4
          %v7747 = vmax.f32 %v7745, %v7746
          %v7748 = vrot.slane %v7747, 2
          %v7749 = vmax.f32 %v7747, %v7748
          %v7750 = vrot.slane %v7749, 1
          %v7751 = vmax.f32 %v7749, %v7750
          %v7752 = vmax.f32 %v7674, %v7682
          %v7753 = vrot.slane %v7752, 4
          %v7754 = vmax.f32 %v7752, %v7753
          %v7755 = vrot.slane %v7754, 2
          %v7756 = vmax.f32 %v7754, %v7755
          %v7757 = vrot.slane %v7756, 1
          %v7758 = vmax.f32 %v7756, %v7757
          %v7759 = vmax.f32 %v7675, %v7683
          %v7760 = vrot.slane %v7759, 4
          %v7761 = vmax.f32 %v7759, %v7760
          %v7762 = vrot.slane %v7761, 2
          %v7763 = vmax.f32 %v7761, %v7762
          %v7764 = vrot.slane %v7763, 1
          %v7765 = vmax.f32 %v7763, %v7764
          %v7766 = vmax.f32 %v7676, %v7684
          %v7767 = vrot.slane %v7766, 4
          %v7768 = vmax.f32 %v7766, %v7767
          %v7769 = vrot.slane %v7768, 2
          %v7770 = vmax.f32 %v7768, %v7769
          %v7771 = vrot.slane %v7770, 1
          %v7772 = vmax.f32 %v7770, %v7771
          %v7773 = vmax.f32 %v7677, %v7685
          %v7774 = vrot.slane %v7773, 4
          %v7775 = vmax.f32 %v7773, %v7774
          %v7776 = vrot.slane %v7775, 2
          %v7777 = vmax.f32 %v7775, %v7776
          %v7778 = vrot.slane %v7777, 1
          %v7779 = vmax.f32 %v7777, %v7778
          %v7780 = vmax.f32 %v7678, %v7686
          %v7781 = vrot.slane %v7780, 4
          %v7782 = vmax.f32 %v7780, %v7781
          %v7783 = vrot.slane %v7782, 2
          %v7784 = vmax.f32 %v7782, %v7783
          %v7785 = vrot.slane %v7784, 1
          %v7786 = vmax.f32 %v7784, %v7785
          %v7787 = vmax.f32 %v7679, %v7687
          %v7788 = vrot.slane %v7787, 4
          %v7789 = vmax.f32 %v7787, %v7788
          %v7790 = vrot.slane %v7789, 2
          %v7791 = vmax.f32 %v7789, %v7790
          %v7792 = vrot.slane %v7791, 1
          %v7793 = vmax.f32 %v7791, %v7792
          %v7794 = vmax.f32 %v7680, %v7688
          %v7795 = vrot.slane %v7794, 4
          %v7796 = vmax.f32 %v7794, %v7795
          %v7797 = vrot.slane %v7796, 2
          %v7798 = vmax.f32 %v7796, %v7797
          %v7799 = vrot.slane %v7798, 1
          %v7800 = vmax.f32 %v7798, %v7799
          %v7817 = vcombine.low %v7695, %v7702
          %v7818 = vcombine.low %v7709, %v7716
          %v7820 = vunpack.c.l.s4 1983009808
          %v7821 = vunpack.c.0.s8 %v7820
          %v7822 = vlaneseq
          %v7823 = vshrl.u32 %v7822, 7
          %v7824 = vsub.s32 %v7821, %v7823
          %v7825 = vrot.slane %v7817, %v7824
          %v7827 = vunpack.c.l.s4 1983009808
          %v7828 = vunpack.c.0.s8 %v7827
          %v7829 = vlaneseq
          %v7830 = vshrl.u32 %v7829, 7
          %v7831 = vsub.s32 %v7828, %v7830
          %v7832 = vrot.slane %v7818, %v7831
          %v7833 = vcombine.low %v7825, %v7832
          %v7834 = vcombine.low %v7723, %v7730
          %v7835 = vcombine.low %v7737, %v7744
          %v7837 = vunpack.c.l.s4 1983009808
          %v7838 = vunpack.c.0.s8 %v7837
          %v7839 = vlaneseq
          %v7840 = vshrl.u32 %v7839, 7
          %v7841 = vsub.s32 %v7838, %v7840
          %v7842 = vrot.slane %v7834, %v7841
          %v7844 = vunpack.c.l.s4 1983009808
          %v7845 = vunpack.c.0.s8 %v7844
          %v7846 = vlaneseq
          %v7847 = vshrl.u32 %v7846, 7
          %v7848 = vsub.s32 %v7845, %v7847
          %v7849 = vrot.slane %v7835, %v7848
          %v7850 = vcombine.low %v7842, %v7849
          %v7851 = vcombine.low %v7751, %v7758
          %v7852 = vcombine.low %v7765, %v7772
          %v7854 = vunpack.c.l.s4 1983009808
          %v7855 = vunpack.c.0.s8 %v7854
          %v7856 = vlaneseq
          %v7857 = vshrl.u32 %v7856, 7
          %v7858 = vsub.s32 %v7855, %v7857
          %v7859 = vrot.slane %v7851, %v7858
          %v7861 = vunpack.c.l.s4 1983009808
          %v7862 = vunpack.c.0.s8 %v7861
          %v7863 = vlaneseq
          %v7864 = vshrl.u32 %v7863, 7
          %v7865 = vsub.s32 %v7862, %v7864
          %v7866 = vrot.slane %v7852, %v7865
          %v7867 = vcombine.low %v7859, %v7866
          %v7868 = vcombine.low %v7779, %v7786
          %v7869 = vcombine.low %v7793, %v7800
          %v7871 = vunpack.c.l.s4 1983009808
          %v7872 = vunpack.c.0.s8 %v7871
          %v7873 = vlaneseq
          %v7874 = vshrl.u32 %v7873, 7
          %v7875 = vsub.s32 %v7872, %v7874
          %v7876 = vrot.slane %v7868, %v7875
          %v7878 = vunpack.c.l.s4 1983009808
          %v7879 = vunpack.c.0.s8 %v7878
          %v7880 = vlaneseq
          %v7881 = vshrl.u32 %v7880, 7
          %v7882 = vsub.s32 %v7879, %v7881
          %v7883 = vrot.slane %v7869, %v7882
          %v7884 = vcombine.low %v7876, %v7883
          %v7885 = vsel %vm5653, %v7833, %v7833
          %v7886 = vsel %vm5655, %v7833, %v7885
          %v7887 = vrot.slane %v7867, 7
          %v7888 = vsel %vm5658, %v7887, %v7886
          %v7889 = vsel %vm5660, %v7887, %v7888
          %v7890 = vsel %vm5662, %v7887, %v7889
          %v7891 = vsel %vm5664, %v7887, %v7890
          %v7892 = vsel %vm5653, %v7850, %v7850
          %v7893 = vsel %vm5655, %v7850, %v7892
          %v7894 = vrot.slane %v7884, 7
          %v7895 = vsel %vm5658, %v7894, %v7893
          %v7896 = vsel %vm5660, %v7894, %v7895
          %v7897 = vsel %vm5662, %v7894, %v7896
          %v7898 = vsel %vm5664, %v7894, %v7897
          %7901 = vst [vmem:[%s260 + $0x10] sm:$0xff] %v7891
          %7902 = vst [vmem:[%s260 + $0x18] sm:$0xff] %v7898
        $region52: #{tpu_custom_call.1} parent=31 // pred_fallthru
          _
        %s7903 = sand.u32 %s121, 1
        %s7904 = scalar_lea.sflag [#allocation4], %s7903
        %s7905 = sand.u32 %s121, 1
        %s7906 = smul.addr %s7905, 32
        %s7907 = scalar_lea.vmem [#allocation8], %s7906
        // Predicated region
        $region53: #{tpu_custom_call.1} parent=31 // pred_check
          %p7908 = pneg %p131
        $region54: #{tpu_custom_call.1} parent=31 // pred_check_branch
          %7910 = sbr.rel (%p7908) target = $region56
        $region55: #{tpu_custom_call.1} parent=31 // pred_region
          %s7911 = smul.u32 16, %s25
          %s7913 = ssub.s32 512, 512
          %7914 = vsyncadd %s7904, %s7913
          %s7915 = smul.addr %s26, 32
          %s7916 = sadd.s32 %s7911, %s7915
          %s7917 = smul.addr %s7916, 32
          %s7918 = scalar_lea.hbm %s3, %s7917
          %s7920 = sshll.u32 %s7907, 4
          %s7921 = int_to_ptr.vmem [resolvable:$true] %s7920
          %7923 = dma.vmem_to_hbm [thread:$0]  %s7921, 512, %s7918, %s7904
        $region56: #{tpu_custom_call.1} parent=31 // pred_fallthru
          _
      $region32: #{tpu_custom_call.1} parent=5 // pred_fallthru
        _
      %p7924 = scmp.le.s32.totalorder 2, %s16
      // Predicated region
      $region57: #{tpu_custom_call.1} parent=5 // pred_check
        %p7925 = pneg %p7924
      $region58: #{tpu_custom_call.1} parent=5 // pred_check_branch
        %7927 = sbr.rel (%p7925) target = $region60
      $region59: #{tpu_custom_call.1} parent=5 // pred_region
        %s7928 = ssub.s32 %s16, 2
        // Predicated region
        $region61: #{tpu_custom_call.1} parent=59 // pred_check
          %p7929 = pneg %p137
        $region62: #{tpu_custom_call.1} parent=59 // pred_check_branch
          %7931 = sbr.rel (%p7929) target = $region64
        $region63: #{tpu_custom_call.1} parent=59 // pred_region
          %s7932 = sand.u32 %s122, 1
          %s7933 = scalar_lea.sflag [#allocation4], %s7932
          %s7934 = sand.u32 %s122, 1
          %s7935 = smul.addr %s7934, 32
          %s7936 = scalar_lea.vmem [#allocation8], %s7935
          %7937 = dma.done %s7933, 512
        $region64: #{tpu_custom_call.1} parent=59 // pred_fallthru
          _
      $region60: #{tpu_custom_call.1} parent=5 // pred_fallthru
        _
    $region6: #{tpu_custom_call.1} parent=1 // loop_footer
      %s20 = sadd.s32 1, %s16
    $region7: #{tpu_custom_call.1} parent=1 // loop_footer_branch
      %15 = sbr.rel target = $region3
    $region8: #{tpu_custom_call.1} parent=1 // loop_exit
      _
    %7938 = vsyncpa [#allocation3], 1
    %s7939 = scalar_lea.sflag [#allocation3], 1
    %7940 = vsyncpa %s7939, 1
    %7941 = vsyncpa [#allocation6], 1
    %s7942 = scalar_lea.sflag [#allocation6], 1
    %7943 = vsyncpa %s7942, 1
    %7944 = vsyncpa [#allocation4], 1
    %s7945 = scalar_lea.sflag [#allocation4], 1
    %7946 = vsyncpa %s7945, 1

</llo_original>
